<compile_context>
chip_gen: v7x
topology: tpu7x:2x2x1
jax: 0.10.0
libtpu: 0.0.40
codegen_flags: <defaults>
</compile_context>

<pallas_src>
import jax
import jax.numpy as jnp
from jax import lax
from jax.experimental import pallas as pl
from jax.experimental.pallas import tpu as pltpu

K7 = 7
PAD = K7 // 2          # 'same' padding for a 7x7 kernel, stride 1
BN_EPS = 1e-3
LANE = 128


# --------------------------------------------------------------------------------------
# Pallas kernel
# --------------------------------------------------------------------------------------
def _dw7x7_kernel(x_ref, w7_ref, b7_ref, wp_ref, bp_ref, out_ref, patch_ref):
    """One batch tile of the fused depthwise7x7 block.

    x_ref:     (TB, H+6, W+6, Cin) f32  zero-padded NHWC input tile
    w7_ref:    (49*Cin, Cin)       bf16 7x7 conv weight, BN0 scale folded in
    b7_ref:    (1, Cin)            f32  7x7 conv bias + BN0 shift
    wp_ref:    (Cin, CoutP)        bf16 1x1 conv weight, BN1 scale folded, Cout padded
    bp_ref:    (1, CoutP)          f32  1x1 conv bias + BN1 shift (padded)
    out_ref:   (TB, H*W, CoutP)    f32
    patch_ref: (TB, H, W, 49*Cin)  f32  VMEM scratch for im2col
    """
    tb, hp, wp_, cin = x_ref.shape
    h, w = hp - 2 * PAD, wp_ - 2 * PAD

    xp = x_ref[...]

    # im2col into VMEM scratch. Column order is (kh*7 + kw)*Cin + ci, matching the
    # weight reshape done in the wrapper.
    for kh in range(K7):
        for kw in range(K7):
            p = kh * K7 + kw
            patch_ref[:, :, :, p * cin:(p + 1) * cin] = xp[:, kh:kh + h, kw:kw + w, :]

    patches = patch_ref[...].reshape(tb * h * w, K7 * K7 * cin)

    # 7x7 conv (+ folded BN0): single MXU matmul with K = 49*Cin, f32 accumulation.
    z = jnp.dot(patches.astype(jnp.bfloat16), w7_ref[...],
                preferred_element_type=jnp.float32) + b7_ref[...]          # (TB*H*W, Cin)

    # 1x1 pointwise conv (+ folded BN1) + ReLU; output is lane-dense (CoutP = k*128).
    y = jnp.dot(z.astype(jnp.bfloat16), wp_ref[...],
                preferred_element_type=jnp.float32) + bp_ref[...]          # (TB*H*W, CoutP)
    out_ref[...] = jnp.maximum(y, 0.0).reshape(tb, h * w, -1)


# --------------------------------------------------------------------------------------
# Parameter folding (eval-mode BN + conv bias -> weight scale / bias), bf16 weights
# --------------------------------------------------------------------------------------
def _fold_params(raw, cout_pad):
    cin = raw["w_depth"].shape[1]
    cout = raw["w_point"].shape[0]

    s0 = raw["gamma0"] / jnp.sqrt(raw["var0"] + BN_EPS)          # (Cin,)
    t0 = raw["beta0"] - s0 * raw["mean0"]
    s1 = raw["gamma1"] / jnp.sqrt(raw["var1"] + BN_EPS)          # (Cout,)
    t1 = raw["beta1"] - s1 * raw["mean1"]

    # depth1 weight: PyTorch OIHW (Cin, Cin, 7, 7) -> (kh, kw, ci, co) -> (49*Cin, Cin),
    # row index = (kh*7 + kw)*Cin + ci to match the kernel's im2col column order.
    w7 = jnp.transpose(raw["w_depth"], (2, 3, 1, 0)).reshape(K7 * K7 * cin, cin)
    w7 = w7 * s0[None, :]                                        # fold BN0 scale per out-ch
    b7 = s0 * raw["b_depth"] + t0                                # (Cin,)

    # point1 weight: OIHW (Cout, Cin, 1, 1) -> (Cin, Cout), fold BN1 scale per out-ch.
    wp = jnp.transpose(raw["w_point"][:, :, 0, 0], (1, 0)) * s1[None, :]
    bp = s1 * raw["b_point"] + t1                                # (Cout,)

    # Pad Cout to a 128-lane multiple for a lane-dense output store.
    wp = jnp.pad(wp, ((0, 0), (0, cout_pad - cout)))
    bp = jnp.pad(bp, ((0, cout_pad - cout),))

    return dict(
        w7=w7.astype(jnp.bfloat16),
        b7=b7.reshape(1, cin).astype(jnp.float32),
        wp=wp.astype(jnp.bfloat16),
        bp=bp.reshape(1, cout_pad).astype(jnp.float32),
    )


# --------------------------------------------------------------------------------------
# Wrapper
# --------------------------------------------------------------------------------------
def depthwise7x7_forward(x_nchw, raw_params, batch_tile=1):
    """x_nchw: (N, Cin, H, W) f32, PyTorch layout. Returns (N, Cout, H, W) f32."""
    n, cin, h, w = x_nchw.shape
    cout = raw_params["w_point"].shape[0]
    cout_pad = ((cout + LANE - 1) // LANE) * LANE
    assert n % batch_tile == 0

    p = _fold_params(raw_params, cout_pad)

    x = jnp.transpose(x_nchw, (0, 2, 3, 1)).astype(jnp.float32)          # NHWC
    xp = jnp.pad(x, ((0, 0), (PAD, PAD), (PAD, PAD), (0, 0)))            # 'same' zero pad
    hp, wp_ = h + 2 * PAD, w + 2 * PAD

    tb = batch_tile
    grid = (pl.cdiv(n, tb),)

    out = pl.pallas_call(
        _dw7x7_kernel,
        out_shape=jax.ShapeDtypeStruct((n, h * w, cout_pad), jnp.float32),
        grid=grid,
        in_specs=[
            pl.BlockSpec((tb, hp, wp_, cin), lambda i: (i, 0, 0, 0)),    # input tile
            pl.BlockSpec((K7 * K7 * cin, cin), lambda i: (0, 0)),        # w7 (resident)
            pl.BlockSpec((1, cin), lambda i: (0, 0)),                    # b7
            pl.BlockSpec((cin, cout_pad), lambda i: (0, 0)),             # wp (resident)
            pl.BlockSpec((1, cout_pad), lambda i: (0, 0)),               # bp
        ],
        out_specs=pl.BlockSpec((tb, h * w, cout_pad), lambda i: (i, 0, 0)),
        scratch_shapes=[pltpu.VMEM((tb, h, w, K7 * K7 * cin), jnp.float32)],
        compiler_params=pltpu.CompilerParams(dimension_semantics=("parallel",)),
    )(xp, p["w7"], p["b7"], p["wp"], p["bp"])

    out = out[:, :, :cout].reshape(n, h, w, cout)
    return jnp.transpose(out, (0, 3, 1, 2))                              # back to NCHW


# --------------------------------------------------------------------------------------
# Deterministic synthetic parameters (raw, PyTorch-layout) and a pure-JAX reference
# --------------------------------------------------------------------------------------
def init_raw_params(key, cin, cout):
    ks = jax.random.split(key, 12)
    nrm = lambda k, shape, std=0.1: std * jax.random.normal(k, shape, jnp.float32)
    return dict(
        w_depth=nrm(ks[0], (cin, cin, K7, K7)),
        b_depth=nrm(ks[1], (cin,)),
        gamma0=1.0 + nrm(ks[2], (cin,)),
        beta0=nrm(ks[3], (cin,)),
        mean0=nrm(ks[4], (cin,)),
        var0=jnp.abs(nrm(ks[5], (cin,), 0.2)) + 1.0,
        w_point=nrm(ks[6], (cout, cin, 1, 1)),
        b_point=nrm(ks[7], (cout,)),
        gamma1=1.0 + nrm(ks[8], (cout,)),
        beta1=nrm(ks[9], (cout,)),
        mean1=nrm(ks[10], (cout,)),
        var1=jnp.abs(nrm(ks[11], (cout,), 0.2)) + 1.0,
    )


def _bn_nchw(v, gamma, beta, mean, var):
    s = gamma / jnp.sqrt(var + BN_EPS)
    return s[None, :, None, None] * (v - mean[None, :, None, None]) + beta[None, :, None, None]


def reference_forward(x_nchw, raw):
    y = lax.conv_general_dilated(
        x_nchw, raw["w_depth"], window_strides=(1, 1), padding="SAME",
        dimension_numbers=("NCHW", "OIHW", "NCHW"), precision=lax.Precision.HIGHEST)
    y = y + raw["b_depth"][None, :, None, None]
    y = _bn_nchw(y, raw["gamma0"], raw["beta0"], raw["mean0"], raw["var0"])
    z = lax.conv_general_dilated(
        y, raw["w_point"], window_strides=(1, 1), padding="SAME",
        dimension_numbers=("NCHW", "OIHW", "NCHW"), precision=lax.Precision.HIGHEST)
    z = z + raw["b_point"][None, :, None, None]
    z = _bn_nchw(z, raw["gamma1"], raw["beta1"], raw["mean1"], raw["var1"])
    return jnp.maximum(z, 0.0)


if __name__ == "__main__":
    key = jax.random.PRNGKey(0)
    kx, kp = jax.random.split(key)

    N, Cin, Cout, H, W = 2, 4, 8, 16, 16
    x = jax.random.normal(kx, (N, Cin, H, W), jnp.float32)
    raw = init_raw_params(kp, Cin, Cout)

    out = depthwise7x7_forward(x, raw)
    out = jax.block_until_ready(out)

    assert out.shape == (N, Cout, H, W)
    assert bool(jnp.all(jnp.isfinite(out)))

    ref = reference_forward(x, raw)
    max_err = float(jnp.max(jnp.abs(out - ref)))
    assert max_err < 5e-2, f"max abs error vs f32 reference: {max_err}"

    print("KERNEL_OK")
</pallas_src>

<mosaic_0001>
module attributes {stable_mosaic.version = 11 : i64} {
  func.func @_dw7x7_kernel(%arg0: i32, %arg1: memref<1x22x22x4xf32, #tpu.memory_space<vmem>>, %arg2: memref<196x4xbf16, #tpu.memory_space<vmem>>, %arg3: memref<1x4xf32, #tpu.memory_space<vmem>>, %arg4: memref<4x128xbf16, #tpu.memory_space<vmem>>, %arg5: memref<1x128xf32, #tpu.memory_space<vmem>>, %arg6: memref<1x256x128xf32, #tpu.memory_space<vmem>>, %arg7: memref<1x16x16x196xf32, #tpu.memory_space<vmem>>) attributes {dimension_semantics = [#tpu.dimension_semantics<parallel>], iteration_bounds = array<i64: 2>, scalar_prefetch = 0 : i64, scratch_operands = 1 : i64, tpu.core_type = #tpu.core_type<tc>, window_params = [{transform_indices = @transform_0, window_bounds = array<i64: 1, 22, 22, 4>}, {pipeline_mode = #tpu.pipeline_mode<synchronous>, transform_indices = @transform_1, window_bounds = array<i64: 196, 4>}, {pipeline_mode = #tpu.pipeline_mode<synchronous>, transform_indices = @transform_2, window_bounds = array<i64: 1, 4>}, {pipeline_mode = #tpu.pipeline_mode<synchronous>, transform_indices = @transform_3, window_bounds = array<i64: 4, 128>}, {pipeline_mode = #tpu.pipeline_mode<synchronous>, transform_indices = @transform_4, window_bounds = array<i64: 1, 128>}, {transform_indices = @transform_5, window_bounds = array<i64: 1, 256, 128>}]} {
    %c0 = arith.constant 0 : index
    %c0_0 = arith.constant 0 : index
    %c0_1 = arith.constant 0 : index
    %c0_2 = arith.constant 0 : index
    %0 = vector.load %arg1[%c0, %c0_0, %c0_1, %c0_2] : memref<1x22x22x4xf32, #tpu.memory_space<vmem>>, vector<1x22x22x4xf32>
    %1 = vector.extract_strided_slice %0 {offsets = [0, 0, 0, 0], sizes = [1, 16, 16, 4], strides = [1, 1, 1, 1]} : vector<1x22x22x4xf32> to vector<1x16x16x4xf32>
    %c0_3 = arith.constant 0 : index
    %c0_4 = arith.constant 0 : index
    %c0_5 = arith.constant 0 : index
    %c0_6 = arith.constant 0 : index
    %2 = vector.load %arg7[%c0_3, %c0_4, %c0_5, %c0_6] : memref<1x16x16x196xf32, #tpu.memory_space<vmem>>, vector<1x16x16x4xf32>
    tpu.vector_store %arg7[%c0_3, %c0_4, %c0_5, %c0_6], %1 {strides = array<i32>} : memref<1x16x16x196xf32, #tpu.memory_space<vmem>>, vector<1x16x16x4xf32>,
    %3 = vector.extract_strided_slice %0 {offsets = [0, 0, 1, 0], sizes = [1, 16, 16, 4], strides = [1, 1, 1, 1]} : vector<1x22x22x4xf32> to vector<1x16x16x4xf32>
    %c0_7 = arith.constant 0 : index
    %c0_8 = arith.constant 0 : index
    %c0_9 = arith.constant 0 : index
    %c4 = arith.constant 4 : index
    %4 = vector.load %arg7[%c0_7, %c0_8, %c0_9, %c4] : memref<1x16x16x196xf32, #tpu.memory_space<vmem>>, vector<1x16x16x4xf32>
    tpu.vector_store %arg7[%c0_7, %c0_8, %c0_9, %c4], %3 {strides = array<i32>} : memref<1x16x16x196xf32, #tpu.memory_space<vmem>>, vector<1x16x16x4xf32>,
    %5 = vector.extract_strided_slice %0 {offsets = [0, 0, 2, 0], sizes = [1, 16, 16, 4], strides = [1, 1, 1, 1]} : vector<1x22x22x4xf32> to vector<1x16x16x4xf32>
    %c0_10 = arith.constant 0 : index
    %c0_11 = arith.constant 0 : index
    %c0_12 = arith.constant 0 : index
    %c8 = arith.constant 8 : index
    %6 = vector.load %arg7[%c0_10, %c0_11, %c0_12, %c8] : memref<1x16x16x196xf32, #tpu.memory_space<vmem>>, vector<1x16x16x4xf32>
    tpu.vector_store %arg7[%c0_10, %c0_11, %c0_12, %c8], %5 {strides = array<i32>} : memref<1x16x16x196xf32, #tpu.memory_space<vmem>>, vector<1x16x16x4xf32>,
    %7 = vector.extract_strided_slice %0 {offsets = [0, 0, 3, 0], sizes = [1, 16, 16, 4], strides = [1, 1, 1, 1]} : vector<1x22x22x4xf32> to vector<1x16x16x4xf32>
    %c0_13 = arith.constant 0 : index
    %c0_14 = arith.constant 0 : index
    %c0_15 = arith.constant 0 : index
    %c12 = arith.constant 12 : index
    %8 = vector.load %arg7[%c0_13, %c0_14, %c0_15, %c12] : memref<1x16x16x196xf32, #tpu.memory_space<vmem>>, vector<1x16x16x4xf32>
    tpu.vector_store %arg7[%c0_13, %c0_14, %c0_15, %c12], %7 {strides = array<i32>} : memref<1x16x16x196xf32, #tpu.memory_space<vmem>>, vector<1x16x16x4xf32>,
    %9 = vector.extract_strided_slice %0 {offsets = [0, 0, 4, 0], sizes = [1, 16, 16, 4], strides = [1, 1, 1, 1]} : vector<1x22x22x4xf32> to vector<1x16x16x4xf32>
    %c0_16 = arith.constant 0 : index
    %c0_17 = arith.constant 0 : index
    %c0_18 = arith.constant 0 : index
    %c16 = arith.constant 16 : index
    %10 = vector.load %arg7[%c0_16, %c0_17, %c0_18, %c16] : memref<1x16x16x196xf32, #tpu.memory_space<vmem>>, vector<1x16x16x4xf32>
    tpu.vector_store %arg7[%c0_16, %c0_17, %c0_18, %c16], %9 {strides = array<i32>} : memref<1x16x16x196xf32, #tpu.memory_space<vmem>>, vector<1x16x16x4xf32>,
    %11 = vector.extract_strided_slice %0 {offsets = [0, 0, 5, 0], sizes = [1, 16, 16, 4], strides = [1, 1, 1, 1]} : vector<1x22x22x4xf32> to vector<1x16x16x4xf32>
    %c0_19 = arith.constant 0 : index
    %c0_20 = arith.constant 0 : index
    %c0_21 = arith.constant 0 : index
    %c20 = arith.constant 20 : index
    %12 = vector.load %arg7[%c0_19, %c0_20, %c0_21, %c20] : memref<1x16x16x196xf32, #tpu.memory_space<vmem>>, vector<1x16x16x4xf32>
    tpu.vector_store %arg7[%c0_19, %c0_20, %c0_21, %c20], %11 {strides = array<i32>} : memref<1x16x16x196xf32, #tpu.memory_space<vmem>>, vector<1x16x16x4xf32>,
    %13 = vector.extract_strided_slice %0 {offsets = [0, 0, 6, 0], sizes = [1, 16, 16, 4], strides = [1, 1, 1, 1]} : vector<1x22x22x4xf32> to vector<1x16x16x4xf32>
    %c0_22 = arith.constant 0 : index
    %c0_23 = arith.constant 0 : index
    %c0_24 = arith.constant 0 : index
    %c24 = arith.constant 24 : index
    %14 = vector.load %arg7[%c0_22, %c0_23, %c0_24, %c24] : memref<1x16x16x196xf32, #tpu.memory_space<vmem>>, vector<1x16x16x4xf32>
    tpu.vector_store %arg7[%c0_22, %c0_23, %c0_24, %c24], %13 {strides = array<i32>} : memref<1x16x16x196xf32, #tpu.memory_space<vmem>>, vector<1x16x16x4xf32>,
    %15 = vector.extract_strided_slice %0 {offsets = [0, 1, 0, 0], sizes = [1, 16, 16, 4], strides = [1, 1, 1, 1]} : vector<1x22x22x4xf32> to vector<1x16x16x4xf32>
    %c0_25 = arith.constant 0 : index
    %c0_26 = arith.constant 0 : index
    %c0_27 = arith.constant 0 : index
    %c28 = arith.constant 28 : index
    %16 = vector.load %arg7[%c0_25, %c0_26, %c0_27, %c28] : memref<1x16x16x196xf32, #tpu.memory_space<vmem>>, vector<1x16x16x4xf32>
    tpu.vector_store %arg7[%c0_25, %c0_26, %c0_27, %c28], %15 {strides = array<i32>} : memref<1x16x16x196xf32, #tpu.memory_space<vmem>>, vector<1x16x16x4xf32>,
    %17 = vector.extract_strided_slice %0 {offsets = [0, 1, 1, 0], sizes = [1, 16, 16, 4], strides = [1, 1, 1, 1]} : vector<1x22x22x4xf32> to vector<1x16x16x4xf32>
    %c0_28 = arith.constant 0 : index
    %c0_29 = arith.constant 0 : index
    %c0_30 = arith.constant 0 : index
    %c32 = arith.constant 32 : index
    %18 = vector.load %arg7[%c0_28, %c0_29, %c0_30, %c32] : memref<1x16x16x196xf32, #tpu.memory_space<vmem>>, vector<1x16x16x4xf32>
    tpu.vector_store %arg7[%c0_28, %c0_29, %c0_30, %c32], %17 {strides = array<i32>} : memref<1x16x16x196xf32, #tpu.memory_space<vmem>>, vector<1x16x16x4xf32>,
    %19 = vector.extract_strided_slice %0 {offsets = [0, 1, 2, 0], sizes = [1, 16, 16, 4], strides = [1, 1, 1, 1]} : vector<1x22x22x4xf32> to vector<1x16x16x4xf32>
    %c0_31 = arith.constant 0 : index
    %c0_32 = arith.constant 0 : index
    %c0_33 = arith.constant 0 : index
    %c36 = arith.constant 36 : index
    %20 = vector.load %arg7[%c0_31, %c0_32, %c0_33, %c36] : memref<1x16x16x196xf32, #tpu.memory_space<vmem>>, vector<1x16x16x4xf32>
    tpu.vector_store %arg7[%c0_31, %c0_32, %c0_33, %c36], %19 {strides = array<i32>} : memref<1x16x16x196xf32, #tpu.memory_space<vmem>>, vector<1x16x16x4xf32>,
    %21 = vector.extract_strided_slice %0 {offsets = [0, 1, 3, 0], sizes = [1, 16, 16, 4], strides = [1, 1, 1, 1]} : vector<1x22x22x4xf32> to vector<1x16x16x4xf32>
    %c0_34 = arith.constant 0 : index
    %c0_35 = arith.constant 0 : index
    %c0_36 = arith.constant 0 : index
    %c40 = arith.constant 40 : index
    %22 = vector.load %arg7[%c0_34, %c0_35, %c0_36, %c40] : memref<1x16x16x196xf32, #tpu.memory_space<vmem>>, vector<1x16x16x4xf32>
    tpu.vector_store %arg7[%c0_34, %c0_35, %c0_36, %c40], %21 {strides = array<i32>} : memref<1x16x16x196xf32, #tpu.memory_space<vmem>>, vector<1x16x16x4xf32>,
    %23 = vector.extract_strided_slice %0 {offsets = [0, 1, 4, 0], sizes = [1, 16, 16, 4], strides = [1, 1, 1, 1]} : vector<1x22x22x4xf32> to vector<1x16x16x4xf32>
    %c0_37 = arith.constant 0 : index
    %c0_38 = arith.constant 0 : index
    %c0_39 = arith.constant 0 : index
    %c44 = arith.constant 44 : index
    %24 = vector.load %arg7[%c0_37, %c0_38, %c0_39, %c44] : memref<1x16x16x196xf32, #tpu.memory_space<vmem>>, vector<1x16x16x4xf32>
    tpu.vector_store %arg7[%c0_37, %c0_38, %c0_39, %c44], %23 {strides = array<i32>} : memref<1x16x16x196xf32, #tpu.memory_space<vmem>>, vector<1x16x16x4xf32>,
    %25 = vector.extract_strided_slice %0 {offsets = [0, 1, 5, 0], sizes = [1, 16, 16, 4], strides = [1, 1, 1, 1]} : vector<1x22x22x4xf32> to vector<1x16x16x4xf32>
    %c0_40 = arith.constant 0 : index
    %c0_41 = arith.constant 0 : index
    %c0_42 = arith.constant 0 : index
    %c48 = arith.constant 48 : index
    %26 = vector.load %arg7[%c0_40, %c0_41, %c0_42, %c48] : memref<1x16x16x196xf32, #tpu.memory_space<vmem>>, vector<1x16x16x4xf32>
    tpu.vector_store %arg7[%c0_40, %c0_41, %c0_42, %c48], %25 {strides = array<i32>} : memref<1x16x16x196xf32, #tpu.memory_space<vmem>>, vector<1x16x16x4xf32>,
    %27 = vector.extract_strided_slice %0 {offsets = [0, 1, 6, 0], sizes = [1, 16, 16, 4], strides = [1, 1, 1, 1]} : vector<1x22x22x4xf32> to vector<1x16x16x4xf32>
    %c0_43 = arith.constant 0 : index
    %c0_44 = arith.constant 0 : index
    %c0_45 = arith.constant 0 : index
    %c52 = arith.constant 52 : index
    %28 = vector.load %arg7[%c0_43, %c0_44, %c0_45, %c52] : memref<1x16x16x196xf32, #tpu.memory_space<vmem>>, vector<1x16x16x4xf32>
    tpu.vector_store %arg7[%c0_43, %c0_44, %c0_45, %c52], %27 {strides = array<i32>} : memref<1x16x16x196xf32, #tpu.memory_space<vmem>>, vector<1x16x16x4xf32>,
    %29 = vector.extract_strided_slice %0 {offsets = [0, 2, 0, 0], sizes = [1, 16, 16, 4], strides = [1, 1, 1, 1]} : vector<1x22x22x4xf32> to vector<1x16x16x4xf32>
    %c0_46 = arith.constant 0 : index
    %c0_47 = arith.constant 0 : index
    %c0_48 = arith.constant 0 : index
    %c56 = arith.constant 56 : index
    %30 = vector.load %arg7[%c0_46, %c0_47, %c0_48, %c56] : memref<1x16x16x196xf32, #tpu.memory_space<vmem>>, vector<1x16x16x4xf32>
    tpu.vector_store %arg7[%c0_46, %c0_47, %c0_48, %c56], %29 {strides = array<i32>} : memref<1x16x16x196xf32, #tpu.memory_space<vmem>>, vector<1x16x16x4xf32>,
    %31 = vector.extract_strided_slice %0 {offsets = [0, 2, 1, 0], sizes = [1, 16, 16, 4], strides = [1, 1, 1, 1]} : vector<1x22x22x4xf32> to vector<1x16x16x4xf32>
    %c0_49 = arith.constant 0 : index
    %c0_50 = arith.constant 0 : index
    %c0_51 = arith.constant 0 : index
    %c60 = arith.constant 60 : index
    %32 = vector.load %arg7[%c0_49, %c0_50, %c0_51, %c60] : memref<1x16x16x196xf32, #tpu.memory_space<vmem>>, vector<1x16x16x4xf32>
    tpu.vector_store %arg7[%c0_49, %c0_50, %c0_51, %c60], %31 {strides = array<i32>} : memref<1x16x16x196xf32, #tpu.memory_space<vmem>>, vector<1x16x16x4xf32>,
    %33 = vector.extract_strided_slice %0 {offsets = [0, 2, 2, 0], sizes = [1, 16, 16, 4], strides = [1, 1, 1, 1]} : vector<1x22x22x4xf32> to vector<1x16x16x4xf32>
    %c0_52 = arith.constant 0 : index
    %c0_53 = arith.constant 0 : index
    %c0_54 = arith.constant 0 : index
    %c64 = arith.constant 64 : index
    %34 = vector.load %arg7[%c0_52, %c0_53, %c0_54, %c64] : memref<1x16x16x196xf32, #tpu.memory_space<vmem>>, vector<1x16x16x4xf32>
    tpu.vector_store %arg7[%c0_52, %c0_53, %c0_54, %c64], %33 {strides = array<i32>} : memref<1x16x16x196xf32, #tpu.memory_space<vmem>>, vector<1x16x16x4xf32>,
    %35 = vector.extract_strided_slice %0 {offsets = [0, 2, 3, 0], sizes = [1, 16, 16, 4], strides = [1, 1, 1, 1]} : vector<1x22x22x4xf32> to vector<1x16x16x4xf32>
    %c0_55 = arith.constant 0 : index
    %c0_56 = arith.constant 0 : index
    %c0_57 = arith.constant 0 : index
    %c68 = arith.constant 68 : index
    %36 = vector.load %arg7[%c0_55, %c0_56, %c0_57, %c68] : memref<1x16x16x196xf32, #tpu.memory_space<vmem>>, vector<1x16x16x4xf32>
    tpu.vector_store %arg7[%c0_55, %c0_56, %c0_57, %c68], %35 {strides = array<i32>} : memref<1x16x16x196xf32, #tpu.memory_space<vmem>>, vector<1x16x16x4xf32>,
    %37 = vector.extract_strided_slice %0 {offsets = [0, 2, 4, 0], sizes = [1, 16, 16, 4], strides = [1, 1, 1, 1]} : vector<1x22x22x4xf32> to vector<1x16x16x4xf32>
    %c0_58 = arith.constant 0 : index
    %c0_59 = arith.constant 0 : index
    %c0_60 = arith.constant 0 : index
    %c72 = arith.constant 72 : index
    %38 = vector.load %arg7[%c0_58, %c0_59, %c0_60, %c72] : memref<1x16x16x196xf32, #tpu.memory_space<vmem>>, vector<1x16x16x4xf32>
    tpu.vector_store %arg7[%c0_58, %c0_59, %c0_60, %c72], %37 {strides = array<i32>} : memref<1x16x16x196xf32, #tpu.memory_space<vmem>>, vector<1x16x16x4xf32>,
    %39 = vector.extract_strided_slice %0 {offsets = [0, 2, 5, 0], sizes = [1, 16, 16, 4], strides = [1, 1, 1, 1]} : vector<1x22x22x4xf32> to vector<1x16x16x4xf32>
    %c0_61 = arith.constant 0 : index
    %c0_62 = arith.constant 0 : index
    %c0_63 = arith.constant 0 : index
    %c76 = arith.constant 76 : index
    %40 = vector.load %arg7[%c0_61, %c0_62, %c0_63, %c76] : memref<1x16x16x196xf32, #tpu.memory_space<vmem>>, vector<1x16x16x4xf32>
    tpu.vector_store %arg7[%c0_61, %c0_62, %c0_63, %c76], %39 {strides = array<i32>} : memref<1x16x16x196xf32, #tpu.memory_space<vmem>>, vector<1x16x16x4xf32>,
    %41 = vector.extract_strided_slice %0 {offsets = [0, 2, 6, 0], sizes = [1, 16, 16, 4], strides = [1, 1, 1, 1]} : vector<1x22x22x4xf32> to vector<1x16x16x4xf32>
    %c0_64 = arith.constant 0 : index
    %c0_65 = arith.constant 0 : index
    %c0_66 = arith.constant 0 : index
    %c80 = arith.constant 80 : index
    %42 = vector.load %arg7[%c0_64, %c0_65, %c0_66, %c80] : memref<1x16x16x196xf32, #tpu.memory_space<vmem>>, vector<1x16x16x4xf32>
    tpu.vector_store %arg7[%c0_64, %c0_65, %c0_66, %c80], %41 {strides = array<i32>} : memref<1x16x16x196xf32, #tpu.memory_space<vmem>>, vector<1x16x16x4xf32>,
    %43 = vector.extract_strided_slice %0 {offsets = [0, 3, 0, 0], sizes = [1, 16, 16, 4], strides = [1, 1, 1, 1]} : vector<1x22x22x4xf32> to vector<1x16x16x4xf32>
    %c0_67 = arith.constant 0 : index
    %c0_68 = arith.constant 0 : index
    %c0_69 = arith.constant 0 : index
    %c84 = arith.constant 84 : index
    %44 = vector.load %arg7[%c0_67, %c0_68, %c0_69, %c84] : memref<1x16x16x196xf32, #tpu.memory_space<vmem>>, vector<1x16x16x4xf32>
    tpu.vector_store %arg7[%c0_67, %c0_68, %c0_69, %c84], %43 {strides = array<i32>} : memref<1x16x16x196xf32, #tpu.memory_space<vmem>>, vector<1x16x16x4xf32>,
    %45 = vector.extract_strided_slice %0 {offsets = [0, 3, 1, 0], sizes = [1, 16, 16, 4], strides = [1, 1, 1, 1]} : vector<1x22x22x4xf32> to vector<1x16x16x4xf32>
    %c0_70 = arith.constant 0 : index
    %c0_71 = arith.constant 0 : index
    %c0_72 = arith.constant 0 : index
    %c88 = arith.constant 88 : index
    %46 = vector.load %arg7[%c0_70, %c0_71, %c0_72, %c88] : memref<1x16x16x196xf32, #tpu.memory_space<vmem>>, vector<1x16x16x4xf32>
    tpu.vector_store %arg7[%c0_70, %c0_71, %c0_72, %c88], %45 {strides = array<i32>} : memref<1x16x16x196xf32, #tpu.memory_space<vmem>>, vector<1x16x16x4xf32>,
    %47 = vector.extract_strided_slice %0 {offsets = [0, 3, 2, 0], sizes = [1, 16, 16, 4], strides = [1, 1, 1, 1]} : vector<1x22x22x4xf32> to vector<1x16x16x4xf32>
    %c0_73 = arith.constant 0 : index
    %c0_74 = arith.constant 0 : index
    %c0_75 = arith.constant 0 : index
    %c92 = arith.constant 92 : index
    %48 = vector.load %arg7[%c0_73, %c0_74, %c0_75, %c92] : memref<1x16x16x196xf32, #tpu.memory_space<vmem>>, vector<1x16x16x4xf32>
    tpu.vector_store %arg7[%c0_73, %c0_74, %c0_75, %c92], %47 {strides = array<i32>} : memref<1x16x16x196xf32, #tpu.memory_space<vmem>>, vector<1x16x16x4xf32>,
    %49 = vector.extract_strided_slice %0 {offsets = [0, 3, 3, 0], sizes = [1, 16, 16, 4], strides = [1, 1, 1, 1]} : vector<1x22x22x4xf32> to vector<1x16x16x4xf32>
    %c0_76 = arith.constant 0 : index
    %c0_77 = arith.constant 0 : index
    %c0_78 = arith.constant 0 : index
    %c96 = arith.constant 96 : index
    %50 = vector.load %arg7[%c0_76, %c0_77, %c0_78, %c96] : memref<1x16x16x196xf32, #tpu.memory_space<vmem>>, vector<1x16x16x4xf32>
    tpu.vector_store %arg7[%c0_76, %c0_77, %c0_78, %c96], %49 {strides = array<i32>} : memref<1x16x16x196xf32, #tpu.memory_space<vmem>>, vector<1x16x16x4xf32>,
    %51 = vector.extract_strided_slice %0 {offsets = [0, 3, 4, 0], sizes = [1, 16, 16, 4], strides = [1, 1, 1, 1]} : vector<1x22x22x4xf32> to vector<1x16x16x4xf32>
    %c0_79 = arith.constant 0 : index
    %c0_80 = arith.constant 0 : index
    %c0_81 = arith.constant 0 : index
    %c100 = arith.constant 100 : index
    %52 = vector.load %arg7[%c0_79, %c0_80, %c0_81, %c100] : memref<1x16x16x196xf32, #tpu.memory_space<vmem>>, vector<1x16x16x4xf32>
    tpu.vector_store %arg7[%c0_79, %c0_80, %c0_81, %c100], %51 {strides = array<i32>} : memref<1x16x16x196xf32, #tpu.memory_space<vmem>>, vector<1x16x16x4xf32>,
    %53 = vector.extract_strided_slice %0 {offsets = [0, 3, 5, 0], sizes = [1, 16, 16, 4], strides = [1, 1, 1, 1]} : vector<1x22x22x4xf32> to vector<1x16x16x4xf32>
    %c0_82 = arith.constant 0 : index
    %c0_83 = arith.constant 0 : index
    %c0_84 = arith.constant 0 : index
    %c104 = arith.constant 104 : index
    %54 = vector.load %arg7[%c0_82, %c0_83, %c0_84, %c104] : memref<1x16x16x196xf32, #tpu.memory_space<vmem>>, vector<1x16x16x4xf32>
    tpu.vector_store %arg7[%c0_82, %c0_83, %c0_84, %c104], %53 {strides = array<i32>} : memref<1x16x16x196xf32, #tpu.memory_space<vmem>>, vector<1x16x16x4xf32>,
    %55 = vector.extract_strided_slice %0 {offsets = [0, 3, 6, 0], sizes = [1, 16, 16, 4], strides = [1, 1, 1, 1]} : vector<1x22x22x4xf32> to vector<1x16x16x4xf32>
    %c0_85 = arith.constant 0 : index
    %c0_86 = arith.constant 0 : index
    %c0_87 = arith.constant 0 : index
    %c108 = arith.constant 108 : index
    %56 = vector.load %arg7[%c0_85, %c0_86, %c0_87, %c108] : memref<1x16x16x196xf32, #tpu.memory_space<vmem>>, vector<1x16x16x4xf32>
    tpu.vector_store %arg7[%c0_85, %c0_86, %c0_87, %c108], %55 {strides = array<i32>} : memref<1x16x16x196xf32, #tpu.memory_space<vmem>>, vector<1x16x16x4xf32>,
    %57 = vector.extract_strided_slice %0 {offsets = [0, 4, 0, 0], sizes = [1, 16, 16, 4], strides = [1, 1, 1, 1]} : vector<1x22x22x4xf32> to vector<1x16x16x4xf32>
    %c0_88 = arith.constant 0 : index
    %c0_89 = arith.constant 0 : index
    %c0_90 = arith.constant 0 : index
    %c112 = arith.constant 112 : index
    %58 = vector.load %arg7[%c0_88, %c0_89, %c0_90, %c112] : memref<1x16x16x196xf32, #tpu.memory_space<vmem>>, vector<1x16x16x4xf32>
    tpu.vector_store %arg7[%c0_88, %c0_89, %c0_90, %c112], %57 {strides = array<i32>} : memref<1x16x16x196xf32, #tpu.memory_space<vmem>>, vector<1x16x16x4xf32>,
    %59 = vector.extract_strided_slice %0 {offsets = [0, 4, 1, 0], sizes = [1, 16, 16, 4], strides = [1, 1, 1, 1]} : vector<1x22x22x4xf32> to vector<1x16x16x4xf32>
    %c0_91 = arith.constant 0 : index
    %c0_92 = arith.constant 0 : index
    %c0_93 = arith.constant 0 : index
    %c116 = arith.constant 116 : index
    %60 = vector.load %arg7[%c0_91, %c0_92, %c0_93, %c116] : memref<1x16x16x196xf32, #tpu.memory_space<vmem>>, vector<1x16x16x4xf32>
    tpu.vector_store %arg7[%c0_91, %c0_92, %c0_93, %c116], %59 {strides = array<i32>} : memref<1x16x16x196xf32, #tpu.memory_space<vmem>>, vector<1x16x16x4xf32>,
    %61 = vector.extract_strided_slice %0 {offsets = [0, 4, 2, 0], sizes = [1, 16, 16, 4], strides = [1, 1, 1, 1]} : vector<1x22x22x4xf32> to vector<1x16x16x4xf32>
    %c0_94 = arith.constant 0 : index
    %c0_95 = arith.constant 0 : index
    %c0_96 = arith.constant 0 : index
    %c120 = arith.constant 120 : index
    %62 = vector.load %arg7[%c0_94, %c0_95, %c0_96, %c120] : memref<1x16x16x196xf32, #tpu.memory_space<vmem>>, vector<1x16x16x4xf32>
    tpu.vector_store %arg7[%c0_94, %c0_95, %c0_96, %c120], %61 {strides = array<i32>} : memref<1x16x16x196xf32, #tpu.memory_space<vmem>>, vector<1x16x16x4xf32>,
    %63 = vector.extract_strided_slice %0 {offsets = [0, 4, 3, 0], sizes = [1, 16, 16, 4], strides = [1, 1, 1, 1]} : vector<1x22x22x4xf32> to vector<1x16x16x4xf32>
    %c0_97 = arith.constant 0 : index
    %c0_98 = arith.constant 0 : index
    %c0_99 = arith.constant 0 : index
    %c124 = arith.constant 124 : index
    %64 = vector.load %arg7[%c0_97, %c0_98, %c0_99, %c124] : memref<1x16x16x196xf32, #tpu.memory_space<vmem>>, vector<1x16x16x4xf32>
    tpu.vector_store %arg7[%c0_97, %c0_98, %c0_99, %c124], %63 {strides = array<i32>} : memref<1x16x16x196xf32, #tpu.memory_space<vmem>>, vector<1x16x16x4xf32>,
    %65 = vector.extract_strided_slice %0 {offsets = [0, 4, 4, 0], sizes = [1, 16, 16, 4], strides = [1, 1, 1, 1]} : vector<1x22x22x4xf32> to vector<1x16x16x4xf32>
    %c0_100 = arith.constant 0 : index
    %c0_101 = arith.constant 0 : index
    %c0_102 = arith.constant 0 : index
    %c128 = arith.constant 128 : index
    %66 = vector.load %arg7[%c0_100, %c0_101, %c0_102, %c128] : memref<1x16x16x196xf32, #tpu.memory_space<vmem>>, vector<1x16x16x4xf32>
    tpu.vector_store %arg7[%c0_100, %c0_101, %c0_102, %c128], %65 {strides = array<i32>} : memref<1x16x16x196xf32, #tpu.memory_space<vmem>>, vector<1x16x16x4xf32>,
    %67 = vector.extract_strided_slice %0 {offsets = [0, 4, 5, 0], sizes = [1, 16, 16, 4], strides = [1, 1, 1, 1]} : vector<1x22x22x4xf32> to vector<1x16x16x4xf32>
    %c0_103 = arith.constant 0 : index
    %c0_104 = arith.constant 0 : index
    %c0_105 = arith.constant 0 : index
    %c132 = arith.constant 132 : index
    %68 = vector.load %arg7[%c0_103, %c0_104, %c0_105, %c132] : memref<1x16x16x196xf32, #tpu.memory_space<vmem>>, vector<1x16x16x4xf32>
    tpu.vector_store %arg7[%c0_103, %c0_104, %c0_105, %c132], %67 {strides = array<i32>} : memref<1x16x16x196xf32, #tpu.memory_space<vmem>>, vector<1x16x16x4xf32>,
    %69 = vector.extract_strided_slice %0 {offsets = [0, 4, 6, 0], sizes = [1, 16, 16, 4], strides = [1, 1, 1, 1]} : vector<1x22x22x4xf32> to vector<1x16x16x4xf32>
    %c0_106 = arith.constant 0 : index
    %c0_107 = arith.constant 0 : index
    %c0_108 = arith.constant 0 : index
    %c136 = arith.constant 136 : index
    %70 = vector.load %arg7[%c0_106, %c0_107, %c0_108, %c136] : memref<1x16x16x196xf32, #tpu.memory_space<vmem>>, vector<1x16x16x4xf32>
    tpu.vector_store %arg7[%c0_106, %c0_107, %c0_108, %c136], %69 {strides = array<i32>} : memref<1x16x16x196xf32, #tpu.memory_space<vmem>>, vector<1x16x16x4xf32>,
    %71 = vector.extract_strided_slice %0 {offsets = [0, 5, 0, 0], sizes = [1, 16, 16, 4], strides = [1, 1, 1, 1]} : vector<1x22x22x4xf32> to vector<1x16x16x4xf32>
    %c0_109 = arith.constant 0 : index
    %c0_110 = arith.constant 0 : index
    %c0_111 = arith.constant 0 : index
    %c140 = arith.constant 140 : index
    %72 = vector.load %arg7[%c0_109, %c0_110, %c0_111, %c140] : memref<1x16x16x196xf32, #tpu.memory_space<vmem>>, vector<1x16x16x4xf32>
    tpu.vector_store %arg7[%c0_109, %c0_110, %c0_111, %c140], %71 {strides = array<i32>} : memref<1x16x16x196xf32, #tpu.memory_space<vmem>>, vector<1x16x16x4xf32>,
    %73 = vector.extract_strided_slice %0 {offsets = [0, 5, 1, 0], sizes = [1, 16, 16, 4], strides = [1, 1, 1, 1]} : vector<1x22x22x4xf32> to vector<1x16x16x4xf32>
    %c0_112 = arith.constant 0 : index
    %c0_113 = arith.constant 0 : index
    %c0_114 = arith.constant 0 : index
    %c144 = arith.constant 144 : index
    %74 = vector.load %arg7[%c0_112, %c0_113, %c0_114, %c144] : memref<1x16x16x196xf32, #tpu.memory_space<vmem>>, vector<1x16x16x4xf32>
    tpu.vector_store %arg7[%c0_112, %c0_113, %c0_114, %c144], %73 {strides = array<i32>} : memref<1x16x16x196xf32, #tpu.memory_space<vmem>>, vector<1x16x16x4xf32>,
    %75 = vector.extract_strided_slice %0 {offsets = [0, 5, 2, 0], sizes = [1, 16, 16, 4], strides = [1, 1, 1, 1]} : vector<1x22x22x4xf32> to vector<1x16x16x4xf32>
    %c0_115 = arith.constant 0 : index
    %c0_116 = arith.constant 0 : index
    %c0_117 = arith.constant 0 : index
    %c148 = arith.constant 148 : index
    %76 = vector.load %arg7[%c0_115, %c0_116, %c0_117, %c148] : memref<1x16x16x196xf32, #tpu.memory_space<vmem>>, vector<1x16x16x4xf32>
    tpu.vector_store %arg7[%c0_115, %c0_116, %c0_117, %c148], %75 {strides = array<i32>} : memref<1x16x16x196xf32, #tpu.memory_space<vmem>>, vector<1x16x16x4xf32>,
    %77 = vector.extract_strided_slice %0 {offsets = [0, 5, 3, 0], sizes = [1, 16, 16, 4], strides = [1, 1, 1, 1]} : vector<1x22x22x4xf32> to vector<1x16x16x4xf32>
    %c0_118 = arith.constant 0 : index
    %c0_119 = arith.constant 0 : index
    %c0_120 = arith.constant 0 : index
    %c152 = arith.constant 152 : index
    %78 = vector.load %arg7[%c0_118, %c0_119, %c0_120, %c152] : memref<1x16x16x196xf32, #tpu.memory_space<vmem>>, vector<1x16x16x4xf32>
    tpu.vector_store %arg7[%c0_118, %c0_119, %c0_120, %c152], %77 {strides = array<i32>} : memref<1x16x16x196xf32, #tpu.memory_space<vmem>>, vector<1x16x16x4xf32>,
    %79 = vector.extract_strided_slice %0 {offsets = [0, 5, 4, 0], sizes = [1, 16, 16, 4], strides = [1, 1, 1, 1]} : vector<1x22x22x4xf32> to vector<1x16x16x4xf32>
    %c0_121 = arith.constant 0 : index
    %c0_122 = arith.constant 0 : index
    %c0_123 = arith.constant 0 : index
    %c156 = arith.constant 156 : index
    %80 = vector.load %arg7[%c0_121, %c0_122, %c0_123, %c156] : memref<1x16x16x196xf32, #tpu.memory_space<vmem>>, vector<1x16x16x4xf32>
    tpu.vector_store %arg7[%c0_121, %c0_122, %c0_123, %c156], %79 {strides = array<i32>} : memref<1x16x16x196xf32, #tpu.memory_space<vmem>>, vector<1x16x16x4xf32>,
    %81 = vector.extract_strided_slice %0 {offsets = [0, 5, 5, 0], sizes = [1, 16, 16, 4], strides = [1, 1, 1, 1]} : vector<1x22x22x4xf32> to vector<1x16x16x4xf32>
    %c0_124 = arith.constant 0 : index
    %c0_125 = arith.constant 0 : index
    %c0_126 = arith.constant 0 : index
    %c160 = arith.constant 160 : index
    %82 = vector.load %arg7[%c0_124, %c0_125, %c0_126, %c160] : memref<1x16x16x196xf32, #tpu.memory_space<vmem>>, vector<1x16x16x4xf32>
    tpu.vector_store %arg7[%c0_124, %c0_125, %c0_126, %c160], %81 {strides = array<i32>} : memref<1x16x16x196xf32, #tpu.memory_space<vmem>>, vector<1x16x16x4xf32>,
    %83 = vector.extract_strided_slice %0 {offsets = [0, 5, 6, 0], sizes = [1, 16, 16, 4], strides = [1, 1, 1, 1]} : vector<1x22x22x4xf32> to vector<1x16x16x4xf32>
    %c0_127 = arith.constant 0 : index
    %c0_128 = arith.constant 0 : index
    %c0_129 = arith.constant 0 : index
    %c164 = arith.constant 164 : index
    %84 = vector.load %arg7[%c0_127, %c0_128, %c0_129, %c164] : memref<1x16x16x196xf32, #tpu.memory_space<vmem>>, vector<1x16x16x4xf32>
    tpu.vector_store %arg7[%c0_127, %c0_128, %c0_129, %c164], %83 {strides = array<i32>} : memref<1x16x16x196xf32, #tpu.memory_space<vmem>>, vector<1x16x16x4xf32>,
    %85 = vector.extract_strided_slice %0 {offsets = [0, 6, 0, 0], sizes = [1, 16, 16, 4], strides = [1, 1, 1, 1]} : vector<1x22x22x4xf32> to vector<1x16x16x4xf32>
    %c0_130 = arith.constant 0 : index
    %c0_131 = arith.constant 0 : index
    %c0_132 = arith.constant 0 : index
    %c168 = arith.constant 168 : index
    %86 = vector.load %arg7[%c0_130, %c0_131, %c0_132, %c168] : memref<1x16x16x196xf32, #tpu.memory_space<vmem>>, vector<1x16x16x4xf32>
    tpu.vector_store %arg7[%c0_130, %c0_131, %c0_132, %c168], %85 {strides = array<i32>} : memref<1x16x16x196xf32, #tpu.memory_space<vmem>>, vector<1x16x16x4xf32>,
    %87 = vector.extract_strided_slice %0 {offsets = [0, 6, 1, 0], sizes = [1, 16, 16, 4], strides = [1, 1, 1, 1]} : vector<1x22x22x4xf32> to vector<1x16x16x4xf32>
    %c0_133 = arith.constant 0 : index
    %c0_134 = arith.constant 0 : index
    %c0_135 = arith.constant 0 : index
    %c172 = arith.constant 172 : index
    %88 = vector.load %arg7[%c0_133, %c0_134, %c0_135, %c172] : memref<1x16x16x196xf32, #tpu.memory_space<vmem>>, vector<1x16x16x4xf32>
    tpu.vector_store %arg7[%c0_133, %c0_134, %c0_135, %c172], %87 {strides = array<i32>} : memref<1x16x16x196xf32, #tpu.memory_space<vmem>>, vector<1x16x16x4xf32>,
    %89 = vector.extract_strided_slice %0 {offsets = [0, 6, 2, 0], sizes = [1, 16, 16, 4], strides = [1, 1, 1, 1]} : vector<1x22x22x4xf32> to vector<1x16x16x4xf32>
    %c0_136 = arith.constant 0 : index
    %c0_137 = arith.constant 0 : index
    %c0_138 = arith.constant 0 : index
    %c176 = arith.constant 176 : index
    %90 = vector.load %arg7[%c0_136, %c0_137, %c0_138, %c176] : memref<1x16x16x196xf32, #tpu.memory_space<vmem>>, vector<1x16x16x4xf32>
    tpu.vector_store %arg7[%c0_136, %c0_137, %c0_138, %c176], %89 {strides = array<i32>} : memref<1x16x16x196xf32, #tpu.memory_space<vmem>>, vector<1x16x16x4xf32>,
    %91 = vector.extract_strided_slice %0 {offsets = [0, 6, 3, 0], sizes = [1, 16, 16, 4], strides = [1, 1, 1, 1]} : vector<1x22x22x4xf32> to vector<1x16x16x4xf32>
    %c0_139 = arith.constant 0 : index
    %c0_140 = arith.constant 0 : index
    %c0_141 = arith.constant 0 : index
    %c180 = arith.constant 180 : index
    %92 = vector.load %arg7[%c0_139, %c0_140, %c0_141, %c180] : memref<1x16x16x196xf32, #tpu.memory_space<vmem>>, vector<1x16x16x4xf32>
    tpu.vector_store %arg7[%c0_139, %c0_140, %c0_141, %c180], %91 {strides = array<i32>} : memref<1x16x16x196xf32, #tpu.memory_space<vmem>>, vector<1x16x16x4xf32>,
    %93 = vector.extract_strided_slice %0 {offsets = [0, 6, 4, 0], sizes = [1, 16, 16, 4], strides = [1, 1, 1, 1]} : vector<1x22x22x4xf32> to vector<1x16x16x4xf32>
    %c0_142 = arith.constant 0 : index
    %c0_143 = arith.constant 0 : index
    %c0_144 = arith.constant 0 : index
    %c184 = arith.constant 184 : index
    %94 = vector.load %arg7[%c0_142, %c0_143, %c0_144, %c184] : memref<1x16x16x196xf32, #tpu.memory_space<vmem>>, vector<1x16x16x4xf32>
    tpu.vector_store %arg7[%c0_142, %c0_143, %c0_144, %c184], %93 {strides = array<i32>} : memref<1x16x16x196xf32, #tpu.memory_space<vmem>>, vector<1x16x16x4xf32>,
    %95 = vector.extract_strided_slice %0 {offsets = [0, 6, 5, 0], sizes = [1, 16, 16, 4], strides = [1, 1, 1, 1]} : vector<1x22x22x4xf32> to vector<1x16x16x4xf32>
    %c0_145 = arith.constant 0 : index
    %c0_146 = arith.constant 0 : index
    %c0_147 = arith.constant 0 : index
    %c188 = arith.constant 188 : index
    %96 = vector.load %arg7[%c0_145, %c0_146, %c0_147, %c188] : memref<1x16x16x196xf32, #tpu.memory_space<vmem>>, vector<1x16x16x4xf32>
    tpu.vector_store %arg7[%c0_145, %c0_146, %c0_147, %c188], %95 {strides = array<i32>} : memref<1x16x16x196xf32, #tpu.memory_space<vmem>>, vector<1x16x16x4xf32>,
    %97 = vector.extract_strided_slice %0 {offsets = [0, 6, 6, 0], sizes = [1, 16, 16, 4], strides = [1, 1, 1, 1]} : vector<1x22x22x4xf32> to vector<1x16x16x4xf32>
    %c0_148 = arith.constant 0 : index
    %c0_149 = arith.constant 0 : index
    %c0_150 = arith.constant 0 : index
    %c192 = arith.constant 192 : index
    %98 = vector.load %arg7[%c0_148, %c0_149, %c0_150, %c192] : memref<1x16x16x196xf32, #tpu.memory_space<vmem>>, vector<1x16x16x4xf32>
    tpu.vector_store %arg7[%c0_148, %c0_149, %c0_150, %c192], %97 {strides = array<i32>} : memref<1x16x16x196xf32, #tpu.memory_space<vmem>>, vector<1x16x16x4xf32>,
    %c0_151 = arith.constant 0 : index
    %c0_152 = arith.constant 0 : index
    %c0_153 = arith.constant 0 : index
    %c0_154 = arith.constant 0 : index
    %99 = vector.load %arg7[%c0_151, %c0_152, %c0_153, %c0_154] : memref<1x16x16x196xf32, #tpu.memory_space<vmem>>, vector<1x16x16x196xf32>
    %100 = vector.shape_cast %99 : vector<1x16x16x196xf32> to vector<256x196xf32>
    %101 = arith.truncf %100 : vector<256x196xf32> to vector<256x196xbf16>
    %c0_155 = arith.constant 0 : index
    %c0_156 = arith.constant 0 : index
    %102 = vector.load %arg2[%c0_155, %c0_156] : memref<196x4xbf16, #tpu.memory_space<vmem>>, vector<196x4xbf16>
    %cst = arith.constant dense<0.000000e+00> : vector<256x4xf32>
    %103 = tpu.matmul %101, %102, %cst {dimension_numbers = #tpu.dot_dimension_numbers<[1], [0], [0], [1], [0, 0, 1, 1], [], []>} : vector<256x196xbf16>, vector<196x4xbf16>, vector<256x4xf32> -> vector<256x4xf32>
    %c0_157 = arith.constant 0 : index
    %c0_158 = arith.constant 0 : index
    %104 = vector.load %arg3[%c0_157, %c0_158] : memref<1x4xf32, #tpu.memory_space<vmem>>, vector<1x4xf32>
    %105 = vector.broadcast %104 : vector<1x4xf32> to vector<256x4xf32>
    %106 = arith.addf %103, %105 : vector<256x4xf32>
    %107 = arith.truncf %106 : vector<256x4xf32> to vector<256x4xbf16>
    %c0_159 = arith.constant 0 : index
    %c0_160 = arith.constant 0 : index
    %108 = vector.load %arg4[%c0_159, %c0_160] : memref<4x128xbf16, #tpu.memory_space<vmem>>, vector<4x128xbf16>
    %cst_161 = arith.constant dense<0.000000e+00> : vector<256x128xf32>
    %109 = tpu.matmul %107, %108, %cst_161 {dimension_numbers = #tpu.dot_dimension_numbers<[1], [0], [0], [1], [0, 0, 1, 1], [], []>} : vector<256x4xbf16>, vector<4x128xbf16>, vector<256x128xf32> -> vector<256x128xf32>
    %c0_162 = arith.constant 0 : index
    %c0_163 = arith.constant 0 : index
    %110 = vector.load %arg5[%c0_162, %c0_163] : memref<1x128xf32, #tpu.memory_space<vmem>>, vector<1x128xf32>
    %111 = vector.broadcast %110 : vector<1x128xf32> to vector<256x128xf32>
    %112 = arith.addf %109, %111 : vector<256x128xf32>
    %cst_164 = arith.constant 0.000000e+00 : f32
    %113 = vector.broadcast %cst_164 : f32 to vector<256x128xf32>
    %114 = arith.maximumf %112, %113 : vector<256x128xf32>
    %115 = vector.shape_cast %114 : vector<256x128xf32> to vector<1x256x128xf32>
    %c0_165 = arith.constant 0 : index
    %c0_166 = arith.constant 0 : index
    %c0_167 = arith.constant 0 : index
    %116 = vector.load %arg6[%c0_165, %c0_166, %c0_167] : memref<1x256x128xf32, #tpu.memory_space<vmem>>, vector<1x256x128xf32>
    tpu.vector_store %arg6[%c0_165, %c0_166, %c0_167], %115 {strides = array<i32>} : memref<1x256x128xf32, #tpu.memory_space<vmem>>, vector<1x256x128xf32>,
    return
  }
  func.func @transform_0(%arg0: i32) -> (i32, i32, i32, i32) {
    %c0_i32 = arith.constant 0 : i32
    %c0_i32_0 = arith.constant 0 : i32
    %c0_i32_1 = arith.constant 0 : i32
    %c0_i32_2 = arith.constant 0 : i32
    return %arg0, %c0_i32, %c0_i32_0, %c0_i32_1 : i32, i32, i32, i32
  }
  func.func @transform_1(%arg0: i32) -> (i32, i32) {
    %c0_i32 = arith.constant 0 : i32
    %c0_i32_0 = arith.constant 0 : i32
    %c0_i32_1 = arith.constant 0 : i32
    return %c0_i32, %c0_i32_0 : i32, i32
  }
  func.func @transform_2(%arg0: i32) -> (i32, i32) {
    %c0_i32 = arith.constant 0 : i32
    %c0_i32_0 = arith.constant 0 : i32
    %c0_i32_1 = arith.constant 0 : i32
    return %c0_i32, %c0_i32_0 : i32, i32
  }
  func.func @transform_3(%arg0: i32) -> (i32, i32) {
    %c0_i32 = arith.constant 0 : i32
    %c0_i32_0 = arith.constant 0 : i32
    %c0_i32_1 = arith.constant 0 : i32
    return %c0_i32, %c0_i32_0 : i32, i32
  }
  func.func @transform_4(%arg0: i32) -> (i32, i32) {
    %c0_i32 = arith.constant 0 : i32
    %c0_i32_0 = arith.constant 0 : i32
    %c0_i32_1 = arith.constant 0 : i32
    return %c0_i32, %c0_i32_0 : i32, i32
  }
  func.func @transform_5(%arg0: i32) -> (i32, i32, i32) {
    %c0_i32 = arith.constant 0 : i32
    %c0_i32_0 = arith.constant 0 : i32
    %c0_i32_1 = arith.constant 0 : i32
    return %arg0, %c0_i32, %c0_i32_0 : i32, i32, i32
  }
}

</mosaic_0001>

<llo_original>
// kernel: tpu_custom_call.1
$region0: #{tpu_custom_call.1}
  #allocation0 [shape = 'u32[]', space=smem, size = 0x4, offset = 0x4, fixed_abs, tag = 'smem constant byte address 0x4 - core index']
  #allocation1 [shape = 'u32[144,128]{1,0:T(1,128)}', space=vmem, size = 0x12000, scoped, tag = 'internal scratch']
  #allocation2 [shape = 'f32[1,16,16,196]{3,2,1,0:T(8,128)}', space=vmem, size = 0x40000, scoped, tag = 'scratch operand']
  %s0 = inlined_call_operand.vmem [shape: f32[2,22,22,4], index: 0, kind: input, shape index: {}]
  %s1 = inlined_call_operand.vmem [shape: bf16[196,4], index: 1, kind: input, shape index: {}]
  %s2 = inlined_call_operand.vmem [shape: f32[1,4], index: 2, kind: input, shape index: {}]
  %s3 = inlined_call_operand.vmem [shape: bf16[4,128], index: 3, kind: input, shape index: {}]
  %s4 = inlined_call_operand.vmem [shape: f32[1,128], index: 4, kind: input, shape index: {}]
  %s5 = inlined_call_operand.hbm [shape: f32[2,256,128], index: 5, kind: output, shape index: {}]
  %s6 = sld [smem:[#allocation0]]
  $region53: #{tpu_custom_call.1} parent=0
    _
  %s8 = ssub.s32 1, %s6
  %s9 = scalar_select 0, %s8, %s6
  $region1: #{tpu_custom_call.1} parent=0
    #allocation3 [shape = 'u8[262144]{0}', space=vmem, size = 0x40000, scoped, tag = 'output window, operand 0']
    #allocation4 [shape = 's32[2]{0}', space=sflag, size = 0x8, scoped, tag = 'scoped memory for tpu_custom_call.1']
    %10 = vsyncpa [#allocation4], 0
    %s11 = scalar_lea.sflag [#allocation4], 1
    %12 = vsyncpa %s11, 0
    loop: start=0, step=1, limit=4
    $region2: #{tpu_custom_call.1} parent=1 // loop_pre_header
      _
    $region3: #{tpu_custom_call.1} parent=1 // loop_header
      %s14 = sphi 0, %s18
      %p15 = scmp.ge.s32.totalorder %s14, 4
      %s24 = sphi 0, %s26
      %s27 = sphi 0, %s24
      %s28 = sphi 0, %s27
      %s44 = sphi 0, %s28
      %s48 = sphi 0, %s48
      %s50 = sphi 0, %s48
      %s51 = sphi 0, %s50
      %s65 = sphi 0, %s51
      %s69 = sphi 0, %s69
      %s71 = sphi 0, %s69
      %s72 = sphi 0, %s71
      %s86 = sphi 0, %s72
      %s90 = sphi 0, %s90
      %s92 = sphi 0, %s90
      %s93 = sphi 0, %s92
      %s107 = sphi 0, %s93
      %s111 = sphi 0, %s111
      %s113 = sphi 0, %s111
      %s114 = sphi 0, %s113
      %s128 = sphi 0, %s114
      %s134 = sphi 0, %s136
      %s137 = sphi 0, %s134
      %s138 = sphi 0, %s137
      %s154 = sphi 0, %s138
    $region4: #{tpu_custom_call.1} parent=1 // loop_header_branch
      %17 = sbr.rel (%p15) target = $region8
    $region5: #{tpu_custom_call.1} parent=1 // loop_body
      %s19 = ssub.s32 %s14, 1
      %s20 = ssub.s32 %s14, 2
      %s21 = sadd.s32 %s14, 1
      %s22 = ssub.s32 %s14, %s21
      %p23 = scmp.eq.s32.totalorder %s22, 0
      %s25 = sadd.s32 %s24, 1
      %s26 = scalar_select %p23, %s24, %s25
      %p29 = pneg %p23
      %p30 = scmp.eq.s32.totalorder %s14, 1
      %p31 = por %p29, %p30
      %p32 = scmp.ne.s32.totalorder %s24, %s27
      %p33 = scmp.eq.s32.totalorder %s14, 0
      %p34 = por %p32, %p33
      %p35 = scmp.ne.s32.totalorder %s24, %s27
      %p36 = scmp.eq.s32.totalorder %s19, 1
      %p37 = por %p35, %p36
      %p38 = scmp.ne.s32.totalorder %s27, %s28
      %p39 = scmp.eq.s32.totalorder %s19, 0
      %p40 = por %p38, %p39
      %p41 = scmp.ne.s32.totalorder %s27, %s28
      %p42 = scmp.eq.s32.totalorder %s20, 1
      %p43 = por %p41, %p42
      %p45 = scmp.ne.s32.totalorder %s28, %s44
      %p46 = scmp.eq.s32.totalorder %s20, 0
      %p47 = por %p45, %p46
      %s49 = sadd.s32 %s48, 1
      %p52 = scmp.eq.s32.totalorder %s14, 1
      %p53 = scmp.ne.s32.totalorder %s48, %s50
      %p54 = scmp.eq.s32.totalorder %s14, 0
      %p55 = por %p53, %p54
      %p56 = scmp.ne.s32.totalorder %s48, %s50
      %p57 = scmp.eq.s32.totalorder %s19, 1
      %p58 = por %p56, %p57
      %p59 = scmp.ne.s32.totalorder %s50, %s51
      %p60 = scmp.eq.s32.totalorder %s19, 0
      %p61 = por %p59, %p60
      %p62 = scmp.ne.s32.totalorder %s50, %s51
      %p63 = scmp.eq.s32.totalorder %s20, 1
      %p64 = por %p62, %p63
      %p66 = scmp.ne.s32.totalorder %s51, %s65
      %p67 = scmp.eq.s32.totalorder %s20, 0
      %p68 = por %p66, %p67
      %s70 = sadd.s32 %s69, 1
      %p73 = scmp.eq.s32.totalorder %s14, 1
      %p74 = scmp.ne.s32.totalorder %s69, %s71
      %p75 = scmp.eq.s32.totalorder %s14, 0
      %p76 = por %p74, %p75
      %p77 = scmp.ne.s32.totalorder %s69, %s71
      %p78 = scmp.eq.s32.totalorder %s19, 1
      %p79 = por %p77, %p78
      %p80 = scmp.ne.s32.totalorder %s71, %s72
      %p81 = scmp.eq.s32.totalorder %s19, 0
      %p82 = por %p80, %p81
      %p83 = scmp.ne.s32.totalorder %s71, %s72
      %p84 = scmp.eq.s32.totalorder %s20, 1
      %p85 = por %p83, %p84
      %p87 = scmp.ne.s32.totalorder %s72, %s86
      %p88 = scmp.eq.s32.totalorder %s20, 0
      %p89 = por %p87, %p88
      %s91 = sadd.s32 %s90, 1
      %p94 = scmp.eq.s32.totalorder %s14, 1
      %p95 = scmp.ne.s32.totalorder %s90, %s92
      %p96 = scmp.eq.s32.totalorder %s14, 0
      %p97 = por %p95, %p96
      %p98 = scmp.ne.s32.totalorder %s90, %s92
      %p99 = scmp.eq.s32.totalorder %s19, 1
      %p100 = por %p98, %p99
      %p101 = scmp.ne.s32.totalorder %s92, %s93
      %p102 = scmp.eq.s32.totalorder %s19, 0
      %p103 = por %p101, %p102
      %p104 = scmp.ne.s32.totalorder %s92, %s93
      %p105 = scmp.eq.s32.totalorder %s20, 1
      %p106 = por %p104, %p105
      %p108 = scmp.ne.s32.totalorder %s93, %s107
      %p109 = scmp.eq.s32.totalorder %s20, 0
      %p110 = por %p108, %p109
      %s112 = sadd.s32 %s111, 1
      %p115 = scmp.eq.s32.totalorder %s14, 1
      %p116 = scmp.ne.s32.totalorder %s111, %s113
      %p117 = scmp.eq.s32.totalorder %s14, 0
      %p118 = por %p116, %p117
      %p119 = scmp.ne.s32.totalorder %s111, %s113
      %p120 = scmp.eq.s32.totalorder %s19, 1
      %p121 = por %p119, %p120
      %p122 = scmp.ne.s32.totalorder %s113, %s114
      %p123 = scmp.eq.s32.totalorder %s19, 0
      %p124 = por %p122, %p123
      %p125 = scmp.ne.s32.totalorder %s113, %s114
      %p126 = scmp.eq.s32.totalorder %s20, 1
      %p127 = por %p125, %p126
      %p129 = scmp.ne.s32.totalorder %s114, %s128
      %p130 = scmp.eq.s32.totalorder %s20, 0
      %p131 = por %p129, %p130
      %s132 = ssub.s32 %s14, %s21
      %p133 = scmp.eq.s32.totalorder %s132, 0
      %s135 = sadd.s32 %s134, 1
      %s136 = scalar_select %p133, %s134, %s135
      %p139 = pneg %p133
      %p140 = scmp.eq.s32.totalorder %s14, 1
      %p141 = por %p139, %p140
      %p142 = scmp.ne.s32.totalorder %s134, %s137
      %p143 = scmp.eq.s32.totalorder %s14, 0
      %p144 = por %p142, %p143
      %p145 = scmp.ne.s32.totalorder %s134, %s137
      %p146 = scmp.eq.s32.totalorder %s19, 1
      %p147 = por %p145, %p146
      %p148 = scmp.ne.s32.totalorder %s137, %s138
      %p149 = scmp.eq.s32.totalorder %s19, 0
      %p150 = por %p148, %p149
      %p151 = scmp.ne.s32.totalorder %s137, %s138
      %p152 = scmp.eq.s32.totalorder %s20, 1
      %p153 = por %p151, %p152
      %p155 = scmp.ne.s32.totalorder %s138, %s154
      %p156 = scmp.eq.s32.totalorder %s20, 0
      %p157 = por %p155, %p156
      %p158 = scmp.le.s32.totalorder 1, %s14
      %p159 = scmp.lt.s32.totalorder %s14, 3
      %p160 = pnand %p158, %p159
      %p161 = pneg %p160
      // Predicated region
      $region9: #{tpu_custom_call.1} parent=5 // pred_check
        _
      $region10: #{tpu_custom_call.1} parent=5 // pred_check_branch
        %163 = sbr.rel (%p160) target = $region12
      $region11: #{tpu_custom_call.1} parent=5 // pred_region
        %s164 = ssub.s32 %s14, 1
        // Predicated region
        $region13: #{tpu_custom_call.1} parent=11 // pred_check
          %p165 = pneg %p61
        $region14: #{tpu_custom_call.1} parent=11 // pred_check_branch
          %167 = sbr.rel (%p165) target = $region16
        $region15: #{tpu_custom_call.1} parent=11 // pred_region
          _
        $region16: #{tpu_custom_call.1} parent=11 // pred_fallthru
          _
        // Predicated region
        $region17: #{tpu_custom_call.1} parent=11 // pred_check
          %p168 = pneg %p82
        $region18: #{tpu_custom_call.1} parent=11 // pred_check_branch
          %170 = sbr.rel (%p168) target = $region20
        $region19: #{tpu_custom_call.1} parent=11 // pred_region
          _
        $region20: #{tpu_custom_call.1} parent=11 // pred_fallthru
          _
        // Predicated region
        $region21: #{tpu_custom_call.1} parent=11 // pred_check
          %p171 = pneg %p103
        $region22: #{tpu_custom_call.1} parent=11 // pred_check_branch
          %173 = sbr.rel (%p171) target = $region24
        $region23: #{tpu_custom_call.1} parent=11 // pred_region
          _
        $region24: #{tpu_custom_call.1} parent=11 // pred_fallthru
          _
        // Predicated region
        $region25: #{tpu_custom_call.1} parent=11 // pred_check
          %p174 = pneg %p124
        $region26: #{tpu_custom_call.1} parent=11 // pred_check_branch
          %176 = sbr.rel (%p174) target = $region28
        $region27: #{tpu_custom_call.1} parent=11 // pred_region
          _
        $region28: #{tpu_custom_call.1} parent=11 // pred_fallthru
          _
      $region12: #{tpu_custom_call.1} parent=5 // pred_fallthru
        _
      %p177 = scmp.lt.s32.totalorder %s14, 2
      // Predicated region
      $region29: #{tpu_custom_call.1} parent=5 // pred_check
        %p178 = pneg %p177
      $region30: #{tpu_custom_call.1} parent=5 // pred_check_branch
        %180 = sbr.rel (%p178) target = $region32
      $region31: #{tpu_custom_call.1} parent=5 // pred_region
        // Predicated region
        $region33: #{tpu_custom_call.1} parent=31 // pred_check
          %p181 = pneg %p34
        $region34: #{tpu_custom_call.1} parent=31 // pred_check_branch
          %183 = sbr.rel (%p181) target = $region36
        $region35: #{tpu_custom_call.1} parent=31 // pred_region
          %p184 = scmp.lt.s32.totalorder %s14, 1
          %s185 = scalar_select %p184, %s14, 1
          %s186 = smul.addr %s185, 66
          %s187 = smul.addr %s186, 8
          %s188 = scalar_lea.vmem %s0, %s187
        $region36: #{tpu_custom_call.1} parent=31 // pred_fallthru
          _
      $region32: #{tpu_custom_call.1} parent=5 // pred_fallthru
        _
      %p189 = scmp.le.s32.totalorder 1, %s14
      %p190 = scmp.lt.s32.totalorder %s14, 3
      %p191 = pnand %p189, %p190
      %p192 = pneg %p191
      // Predicated region
      $region37: #{tpu_custom_call.1} parent=5 // pred_check
        _
      $region38: #{tpu_custom_call.1} parent=5 // pred_check_branch
        %194 = sbr.rel (%p191) target = $region40
      $region39: #{tpu_custom_call.1} parent=5 // pred_region
        %s195 = ssub.s32 %s14, 1
        %p196 = scmp.lt.s32.totalorder %s19, 1
        %s197 = scalar_select %p196, %s19, 1
        %s198 = smul.addr %s197, 66
        %s199 = smul.addr %s198, 8
        %s200 = scalar_lea.vmem %s0, %s199
        %p201 = pneg %p40
        %p202 = pneg %p37
        %p203 = pneg %p61
        %p204 = pneg %p58
        %p205 = pneg %p82
        %p206 = pneg %p79
        %p207 = pneg %p103
        %p208 = pneg %p100
        %p209 = pneg %p124
        %p210 = pneg %p121
        %p211 = pneg %p150
        %p212 = pneg %p147
        %s213 = sand.u32 %s137, 1
        %s214 = scalar_lea.sflag [#allocation4], %s213
        %s215 = sand.u32 %s137, 1
        %s216 = smul.addr %s215, 256
        %s217 = scalar_lea.vmem [#allocation3], %s216
        %p218 = scmp.lt.s32.totalorder %s19, 1
        %s219 = scalar_select %p218, %s19, 1
        %s220 = smul.addr %s219, 66
        %s221 = smul.addr %s220, 8
        %s222 = scalar_lea.vmem %s0, %s221
        %v224 = vld [vmem:[%s222] sm:$0xff]
        %v225 = vld [vmem:[%s222 + $0x8] sm:$0xff]
        %v226 = vld [vmem:[%s222 + $0x10] sm:$0x3f]
        %v227 = vld [vmem:[%s222 + $0x18] sm:$0xff]
        %v228 = vld [vmem:[%s222 + $0x20] sm:$0xff]
        %v229 = vld [vmem:[%s222 + $0x28] sm:$0x3f]
        %v230 = vld [vmem:[%s222 + $0x30] sm:$0xff]
        %v231 = vld [vmem:[%s222 + $0x38] sm:$0xff]
        %v232 = vld [vmem:[%s222 + $0x40] sm:$0x3f]
        %v233 = vld [vmem:[%s222 + $0x48] sm:$0xff]
        %v234 = vld [vmem:[%s222 + $0x50] sm:$0xff]
        %v235 = vld [vmem:[%s222 + $0x58] sm:$0x3f]
        %v236 = vld [vmem:[%s222 + $0x60] sm:$0xff]
        %v237 = vld [vmem:[%s222 + $0x68] sm:$0xff]
        %v238 = vld [vmem:[%s222 + $0x70] sm:$0x3f]
        %v239 = vld [vmem:[%s222 + $0x78] sm:$0xff]
        %v240 = vld [vmem:[%s222 + $0x80] sm:$0xff]
        %v241 = vld [vmem:[%s222 + $0x88] sm:$0x3f]
        %v242 = vld [vmem:[%s222 + $0x90] sm:$0xff]
        %v243 = vld [vmem:[%s222 + $0x98] sm:$0xff]
        %v244 = vld [vmem:[%s222 + $0xa0] sm:$0x3f]
        %v245 = vld [vmem:[%s222 + $0xa8] sm:$0xff]
        %v246 = vld [vmem:[%s222 + $0xb0] sm:$0xff]
        %v247 = vld [vmem:[%s222 + $0xb8] sm:$0x3f]
        %v248 = vld [vmem:[%s222 + $0xc0] sm:$0xff]
        %v249 = vld [vmem:[%s222 + $0xc8] sm:$0xff]
        %v250 = vld [vmem:[%s222 + $0xd0] sm:$0x3f]
        %v251 = vld [vmem:[%s222 + $0xd8] sm:$0xff]
        %v252 = vld [vmem:[%s222 + $0xe0] sm:$0xff]
        %v253 = vld [vmem:[%s222 + $0xe8] sm:$0x3f]
        %v254 = vld [vmem:[%s222 + $0xf0] sm:$0xff]
        %v255 = vld [vmem:[%s222 + $0xf8] sm:$0xff]
        %v256 = vld [vmem:[%s222 + $0x100] sm:$0x3f]
        %v257 = vld [vmem:[%s222 + $0x108] sm:$0xff]
        %v258 = vld [vmem:[%s222 + $0x110] sm:$0xff]
        %v259 = vld [vmem:[%s222 + $0x118] sm:$0x3f]
        %v260 = vld [vmem:[%s222 + $0x120] sm:$0xff]
        %v261 = vld [vmem:[%s222 + $0x128] sm:$0xff]
        %v262 = vld [vmem:[%s222 + $0x130] sm:$0x3f]
        %v263 = vld [vmem:[%s222 + $0x138] sm:$0xff]
        %v264 = vld [vmem:[%s222 + $0x140] sm:$0xff]
        %v265 = vld [vmem:[%s222 + $0x148] sm:$0x3f]
        %v266 = vld [vmem:[%s222 + $0x150] sm:$0xff]
        %v267 = vld [vmem:[%s222 + $0x158] sm:$0xff]
        %v268 = vld [vmem:[%s222 + $0x160] sm:$0x3f]
        %v269 = vld [vmem:[%s222 + $0x168] sm:$0xff]
        %v270 = vld [vmem:[%s222 + $0x170] sm:$0xff]
        %v271 = vld [vmem:[%s222 + $0x178] sm:$0x3f]
        %v272 = vld [vmem:[%s222 + $0x180] sm:$0xff]
        %v273 = vld [vmem:[%s222 + $0x188] sm:$0xff]
        %v274 = vld [vmem:[%s222 + $0x190] sm:$0x3f]
        %v275 = vld [vmem:[%s222 + $0x198] sm:$0xff]
        %v276 = vld [vmem:[%s222 + $0x1a0] sm:$0xff]
        %v277 = vld [vmem:[%s222 + $0x1a8] sm:$0x3f]
        %v278 = vld [vmem:[%s222 + $0x1b0] sm:$0xff]
        %v279 = vld [vmem:[%s222 + $0x1b8] sm:$0xff]
        %v280 = vld [vmem:[%s222 + $0x1c0] sm:$0x3f]
        %v281 = vld [vmem:[%s222 + $0x1c8] sm:$0xff]
        %v282 = vld [vmem:[%s222 + $0x1d0] sm:$0xff]
        %v283 = vld [vmem:[%s222 + $0x1d8] sm:$0x3f]
        %v284 = vld [vmem:[%s222 + $0x1e0] sm:$0xff]
        %v285 = vld [vmem:[%s222 + $0x1e8] sm:$0xff]
        %v286 = vld [vmem:[%s222 + $0x1f0] sm:$0x3f]
        %v287 = vld [vmem:[%s222 + $0x1f8] sm:$0xff]
        %v288 = vld [vmem:[%s222 + $0x200] sm:$0xff]
        %v289 = vld [vmem:[%s222 + $0x208] sm:$0x3f]
        %vm290 = vcmask 31744
        %291 = vst.msk [vmem:[#allocation2] sm:$0xff] %vm290, %v224
        %292 = vst.msk [vmem:[#allocation2 + $0x10] sm:$0xff] %vm290, %v225
        %293 = vst.msk [vmem:[#allocation2 + $0x20] sm:$0xff] %vm290, %v227
        %294 = vst.msk [vmem:[#allocation2 + $0x30] sm:$0xff] %vm290, %v228
        %295 = vst.msk [vmem:[#allocation2 + $0x40] sm:$0xff] %vm290, %v230
        %296 = vst.msk [vmem:[#allocation2 + $0x50] sm:$0xff] %vm290, %v231
        %297 = vst.msk [vmem:[#allocation2 + $0x60] sm:$0xff] %vm290, %v233
        %298 = vst.msk [vmem:[#allocation2 + $0x70] sm:$0xff] %vm290, %v234
        %299 = vst.msk [vmem:[#allocation2 + $0x80] sm:$0xff] %vm290, %v236
        %300 = vst.msk [vmem:[#allocation2 + $0x90] sm:$0xff] %vm290, %v237
        %301 = vst.msk [vmem:[#allocation2 + $0xa0] sm:$0xff] %vm290, %v239
        %302 = vst.msk [vmem:[#allocation2 + $0xb0] sm:$0xff] %vm290, %v240
        %303 = vst.msk [vmem:[#allocation2 + $0xc0] sm:$0xff] %vm290, %v242
        %304 = vst.msk [vmem:[#allocation2 + $0xd0] sm:$0xff] %vm290, %v243
        %305 = vst.msk [vmem:[#allocation2 + $0xe0] sm:$0xff] %vm290, %v245
        %306 = vst.msk [vmem:[#allocation2 + $0xf0] sm:$0xff] %vm290, %v246
        %307 = vst.msk [vmem:[#allocation2 + $0x100] sm:$0xff] %vm290, %v248
        %308 = vst.msk [vmem:[#allocation2 + $0x110] sm:$0xff] %vm290, %v249
        %309 = vst.msk [vmem:[#allocation2 + $0x120] sm:$0xff] %vm290, %v251
        %310 = vst.msk [vmem:[#allocation2 + $0x130] sm:$0xff] %vm290, %v252
        %311 = vst.msk [vmem:[#allocation2 + $0x140] sm:$0xff] %vm290, %v254
        %312 = vst.msk [vmem:[#allocation2 + $0x150] sm:$0xff] %vm290, %v255
        %313 = vst.msk [vmem:[#allocation2 + $0x160] sm:$0xff] %vm290, %v257
        %314 = vst.msk [vmem:[#allocation2 + $0x170] sm:$0xff] %vm290, %v258
        %315 = vst.msk [vmem:[#allocation2 + $0x180] sm:$0xff] %vm290, %v260
        %316 = vst.msk [vmem:[#allocation2 + $0x190] sm:$0xff] %vm290, %v261
        %317 = vst.msk [vmem:[#allocation2 + $0x1a0] sm:$0xff] %vm290, %v263
        %318 = vst.msk [vmem:[#allocation2 + $0x1b0] sm:$0xff] %vm290, %v264
        %319 = vst.msk [vmem:[#allocation2 + $0x1c0] sm:$0xff] %vm290, %v266
        %320 = vst.msk [vmem:[#allocation2 + $0x1d0] sm:$0xff] %vm290, %v267
        %321 = vst.msk [vmem:[#allocation2 + $0x1e0] sm:$0xff] %vm290, %v269
        %322 = vst.msk [vmem:[#allocation2 + $0x1f0] sm:$0xff] %vm290, %v270
        %vm371 = vcmask 1046528
        %v372 = vrot.slane %v224, 1
        %v373 = vrot.slane %v225, 1
        %v374 = vsel %vm371, %v372, %v373
        %v375 = vrot.slane %v226, 1
        %v376 = vsel %vm371, %v373, %v375
        %v377 = vrot.slane %v227, 1
        %v378 = vrot.slane %v228, 1
        %v379 = vsel %vm371, %v377, %v378
        %v380 = vrot.slane %v229, 1
        %v381 = vsel %vm371, %v378, %v380
        %v382 = vrot.slane %v230, 1
        %v383 = vrot.slane %v231, 1
        %v384 = vsel %vm371, %v382, %v383
        %v385 = vrot.slane %v232, 1
        %v386 = vsel %vm371, %v383, %v385
        %v387 = vrot.slane %v233, 1
        %v388 = vrot.slane %v234, 1
        %v389 = vsel %vm371, %v387, %v388
        %v390 = vrot.slane %v235, 1
        %v391 = vsel %vm371, %v388, %v390
        %v392 = vrot.slane %v236, 1
        %v393 = vrot.slane %v237, 1
        %v394 = vsel %vm371, %v392, %v393
        %v395 = vrot.slane %v238, 1
        %v396 = vsel %vm371, %v393, %v395
        %v397 = vrot.slane %v239, 1
        %v398 = vrot.slane %v240, 1
        %v399 = vsel %vm371, %v397, %v398
        %v400 = vrot.slane %v241, 1
        %v401 = vsel %vm371, %v398, %v400
        %v402 = vrot.slane %v242, 1
        %v403 = vrot.slane %v243, 1
        %v404 = vsel %vm371, %v402, %v403
        %v405 = vrot.slane %v244, 1
        %v406 = vsel %vm371, %v403, %v405
        %v407 = vrot.slane %v245, 1
        %v408 = vrot.slane %v246, 1
        %v409 = vsel %vm371, %v407, %v408
        %v410 = vrot.slane %v247, 1
        %v411 = vsel %vm371, %v408, %v410
        %v412 = vrot.slane %v248, 1
        %v413 = vrot.slane %v249, 1
        %v414 = vsel %vm371, %v412, %v413
        %v415 = vrot.slane %v250, 1
        %v416 = vsel %vm371, %v413, %v415
        %v417 = vrot.slane %v251, 1
        %v418 = vrot.slane %v252, 1
        %v419 = vsel %vm371, %v417, %v418
        %v420 = vrot.slane %v253, 1
        %v421 = vsel %vm371, %v418, %v420
        %v422 = vrot.slane %v254, 1
        %v423 = vrot.slane %v255, 1
        %v424 = vsel %vm371, %v422, %v423
        %v425 = vrot.slane %v256, 1
        %v426 = vsel %vm371, %v423, %v425
        %v427 = vrot.slane %v257, 1
        %v428 = vrot.slane %v258, 1
        %v429 = vsel %vm371, %v427, %v428
        %v430 = vrot.slane %v259, 1
        %v431 = vsel %vm371, %v428, %v430
        %v432 = vrot.slane %v260, 1
        %v433 = vrot.slane %v261, 1
        %v434 = vsel %vm371, %v432, %v433
        %v435 = vrot.slane %v262, 1
        %v436 = vsel %vm371, %v433, %v435
        %v437 = vrot.slane %v263, 1
        %v438 = vrot.slane %v264, 1
        %v439 = vsel %vm371, %v437, %v438
        %v440 = vrot.slane %v265, 1
        %v441 = vsel %vm371, %v438, %v440
        %v442 = vrot.slane %v266, 1
        %v443 = vrot.slane %v267, 1
        %v444 = vsel %vm371, %v442, %v443
        %v445 = vrot.slane %v268, 1
        %v446 = vsel %vm371, %v443, %v445
        %v447 = vrot.slane %v269, 1
        %v448 = vrot.slane %v270, 1
        %v449 = vsel %vm371, %v447, %v448
        %v450 = vrot.slane %v271, 1
        %v451 = vsel %vm371, %v448, %v450
        %452 = vrot.lane.b32.xlu0 %v374, 4
        %v453 = vpop.permute.xlu0 %452
        %454 = vrot.lane.b32.xlu0 %v376, 4
        %v455 = vpop.permute.xlu0 %454
        %456 = vrot.lane.b32.xlu0 %v379, 4
        %v457 = vpop.permute.xlu0 %456
        %458 = vrot.lane.b32.xlu0 %v381, 4
        %v459 = vpop.permute.xlu0 %458
        %460 = vrot.lane.b32.xlu0 %v384, 4
        %v461 = vpop.permute.xlu0 %460
        %462 = vrot.lane.b32.xlu0 %v386, 4
        %v463 = vpop.permute.xlu0 %462
        %464 = vrot.lane.b32.xlu0 %v389, 4
        %v465 = vpop.permute.xlu0 %464
        %466 = vrot.lane.b32.xlu0 %v391, 4
        %v467 = vpop.permute.xlu0 %466
        %468 = vrot.lane.b32.xlu0 %v394, 4
        %v469 = vpop.permute.xlu0 %468
        %470 = vrot.lane.b32.xlu0 %v396, 4
        %v471 = vpop.permute.xlu0 %470
        %472 = vrot.lane.b32.xlu0 %v399, 4
        %v473 = vpop.permute.xlu0 %472
        %474 = vrot.lane.b32.xlu0 %v401, 4
        %v475 = vpop.permute.xlu0 %474
        %476 = vrot.lane.b32.xlu0 %v404, 4
        %v477 = vpop.permute.xlu0 %476
        %478 = vrot.lane.b32.xlu0 %v406, 4
        %v479 = vpop.permute.xlu0 %478
        %480 = vrot.lane.b32.xlu0 %v409, 4
        %v481 = vpop.permute.xlu0 %480
        %482 = vrot.lane.b32.xlu0 %v411, 4
        %v483 = vpop.permute.xlu0 %482
        %484 = vrot.lane.b32.xlu0 %v414, 4
        %v485 = vpop.permute.xlu0 %484
        %486 = vrot.lane.b32.xlu0 %v416, 4
        %v487 = vpop.permute.xlu0 %486
        %488 = vrot.lane.b32.xlu0 %v419, 4
        %v489 = vpop.permute.xlu0 %488
        %490 = vrot.lane.b32.xlu0 %v421, 4
        %v491 = vpop.permute.xlu0 %490
        %492 = vrot.lane.b32.xlu0 %v424, 4
        %v493 = vpop.permute.xlu0 %492
        %494 = vrot.lane.b32.xlu0 %v426, 4
        %v495 = vpop.permute.xlu0 %494
        %496 = vrot.lane.b32.xlu0 %v429, 4
        %v497 = vpop.permute.xlu0 %496
        %498 = vrot.lane.b32.xlu0 %v431, 4
        %v499 = vpop.permute.xlu0 %498
        %500 = vrot.lane.b32.xlu0 %v434, 4
        %v501 = vpop.permute.xlu0 %500
        %502 = vrot.lane.b32.xlu0 %v436, 4
        %v503 = vpop.permute.xlu0 %502
        %504 = vrot.lane.b32.xlu0 %v439, 4
        %v505 = vpop.permute.xlu0 %504
        %506 = vrot.lane.b32.xlu0 %v441, 4
        %v507 = vpop.permute.xlu0 %506
        %508 = vrot.lane.b32.xlu0 %v444, 4
        %v509 = vpop.permute.xlu0 %508
        %510 = vrot.lane.b32.xlu0 %v446, 4
        %v511 = vpop.permute.xlu0 %510
        %512 = vrot.lane.b32.xlu0 %v449, 4
        %v513 = vpop.permute.xlu0 %512
        %514 = vrot.lane.b32.xlu0 %v451, 4
        %v515 = vpop.permute.xlu0 %514
        %vm548 = vcmask 64544
        %549 = vst.msk [vmem:[#allocation2] sm:$0xff] %vm548, %v453
        %550 = vst.msk [vmem:[#allocation2 + $0x10] sm:$0xff] %vm548, %v455
        %551 = vst.msk [vmem:[#allocation2 + $0x20] sm:$0xff] %vm548, %v457
        %552 = vst.msk [vmem:[#allocation2 + $0x30] sm:$0xff] %vm548, %v459
        %553 = vst.msk [vmem:[#allocation2 + $0x40] sm:$0xff] %vm548, %v461
        %554 = vst.msk [vmem:[#allocation2 + $0x50] sm:$0xff] %vm548, %v463
        %555 = vst.msk [vmem:[#allocation2 + $0x60] sm:$0xff] %vm548, %v465
        %556 = vst.msk [vmem:[#allocation2 + $0x70] sm:$0xff] %vm548, %v467
        %557 = vst.msk [vmem:[#allocation2 + $0x80] sm:$0xff] %vm548, %v469
        %558 = vst.msk [vmem:[#allocation2 + $0x90] sm:$0xff] %vm548, %v471
        %559 = vst.msk [vmem:[#allocation2 + $0xa0] sm:$0xff] %vm548, %v473
        %560 = vst.msk [vmem:[#allocation2 + $0xb0] sm:$0xff] %vm548, %v475
        %561 = vst.msk [vmem:[#allocation2 + $0xc0] sm:$0xff] %vm548, %v477
        %562 = vst.msk [vmem:[#allocation2 + $0xd0] sm:$0xff] %vm548, %v479
        %563 = vst.msk [vmem:[#allocation2 + $0xe0] sm:$0xff] %vm548, %v481
        %564 = vst.msk [vmem:[#allocation2 + $0xf0] sm:$0xff] %vm548, %v483
        %565 = vst.msk [vmem:[#allocation2 + $0x100] sm:$0xff] %vm548, %v485
        %566 = vst.msk [vmem:[#allocation2 + $0x110] sm:$0xff] %vm548, %v487
        %567 = vst.msk [vmem:[#allocation2 + $0x120] sm:$0xff] %vm548, %v489
        %568 = vst.msk [vmem:[#allocation2 + $0x130] sm:$0xff] %vm548, %v491
        %569 = vst.msk [vmem:[#allocation2 + $0x140] sm:$0xff] %vm548, %v493
        %570 = vst.msk [vmem:[#allocation2 + $0x150] sm:$0xff] %vm548, %v495
        %571 = vst.msk [vmem:[#allocation2 + $0x160] sm:$0xff] %vm548, %v497
        %572 = vst.msk [vmem:[#allocation2 + $0x170] sm:$0xff] %vm548, %v499
        %573 = vst.msk [vmem:[#allocation2 + $0x180] sm:$0xff] %vm548, %v501
        %574 = vst.msk [vmem:[#allocation2 + $0x190] sm:$0xff] %vm548, %v503
        %575 = vst.msk [vmem:[#allocation2 + $0x1a0] sm:$0xff] %vm548, %v505
        %576 = vst.msk [vmem:[#allocation2 + $0x1b0] sm:$0xff] %vm548, %v507
        %577 = vst.msk [vmem:[#allocation2 + $0x1c0] sm:$0xff] %vm548, %v509
        %578 = vst.msk [vmem:[#allocation2 + $0x1d0] sm:$0xff] %vm548, %v511
        %579 = vst.msk [vmem:[#allocation2 + $0x1e0] sm:$0xff] %vm548, %v513
        %580 = vst.msk [vmem:[#allocation2 + $0x1f0] sm:$0xff] %vm548, %v515
        %vm581 = vcmask 1045504
        %v582 = vrot.slane %v224, 2
        %v583 = vrot.slane %v225, 2
        %v584 = vsel %vm581, %v582, %v583
        %v585 = vrot.slane %v226, 2
        %v586 = vsel %vm581, %v583, %v585
        %v587 = vrot.slane %v227, 2
        %v588 = vrot.slane %v228, 2
        %v589 = vsel %vm581, %v587, %v588
        %v590 = vrot.slane %v229, 2
        %v591 = vsel %vm581, %v588, %v590
        %v592 = vrot.slane %v230, 2
        %v593 = vrot.slane %v231, 2
        %v594 = vsel %vm581, %v592, %v593
        %v595 = vrot.slane %v232, 2
        %v596 = vsel %vm581, %v593, %v595
        %v597 = vrot.slane %v233, 2
        %v598 = vrot.slane %v234, 2
        %v599 = vsel %vm581, %v597, %v598
        %v600 = vrot.slane %v235, 2
        %v601 = vsel %vm581, %v598, %v600
        %v602 = vrot.slane %v236, 2
        %v603 = vrot.slane %v237, 2
        %v604 = vsel %vm581, %v602, %v603
        %v605 = vrot.slane %v238, 2
        %v606 = vsel %vm581, %v603, %v605
        %v607 = vrot.slane %v239, 2
        %v608 = vrot.slane %v240, 2
        %v609 = vsel %vm581, %v607, %v608
        %v610 = vrot.slane %v241, 2
        %v611 = vsel %vm581, %v608, %v610
        %v612 = vrot.slane %v242, 2
        %v613 = vrot.slane %v243, 2
        %v614 = vsel %vm581, %v612, %v613
        %v615 = vrot.slane %v244, 2
        %v616 = vsel %vm581, %v613, %v615
        %v617 = vrot.slane %v245, 2
        %v618 = vrot.slane %v246, 2
        %v619 = vsel %vm581, %v617, %v618
        %v620 = vrot.slane %v247, 2
        %v621 = vsel %vm581, %v618, %v620
        %v622 = vrot.slane %v248, 2
        %v623 = vrot.slane %v249, 2
        %v624 = vsel %vm581, %v622, %v623
        %v625 = vrot.slane %v250, 2
        %v626 = vsel %vm581, %v623, %v625
        %v627 = vrot.slane %v251, 2
        %v628 = vrot.slane %v252, 2
        %v629 = vsel %vm581, %v627, %v628
        %v630 = vrot.slane %v253, 2
        %v631 = vsel %vm581, %v628, %v630
        %v632 = vrot.slane %v254, 2
        %v633 = vrot.slane %v255, 2
        %v634 = vsel %vm581, %v632, %v633
        %v635 = vrot.slane %v256, 2
        %v636 = vsel %vm581, %v633, %v635
        %v637 = vrot.slane %v257, 2
        %v638 = vrot.slane %v258, 2
        %v639 = vsel %vm581, %v637, %v638
        %v640 = vrot.slane %v259, 2
        %v641 = vsel %vm581, %v638, %v640
        %v642 = vrot.slane %v260, 2
        %v643 = vrot.slane %v261, 2
        %v644 = vsel %vm581, %v642, %v643
        %v645 = vrot.slane %v262, 2
        %v646 = vsel %vm581, %v643, %v645
        %v647 = vrot.slane %v263, 2
        %v648 = vrot.slane %v264, 2
        %v649 = vsel %vm581, %v647, %v648
        %v650 = vrot.slane %v265, 2
        %v651 = vsel %vm581, %v648, %v650
        %v652 = vrot.slane %v266, 2
        %v653 = vrot.slane %v267, 2
        %v654 = vsel %vm581, %v652, %v653
        %v655 = vrot.slane %v268, 2
        %v656 = vsel %vm581, %v653, %v655
        %v657 = vrot.slane %v269, 2
        %v658 = vrot.slane %v270, 2
        %v659 = vsel %vm581, %v657, %v658
        %v660 = vrot.slane %v271, 2
        %v661 = vsel %vm581, %v658, %v660
        %662 = vrot.lane.b32.xlu0 %v584, 8
        %v663 = vpop.permute.xlu0 %662
        %664 = vrot.lane.b32.xlu0 %v586, 8
        %v665 = vpop.permute.xlu0 %664
        %666 = vrot.lane.b32.xlu0 %v589, 8
        %v667 = vpop.permute.xlu0 %666
        %668 = vrot.lane.b32.xlu0 %v591, 8
        %v669 = vpop.permute.xlu0 %668
        %670 = vrot.lane.b32.xlu0 %v594, 8
        %v671 = vpop.permute.xlu0 %670
        %672 = vrot.lane.b32.xlu0 %v596, 8
        %v673 = vpop.permute.xlu0 %672
        %674 = vrot.lane.b32.xlu0 %v599, 8
        %v675 = vpop.permute.xlu0 %674
        %676 = vrot.lane.b32.xlu0 %v601, 8
        %v677 = vpop.permute.xlu0 %676
        %678 = vrot.lane.b32.xlu0 %v604, 8
        %v679 = vpop.permute.xlu0 %678
        %680 = vrot.lane.b32.xlu0 %v606, 8
        %v681 = vpop.permute.xlu0 %680
        %682 = vrot.lane.b32.xlu0 %v609, 8
        %v683 = vpop.permute.xlu0 %682
        %684 = vrot.lane.b32.xlu0 %v611, 8
        %v685 = vpop.permute.xlu0 %684
        %686 = vrot.lane.b32.xlu0 %v614, 8
        %v687 = vpop.permute.xlu0 %686
        %688 = vrot.lane.b32.xlu0 %v616, 8
        %v689 = vpop.permute.xlu0 %688
        %690 = vrot.lane.b32.xlu0 %v619, 8
        %v691 = vpop.permute.xlu0 %690
        %692 = vrot.lane.b32.xlu0 %v621, 8
        %v693 = vpop.permute.xlu0 %692
        %694 = vrot.lane.b32.xlu0 %v624, 8
        %v695 = vpop.permute.xlu0 %694
        %696 = vrot.lane.b32.xlu0 %v626, 8
        %v697 = vpop.permute.xlu0 %696
        %698 = vrot.lane.b32.xlu0 %v629, 8
        %v699 = vpop.permute.xlu0 %698
        %700 = vrot.lane.b32.xlu0 %v631, 8
        %v701 = vpop.permute.xlu0 %700
        %702 = vrot.lane.b32.xlu0 %v634, 8
        %v703 = vpop.permute.xlu0 %702
        %704 = vrot.lane.b32.xlu0 %v636, 8
        %v705 = vpop.permute.xlu0 %704
        %706 = vrot.lane.b32.xlu0 %v639, 8
        %v707 = vpop.permute.xlu0 %706
        %708 = vrot.lane.b32.xlu0 %v641, 8
        %v709 = vpop.permute.xlu0 %708
        %710 = vrot.lane.b32.xlu0 %v644, 8
        %v711 = vpop.permute.xlu0 %710
        %712 = vrot.lane.b32.xlu0 %v646, 8
        %v713 = vpop.permute.xlu0 %712
        %714 = vrot.lane.b32.xlu0 %v649, 8
        %v715 = vpop.permute.xlu0 %714
        %716 = vrot.lane.b32.xlu0 %v651, 8
        %v717 = vpop.permute.xlu0 %716
        %718 = vrot.lane.b32.xlu0 %v654, 8
        %v719 = vpop.permute.xlu0 %718
        %720 = vrot.lane.b32.xlu0 %v656, 8
        %v721 = vpop.permute.xlu0 %720
        %722 = vrot.lane.b32.xlu0 %v659, 8
        %v723 = vpop.permute.xlu0 %722
        %724 = vrot.lane.b32.xlu0 %v661, 8
        %v725 = vpop.permute.xlu0 %724
        %vm758 = vcmask 97344
        %759 = vst.msk [vmem:[#allocation2] sm:$0xff] %vm758, %v663
        %760 = vst.msk [vmem:[#allocation2 + $0x10] sm:$0xff] %vm758, %v665
        %761 = vst.msk [vmem:[#allocation2 + $0x20] sm:$0xff] %vm758, %v667
        %762 = vst.msk [vmem:[#allocation2 + $0x30] sm:$0xff] %vm758, %v669
        %763 = vst.msk [vmem:[#allocation2 + $0x40] sm:$0xff] %vm758, %v671
        %764 = vst.msk [vmem:[#allocation2 + $0x50] sm:$0xff] %vm758, %v673
        %765 = vst.msk [vmem:[#allocation2 + $0x60] sm:$0xff] %vm758, %v675
        %766 = vst.msk [vmem:[#allocation2 + $0x70] sm:$0xff] %vm758, %v677
        %767 = vst.msk [vmem:[#allocation2 + $0x80] sm:$0xff] %vm758, %v679
        %768 = vst.msk [vmem:[#allocation2 + $0x90] sm:$0xff] %vm758, %v681
        %769 = vst.msk [vmem:[#allocation2 + $0xa0] sm:$0xff] %vm758, %v683
        %770 = vst.msk [vmem:[#allocation2 + $0xb0] sm:$0xff] %vm758, %v685
        %771 = vst.msk [vmem:[#allocation2 + $0xc0] sm:$0xff] %vm758, %v687
        %772 = vst.msk [vmem:[#allocation2 + $0xd0] sm:$0xff] %vm758, %v689
        %773 = vst.msk [vmem:[#allocation2 + $0xe0] sm:$0xff] %vm758, %v691
        %774 = vst.msk [vmem:[#allocation2 + $0xf0] sm:$0xff] %vm758, %v693
        %775 = vst.msk [vmem:[#allocation2 + $0x100] sm:$0xff] %vm758, %v695
        %776 = vst.msk [vmem:[#allocation2 + $0x110] sm:$0xff] %vm758, %v697
        %777 = vst.msk [vmem:[#allocation2 + $0x120] sm:$0xff] %vm758, %v699
        %778 = vst.msk [vmem:[#allocation2 + $0x130] sm:$0xff] %vm758, %v701
        %779 = vst.msk [vmem:[#allocation2 + $0x140] sm:$0xff] %vm758, %v703
        %780 = vst.msk [vmem:[#allocation2 + $0x150] sm:$0xff] %vm758, %v705
        %781 = vst.msk [vmem:[#allocation2 + $0x160] sm:$0xff] %vm758, %v707
        %782 = vst.msk [vmem:[#allocation2 + $0x170] sm:$0xff] %vm758, %v709
        %783 = vst.msk [vmem:[#allocation2 + $0x180] sm:$0xff] %vm758, %v711
        %784 = vst.msk [vmem:[#allocation2 + $0x190] sm:$0xff] %vm758, %v713
        %785 = vst.msk [vmem:[#allocation2 + $0x1a0] sm:$0xff] %vm758, %v715
        %786 = vst.msk [vmem:[#allocation2 + $0x1b0] sm:$0xff] %vm758, %v717
        %787 = vst.msk [vmem:[#allocation2 + $0x1c0] sm:$0xff] %vm758, %v719
        %788 = vst.msk [vmem:[#allocation2 + $0x1d0] sm:$0xff] %vm758, %v721
        %789 = vst.msk [vmem:[#allocation2 + $0x1e0] sm:$0xff] %vm758, %v723
        %790 = vst.msk [vmem:[#allocation2 + $0x1f0] sm:$0xff] %vm758, %v725
        %vm791 = vcmask 1044480
        %v792 = vrot.slane %v224, 3
        %v793 = vrot.slane %v225, 3
        %v794 = vsel %vm791, %v792, %v793
        %v795 = vrot.slane %v226, 3
        %v796 = vsel %vm791, %v793, %v795
        %v797 = vrot.slane %v227, 3
        %v798 = vrot.slane %v228, 3
        %v799 = vsel %vm791, %v797, %v798
        %v800 = vrot.slane %v229, 3
        %v801 = vsel %vm791, %v798, %v800
        %v802 = vrot.slane %v230, 3
        %v803 = vrot.slane %v231, 3
        %v804 = vsel %vm791, %v802, %v803
        %v805 = vrot.slane %v232, 3
        %v806 = vsel %vm791, %v803, %v805
        %v807 = vrot.slane %v233, 3
        %v808 = vrot.slane %v234, 3
        %v809 = vsel %vm791, %v807, %v808
        %v810 = vrot.slane %v235, 3
        %v811 = vsel %vm791, %v808, %v810
        %v812 = vrot.slane %v236, 3
        %v813 = vrot.slane %v237, 3
        %v814 = vsel %vm791, %v812, %v813
        %v815 = vrot.slane %v238, 3
        %v816 = vsel %vm791, %v813, %v815
        %v817 = vrot.slane %v239, 3
        %v818 = vrot.slane %v240, 3
        %v819 = vsel %vm791, %v817, %v818
        %v820 = vrot.slane %v241, 3
        %v821 = vsel %vm791, %v818, %v820
        %v822 = vrot.slane %v242, 3
        %v823 = vrot.slane %v243, 3
        %v824 = vsel %vm791, %v822, %v823
        %v825 = vrot.slane %v244, 3
        %v826 = vsel %vm791, %v823, %v825
        %v827 = vrot.slane %v245, 3
        %v828 = vrot.slane %v246, 3
        %v829 = vsel %vm791, %v827, %v828
        %v830 = vrot.slane %v247, 3
        %v831 = vsel %vm791, %v828, %v830
        %v832 = vrot.slane %v248, 3
        %v833 = vrot.slane %v249, 3
        %v834 = vsel %vm791, %v832, %v833
        %v835 = vrot.slane %v250, 3
        %v836 = vsel %vm791, %v833, %v835
        %v837 = vrot.slane %v251, 3
        %v838 = vrot.slane %v252, 3
        %v839 = vsel %vm791, %v837, %v838
        %v840 = vrot.slane %v253, 3
        %v841 = vsel %vm791, %v838, %v840
        %v842 = vrot.slane %v254, 3
        %v843 = vrot.slane %v255, 3
        %v844 = vsel %vm791, %v842, %v843
        %v845 = vrot.slane %v256, 3
        %v846 = vsel %vm791, %v843, %v845
        %v847 = vrot.slane %v257, 3
        %v848 = vrot.slane %v258, 3
        %v849 = vsel %vm791, %v847, %v848
        %v850 = vrot.slane %v259, 3
        %v851 = vsel %vm791, %v848, %v850
        %v852 = vrot.slane %v260, 3
        %v853 = vrot.slane %v261, 3
        %v854 = vsel %vm791, %v852, %v853
        %v855 = vrot.slane %v262, 3
        %v856 = vsel %vm791, %v853, %v855
        %v857 = vrot.slane %v263, 3
        %v858 = vrot.slane %v264, 3
        %v859 = vsel %vm791, %v857, %v858
        %v860 = vrot.slane %v265, 3
        %v861 = vsel %vm791, %v858, %v860
        %v862 = vrot.slane %v266, 3
        %v863 = vrot.slane %v267, 3
        %v864 = vsel %vm791, %v862, %v863
        %v865 = vrot.slane %v268, 3
        %v866 = vsel %vm791, %v863, %v865
        %v867 = vrot.slane %v269, 3
        %v868 = vrot.slane %v270, 3
        %v869 = vsel %vm791, %v867, %v868
        %v870 = vrot.slane %v271, 3
        %v871 = vsel %vm791, %v868, %v870
        %872 = vrot.lane.b32.xlu0 %v794, 12
        %v873 = vpop.permute.xlu0 %872
        %874 = vrot.lane.b32.xlu0 %v796, 12
        %v875 = vpop.permute.xlu0 %874
        %876 = vrot.lane.b32.xlu0 %v799, 12
        %v877 = vpop.permute.xlu0 %876
        %878 = vrot.lane.b32.xlu0 %v801, 12
        %v879 = vpop.permute.xlu0 %878
        %880 = vrot.lane.b32.xlu0 %v804, 12
        %v881 = vpop.permute.xlu0 %880
        %882 = vrot.lane.b32.xlu0 %v806, 12
        %v883 = vpop.permute.xlu0 %882
        %884 = vrot.lane.b32.xlu0 %v809, 12
        %v885 = vpop.permute.xlu0 %884
        %886 = vrot.lane.b32.xlu0 %v811, 12
        %v887 = vpop.permute.xlu0 %886
        %888 = vrot.lane.b32.xlu0 %v814, 12
        %v889 = vpop.permute.xlu0 %888
        %890 = vrot.lane.b32.xlu0 %v816, 12
        %v891 = vpop.permute.xlu0 %890
        %892 = vrot.lane.b32.xlu0 %v819, 12
        %v893 = vpop.permute.xlu0 %892
        %894 = vrot.lane.b32.xlu0 %v821, 12
        %v895 = vpop.permute.xlu0 %894
        %896 = vrot.lane.b32.xlu0 %v824, 12
        %v897 = vpop.permute.xlu0 %896
        %898 = vrot.lane.b32.xlu0 %v826, 12
        %v899 = vpop.permute.xlu0 %898
        %900 = vrot.lane.b32.xlu0 %v829, 12
        %v901 = vpop.permute.xlu0 %900
        %902 = vrot.lane.b32.xlu0 %v831, 12
        %v903 = vpop.permute.xlu0 %902
        %904 = vrot.lane.b32.xlu0 %v834, 12
        %v905 = vpop.permute.xlu0 %904
        %906 = vrot.lane.b32.xlu0 %v836, 12
        %v907 = vpop.permute.xlu0 %906
        %908 = vrot.lane.b32.xlu0 %v839, 12
        %v909 = vpop.permute.xlu0 %908
        %910 = vrot.lane.b32.xlu0 %v841, 12
        %v911 = vpop.permute.xlu0 %910
        %912 = vrot.lane.b32.xlu0 %v844, 12
        %v913 = vpop.permute.xlu0 %912
        %914 = vrot.lane.b32.xlu0 %v846, 12
        %v915 = vpop.permute.xlu0 %914
        %916 = vrot.lane.b32.xlu0 %v849, 12
        %v917 = vpop.permute.xlu0 %916
        %918 = vrot.lane.b32.xlu0 %v851, 12
        %v919 = vpop.permute.xlu0 %918
        %920 = vrot.lane.b32.xlu0 %v854, 12
        %v921 = vpop.permute.xlu0 %920
        %922 = vrot.lane.b32.xlu0 %v856, 12
        %v923 = vpop.permute.xlu0 %922
        %924 = vrot.lane.b32.xlu0 %v859, 12
        %v925 = vpop.permute.xlu0 %924
        %926 = vrot.lane.b32.xlu0 %v861, 12
        %v927 = vpop.permute.xlu0 %926
        %928 = vrot.lane.b32.xlu0 %v864, 12
        %v929 = vpop.permute.xlu0 %928
        %930 = vrot.lane.b32.xlu0 %v866, 12
        %v931 = vpop.permute.xlu0 %930
        %932 = vrot.lane.b32.xlu0 %v869, 12
        %v933 = vpop.permute.xlu0 %932
        %934 = vrot.lane.b32.xlu0 %v871, 12
        %v935 = vpop.permute.xlu0 %934
        %vm968 = vcmask 130144
        %969 = vst.msk [vmem:[#allocation2] sm:$0xff] %vm968, %v873
        %970 = vst.msk [vmem:[#allocation2 + $0x10] sm:$0xff] %vm968, %v875
        %971 = vst.msk [vmem:[#allocation2 + $0x20] sm:$0xff] %vm968, %v877
        %972 = vst.msk [vmem:[#allocation2 + $0x30] sm:$0xff] %vm968, %v879
        %973 = vst.msk [vmem:[#allocation2 + $0x40] sm:$0xff] %vm968, %v881
        %974 = vst.msk [vmem:[#allocation2 + $0x50] sm:$0xff] %vm968, %v883
        %975 = vst.msk [vmem:[#allocation2 + $0x60] sm:$0xff] %vm968, %v885
        %976 = vst.msk [vmem:[#allocation2 + $0x70] sm:$0xff] %vm968, %v887
        %977 = vst.msk [vmem:[#allocation2 + $0x80] sm:$0xff] %vm968, %v889
        %978 = vst.msk [vmem:[#allocation2 + $0x90] sm:$0xff] %vm968, %v891
        %979 = vst.msk [vmem:[#allocation2 + $0xa0] sm:$0xff] %vm968, %v893
        %980 = vst.msk [vmem:[#allocation2 + $0xb0] sm:$0xff] %vm968, %v895
        %981 = vst.msk [vmem:[#allocation2 + $0xc0] sm:$0xff] %vm968, %v897
        %982 = vst.msk [vmem:[#allocation2 + $0xd0] sm:$0xff] %vm968, %v899
        %983 = vst.msk [vmem:[#allocation2 + $0xe0] sm:$0xff] %vm968, %v901
        %984 = vst.msk [vmem:[#allocation2 + $0xf0] sm:$0xff] %vm968, %v903
        %985 = vst.msk [vmem:[#allocation2 + $0x100] sm:$0xff] %vm968, %v905
        %986 = vst.msk [vmem:[#allocation2 + $0x110] sm:$0xff] %vm968, %v907
        %987 = vst.msk [vmem:[#allocation2 + $0x120] sm:$0xff] %vm968, %v909
        %988 = vst.msk [vmem:[#allocation2 + $0x130] sm:$0xff] %vm968, %v911
        %989 = vst.msk [vmem:[#allocation2 + $0x140] sm:$0xff] %vm968, %v913
        %990 = vst.msk [vmem:[#allocation2 + $0x150] sm:$0xff] %vm968, %v915
        %991 = vst.msk [vmem:[#allocation2 + $0x160] sm:$0xff] %vm968, %v917
        %992 = vst.msk [vmem:[#allocation2 + $0x170] sm:$0xff] %vm968, %v919
        %993 = vst.msk [vmem:[#allocation2 + $0x180] sm:$0xff] %vm968, %v921
        %994 = vst.msk [vmem:[#allocation2 + $0x190] sm:$0xff] %vm968, %v923
        %995 = vst.msk [vmem:[#allocation2 + $0x1a0] sm:$0xff] %vm968, %v925
        %996 = vst.msk [vmem:[#allocation2 + $0x1b0] sm:$0xff] %vm968, %v927
        %997 = vst.msk [vmem:[#allocation2 + $0x1c0] sm:$0xff] %vm968, %v929
        %998 = vst.msk [vmem:[#allocation2 + $0x1d0] sm:$0xff] %vm968, %v931
        %999 = vst.msk [vmem:[#allocation2 + $0x1e0] sm:$0xff] %vm968, %v933
        %1000 = vst.msk [vmem:[#allocation2 + $0x1f0] sm:$0xff] %vm968, %v935
        %vm1001 = vcmask 1043456
        %v1002 = vrot.slane %v224, 4
        %v1003 = vrot.slane %v225, 4
        %v1004 = vsel %vm1001, %v1002, %v1003
        %v1005 = vrot.slane %v226, 4
        %v1006 = vsel %vm1001, %v1003, %v1005
        %v1007 = vrot.slane %v227, 4
        %v1008 = vrot.slane %v228, 4
        %v1009 = vsel %vm1001, %v1007, %v1008
        %v1010 = vrot.slane %v229, 4
        %v1011 = vsel %vm1001, %v1008, %v1010
        %v1012 = vrot.slane %v230, 4
        %v1013 = vrot.slane %v231, 4
        %v1014 = vsel %vm1001, %v1012, %v1013
        %v1015 = vrot.slane %v232, 4
        %v1016 = vsel %vm1001, %v1013, %v1015
        %v1017 = vrot.slane %v233, 4
        %v1018 = vrot.slane %v234, 4
        %v1019 = vsel %vm1001, %v1017, %v1018
        %v1020 = vrot.slane %v235, 4
        %v1021 = vsel %vm1001, %v1018, %v1020
        %v1022 = vrot.slane %v236, 4
        %v1023 = vrot.slane %v237, 4
        %v1024 = vsel %vm1001, %v1022, %v1023
        %v1025 = vrot.slane %v238, 4
        %v1026 = vsel %vm1001, %v1023, %v1025
        %v1027 = vrot.slane %v239, 4
        %v1028 = vrot.slane %v240, 4
        %v1029 = vsel %vm1001, %v1027, %v1028
        %v1030 = vrot.slane %v241, 4
        %v1031 = vsel %vm1001, %v1028, %v1030
        %v1032 = vrot.slane %v242, 4
        %v1033 = vrot.slane %v243, 4
        %v1034 = vsel %vm1001, %v1032, %v1033
        %v1035 = vrot.slane %v244, 4
        %v1036 = vsel %vm1001, %v1033, %v1035
        %v1037 = vrot.slane %v245, 4
        %v1038 = vrot.slane %v246, 4
        %v1039 = vsel %vm1001, %v1037, %v1038
        %v1040 = vrot.slane %v247, 4
        %v1041 = vsel %vm1001, %v1038, %v1040
        %v1042 = vrot.slane %v248, 4
        %v1043 = vrot.slane %v249, 4
        %v1044 = vsel %vm1001, %v1042, %v1043
        %v1045 = vrot.slane %v250, 4
        %v1046 = vsel %vm1001, %v1043, %v1045
        %v1047 = vrot.slane %v251, 4
        %v1048 = vrot.slane %v252, 4
        %v1049 = vsel %vm1001, %v1047, %v1048
        %v1050 = vrot.slane %v253, 4
        %v1051 = vsel %vm1001, %v1048, %v1050
        %v1052 = vrot.slane %v254, 4
        %v1053 = vrot.slane %v255, 4
        %v1054 = vsel %vm1001, %v1052, %v1053
        %v1055 = vrot.slane %v256, 4
        %v1056 = vsel %vm1001, %v1053, %v1055
        %v1057 = vrot.slane %v257, 4
        %v1058 = vrot.slane %v258, 4
        %v1059 = vsel %vm1001, %v1057, %v1058
        %v1060 = vrot.slane %v259, 4
        %v1061 = vsel %vm1001, %v1058, %v1060
        %v1062 = vrot.slane %v260, 4
        %v1063 = vrot.slane %v261, 4
        %v1064 = vsel %vm1001, %v1062, %v1063
        %v1065 = vrot.slane %v262, 4
        %v1066 = vsel %vm1001, %v1063, %v1065
        %v1067 = vrot.slane %v263, 4
        %v1068 = vrot.slane %v264, 4
        %v1069 = vsel %vm1001, %v1067, %v1068
        %v1070 = vrot.slane %v265, 4
        %v1071 = vsel %vm1001, %v1068, %v1070
        %v1072 = vrot.slane %v266, 4
        %v1073 = vrot.slane %v267, 4
        %v1074 = vsel %vm1001, %v1072, %v1073
        %v1075 = vrot.slane %v268, 4
        %v1076 = vsel %vm1001, %v1073, %v1075
        %v1077 = vrot.slane %v269, 4
        %v1078 = vrot.slane %v270, 4
        %v1079 = vsel %vm1001, %v1077, %v1078
        %v1080 = vrot.slane %v271, 4
        %v1081 = vsel %vm1001, %v1078, %v1080
        %1082 = vrot.lane.b32.xlu0 %v1004, 16
        %v1083 = vpop.permute.xlu0 %1082
        %1084 = vrot.lane.b32.xlu0 %v1006, 16
        %v1085 = vpop.permute.xlu0 %1084
        %1086 = vrot.lane.b32.xlu0 %v1009, 16
        %v1087 = vpop.permute.xlu0 %1086
        %1088 = vrot.lane.b32.xlu0 %v1011, 16
        %v1089 = vpop.permute.xlu0 %1088
        %1090 = vrot.lane.b32.xlu0 %v1014, 16
        %v1091 = vpop.permute.xlu0 %1090
        %1092 = vrot.lane.b32.xlu0 %v1016, 16
        %v1093 = vpop.permute.xlu0 %1092
        %1094 = vrot.lane.b32.xlu0 %v1019, 16
        %v1095 = vpop.permute.xlu0 %1094
        %1096 = vrot.lane.b32.xlu0 %v1021, 16
        %v1097 = vpop.permute.xlu0 %1096
        %1098 = vrot.lane.b32.xlu0 %v1024, 16
        %v1099 = vpop.permute.xlu0 %1098
        %1100 = vrot.lane.b32.xlu0 %v1026, 16
        %v1101 = vpop.permute.xlu0 %1100
        %1102 = vrot.lane.b32.xlu0 %v1029, 16
        %v1103 = vpop.permute.xlu0 %1102
        %1104 = vrot.lane.b32.xlu0 %v1031, 16
        %v1105 = vpop.permute.xlu0 %1104
        %1106 = vrot.lane.b32.xlu0 %v1034, 16
        %v1107 = vpop.permute.xlu0 %1106
        %1108 = vrot.lane.b32.xlu0 %v1036, 16
        %v1109 = vpop.permute.xlu0 %1108
        %1110 = vrot.lane.b32.xlu0 %v1039, 16
        %v1111 = vpop.permute.xlu0 %1110
        %1112 = vrot.lane.b32.xlu0 %v1041, 16
        %v1113 = vpop.permute.xlu0 %1112
        %1114 = vrot.lane.b32.xlu0 %v1044, 16
        %v1115 = vpop.permute.xlu0 %1114
        %1116 = vrot.lane.b32.xlu0 %v1046, 16
        %v1117 = vpop.permute.xlu0 %1116
        %1118 = vrot.lane.b32.xlu0 %v1049, 16
        %v1119 = vpop.permute.xlu0 %1118
        %1120 = vrot.lane.b32.xlu0 %v1051, 16
        %v1121 = vpop.permute.xlu0 %1120
        %1122 = vrot.lane.b32.xlu0 %v1054, 16
        %v1123 = vpop.permute.xlu0 %1122
        %1124 = vrot.lane.b32.xlu0 %v1056, 16
        %v1125 = vpop.permute.xlu0 %1124
        %1126 = vrot.lane.b32.xlu0 %v1059, 16
        %v1127 = vpop.permute.xlu0 %1126
        %1128 = vrot.lane.b32.xlu0 %v1061, 16
        %v1129 = vpop.permute.xlu0 %1128
        %1130 = vrot.lane.b32.xlu0 %v1064, 16
        %v1131 = vpop.permute.xlu0 %1130
        %1132 = vrot.lane.b32.xlu0 %v1066, 16
        %v1133 = vpop.permute.xlu0 %1132
        %1134 = vrot.lane.b32.xlu0 %v1069, 16
        %v1135 = vpop.permute.xlu0 %1134
        %1136 = vrot.lane.b32.xlu0 %v1071, 16
        %v1137 = vpop.permute.xlu0 %1136
        %1138 = vrot.lane.b32.xlu0 %v1074, 16
        %v1139 = vpop.permute.xlu0 %1138
        %1140 = vrot.lane.b32.xlu0 %v1076, 16
        %v1141 = vpop.permute.xlu0 %1140
        %1142 = vrot.lane.b32.xlu0 %v1079, 16
        %v1143 = vpop.permute.xlu0 %1142
        %1144 = vrot.lane.b32.xlu0 %v1081, 16
        %v1145 = vpop.permute.xlu0 %1144
        %vm1178 = vcmask 162944
        %1179 = vst.msk [vmem:[#allocation2] sm:$0xff] %vm1178, %v1083
        %1180 = vst.msk [vmem:[#allocation2 + $0x10] sm:$0xff] %vm1178, %v1085
        %1181 = vst.msk [vmem:[#allocation2 + $0x20] sm:$0xff] %vm1178, %v1087
        %1182 = vst.msk [vmem:[#allocation2 + $0x30] sm:$0xff] %vm1178, %v1089
        %1183 = vst.msk [vmem:[#allocation2 + $0x40] sm:$0xff] %vm1178, %v1091
        %1184 = vst.msk [vmem:[#allocation2 + $0x50] sm:$0xff] %vm1178, %v1093
        %1185 = vst.msk [vmem:[#allocation2 + $0x60] sm:$0xff] %vm1178, %v1095
        %1186 = vst.msk [vmem:[#allocation2 + $0x70] sm:$0xff] %vm1178, %v1097
        %1187 = vst.msk [vmem:[#allocation2 + $0x80] sm:$0xff] %vm1178, %v1099
        %1188 = vst.msk [vmem:[#allocation2 + $0x90] sm:$0xff] %vm1178, %v1101
        %1189 = vst.msk [vmem:[#allocation2 + $0xa0] sm:$0xff] %vm1178, %v1103
        %1190 = vst.msk [vmem:[#allocation2 + $0xb0] sm:$0xff] %vm1178, %v1105
        %1191 = vst.msk [vmem:[#allocation2 + $0xc0] sm:$0xff] %vm1178, %v1107
        %1192 = vst.msk [vmem:[#allocation2 + $0xd0] sm:$0xff] %vm1178, %v1109
        %1193 = vst.msk [vmem:[#allocation2 + $0xe0] sm:$0xff] %vm1178, %v1111
        %1194 = vst.msk [vmem:[#allocation2 + $0xf0] sm:$0xff] %vm1178, %v1113
        %1195 = vst.msk [vmem:[#allocation2 + $0x100] sm:$0xff] %vm1178, %v1115
        %1196 = vst.msk [vmem:[#allocation2 + $0x110] sm:$0xff] %vm1178, %v1117
        %1197 = vst.msk [vmem:[#allocation2 + $0x120] sm:$0xff] %vm1178, %v1119
        %1198 = vst.msk [vmem:[#allocation2 + $0x130] sm:$0xff] %vm1178, %v1121
        %1199 = vst.msk [vmem:[#allocation2 + $0x140] sm:$0xff] %vm1178, %v1123
        %1200 = vst.msk [vmem:[#allocation2 + $0x150] sm:$0xff] %vm1178, %v1125
        %1201 = vst.msk [vmem:[#allocation2 + $0x160] sm:$0xff] %vm1178, %v1127
        %1202 = vst.msk [vmem:[#allocation2 + $0x170] sm:$0xff] %vm1178, %v1129
        %1203 = vst.msk [vmem:[#allocation2 + $0x180] sm:$0xff] %vm1178, %v1131
        %1204 = vst.msk [vmem:[#allocation2 + $0x190] sm:$0xff] %vm1178, %v1133
        %1205 = vst.msk [vmem:[#allocation2 + $0x1a0] sm:$0xff] %vm1178, %v1135
        %1206 = vst.msk [vmem:[#allocation2 + $0x1b0] sm:$0xff] %vm1178, %v1137
        %1207 = vst.msk [vmem:[#allocation2 + $0x1c0] sm:$0xff] %vm1178, %v1139
        %1208 = vst.msk [vmem:[#allocation2 + $0x1d0] sm:$0xff] %vm1178, %v1141
        %1209 = vst.msk [vmem:[#allocation2 + $0x1e0] sm:$0xff] %vm1178, %v1143
        %1210 = vst.msk [vmem:[#allocation2 + $0x1f0] sm:$0xff] %vm1178, %v1145
        %vm1211 = vcmask 1042432
        %v1212 = vrot.slane %v224, 5
        %v1213 = vrot.slane %v225, 5
        %v1214 = vsel %vm1211, %v1212, %v1213
        %v1215 = vrot.slane %v226, 5
        %v1216 = vsel %vm1211, %v1213, %v1215
        %v1217 = vrot.slane %v227, 5
        %v1218 = vrot.slane %v228, 5
        %v1219 = vsel %vm1211, %v1217, %v1218
        %v1220 = vrot.slane %v229, 5
        %v1221 = vsel %vm1211, %v1218, %v1220
        %v1222 = vrot.slane %v230, 5
        %v1223 = vrot.slane %v231, 5
        %v1224 = vsel %vm1211, %v1222, %v1223
        %v1225 = vrot.slane %v232, 5
        %v1226 = vsel %vm1211, %v1223, %v1225
        %v1227 = vrot.slane %v233, 5
        %v1228 = vrot.slane %v234, 5
        %v1229 = vsel %vm1211, %v1227, %v1228
        %v1230 = vrot.slane %v235, 5
        %v1231 = vsel %vm1211, %v1228, %v1230
        %v1232 = vrot.slane %v236, 5
        %v1233 = vrot.slane %v237, 5
        %v1234 = vsel %vm1211, %v1232, %v1233
        %v1235 = vrot.slane %v238, 5
        %v1236 = vsel %vm1211, %v1233, %v1235
        %v1237 = vrot.slane %v239, 5
        %v1238 = vrot.slane %v240, 5
        %v1239 = vsel %vm1211, %v1237, %v1238
        %v1240 = vrot.slane %v241, 5
        %v1241 = vsel %vm1211, %v1238, %v1240
        %v1242 = vrot.slane %v242, 5
        %v1243 = vrot.slane %v243, 5
        %v1244 = vsel %vm1211, %v1242, %v1243
        %v1245 = vrot.slane %v244, 5
        %v1246 = vsel %vm1211, %v1243, %v1245
        %v1247 = vrot.slane %v245, 5
        %v1248 = vrot.slane %v246, 5
        %v1249 = vsel %vm1211, %v1247, %v1248
        %v1250 = vrot.slane %v247, 5
        %v1251 = vsel %vm1211, %v1248, %v1250
        %v1252 = vrot.slane %v248, 5
        %v1253 = vrot.slane %v249, 5
        %v1254 = vsel %vm1211, %v1252, %v1253
        %v1255 = vrot.slane %v250, 5
        %v1256 = vsel %vm1211, %v1253, %v1255
        %v1257 = vrot.slane %v251, 5
        %v1258 = vrot.slane %v252, 5
        %v1259 = vsel %vm1211, %v1257, %v1258
        %v1260 = vrot.slane %v253, 5
        %v1261 = vsel %vm1211, %v1258, %v1260
        %v1262 = vrot.slane %v254, 5
        %v1263 = vrot.slane %v255, 5
        %v1264 = vsel %vm1211, %v1262, %v1263
        %v1265 = vrot.slane %v256, 5
        %v1266 = vsel %vm1211, %v1263, %v1265
        %v1267 = vrot.slane %v257, 5
        %v1268 = vrot.slane %v258, 5
        %v1269 = vsel %vm1211, %v1267, %v1268
        %v1270 = vrot.slane %v259, 5
        %v1271 = vsel %vm1211, %v1268, %v1270
        %v1272 = vrot.slane %v260, 5
        %v1273 = vrot.slane %v261, 5
        %v1274 = vsel %vm1211, %v1272, %v1273
        %v1275 = vrot.slane %v262, 5
        %v1276 = vsel %vm1211, %v1273, %v1275
        %v1277 = vrot.slane %v263, 5
        %v1278 = vrot.slane %v264, 5
        %v1279 = vsel %vm1211, %v1277, %v1278
        %v1280 = vrot.slane %v265, 5
        %v1281 = vsel %vm1211, %v1278, %v1280
        %v1282 = vrot.slane %v266, 5
        %v1283 = vrot.slane %v267, 5
        %v1284 = vsel %vm1211, %v1282, %v1283
        %v1285 = vrot.slane %v268, 5
        %v1286 = vsel %vm1211, %v1283, %v1285
        %v1287 = vrot.slane %v269, 5
        %v1288 = vrot.slane %v270, 5
        %v1289 = vsel %vm1211, %v1287, %v1288
        %v1290 = vrot.slane %v271, 5
        %v1291 = vsel %vm1211, %v1288, %v1290
        %1292 = vrot.lane.b32.xlu0 %v1214, 20
        %v1293 = vpop.permute.xlu0 %1292
        %1294 = vrot.lane.b32.xlu0 %v1216, 20
        %v1295 = vpop.permute.xlu0 %1294
        %1296 = vrot.lane.b32.xlu0 %v1219, 20
        %v1297 = vpop.permute.xlu0 %1296
        %1298 = vrot.lane.b32.xlu0 %v1221, 20
        %v1299 = vpop.permute.xlu0 %1298
        %1300 = vrot.lane.b32.xlu0 %v1224, 20
        %v1301 = vpop.permute.xlu0 %1300
        %1302 = vrot.lane.b32.xlu0 %v1226, 20
        %v1303 = vpop.permute.xlu0 %1302
        %1304 = vrot.lane.b32.xlu0 %v1229, 20
        %v1305 = vpop.permute.xlu0 %1304
        %1306 = vrot.lane.b32.xlu0 %v1231, 20
        %v1307 = vpop.permute.xlu0 %1306
        %1308 = vrot.lane.b32.xlu0 %v1234, 20
        %v1309 = vpop.permute.xlu0 %1308
        %1310 = vrot.lane.b32.xlu0 %v1236, 20
        %v1311 = vpop.permute.xlu0 %1310
        %1312 = vrot.lane.b32.xlu0 %v1239, 20
        %v1313 = vpop.permute.xlu0 %1312
        %1314 = vrot.lane.b32.xlu0 %v1241, 20
        %v1315 = vpop.permute.xlu0 %1314
        %1316 = vrot.lane.b32.xlu0 %v1244, 20
        %v1317 = vpop.permute.xlu0 %1316
        %1318 = vrot.lane.b32.xlu0 %v1246, 20
        %v1319 = vpop.permute.xlu0 %1318
        %1320 = vrot.lane.b32.xlu0 %v1249, 20
        %v1321 = vpop.permute.xlu0 %1320
        %1322 = vrot.lane.b32.xlu0 %v1251, 20
        %v1323 = vpop.permute.xlu0 %1322
        %1324 = vrot.lane.b32.xlu0 %v1254, 20
        %v1325 = vpop.permute.xlu0 %1324
        %1326 = vrot.lane.b32.xlu0 %v1256, 20
        %v1327 = vpop.permute.xlu0 %1326
        %1328 = vrot.lane.b32.xlu0 %v1259, 20
        %v1329 = vpop.permute.xlu0 %1328
        %1330 = vrot.lane.b32.xlu0 %v1261, 20
        %v1331 = vpop.permute.xlu0 %1330
        %1332 = vrot.lane.b32.xlu0 %v1264, 20
        %v1333 = vpop.permute.xlu0 %1332
        %1334 = vrot.lane.b32.xlu0 %v1266, 20
        %v1335 = vpop.permute.xlu0 %1334
        %1336 = vrot.lane.b32.xlu0 %v1269, 20
        %v1337 = vpop.permute.xlu0 %1336
        %1338 = vrot.lane.b32.xlu0 %v1271, 20
        %v1339 = vpop.permute.xlu0 %1338
        %1340 = vrot.lane.b32.xlu0 %v1274, 20
        %v1341 = vpop.permute.xlu0 %1340
        %1342 = vrot.lane.b32.xlu0 %v1276, 20
        %v1343 = vpop.permute.xlu0 %1342
        %1344 = vrot.lane.b32.xlu0 %v1279, 20
        %v1345 = vpop.permute.xlu0 %1344
        %1346 = vrot.lane.b32.xlu0 %v1281, 20
        %v1347 = vpop.permute.xlu0 %1346
        %1348 = vrot.lane.b32.xlu0 %v1284, 20
        %v1349 = vpop.permute.xlu0 %1348
        %1350 = vrot.lane.b32.xlu0 %v1286, 20
        %v1351 = vpop.permute.xlu0 %1350
        %1352 = vrot.lane.b32.xlu0 %v1289, 20
        %v1353 = vpop.permute.xlu0 %1352
        %1354 = vrot.lane.b32.xlu0 %v1291, 20
        %v1355 = vpop.permute.xlu0 %1354
        %vm1388 = vcmask 195744
        %1389 = vst.msk [vmem:[#allocation2] sm:$0xff] %vm1388, %v1293
        %1390 = vst.msk [vmem:[#allocation2 + $0x10] sm:$0xff] %vm1388, %v1295
        %1391 = vst.msk [vmem:[#allocation2 + $0x20] sm:$0xff] %vm1388, %v1297
        %1392 = vst.msk [vmem:[#allocation2 + $0x30] sm:$0xff] %vm1388, %v1299
        %1393 = vst.msk [vmem:[#allocation2 + $0x40] sm:$0xff] %vm1388, %v1301
        %1394 = vst.msk [vmem:[#allocation2 + $0x50] sm:$0xff] %vm1388, %v1303
        %1395 = vst.msk [vmem:[#allocation2 + $0x60] sm:$0xff] %vm1388, %v1305
        %1396 = vst.msk [vmem:[#allocation2 + $0x70] sm:$0xff] %vm1388, %v1307
        %1397 = vst.msk [vmem:[#allocation2 + $0x80] sm:$0xff] %vm1388, %v1309
        %1398 = vst.msk [vmem:[#allocation2 + $0x90] sm:$0xff] %vm1388, %v1311
        %1399 = vst.msk [vmem:[#allocation2 + $0xa0] sm:$0xff] %vm1388, %v1313
        %1400 = vst.msk [vmem:[#allocation2 + $0xb0] sm:$0xff] %vm1388, %v1315
        %1401 = vst.msk [vmem:[#allocation2 + $0xc0] sm:$0xff] %vm1388, %v1317
        %1402 = vst.msk [vmem:[#allocation2 + $0xd0] sm:$0xff] %vm1388, %v1319
        %1403 = vst.msk [vmem:[#allocation2 + $0xe0] sm:$0xff] %vm1388, %v1321
        %1404 = vst.msk [vmem:[#allocation2 + $0xf0] sm:$0xff] %vm1388, %v1323
        %1405 = vst.msk [vmem:[#allocation2 + $0x100] sm:$0xff] %vm1388, %v1325
        %1406 = vst.msk [vmem:[#allocation2 + $0x110] sm:$0xff] %vm1388, %v1327
        %1407 = vst.msk [vmem:[#allocation2 + $0x120] sm:$0xff] %vm1388, %v1329
        %1408 = vst.msk [vmem:[#allocation2 + $0x130] sm:$0xff] %vm1388, %v1331
        %1409 = vst.msk [vmem:[#allocation2 + $0x140] sm:$0xff] %vm1388, %v1333
        %1410 = vst.msk [vmem:[#allocation2 + $0x150] sm:$0xff] %vm1388, %v1335
        %1411 = vst.msk [vmem:[#allocation2 + $0x160] sm:$0xff] %vm1388, %v1337
        %1412 = vst.msk [vmem:[#allocation2 + $0x170] sm:$0xff] %vm1388, %v1339
        %1413 = vst.msk [vmem:[#allocation2 + $0x180] sm:$0xff] %vm1388, %v1341
        %1414 = vst.msk [vmem:[#allocation2 + $0x190] sm:$0xff] %vm1388, %v1343
        %1415 = vst.msk [vmem:[#allocation2 + $0x1a0] sm:$0xff] %vm1388, %v1345
        %1416 = vst.msk [vmem:[#allocation2 + $0x1b0] sm:$0xff] %vm1388, %v1347
        %1417 = vst.msk [vmem:[#allocation2 + $0x1c0] sm:$0xff] %vm1388, %v1349
        %1418 = vst.msk [vmem:[#allocation2 + $0x1d0] sm:$0xff] %vm1388, %v1351
        %1419 = vst.msk [vmem:[#allocation2 + $0x1e0] sm:$0xff] %vm1388, %v1353
        %1420 = vst.msk [vmem:[#allocation2 + $0x1f0] sm:$0xff] %vm1388, %v1355
        %vm1421 = vcmask 1041408
        %v1422 = vrot.slane %v224, 6
        %v1423 = vrot.slane %v225, 6
        %v1424 = vsel %vm1421, %v1422, %v1423
        %v1425 = vrot.slane %v226, 6
        %v1426 = vsel %vm1421, %v1423, %v1425
        %v1427 = vrot.slane %v227, 6
        %v1428 = vrot.slane %v228, 6
        %v1429 = vsel %vm1421, %v1427, %v1428
        %v1430 = vrot.slane %v229, 6
        %v1431 = vsel %vm1421, %v1428, %v1430
        %v1432 = vrot.slane %v230, 6
        %v1433 = vrot.slane %v231, 6
        %v1434 = vsel %vm1421, %v1432, %v1433
        %v1435 = vrot.slane %v232, 6
        %v1436 = vsel %vm1421, %v1433, %v1435
        %v1437 = vrot.slane %v233, 6
        %v1438 = vrot.slane %v234, 6
        %v1439 = vsel %vm1421, %v1437, %v1438
        %v1440 = vrot.slane %v235, 6
        %v1441 = vsel %vm1421, %v1438, %v1440
        %v1442 = vrot.slane %v236, 6
        %v1443 = vrot.slane %v237, 6
        %v1444 = vsel %vm1421, %v1442, %v1443
        %v1445 = vrot.slane %v238, 6
        %v1446 = vsel %vm1421, %v1443, %v1445
        %v1447 = vrot.slane %v239, 6
        %v1448 = vrot.slane %v240, 6
        %v1449 = vsel %vm1421, %v1447, %v1448
        %v1450 = vrot.slane %v241, 6
        %v1451 = vsel %vm1421, %v1448, %v1450
        %v1452 = vrot.slane %v242, 6
        %v1453 = vrot.slane %v243, 6
        %v1454 = vsel %vm1421, %v1452, %v1453
        %v1455 = vrot.slane %v244, 6
        %v1456 = vsel %vm1421, %v1453, %v1455
        %v1457 = vrot.slane %v245, 6
        %v1458 = vrot.slane %v246, 6
        %v1459 = vsel %vm1421, %v1457, %v1458
        %v1460 = vrot.slane %v247, 6
        %v1461 = vsel %vm1421, %v1458, %v1460
        %v1462 = vrot.slane %v248, 6
        %v1463 = vrot.slane %v249, 6
        %v1464 = vsel %vm1421, %v1462, %v1463
        %v1465 = vrot.slane %v250, 6
        %v1466 = vsel %vm1421, %v1463, %v1465
        %v1467 = vrot.slane %v251, 6
        %v1468 = vrot.slane %v252, 6
        %v1469 = vsel %vm1421, %v1467, %v1468
        %v1470 = vrot.slane %v253, 6
        %v1471 = vsel %vm1421, %v1468, %v1470
        %v1472 = vrot.slane %v254, 6
        %v1473 = vrot.slane %v255, 6
        %v1474 = vsel %vm1421, %v1472, %v1473
        %v1475 = vrot.slane %v256, 6
        %v1476 = vsel %vm1421, %v1473, %v1475
        %v1477 = vrot.slane %v257, 6
        %v1478 = vrot.slane %v258, 6
        %v1479 = vsel %vm1421, %v1477, %v1478
        %v1480 = vrot.slane %v259, 6
        %v1481 = vsel %vm1421, %v1478, %v1480
        %v1482 = vrot.slane %v260, 6
        %v1483 = vrot.slane %v261, 6
        %v1484 = vsel %vm1421, %v1482, %v1483
        %v1485 = vrot.slane %v262, 6
        %v1486 = vsel %vm1421, %v1483, %v1485
        %v1487 = vrot.slane %v263, 6
        %v1488 = vrot.slane %v264, 6
        %v1489 = vsel %vm1421, %v1487, %v1488
        %v1490 = vrot.slane %v265, 6
        %v1491 = vsel %vm1421, %v1488, %v1490
        %v1492 = vrot.slane %v266, 6
        %v1493 = vrot.slane %v267, 6
        %v1494 = vsel %vm1421, %v1492, %v1493
        %v1495 = vrot.slane %v268, 6
        %v1496 = vsel %vm1421, %v1493, %v1495
        %v1497 = vrot.slane %v269, 6
        %v1498 = vrot.slane %v270, 6
        %v1499 = vsel %vm1421, %v1497, %v1498
        %v1500 = vrot.slane %v271, 6
        %v1501 = vsel %vm1421, %v1498, %v1500
        %1502 = vrot.lane.b32.xlu0 %v1424, 24
        %v1503 = vpop.permute.xlu0 %1502
        %1504 = vrot.lane.b32.xlu0 %v1426, 24
        %v1505 = vpop.permute.xlu0 %1504
        %1506 = vrot.lane.b32.xlu0 %v1429, 24
        %v1507 = vpop.permute.xlu0 %1506
        %1508 = vrot.lane.b32.xlu0 %v1431, 24
        %v1509 = vpop.permute.xlu0 %1508
        %1510 = vrot.lane.b32.xlu0 %v1434, 24
        %v1511 = vpop.permute.xlu0 %1510
        %1512 = vrot.lane.b32.xlu0 %v1436, 24
        %v1513 = vpop.permute.xlu0 %1512
        %1514 = vrot.lane.b32.xlu0 %v1439, 24
        %v1515 = vpop.permute.xlu0 %1514
        %1516 = vrot.lane.b32.xlu0 %v1441, 24
        %v1517 = vpop.permute.xlu0 %1516
        %1518 = vrot.lane.b32.xlu0 %v1444, 24
        %v1519 = vpop.permute.xlu0 %1518
        %1520 = vrot.lane.b32.xlu0 %v1446, 24
        %v1521 = vpop.permute.xlu0 %1520
        %1522 = vrot.lane.b32.xlu0 %v1449, 24
        %v1523 = vpop.permute.xlu0 %1522
        %1524 = vrot.lane.b32.xlu0 %v1451, 24
        %v1525 = vpop.permute.xlu0 %1524
        %1526 = vrot.lane.b32.xlu0 %v1454, 24
        %v1527 = vpop.permute.xlu0 %1526
        %1528 = vrot.lane.b32.xlu0 %v1456, 24
        %v1529 = vpop.permute.xlu0 %1528
        %1530 = vrot.lane.b32.xlu0 %v1459, 24
        %v1531 = vpop.permute.xlu0 %1530
        %1532 = vrot.lane.b32.xlu0 %v1461, 24
        %v1533 = vpop.permute.xlu0 %1532
        %1534 = vrot.lane.b32.xlu0 %v1464, 24
        %v1535 = vpop.permute.xlu0 %1534
        %1536 = vrot.lane.b32.xlu0 %v1466, 24
        %v1537 = vpop.permute.xlu0 %1536
        %1538 = vrot.lane.b32.xlu0 %v1469, 24
        %v1539 = vpop.permute.xlu0 %1538
        %1540 = vrot.lane.b32.xlu0 %v1471, 24
        %v1541 = vpop.permute.xlu0 %1540
        %1542 = vrot.lane.b32.xlu0 %v1474, 24
        %v1543 = vpop.permute.xlu0 %1542
        %1544 = vrot.lane.b32.xlu0 %v1476, 24
        %v1545 = vpop.permute.xlu0 %1544
        %1546 = vrot.lane.b32.xlu0 %v1479, 24
        %v1547 = vpop.permute.xlu0 %1546
        %1548 = vrot.lane.b32.xlu0 %v1481, 24
        %v1549 = vpop.permute.xlu0 %1548
        %1550 = vrot.lane.b32.xlu0 %v1484, 24
        %v1551 = vpop.permute.xlu0 %1550
        %1552 = vrot.lane.b32.xlu0 %v1486, 24
        %v1553 = vpop.permute.xlu0 %1552
        %1554 = vrot.lane.b32.xlu0 %v1489, 24
        %v1555 = vpop.permute.xlu0 %1554
        %1556 = vrot.lane.b32.xlu0 %v1491, 24
        %v1557 = vpop.permute.xlu0 %1556
        %1558 = vrot.lane.b32.xlu0 %v1494, 24
        %v1559 = vpop.permute.xlu0 %1558
        %1560 = vrot.lane.b32.xlu0 %v1496, 24
        %v1561 = vpop.permute.xlu0 %1560
        %1562 = vrot.lane.b32.xlu0 %v1499, 24
        %v1563 = vpop.permute.xlu0 %1562
        %1564 = vrot.lane.b32.xlu0 %v1501, 24
        %v1565 = vpop.permute.xlu0 %1564
        %vm1598 = vcmask 228544
        %1599 = vst.msk [vmem:[#allocation2] sm:$0xff] %vm1598, %v1503
        %1600 = vst.msk [vmem:[#allocation2 + $0x10] sm:$0xff] %vm1598, %v1505
        %1601 = vst.msk [vmem:[#allocation2 + $0x20] sm:$0xff] %vm1598, %v1507
        %1602 = vst.msk [vmem:[#allocation2 + $0x30] sm:$0xff] %vm1598, %v1509
        %1603 = vst.msk [vmem:[#allocation2 + $0x40] sm:$0xff] %vm1598, %v1511
        %1604 = vst.msk [vmem:[#allocation2 + $0x50] sm:$0xff] %vm1598, %v1513
        %1605 = vst.msk [vmem:[#allocation2 + $0x60] sm:$0xff] %vm1598, %v1515
        %1606 = vst.msk [vmem:[#allocation2 + $0x70] sm:$0xff] %vm1598, %v1517
        %1607 = vst.msk [vmem:[#allocation2 + $0x80] sm:$0xff] %vm1598, %v1519
        %1608 = vst.msk [vmem:[#allocation2 + $0x90] sm:$0xff] %vm1598, %v1521
        %1609 = vst.msk [vmem:[#allocation2 + $0xa0] sm:$0xff] %vm1598, %v1523
        %1610 = vst.msk [vmem:[#allocation2 + $0xb0] sm:$0xff] %vm1598, %v1525
        %1611 = vst.msk [vmem:[#allocation2 + $0xc0] sm:$0xff] %vm1598, %v1527
        %1612 = vst.msk [vmem:[#allocation2 + $0xd0] sm:$0xff] %vm1598, %v1529
        %1613 = vst.msk [vmem:[#allocation2 + $0xe0] sm:$0xff] %vm1598, %v1531
        %1614 = vst.msk [vmem:[#allocation2 + $0xf0] sm:$0xff] %vm1598, %v1533
        %1615 = vst.msk [vmem:[#allocation2 + $0x100] sm:$0xff] %vm1598, %v1535
        %1616 = vst.msk [vmem:[#allocation2 + $0x110] sm:$0xff] %vm1598, %v1537
        %1617 = vst.msk [vmem:[#allocation2 + $0x120] sm:$0xff] %vm1598, %v1539
        %1618 = vst.msk [vmem:[#allocation2 + $0x130] sm:$0xff] %vm1598, %v1541
        %1619 = vst.msk [vmem:[#allocation2 + $0x140] sm:$0xff] %vm1598, %v1543
        %1620 = vst.msk [vmem:[#allocation2 + $0x150] sm:$0xff] %vm1598, %v1545
        %1621 = vst.msk [vmem:[#allocation2 + $0x160] sm:$0xff] %vm1598, %v1547
        %1622 = vst.msk [vmem:[#allocation2 + $0x170] sm:$0xff] %vm1598, %v1549
        %1623 = vst.msk [vmem:[#allocation2 + $0x180] sm:$0xff] %vm1598, %v1551
        %1624 = vst.msk [vmem:[#allocation2 + $0x190] sm:$0xff] %vm1598, %v1553
        %1625 = vst.msk [vmem:[#allocation2 + $0x1a0] sm:$0xff] %vm1598, %v1555
        %1626 = vst.msk [vmem:[#allocation2 + $0x1b0] sm:$0xff] %vm1598, %v1557
        %1627 = vst.msk [vmem:[#allocation2 + $0x1c0] sm:$0xff] %vm1598, %v1559
        %1628 = vst.msk [vmem:[#allocation2 + $0x1d0] sm:$0xff] %vm1598, %v1561
        %1629 = vst.msk [vmem:[#allocation2 + $0x1e0] sm:$0xff] %vm1598, %v1563
        %1630 = vst.msk [vmem:[#allocation2 + $0x1f0] sm:$0xff] %vm1598, %v1565
        %1633 = vrot.lane.b32.xlu0 %v227, 28
        %v1634 = vpop.permute.xlu0 %1633
        %1635 = vrot.lane.b32.xlu0 %v228, 28
        %v1636 = vpop.permute.xlu0 %1635
        %1637 = vrot.lane.b32.xlu0 %v230, 28
        %v1638 = vpop.permute.xlu0 %1637
        %1639 = vrot.lane.b32.xlu0 %v231, 28
        %v1640 = vpop.permute.xlu0 %1639
        %1641 = vrot.lane.b32.xlu0 %v233, 28
        %v1642 = vpop.permute.xlu0 %1641
        %1643 = vrot.lane.b32.xlu0 %v234, 28
        %v1644 = vpop.permute.xlu0 %1643
        %1645 = vrot.lane.b32.xlu0 %v236, 28
        %v1646 = vpop.permute.xlu0 %1645
        %1647 = vrot.lane.b32.xlu0 %v237, 28
        %v1648 = vpop.permute.xlu0 %1647
        %1649 = vrot.lane.b32.xlu0 %v239, 28
        %v1650 = vpop.permute.xlu0 %1649
        %1651 = vrot.lane.b32.xlu0 %v240, 28
        %v1652 = vpop.permute.xlu0 %1651
        %1653 = vrot.lane.b32.xlu0 %v242, 28
        %v1654 = vpop.permute.xlu0 %1653
        %1655 = vrot.lane.b32.xlu0 %v243, 28
        %v1656 = vpop.permute.xlu0 %1655
        %1657 = vrot.lane.b32.xlu0 %v245, 28
        %v1658 = vpop.permute.xlu0 %1657
        %1659 = vrot.lane.b32.xlu0 %v246, 28
        %v1660 = vpop.permute.xlu0 %1659
        %1661 = vrot.lane.b32.xlu0 %v248, 28
        %v1662 = vpop.permute.xlu0 %1661
        %1663 = vrot.lane.b32.xlu0 %v249, 28
        %v1664 = vpop.permute.xlu0 %1663
        %1665 = vrot.lane.b32.xlu0 %v251, 28
        %v1666 = vpop.permute.xlu0 %1665
        %1667 = vrot.lane.b32.xlu0 %v252, 28
        %v1668 = vpop.permute.xlu0 %1667
        %1669 = vrot.lane.b32.xlu0 %v254, 28
        %v1670 = vpop.permute.xlu0 %1669
        %1671 = vrot.lane.b32.xlu0 %v255, 28
        %v1672 = vpop.permute.xlu0 %1671
        %1673 = vrot.lane.b32.xlu0 %v257, 28
        %v1674 = vpop.permute.xlu0 %1673
        %1675 = vrot.lane.b32.xlu0 %v258, 28
        %v1676 = vpop.permute.xlu0 %1675
        %1677 = vrot.lane.b32.xlu0 %v260, 28
        %v1678 = vpop.permute.xlu0 %1677
        %1679 = vrot.lane.b32.xlu0 %v261, 28
        %v1680 = vpop.permute.xlu0 %1679
        %1681 = vrot.lane.b32.xlu0 %v263, 28
        %v1682 = vpop.permute.xlu0 %1681
        %1683 = vrot.lane.b32.xlu0 %v264, 28
        %v1684 = vpop.permute.xlu0 %1683
        %1685 = vrot.lane.b32.xlu0 %v266, 28
        %v1686 = vpop.permute.xlu0 %1685
        %1687 = vrot.lane.b32.xlu0 %v267, 28
        %v1688 = vpop.permute.xlu0 %1687
        %1689 = vrot.lane.b32.xlu0 %v269, 28
        %v1690 = vpop.permute.xlu0 %1689
        %1691 = vrot.lane.b32.xlu0 %v270, 28
        %v1692 = vpop.permute.xlu0 %1691
        %1693 = vrot.lane.b32.xlu0 %v272, 28
        %v1694 = vpop.permute.xlu0 %1693
        %1695 = vrot.lane.b32.xlu0 %v273, 28
        %v1696 = vpop.permute.xlu0 %1695
        %vm1729 = vcmask 261344
        %1730 = vst.msk [vmem:[#allocation2] sm:$0xff] %vm1729, %v1634
        %1731 = vst.msk [vmem:[#allocation2 + $0x10] sm:$0xff] %vm1729, %v1636
        %1732 = vst.msk [vmem:[#allocation2 + $0x20] sm:$0xff] %vm1729, %v1638
        %1733 = vst.msk [vmem:[#allocation2 + $0x30] sm:$0xff] %vm1729, %v1640
        %1734 = vst.msk [vmem:[#allocation2 + $0x40] sm:$0xff] %vm1729, %v1642
        %1735 = vst.msk [vmem:[#allocation2 + $0x50] sm:$0xff] %vm1729, %v1644
        %1736 = vst.msk [vmem:[#allocation2 + $0x60] sm:$0xff] %vm1729, %v1646
        %1737 = vst.msk [vmem:[#allocation2 + $0x70] sm:$0xff] %vm1729, %v1648
        %1738 = vst.msk [vmem:[#allocation2 + $0x80] sm:$0xff] %vm1729, %v1650
        %1739 = vst.msk [vmem:[#allocation2 + $0x90] sm:$0xff] %vm1729, %v1652
        %1740 = vst.msk [vmem:[#allocation2 + $0xa0] sm:$0xff] %vm1729, %v1654
        %1741 = vst.msk [vmem:[#allocation2 + $0xb0] sm:$0xff] %vm1729, %v1656
        %1742 = vst.msk [vmem:[#allocation2 + $0xc0] sm:$0xff] %vm1729, %v1658
        %1743 = vst.msk [vmem:[#allocation2 + $0xd0] sm:$0xff] %vm1729, %v1660
        %1744 = vst.msk [vmem:[#allocation2 + $0xe0] sm:$0xff] %vm1729, %v1662
        %1745 = vst.msk [vmem:[#allocation2 + $0xf0] sm:$0xff] %vm1729, %v1664
        %1746 = vst.msk [vmem:[#allocation2 + $0x100] sm:$0xff] %vm1729, %v1666
        %1747 = vst.msk [vmem:[#allocation2 + $0x110] sm:$0xff] %vm1729, %v1668
        %1748 = vst.msk [vmem:[#allocation2 + $0x120] sm:$0xff] %vm1729, %v1670
        %1749 = vst.msk [vmem:[#allocation2 + $0x130] sm:$0xff] %vm1729, %v1672
        %1750 = vst.msk [vmem:[#allocation2 + $0x140] sm:$0xff] %vm1729, %v1674
        %1751 = vst.msk [vmem:[#allocation2 + $0x150] sm:$0xff] %vm1729, %v1676
        %1752 = vst.msk [vmem:[#allocation2 + $0x160] sm:$0xff] %vm1729, %v1678
        %1753 = vst.msk [vmem:[#allocation2 + $0x170] sm:$0xff] %vm1729, %v1680
        %1754 = vst.msk [vmem:[#allocation2 + $0x180] sm:$0xff] %vm1729, %v1682
        %1755 = vst.msk [vmem:[#allocation2 + $0x190] sm:$0xff] %vm1729, %v1684
        %1756 = vst.msk [vmem:[#allocation2 + $0x1a0] sm:$0xff] %vm1729, %v1686
        %1757 = vst.msk [vmem:[#allocation2 + $0x1b0] sm:$0xff] %vm1729, %v1688
        %1758 = vst.msk [vmem:[#allocation2 + $0x1c0] sm:$0xff] %vm1729, %v1690
        %1759 = vst.msk [vmem:[#allocation2 + $0x1d0] sm:$0xff] %vm1729, %v1692
        %1760 = vst.msk [vmem:[#allocation2 + $0x1e0] sm:$0xff] %vm1729, %v1694
        %1761 = vst.msk [vmem:[#allocation2 + $0x1f0] sm:$0xff] %vm1729, %v1696
        %v1763 = vrot.slane %v272, 1
        %v1764 = vrot.slane %v273, 1
        %v1765 = vsel %vm371, %v1763, %v1764
        %v1766 = vrot.slane %v274, 1
        %v1767 = vsel %vm371, %v1764, %v1766
        %1768 = vrot.lane.b32.xlu0 %v379, 32
        %v1769 = vpop.permute.xlu0 %1768
        %1770 = vrot.lane.b32.xlu0 %v381, 32
        %v1771 = vpop.permute.xlu0 %1770
        %1772 = vrot.lane.b32.xlu0 %v384, 32
        %v1773 = vpop.permute.xlu0 %1772
        %1774 = vrot.lane.b32.xlu0 %v386, 32
        %v1775 = vpop.permute.xlu0 %1774
        %1776 = vrot.lane.b32.xlu0 %v389, 32
        %v1777 = vpop.permute.xlu0 %1776
        %1778 = vrot.lane.b32.xlu0 %v391, 32
        %v1779 = vpop.permute.xlu0 %1778
        %1780 = vrot.lane.b32.xlu0 %v394, 32
        %v1781 = vpop.permute.xlu0 %1780
        %1782 = vrot.lane.b32.xlu0 %v396, 32
        %v1783 = vpop.permute.xlu0 %1782
        %1784 = vrot.lane.b32.xlu0 %v399, 32
        %v1785 = vpop.permute.xlu0 %1784
        %1786 = vrot.lane.b32.xlu0 %v401, 32
        %v1787 = vpop.permute.xlu0 %1786
        %1788 = vrot.lane.b32.xlu0 %v404, 32
        %v1789 = vpop.permute.xlu0 %1788
        %1790 = vrot.lane.b32.xlu0 %v406, 32
        %v1791 = vpop.permute.xlu0 %1790
        %1792 = vrot.lane.b32.xlu0 %v409, 32
        %v1793 = vpop.permute.xlu0 %1792
        %1794 = vrot.lane.b32.xlu0 %v411, 32
        %v1795 = vpop.permute.xlu0 %1794
        %1796 = vrot.lane.b32.xlu0 %v414, 32
        %v1797 = vpop.permute.xlu0 %1796
        %1798 = vrot.lane.b32.xlu0 %v416, 32
        %v1799 = vpop.permute.xlu0 %1798
        %1800 = vrot.lane.b32.xlu0 %v419, 32
        %v1801 = vpop.permute.xlu0 %1800
        %1802 = vrot.lane.b32.xlu0 %v421, 32
        %v1803 = vpop.permute.xlu0 %1802
        %1804 = vrot.lane.b32.xlu0 %v424, 32
        %v1805 = vpop.permute.xlu0 %1804
        %1806 = vrot.lane.b32.xlu0 %v426, 32
        %v1807 = vpop.permute.xlu0 %1806
        %1808 = vrot.lane.b32.xlu0 %v429, 32
        %v1809 = vpop.permute.xlu0 %1808
        %1810 = vrot.lane.b32.xlu0 %v431, 32
        %v1811 = vpop.permute.xlu0 %1810
        %1812 = vrot.lane.b32.xlu0 %v434, 32
        %v1813 = vpop.permute.xlu0 %1812
        %1814 = vrot.lane.b32.xlu0 %v436, 32
        %v1815 = vpop.permute.xlu0 %1814
        %1816 = vrot.lane.b32.xlu0 %v439, 32
        %v1817 = vpop.permute.xlu0 %1816
        %1818 = vrot.lane.b32.xlu0 %v441, 32
        %v1819 = vpop.permute.xlu0 %1818
        %1820 = vrot.lane.b32.xlu0 %v444, 32
        %v1821 = vpop.permute.xlu0 %1820
        %1822 = vrot.lane.b32.xlu0 %v446, 32
        %v1823 = vpop.permute.xlu0 %1822
        %1824 = vrot.lane.b32.xlu0 %v449, 32
        %v1825 = vpop.permute.xlu0 %1824
        %1826 = vrot.lane.b32.xlu0 %v451, 32
        %v1827 = vpop.permute.xlu0 %1826
        %1828 = vrot.lane.b32.xlu0 %v1765, 32
        %v1829 = vpop.permute.xlu0 %1828
        %1830 = vrot.lane.b32.xlu0 %v1767, 32
        %v1831 = vpop.permute.xlu0 %1830
        %vm1864 = vcmask 294144
        %1865 = vst.msk [vmem:[#allocation2] sm:$0xff] %vm1864, %v1769
        %1866 = vst.msk [vmem:[#allocation2 + $0x10] sm:$0xff] %vm1864, %v1771
        %1867 = vst.msk [vmem:[#allocation2 + $0x20] sm:$0xff] %vm1864, %v1773
        %1868 = vst.msk [vmem:[#allocation2 + $0x30] sm:$0xff] %vm1864, %v1775
        %1869 = vst.msk [vmem:[#allocation2 + $0x40] sm:$0xff] %vm1864, %v1777
        %1870 = vst.msk [vmem:[#allocation2 + $0x50] sm:$0xff] %vm1864, %v1779
        %1871 = vst.msk [vmem:[#allocation2 + $0x60] sm:$0xff] %vm1864, %v1781
        %1872 = vst.msk [vmem:[#allocation2 + $0x70] sm:$0xff] %vm1864, %v1783
        %1873 = vst.msk [vmem:[#allocation2 + $0x80] sm:$0xff] %vm1864, %v1785
        %1874 = vst.msk [vmem:[#allocation2 + $0x90] sm:$0xff] %vm1864, %v1787
        %1875 = vst.msk [vmem:[#allocation2 + $0xa0] sm:$0xff] %vm1864, %v1789
        %1876 = vst.msk [vmem:[#allocation2 + $0xb0] sm:$0xff] %vm1864, %v1791
        %1877 = vst.msk [vmem:[#allocation2 + $0xc0] sm:$0xff] %vm1864, %v1793
        %1878 = vst.msk [vmem:[#allocation2 + $0xd0] sm:$0xff] %vm1864, %v1795
        %1879 = vst.msk [vmem:[#allocation2 + $0xe0] sm:$0xff] %vm1864, %v1797
        %1880 = vst.msk [vmem:[#allocation2 + $0xf0] sm:$0xff] %vm1864, %v1799
        %1881 = vst.msk [vmem:[#allocation2 + $0x100] sm:$0xff] %vm1864, %v1801
        %1882 = vst.msk [vmem:[#allocation2 + $0x110] sm:$0xff] %vm1864, %v1803
        %1883 = vst.msk [vmem:[#allocation2 + $0x120] sm:$0xff] %vm1864, %v1805
        %1884 = vst.msk [vmem:[#allocation2 + $0x130] sm:$0xff] %vm1864, %v1807
        %1885 = vst.msk [vmem:[#allocation2 + $0x140] sm:$0xff] %vm1864, %v1809
        %1886 = vst.msk [vmem:[#allocation2 + $0x150] sm:$0xff] %vm1864, %v1811
        %1887 = vst.msk [vmem:[#allocation2 + $0x160] sm:$0xff] %vm1864, %v1813
        %1888 = vst.msk [vmem:[#allocation2 + $0x170] sm:$0xff] %vm1864, %v1815
        %1889 = vst.msk [vmem:[#allocation2 + $0x180] sm:$0xff] %vm1864, %v1817
        %1890 = vst.msk [vmem:[#allocation2 + $0x190] sm:$0xff] %vm1864, %v1819
        %1891 = vst.msk [vmem:[#allocation2 + $0x1a0] sm:$0xff] %vm1864, %v1821
        %1892 = vst.msk [vmem:[#allocation2 + $0x1b0] sm:$0xff] %vm1864, %v1823
        %1893 = vst.msk [vmem:[#allocation2 + $0x1c0] sm:$0xff] %vm1864, %v1825
        %1894 = vst.msk [vmem:[#allocation2 + $0x1d0] sm:$0xff] %vm1864, %v1827
        %1895 = vst.msk [vmem:[#allocation2 + $0x1e0] sm:$0xff] %vm1864, %v1829
        %1896 = vst.msk [vmem:[#allocation2 + $0x1f0] sm:$0xff] %vm1864, %v1831
        %v1897 = vrot.slane %v272, 2
        %v1898 = vrot.slane %v273, 2
        %v1899 = vsel %vm581, %v1897, %v1898
        %v1900 = vrot.slane %v274, 2
        %v1901 = vsel %vm581, %v1898, %v1900
        %1902 = vrot.lane.b32.xlu0 %v589, 36
        %v1903 = vpop.permute.xlu0 %1902
        %1904 = vrot.lane.b32.xlu0 %v591, 36
        %v1905 = vpop.permute.xlu0 %1904
        %1906 = vrot.lane.b32.xlu0 %v594, 36
        %v1907 = vpop.permute.xlu0 %1906
        %1908 = vrot.lane.b32.xlu0 %v596, 36
        %v1909 = vpop.permute.xlu0 %1908
        %1910 = vrot.lane.b32.xlu0 %v599, 36
        %v1911 = vpop.permute.xlu0 %1910
        %1912 = vrot.lane.b32.xlu0 %v601, 36
        %v1913 = vpop.permute.xlu0 %1912
        %1914 = vrot.lane.b32.xlu0 %v604, 36
        %v1915 = vpop.permute.xlu0 %1914
        %1916 = vrot.lane.b32.xlu0 %v606, 36
        %v1917 = vpop.permute.xlu0 %1916
        %1918 = vrot.lane.b32.xlu0 %v609, 36
        %v1919 = vpop.permute.xlu0 %1918
        %1920 = vrot.lane.b32.xlu0 %v611, 36
        %v1921 = vpop.permute.xlu0 %1920
        %1922 = vrot.lane.b32.xlu0 %v614, 36
        %v1923 = vpop.permute.xlu0 %1922
        %1924 = vrot.lane.b32.xlu0 %v616, 36
        %v1925 = vpop.permute.xlu0 %1924
        %1926 = vrot.lane.b32.xlu0 %v619, 36
        %v1927 = vpop.permute.xlu0 %1926
        %1928 = vrot.lane.b32.xlu0 %v621, 36
        %v1929 = vpop.permute.xlu0 %1928
        %1930 = vrot.lane.b32.xlu0 %v624, 36
        %v1931 = vpop.permute.xlu0 %1930
        %1932 = vrot.lane.b32.xlu0 %v626, 36
        %v1933 = vpop.permute.xlu0 %1932
        %1934 = vrot.lane.b32.xlu0 %v629, 36
        %v1935 = vpop.permute.xlu0 %1934
        %1936 = vrot.lane.b32.xlu0 %v631, 36
        %v1937 = vpop.permute.xlu0 %1936
        %1938 = vrot.lane.b32.xlu0 %v634, 36
        %v1939 = vpop.permute.xlu0 %1938
        %1940 = vrot.lane.b32.xlu0 %v636, 36
        %v1941 = vpop.permute.xlu0 %1940
        %1942 = vrot.lane.b32.xlu0 %v639, 36
        %v1943 = vpop.permute.xlu0 %1942
        %1944 = vrot.lane.b32.xlu0 %v641, 36
        %v1945 = vpop.permute.xlu0 %1944
        %1946 = vrot.lane.b32.xlu0 %v644, 36
        %v1947 = vpop.permute.xlu0 %1946
        %1948 = vrot.lane.b32.xlu0 %v646, 36
        %v1949 = vpop.permute.xlu0 %1948
        %1950 = vrot.lane.b32.xlu0 %v649, 36
        %v1951 = vpop.permute.xlu0 %1950
        %1952 = vrot.lane.b32.xlu0 %v651, 36
        %v1953 = vpop.permute.xlu0 %1952
        %1954 = vrot.lane.b32.xlu0 %v654, 36
        %v1955 = vpop.permute.xlu0 %1954
        %1956 = vrot.lane.b32.xlu0 %v656, 36
        %v1957 = vpop.permute.xlu0 %1956
        %1958 = vrot.lane.b32.xlu0 %v659, 36
        %v1959 = vpop.permute.xlu0 %1958
        %1960 = vrot.lane.b32.xlu0 %v661, 36
        %v1961 = vpop.permute.xlu0 %1960
        %1962 = vrot.lane.b32.xlu0 %v1899, 36
        %v1963 = vpop.permute.xlu0 %1962
        %1964 = vrot.lane.b32.xlu0 %v1901, 36
        %v1965 = vpop.permute.xlu0 %1964
        %vm1998 = vcmask 326944
        %1999 = vst.msk [vmem:[#allocation2] sm:$0xff] %vm1998, %v1903
        %2000 = vst.msk [vmem:[#allocation2 + $0x10] sm:$0xff] %vm1998, %v1905
        %2001 = vst.msk [vmem:[#allocation2 + $0x20] sm:$0xff] %vm1998, %v1907
        %2002 = vst.msk [vmem:[#allocation2 + $0x30] sm:$0xff] %vm1998, %v1909
        %2003 = vst.msk [vmem:[#allocation2 + $0x40] sm:$0xff] %vm1998, %v1911
        %2004 = vst.msk [vmem:[#allocation2 + $0x50] sm:$0xff] %vm1998, %v1913
        %2005 = vst.msk [vmem:[#allocation2 + $0x60] sm:$0xff] %vm1998, %v1915
        %2006 = vst.msk [vmem:[#allocation2 + $0x70] sm:$0xff] %vm1998, %v1917
        %2007 = vst.msk [vmem:[#allocation2 + $0x80] sm:$0xff] %vm1998, %v1919
        %2008 = vst.msk [vmem:[#allocation2 + $0x90] sm:$0xff] %vm1998, %v1921
        %2009 = vst.msk [vmem:[#allocation2 + $0xa0] sm:$0xff] %vm1998, %v1923
        %2010 = vst.msk [vmem:[#allocation2 + $0xb0] sm:$0xff] %vm1998, %v1925
        %2011 = vst.msk [vmem:[#allocation2 + $0xc0] sm:$0xff] %vm1998, %v1927
        %2012 = vst.msk [vmem:[#allocation2 + $0xd0] sm:$0xff] %vm1998, %v1929
        %2013 = vst.msk [vmem:[#allocation2 + $0xe0] sm:$0xff] %vm1998, %v1931
        %2014 = vst.msk [vmem:[#allocation2 + $0xf0] sm:$0xff] %vm1998, %v1933
        %2015 = vst.msk [vmem:[#allocation2 + $0x100] sm:$0xff] %vm1998, %v1935
        %2016 = vst.msk [vmem:[#allocation2 + $0x110] sm:$0xff] %vm1998, %v1937
        %2017 = vst.msk [vmem:[#allocation2 + $0x120] sm:$0xff] %vm1998, %v1939
        %2018 = vst.msk [vmem:[#allocation2 + $0x130] sm:$0xff] %vm1998, %v1941
        %2019 = vst.msk [vmem:[#allocation2 + $0x140] sm:$0xff] %vm1998, %v1943
        %2020 = vst.msk [vmem:[#allocation2 + $0x150] sm:$0xff] %vm1998, %v1945
        %2021 = vst.msk [vmem:[#allocation2 + $0x160] sm:$0xff] %vm1998, %v1947
        %2022 = vst.msk [vmem:[#allocation2 + $0x170] sm:$0xff] %vm1998, %v1949
        %2023 = vst.msk [vmem:[#allocation2 + $0x180] sm:$0xff] %vm1998, %v1951
        %2024 = vst.msk [vmem:[#allocation2 + $0x190] sm:$0xff] %vm1998, %v1953
        %2025 = vst.msk [vmem:[#allocation2 + $0x1a0] sm:$0xff] %vm1998, %v1955
        %2026 = vst.msk [vmem:[#allocation2 + $0x1b0] sm:$0xff] %vm1998, %v1957
        %2027 = vst.msk [vmem:[#allocation2 + $0x1c0] sm:$0xff] %vm1998, %v1959
        %2028 = vst.msk [vmem:[#allocation2 + $0x1d0] sm:$0xff] %vm1998, %v1961
        %2029 = vst.msk [vmem:[#allocation2 + $0x1e0] sm:$0xff] %vm1998, %v1963
        %2030 = vst.msk [vmem:[#allocation2 + $0x1f0] sm:$0xff] %vm1998, %v1965
        %v2031 = vrot.slane %v272, 3
        %v2032 = vrot.slane %v273, 3
        %v2033 = vsel %vm791, %v2031, %v2032
        %v2034 = vrot.slane %v274, 3
        %v2035 = vsel %vm791, %v2032, %v2034
        %2036 = vrot.lane.b32.xlu0 %v799, 40
        %v2037 = vpop.permute.xlu0 %2036
        %2038 = vrot.lane.b32.xlu0 %v801, 40
        %v2039 = vpop.permute.xlu0 %2038
        %2040 = vrot.lane.b32.xlu0 %v804, 40
        %v2041 = vpop.permute.xlu0 %2040
        %2042 = vrot.lane.b32.xlu0 %v806, 40
        %v2043 = vpop.permute.xlu0 %2042
        %2044 = vrot.lane.b32.xlu0 %v809, 40
        %v2045 = vpop.permute.xlu0 %2044
        %2046 = vrot.lane.b32.xlu0 %v811, 40
        %v2047 = vpop.permute.xlu0 %2046
        %2048 = vrot.lane.b32.xlu0 %v814, 40
        %v2049 = vpop.permute.xlu0 %2048
        %2050 = vrot.lane.b32.xlu0 %v816, 40
        %v2051 = vpop.permute.xlu0 %2050
        %2052 = vrot.lane.b32.xlu0 %v819, 40
        %v2053 = vpop.permute.xlu0 %2052
        %2054 = vrot.lane.b32.xlu0 %v821, 40
        %v2055 = vpop.permute.xlu0 %2054
        %2056 = vrot.lane.b32.xlu0 %v824, 40
        %v2057 = vpop.permute.xlu0 %2056
        %2058 = vrot.lane.b32.xlu0 %v826, 40
        %v2059 = vpop.permute.xlu0 %2058
        %2060 = vrot.lane.b32.xlu0 %v829, 40
        %v2061 = vpop.permute.xlu0 %2060
        %2062 = vrot.lane.b32.xlu0 %v831, 40
        %v2063 = vpop.permute.xlu0 %2062
        %2064 = vrot.lane.b32.xlu0 %v834, 40
        %v2065 = vpop.permute.xlu0 %2064
        %2066 = vrot.lane.b32.xlu0 %v836, 40
        %v2067 = vpop.permute.xlu0 %2066
        %2068 = vrot.lane.b32.xlu0 %v839, 40
        %v2069 = vpop.permute.xlu0 %2068
        %2070 = vrot.lane.b32.xlu0 %v841, 40
        %v2071 = vpop.permute.xlu0 %2070
        %2072 = vrot.lane.b32.xlu0 %v844, 40
        %v2073 = vpop.permute.xlu0 %2072
        %2074 = vrot.lane.b32.xlu0 %v846, 40
        %v2075 = vpop.permute.xlu0 %2074
        %2076 = vrot.lane.b32.xlu0 %v849, 40
        %v2077 = vpop.permute.xlu0 %2076
        %2078 = vrot.lane.b32.xlu0 %v851, 40
        %v2079 = vpop.permute.xlu0 %2078
        %2080 = vrot.lane.b32.xlu0 %v854, 40
        %v2081 = vpop.permute.xlu0 %2080
        %2082 = vrot.lane.b32.xlu0 %v856, 40
        %v2083 = vpop.permute.xlu0 %2082
        %2084 = vrot.lane.b32.xlu0 %v859, 40
        %v2085 = vpop.permute.xlu0 %2084
        %2086 = vrot.lane.b32.xlu0 %v861, 40
        %v2087 = vpop.permute.xlu0 %2086
        %2088 = vrot.lane.b32.xlu0 %v864, 40
        %v2089 = vpop.permute.xlu0 %2088
        %2090 = vrot.lane.b32.xlu0 %v866, 40
        %v2091 = vpop.permute.xlu0 %2090
        %2092 = vrot.lane.b32.xlu0 %v869, 40
        %v2093 = vpop.permute.xlu0 %2092
        %2094 = vrot.lane.b32.xlu0 %v871, 40
        %v2095 = vpop.permute.xlu0 %2094
        %2096 = vrot.lane.b32.xlu0 %v2033, 40
        %v2097 = vpop.permute.xlu0 %2096
        %2098 = vrot.lane.b32.xlu0 %v2035, 40
        %v2099 = vpop.permute.xlu0 %2098
        %vm2132 = vcmask 359744
        %2133 = vst.msk [vmem:[#allocation2] sm:$0xff] %vm2132, %v2037
        %2134 = vst.msk [vmem:[#allocation2 + $0x10] sm:$0xff] %vm2132, %v2039
        %2135 = vst.msk [vmem:[#allocation2 + $0x20] sm:$0xff] %vm2132, %v2041
        %2136 = vst.msk [vmem:[#allocation2 + $0x30] sm:$0xff] %vm2132, %v2043
        %2137 = vst.msk [vmem:[#allocation2 + $0x40] sm:$0xff] %vm2132, %v2045
        %2138 = vst.msk [vmem:[#allocation2 + $0x50] sm:$0xff] %vm2132, %v2047
        %2139 = vst.msk [vmem:[#allocation2 + $0x60] sm:$0xff] %vm2132, %v2049
        %2140 = vst.msk [vmem:[#allocation2 + $0x70] sm:$0xff] %vm2132, %v2051
        %2141 = vst.msk [vmem:[#allocation2 + $0x80] sm:$0xff] %vm2132, %v2053
        %2142 = vst.msk [vmem:[#allocation2 + $0x90] sm:$0xff] %vm2132, %v2055
        %2143 = vst.msk [vmem:[#allocation2 + $0xa0] sm:$0xff] %vm2132, %v2057
        %2144 = vst.msk [vmem:[#allocation2 + $0xb0] sm:$0xff] %vm2132, %v2059
        %2145 = vst.msk [vmem:[#allocation2 + $0xc0] sm:$0xff] %vm2132, %v2061
        %2146 = vst.msk [vmem:[#allocation2 + $0xd0] sm:$0xff] %vm2132, %v2063
        %2147 = vst.msk [vmem:[#allocation2 + $0xe0] sm:$0xff] %vm2132, %v2065
        %2148 = vst.msk [vmem:[#allocation2 + $0xf0] sm:$0xff] %vm2132, %v2067
        %2149 = vst.msk [vmem:[#allocation2 + $0x100] sm:$0xff] %vm2132, %v2069
        %2150 = vst.msk [vmem:[#allocation2 + $0x110] sm:$0xff] %vm2132, %v2071
        %2151 = vst.msk [vmem:[#allocation2 + $0x120] sm:$0xff] %vm2132, %v2073
        %2152 = vst.msk [vmem:[#allocation2 + $0x130] sm:$0xff] %vm2132, %v2075
        %2153 = vst.msk [vmem:[#allocation2 + $0x140] sm:$0xff] %vm2132, %v2077
        %2154 = vst.msk [vmem:[#allocation2 + $0x150] sm:$0xff] %vm2132, %v2079
        %2155 = vst.msk [vmem:[#allocation2 + $0x160] sm:$0xff] %vm2132, %v2081
        %2156 = vst.msk [vmem:[#allocation2 + $0x170] sm:$0xff] %vm2132, %v2083
        %2157 = vst.msk [vmem:[#allocation2 + $0x180] sm:$0xff] %vm2132, %v2085
        %2158 = vst.msk [vmem:[#allocation2 + $0x190] sm:$0xff] %vm2132, %v2087
        %2159 = vst.msk [vmem:[#allocation2 + $0x1a0] sm:$0xff] %vm2132, %v2089
        %2160 = vst.msk [vmem:[#allocation2 + $0x1b0] sm:$0xff] %vm2132, %v2091
        %2161 = vst.msk [vmem:[#allocation2 + $0x1c0] sm:$0xff] %vm2132, %v2093
        %2162 = vst.msk [vmem:[#allocation2 + $0x1d0] sm:$0xff] %vm2132, %v2095
        %2163 = vst.msk [vmem:[#allocation2 + $0x1e0] sm:$0xff] %vm2132, %v2097
        %2164 = vst.msk [vmem:[#allocation2 + $0x1f0] sm:$0xff] %vm2132, %v2099
        %v2165 = vrot.slane %v272, 4
        %v2166 = vrot.slane %v273, 4
        %v2167 = vsel %vm1001, %v2165, %v2166
        %v2168 = vrot.slane %v274, 4
        %v2169 = vsel %vm1001, %v2166, %v2168
        %2170 = vrot.lane.b32.xlu0 %v1009, 44
        %v2171 = vpop.permute.xlu0 %2170
        %2172 = vrot.lane.b32.xlu0 %v1011, 44
        %v2173 = vpop.permute.xlu0 %2172
        %2174 = vrot.lane.b32.xlu0 %v1014, 44
        %v2175 = vpop.permute.xlu0 %2174
        %2176 = vrot.lane.b32.xlu0 %v1016, 44
        %v2177 = vpop.permute.xlu0 %2176
        %2178 = vrot.lane.b32.xlu0 %v1019, 44
        %v2179 = vpop.permute.xlu0 %2178
        %2180 = vrot.lane.b32.xlu0 %v1021, 44
        %v2181 = vpop.permute.xlu0 %2180
        %2182 = vrot.lane.b32.xlu0 %v1024, 44
        %v2183 = vpop.permute.xlu0 %2182
        %2184 = vrot.lane.b32.xlu0 %v1026, 44
        %v2185 = vpop.permute.xlu0 %2184
        %2186 = vrot.lane.b32.xlu0 %v1029, 44
        %v2187 = vpop.permute.xlu0 %2186
        %2188 = vrot.lane.b32.xlu0 %v1031, 44
        %v2189 = vpop.permute.xlu0 %2188
        %2190 = vrot.lane.b32.xlu0 %v1034, 44
        %v2191 = vpop.permute.xlu0 %2190
        %2192 = vrot.lane.b32.xlu0 %v1036, 44
        %v2193 = vpop.permute.xlu0 %2192
        %2194 = vrot.lane.b32.xlu0 %v1039, 44
        %v2195 = vpop.permute.xlu0 %2194
        %2196 = vrot.lane.b32.xlu0 %v1041, 44
        %v2197 = vpop.permute.xlu0 %2196
        %2198 = vrot.lane.b32.xlu0 %v1044, 44
        %v2199 = vpop.permute.xlu0 %2198
        %2200 = vrot.lane.b32.xlu0 %v1046, 44
        %v2201 = vpop.permute.xlu0 %2200
        %2202 = vrot.lane.b32.xlu0 %v1049, 44
        %v2203 = vpop.permute.xlu0 %2202
        %2204 = vrot.lane.b32.xlu0 %v1051, 44
        %v2205 = vpop.permute.xlu0 %2204
        %2206 = vrot.lane.b32.xlu0 %v1054, 44
        %v2207 = vpop.permute.xlu0 %2206
        %2208 = vrot.lane.b32.xlu0 %v1056, 44
        %v2209 = vpop.permute.xlu0 %2208
        %2210 = vrot.lane.b32.xlu0 %v1059, 44
        %v2211 = vpop.permute.xlu0 %2210
        %2212 = vrot.lane.b32.xlu0 %v1061, 44
        %v2213 = vpop.permute.xlu0 %2212
        %2214 = vrot.lane.b32.xlu0 %v1064, 44
        %v2215 = vpop.permute.xlu0 %2214
        %2216 = vrot.lane.b32.xlu0 %v1066, 44
        %v2217 = vpop.permute.xlu0 %2216
        %2218 = vrot.lane.b32.xlu0 %v1069, 44
        %v2219 = vpop.permute.xlu0 %2218
        %2220 = vrot.lane.b32.xlu0 %v1071, 44
        %v2221 = vpop.permute.xlu0 %2220
        %2222 = vrot.lane.b32.xlu0 %v1074, 44
        %v2223 = vpop.permute.xlu0 %2222
        %2224 = vrot.lane.b32.xlu0 %v1076, 44
        %v2225 = vpop.permute.xlu0 %2224
        %2226 = vrot.lane.b32.xlu0 %v1079, 44
        %v2227 = vpop.permute.xlu0 %2226
        %2228 = vrot.lane.b32.xlu0 %v1081, 44
        %v2229 = vpop.permute.xlu0 %2228
        %2230 = vrot.lane.b32.xlu0 %v2167, 44
        %v2231 = vpop.permute.xlu0 %2230
        %2232 = vrot.lane.b32.xlu0 %v2169, 44
        %v2233 = vpop.permute.xlu0 %2232
        %vm2266 = vcmask 392544
        %2267 = vst.msk [vmem:[#allocation2] sm:$0xff] %vm2266, %v2171
        %2268 = vst.msk [vmem:[#allocation2 + $0x10] sm:$0xff] %vm2266, %v2173
        %2269 = vst.msk [vmem:[#allocation2 + $0x20] sm:$0xff] %vm2266, %v2175
        %2270 = vst.msk [vmem:[#allocation2 + $0x30] sm:$0xff] %vm2266, %v2177
        %2271 = vst.msk [vmem:[#allocation2 + $0x40] sm:$0xff] %vm2266, %v2179
        %2272 = vst.msk [vmem:[#allocation2 + $0x50] sm:$0xff] %vm2266, %v2181
        %2273 = vst.msk [vmem:[#allocation2 + $0x60] sm:$0xff] %vm2266, %v2183
        %2274 = vst.msk [vmem:[#allocation2 + $0x70] sm:$0xff] %vm2266, %v2185
        %2275 = vst.msk [vmem:[#allocation2 + $0x80] sm:$0xff] %vm2266, %v2187
        %2276 = vst.msk [vmem:[#allocation2 + $0x90] sm:$0xff] %vm2266, %v2189
        %2277 = vst.msk [vmem:[#allocation2 + $0xa0] sm:$0xff] %vm2266, %v2191
        %2278 = vst.msk [vmem:[#allocation2 + $0xb0] sm:$0xff] %vm2266, %v2193
        %2279 = vst.msk [vmem:[#allocation2 + $0xc0] sm:$0xff] %vm2266, %v2195
        %2280 = vst.msk [vmem:[#allocation2 + $0xd0] sm:$0xff] %vm2266, %v2197
        %2281 = vst.msk [vmem:[#allocation2 + $0xe0] sm:$0xff] %vm2266, %v2199
        %2282 = vst.msk [vmem:[#allocation2 + $0xf0] sm:$0xff] %vm2266, %v2201
        %2283 = vst.msk [vmem:[#allocation2 + $0x100] sm:$0xff] %vm2266, %v2203
        %2284 = vst.msk [vmem:[#allocation2 + $0x110] sm:$0xff] %vm2266, %v2205
        %2285 = vst.msk [vmem:[#allocation2 + $0x120] sm:$0xff] %vm2266, %v2207
        %2286 = vst.msk [vmem:[#allocation2 + $0x130] sm:$0xff] %vm2266, %v2209
        %2287 = vst.msk [vmem:[#allocation2 + $0x140] sm:$0xff] %vm2266, %v2211
        %2288 = vst.msk [vmem:[#allocation2 + $0x150] sm:$0xff] %vm2266, %v2213
        %2289 = vst.msk [vmem:[#allocation2 + $0x160] sm:$0xff] %vm2266, %v2215
        %2290 = vst.msk [vmem:[#allocation2 + $0x170] sm:$0xff] %vm2266, %v2217
        %2291 = vst.msk [vmem:[#allocation2 + $0x180] sm:$0xff] %vm2266, %v2219
        %2292 = vst.msk [vmem:[#allocation2 + $0x190] sm:$0xff] %vm2266, %v2221
        %2293 = vst.msk [vmem:[#allocation2 + $0x1a0] sm:$0xff] %vm2266, %v2223
        %2294 = vst.msk [vmem:[#allocation2 + $0x1b0] sm:$0xff] %vm2266, %v2225
        %2295 = vst.msk [vmem:[#allocation2 + $0x1c0] sm:$0xff] %vm2266, %v2227
        %2296 = vst.msk [vmem:[#allocation2 + $0x1d0] sm:$0xff] %vm2266, %v2229
        %2297 = vst.msk [vmem:[#allocation2 + $0x1e0] sm:$0xff] %vm2266, %v2231
        %2298 = vst.msk [vmem:[#allocation2 + $0x1f0] sm:$0xff] %vm2266, %v2233
        %v2299 = vrot.slane %v272, 5
        %v2300 = vrot.slane %v273, 5
        %v2301 = vsel %vm1211, %v2299, %v2300
        %v2302 = vrot.slane %v274, 5
        %v2303 = vsel %vm1211, %v2300, %v2302
        %2304 = vrot.lane.b32.xlu0 %v1219, 48
        %v2305 = vpop.permute.xlu0 %2304
        %2306 = vrot.lane.b32.xlu0 %v1221, 48
        %v2307 = vpop.permute.xlu0 %2306
        %2308 = vrot.lane.b32.xlu0 %v1224, 48
        %v2309 = vpop.permute.xlu0 %2308
        %2310 = vrot.lane.b32.xlu0 %v1226, 48
        %v2311 = vpop.permute.xlu0 %2310
        %2312 = vrot.lane.b32.xlu0 %v1229, 48
        %v2313 = vpop.permute.xlu0 %2312
        %2314 = vrot.lane.b32.xlu0 %v1231, 48
        %v2315 = vpop.permute.xlu0 %2314
        %2316 = vrot.lane.b32.xlu0 %v1234, 48
        %v2317 = vpop.permute.xlu0 %2316
        %2318 = vrot.lane.b32.xlu0 %v1236, 48
        %v2319 = vpop.permute.xlu0 %2318
        %2320 = vrot.lane.b32.xlu0 %v1239, 48
        %v2321 = vpop.permute.xlu0 %2320
        %2322 = vrot.lane.b32.xlu0 %v1241, 48
        %v2323 = vpop.permute.xlu0 %2322
        %2324 = vrot.lane.b32.xlu0 %v1244, 48
        %v2325 = vpop.permute.xlu0 %2324
        %2326 = vrot.lane.b32.xlu0 %v1246, 48
        %v2327 = vpop.permute.xlu0 %2326
        %2328 = vrot.lane.b32.xlu0 %v1249, 48
        %v2329 = vpop.permute.xlu0 %2328
        %2330 = vrot.lane.b32.xlu0 %v1251, 48
        %v2331 = vpop.permute.xlu0 %2330
        %2332 = vrot.lane.b32.xlu0 %v1254, 48
        %v2333 = vpop.permute.xlu0 %2332
        %2334 = vrot.lane.b32.xlu0 %v1256, 48
        %v2335 = vpop.permute.xlu0 %2334
        %2336 = vrot.lane.b32.xlu0 %v1259, 48
        %v2337 = vpop.permute.xlu0 %2336
        %2338 = vrot.lane.b32.xlu0 %v1261, 48
        %v2339 = vpop.permute.xlu0 %2338
        %2340 = vrot.lane.b32.xlu0 %v1264, 48
        %v2341 = vpop.permute.xlu0 %2340
        %2342 = vrot.lane.b32.xlu0 %v1266, 48
        %v2343 = vpop.permute.xlu0 %2342
        %2344 = vrot.lane.b32.xlu0 %v1269, 48
        %v2345 = vpop.permute.xlu0 %2344
        %2346 = vrot.lane.b32.xlu0 %v1271, 48
        %v2347 = vpop.permute.xlu0 %2346
        %2348 = vrot.lane.b32.xlu0 %v1274, 48
        %v2349 = vpop.permute.xlu0 %2348
        %2350 = vrot.lane.b32.xlu0 %v1276, 48
        %v2351 = vpop.permute.xlu0 %2350
        %2352 = vrot.lane.b32.xlu0 %v1279, 48
        %v2353 = vpop.permute.xlu0 %2352
        %2354 = vrot.lane.b32.xlu0 %v1281, 48
        %v2355 = vpop.permute.xlu0 %2354
        %2356 = vrot.lane.b32.xlu0 %v1284, 48
        %v2357 = vpop.permute.xlu0 %2356
        %2358 = vrot.lane.b32.xlu0 %v1286, 48
        %v2359 = vpop.permute.xlu0 %2358
        %2360 = vrot.lane.b32.xlu0 %v1289, 48
        %v2361 = vpop.permute.xlu0 %2360
        %2362 = vrot.lane.b32.xlu0 %v1291, 48
        %v2363 = vpop.permute.xlu0 %2362
        %2364 = vrot.lane.b32.xlu0 %v2301, 48
        %v2365 = vpop.permute.xlu0 %2364
        %2366 = vrot.lane.b32.xlu0 %v2303, 48
        %v2367 = vpop.permute.xlu0 %2366
        %vm2400 = vcmask 425344
        %2401 = vst.msk [vmem:[#allocation2] sm:$0xff] %vm2400, %v2305
        %2402 = vst.msk [vmem:[#allocation2 + $0x10] sm:$0xff] %vm2400, %v2307
        %2403 = vst.msk [vmem:[#allocation2 + $0x20] sm:$0xff] %vm2400, %v2309
        %2404 = vst.msk [vmem:[#allocation2 + $0x30] sm:$0xff] %vm2400, %v2311
        %2405 = vst.msk [vmem:[#allocation2 + $0x40] sm:$0xff] %vm2400, %v2313
        %2406 = vst.msk [vmem:[#allocation2 + $0x50] sm:$0xff] %vm2400, %v2315
        %2407 = vst.msk [vmem:[#allocation2 + $0x60] sm:$0xff] %vm2400, %v2317
        %2408 = vst.msk [vmem:[#allocation2 + $0x70] sm:$0xff] %vm2400, %v2319
        %2409 = vst.msk [vmem:[#allocation2 + $0x80] sm:$0xff] %vm2400, %v2321
        %2410 = vst.msk [vmem:[#allocation2 + $0x90] sm:$0xff] %vm2400, %v2323
        %2411 = vst.msk [vmem:[#allocation2 + $0xa0] sm:$0xff] %vm2400, %v2325
        %2412 = vst.msk [vmem:[#allocation2 + $0xb0] sm:$0xff] %vm2400, %v2327
        %2413 = vst.msk [vmem:[#allocation2 + $0xc0] sm:$0xff] %vm2400, %v2329
        %2414 = vst.msk [vmem:[#allocation2 + $0xd0] sm:$0xff] %vm2400, %v2331
        %2415 = vst.msk [vmem:[#allocation2 + $0xe0] sm:$0xff] %vm2400, %v2333
        %2416 = vst.msk [vmem:[#allocation2 + $0xf0] sm:$0xff] %vm2400, %v2335
        %2417 = vst.msk [vmem:[#allocation2 + $0x100] sm:$0xff] %vm2400, %v2337
        %2418 = vst.msk [vmem:[#allocation2 + $0x110] sm:$0xff] %vm2400, %v2339
        %2419 = vst.msk [vmem:[#allocation2 + $0x120] sm:$0xff] %vm2400, %v2341
        %2420 = vst.msk [vmem:[#allocation2 + $0x130] sm:$0xff] %vm2400, %v2343
        %2421 = vst.msk [vmem:[#allocation2 + $0x140] sm:$0xff] %vm2400, %v2345
        %2422 = vst.msk [vmem:[#allocation2 + $0x150] sm:$0xff] %vm2400, %v2347
        %2423 = vst.msk [vmem:[#allocation2 + $0x160] sm:$0xff] %vm2400, %v2349
        %2424 = vst.msk [vmem:[#allocation2 + $0x170] sm:$0xff] %vm2400, %v2351
        %2425 = vst.msk [vmem:[#allocation2 + $0x180] sm:$0xff] %vm2400, %v2353
        %2426 = vst.msk [vmem:[#allocation2 + $0x190] sm:$0xff] %vm2400, %v2355
        %2427 = vst.msk [vmem:[#allocation2 + $0x1a0] sm:$0xff] %vm2400, %v2357
        %2428 = vst.msk [vmem:[#allocation2 + $0x1b0] sm:$0xff] %vm2400, %v2359
        %2429 = vst.msk [vmem:[#allocation2 + $0x1c0] sm:$0xff] %vm2400, %v2361
        %2430 = vst.msk [vmem:[#allocation2 + $0x1d0] sm:$0xff] %vm2400, %v2363
        %2431 = vst.msk [vmem:[#allocation2 + $0x1e0] sm:$0xff] %vm2400, %v2365
        %2432 = vst.msk [vmem:[#allocation2 + $0x1f0] sm:$0xff] %vm2400, %v2367
        %v2433 = vrot.slane %v272, 6
        %v2434 = vrot.slane %v273, 6
        %v2435 = vsel %vm1421, %v2433, %v2434
        %v2436 = vrot.slane %v274, 6
        %v2437 = vsel %vm1421, %v2434, %v2436
        %2438 = vrot.lane.b32.xlu0 %v1429, 52
        %v2439 = vpop.permute.xlu0 %2438
        %2440 = vrot.lane.b32.xlu0 %v1431, 52
        %v2441 = vpop.permute.xlu0 %2440
        %2442 = vrot.lane.b32.xlu0 %v1434, 52
        %v2443 = vpop.permute.xlu0 %2442
        %2444 = vrot.lane.b32.xlu0 %v1436, 52
        %v2445 = vpop.permute.xlu0 %2444
        %2446 = vrot.lane.b32.xlu0 %v1439, 52
        %v2447 = vpop.permute.xlu0 %2446
        %2448 = vrot.lane.b32.xlu0 %v1441, 52
        %v2449 = vpop.permute.xlu0 %2448
        %2450 = vrot.lane.b32.xlu0 %v1444, 52
        %v2451 = vpop.permute.xlu0 %2450
        %2452 = vrot.lane.b32.xlu0 %v1446, 52
        %v2453 = vpop.permute.xlu0 %2452
        %2454 = vrot.lane.b32.xlu0 %v1449, 52
        %v2455 = vpop.permute.xlu0 %2454
        %2456 = vrot.lane.b32.xlu0 %v1451, 52
        %v2457 = vpop.permute.xlu0 %2456
        %2458 = vrot.lane.b32.xlu0 %v1454, 52
        %v2459 = vpop.permute.xlu0 %2458
        %2460 = vrot.lane.b32.xlu0 %v1456, 52
        %v2461 = vpop.permute.xlu0 %2460
        %2462 = vrot.lane.b32.xlu0 %v1459, 52
        %v2463 = vpop.permute.xlu0 %2462
        %2464 = vrot.lane.b32.xlu0 %v1461, 52
        %v2465 = vpop.permute.xlu0 %2464
        %2466 = vrot.lane.b32.xlu0 %v1464, 52
        %v2467 = vpop.permute.xlu0 %2466
        %2468 = vrot.lane.b32.xlu0 %v1466, 52
        %v2469 = vpop.permute.xlu0 %2468
        %2470 = vrot.lane.b32.xlu0 %v1469, 52
        %v2471 = vpop.permute.xlu0 %2470
        %2472 = vrot.lane.b32.xlu0 %v1471, 52
        %v2473 = vpop.permute.xlu0 %2472
        %2474 = vrot.lane.b32.xlu0 %v1474, 52
        %v2475 = vpop.permute.xlu0 %2474
        %2476 = vrot.lane.b32.xlu0 %v1476, 52
        %v2477 = vpop.permute.xlu0 %2476
        %2478 = vrot.lane.b32.xlu0 %v1479, 52
        %v2479 = vpop.permute.xlu0 %2478
        %2480 = vrot.lane.b32.xlu0 %v1481, 52
        %v2481 = vpop.permute.xlu0 %2480
        %2482 = vrot.lane.b32.xlu0 %v1484, 52
        %v2483 = vpop.permute.xlu0 %2482
        %2484 = vrot.lane.b32.xlu0 %v1486, 52
        %v2485 = vpop.permute.xlu0 %2484
        %2486 = vrot.lane.b32.xlu0 %v1489, 52
        %v2487 = vpop.permute.xlu0 %2486
        %2488 = vrot.lane.b32.xlu0 %v1491, 52
        %v2489 = vpop.permute.xlu0 %2488
        %2490 = vrot.lane.b32.xlu0 %v1494, 52
        %v2491 = vpop.permute.xlu0 %2490
        %2492 = vrot.lane.b32.xlu0 %v1496, 52
        %v2493 = vpop.permute.xlu0 %2492
        %2494 = vrot.lane.b32.xlu0 %v1499, 52
        %v2495 = vpop.permute.xlu0 %2494
        %2496 = vrot.lane.b32.xlu0 %v1501, 52
        %v2497 = vpop.permute.xlu0 %2496
        %2498 = vrot.lane.b32.xlu0 %v2435, 52
        %v2499 = vpop.permute.xlu0 %2498
        %2500 = vrot.lane.b32.xlu0 %v2437, 52
        %v2501 = vpop.permute.xlu0 %2500
        %vm2534 = vcmask 458144
        %2535 = vst.msk [vmem:[#allocation2] sm:$0xff] %vm2534, %v2439
        %2536 = vst.msk [vmem:[#allocation2 + $0x10] sm:$0xff] %vm2534, %v2441
        %2537 = vst.msk [vmem:[#allocation2 + $0x20] sm:$0xff] %vm2534, %v2443
        %2538 = vst.msk [vmem:[#allocation2 + $0x30] sm:$0xff] %vm2534, %v2445
        %2539 = vst.msk [vmem:[#allocation2 + $0x40] sm:$0xff] %vm2534, %v2447
        %2540 = vst.msk [vmem:[#allocation2 + $0x50] sm:$0xff] %vm2534, %v2449
        %2541 = vst.msk [vmem:[#allocation2 + $0x60] sm:$0xff] %vm2534, %v2451
        %2542 = vst.msk [vmem:[#allocation2 + $0x70] sm:$0xff] %vm2534, %v2453
        %2543 = vst.msk [vmem:[#allocation2 + $0x80] sm:$0xff] %vm2534, %v2455
        %2544 = vst.msk [vmem:[#allocation2 + $0x90] sm:$0xff] %vm2534, %v2457
        %2545 = vst.msk [vmem:[#allocation2 + $0xa0] sm:$0xff] %vm2534, %v2459
        %2546 = vst.msk [vmem:[#allocation2 + $0xb0] sm:$0xff] %vm2534, %v2461
        %2547 = vst.msk [vmem:[#allocation2 + $0xc0] sm:$0xff] %vm2534, %v2463
        %2548 = vst.msk [vmem:[#allocation2 + $0xd0] sm:$0xff] %vm2534, %v2465
        %2549 = vst.msk [vmem:[#allocation2 + $0xe0] sm:$0xff] %vm2534, %v2467
        %2550 = vst.msk [vmem:[#allocation2 + $0xf0] sm:$0xff] %vm2534, %v2469
        %2551 = vst.msk [vmem:[#allocation2 + $0x100] sm:$0xff] %vm2534, %v2471
        %2552 = vst.msk [vmem:[#allocation2 + $0x110] sm:$0xff] %vm2534, %v2473
        %2553 = vst.msk [vmem:[#allocation2 + $0x120] sm:$0xff] %vm2534, %v2475
        %2554 = vst.msk [vmem:[#allocation2 + $0x130] sm:$0xff] %vm2534, %v2477
        %2555 = vst.msk [vmem:[#allocation2 + $0x140] sm:$0xff] %vm2534, %v2479
        %2556 = vst.msk [vmem:[#allocation2 + $0x150] sm:$0xff] %vm2534, %v2481
        %2557 = vst.msk [vmem:[#allocation2 + $0x160] sm:$0xff] %vm2534, %v2483
        %2558 = vst.msk [vmem:[#allocation2 + $0x170] sm:$0xff] %vm2534, %v2485
        %2559 = vst.msk [vmem:[#allocation2 + $0x180] sm:$0xff] %vm2534, %v2487
        %2560 = vst.msk [vmem:[#allocation2 + $0x190] sm:$0xff] %vm2534, %v2489
        %2561 = vst.msk [vmem:[#allocation2 + $0x1a0] sm:$0xff] %vm2534, %v2491
        %2562 = vst.msk [vmem:[#allocation2 + $0x1b0] sm:$0xff] %vm2534, %v2493
        %2563 = vst.msk [vmem:[#allocation2 + $0x1c0] sm:$0xff] %vm2534, %v2495
        %2564 = vst.msk [vmem:[#allocation2 + $0x1d0] sm:$0xff] %vm2534, %v2497
        %2565 = vst.msk [vmem:[#allocation2 + $0x1e0] sm:$0xff] %vm2534, %v2499
        %2566 = vst.msk [vmem:[#allocation2 + $0x1f0] sm:$0xff] %vm2534, %v2501
        %2569 = vrot.lane.b32.xlu0 %v230, 56
        %v2570 = vpop.permute.xlu0 %2569
        %2571 = vrot.lane.b32.xlu0 %v231, 56
        %v2572 = vpop.permute.xlu0 %2571
        %2573 = vrot.lane.b32.xlu0 %v233, 56
        %v2574 = vpop.permute.xlu0 %2573
        %2575 = vrot.lane.b32.xlu0 %v234, 56
        %v2576 = vpop.permute.xlu0 %2575
        %2577 = vrot.lane.b32.xlu0 %v236, 56
        %v2578 = vpop.permute.xlu0 %2577
        %2579 = vrot.lane.b32.xlu0 %v237, 56
        %v2580 = vpop.permute.xlu0 %2579
        %2581 = vrot.lane.b32.xlu0 %v239, 56
        %v2582 = vpop.permute.xlu0 %2581
        %2583 = vrot.lane.b32.xlu0 %v240, 56
        %v2584 = vpop.permute.xlu0 %2583
        %2585 = vrot.lane.b32.xlu0 %v242, 56
        %v2586 = vpop.permute.xlu0 %2585
        %2587 = vrot.lane.b32.xlu0 %v243, 56
        %v2588 = vpop.permute.xlu0 %2587
        %2589 = vrot.lane.b32.xlu0 %v245, 56
        %v2590 = vpop.permute.xlu0 %2589
        %2591 = vrot.lane.b32.xlu0 %v246, 56
        %v2592 = vpop.permute.xlu0 %2591
        %2593 = vrot.lane.b32.xlu0 %v248, 56
        %v2594 = vpop.permute.xlu0 %2593
        %2595 = vrot.lane.b32.xlu0 %v249, 56
        %v2596 = vpop.permute.xlu0 %2595
        %2597 = vrot.lane.b32.xlu0 %v251, 56
        %v2598 = vpop.permute.xlu0 %2597
        %2599 = vrot.lane.b32.xlu0 %v252, 56
        %v2600 = vpop.permute.xlu0 %2599
        %2601 = vrot.lane.b32.xlu0 %v254, 56
        %v2602 = vpop.permute.xlu0 %2601
        %2603 = vrot.lane.b32.xlu0 %v255, 56
        %v2604 = vpop.permute.xlu0 %2603
        %2605 = vrot.lane.b32.xlu0 %v257, 56
        %v2606 = vpop.permute.xlu0 %2605
        %2607 = vrot.lane.b32.xlu0 %v258, 56
        %v2608 = vpop.permute.xlu0 %2607
        %2609 = vrot.lane.b32.xlu0 %v260, 56
        %v2610 = vpop.permute.xlu0 %2609
        %2611 = vrot.lane.b32.xlu0 %v261, 56
        %v2612 = vpop.permute.xlu0 %2611
        %2613 = vrot.lane.b32.xlu0 %v263, 56
        %v2614 = vpop.permute.xlu0 %2613
        %2615 = vrot.lane.b32.xlu0 %v264, 56
        %v2616 = vpop.permute.xlu0 %2615
        %2617 = vrot.lane.b32.xlu0 %v266, 56
        %v2618 = vpop.permute.xlu0 %2617
        %2619 = vrot.lane.b32.xlu0 %v267, 56
        %v2620 = vpop.permute.xlu0 %2619
        %2621 = vrot.lane.b32.xlu0 %v269, 56
        %v2622 = vpop.permute.xlu0 %2621
        %2623 = vrot.lane.b32.xlu0 %v270, 56
        %v2624 = vpop.permute.xlu0 %2623
        %2625 = vrot.lane.b32.xlu0 %v272, 56
        %v2626 = vpop.permute.xlu0 %2625
        %2627 = vrot.lane.b32.xlu0 %v273, 56
        %v2628 = vpop.permute.xlu0 %2627
        %2629 = vrot.lane.b32.xlu0 %v275, 56
        %v2630 = vpop.permute.xlu0 %2629
        %2631 = vrot.lane.b32.xlu0 %v276, 56
        %v2632 = vpop.permute.xlu0 %2631
        %vm2665 = vcmask 490944
        %2666 = vst.msk [vmem:[#allocation2] sm:$0xff] %vm2665, %v2570
        %2667 = vst.msk [vmem:[#allocation2 + $0x10] sm:$0xff] %vm2665, %v2572
        %2668 = vst.msk [vmem:[#allocation2 + $0x20] sm:$0xff] %vm2665, %v2574
        %2669 = vst.msk [vmem:[#allocation2 + $0x30] sm:$0xff] %vm2665, %v2576
        %2670 = vst.msk [vmem:[#allocation2 + $0x40] sm:$0xff] %vm2665, %v2578
        %2671 = vst.msk [vmem:[#allocation2 + $0x50] sm:$0xff] %vm2665, %v2580
        %2672 = vst.msk [vmem:[#allocation2 + $0x60] sm:$0xff] %vm2665, %v2582
        %2673 = vst.msk [vmem:[#allocation2 + $0x70] sm:$0xff] %vm2665, %v2584
        %2674 = vst.msk [vmem:[#allocation2 + $0x80] sm:$0xff] %vm2665, %v2586
        %2675 = vst.msk [vmem:[#allocation2 + $0x90] sm:$0xff] %vm2665, %v2588
        %2676 = vst.msk [vmem:[#allocation2 + $0xa0] sm:$0xff] %vm2665, %v2590
        %2677 = vst.msk [vmem:[#allocation2 + $0xb0] sm:$0xff] %vm2665, %v2592
        %2678 = vst.msk [vmem:[#allocation2 + $0xc0] sm:$0xff] %vm2665, %v2594
        %2679 = vst.msk [vmem:[#allocation2 + $0xd0] sm:$0xff] %vm2665, %v2596
        %2680 = vst.msk [vmem:[#allocation2 + $0xe0] sm:$0xff] %vm2665, %v2598
        %2681 = vst.msk [vmem:[#allocation2 + $0xf0] sm:$0xff] %vm2665, %v2600
        %2682 = vst.msk [vmem:[#allocation2 + $0x100] sm:$0xff] %vm2665, %v2602
        %2683 = vst.msk [vmem:[#allocation2 + $0x110] sm:$0xff] %vm2665, %v2604
        %2684 = vst.msk [vmem:[#allocation2 + $0x120] sm:$0xff] %vm2665, %v2606
        %2685 = vst.msk [vmem:[#allocation2 + $0x130] sm:$0xff] %vm2665, %v2608
        %2686 = vst.msk [vmem:[#allocation2 + $0x140] sm:$0xff] %vm2665, %v2610
        %2687 = vst.msk [vmem:[#allocation2 + $0x150] sm:$0xff] %vm2665, %v2612
        %2688 = vst.msk [vmem:[#allocation2 + $0x160] sm:$0xff] %vm2665, %v2614
        %2689 = vst.msk [vmem:[#allocation2 + $0x170] sm:$0xff] %vm2665, %v2616
        %2690 = vst.msk [vmem:[#allocation2 + $0x180] sm:$0xff] %vm2665, %v2618
        %2691 = vst.msk [vmem:[#allocation2 + $0x190] sm:$0xff] %vm2665, %v2620
        %2692 = vst.msk [vmem:[#allocation2 + $0x1a0] sm:$0xff] %vm2665, %v2622
        %2693 = vst.msk [vmem:[#allocation2 + $0x1b0] sm:$0xff] %vm2665, %v2624
        %2694 = vst.msk [vmem:[#allocation2 + $0x1c0] sm:$0xff] %vm2665, %v2626
        %2695 = vst.msk [vmem:[#allocation2 + $0x1d0] sm:$0xff] %vm2665, %v2628
        %2696 = vst.msk [vmem:[#allocation2 + $0x1e0] sm:$0xff] %vm2665, %v2630
        %2697 = vst.msk [vmem:[#allocation2 + $0x1f0] sm:$0xff] %vm2665, %v2632
        %v2699 = vrot.slane %v275, 1
        %v2700 = vrot.slane %v276, 1
        %v2701 = vsel %vm371, %v2699, %v2700
        %v2702 = vrot.slane %v277, 1
        %v2703 = vsel %vm371, %v2700, %v2702
        %2704 = vrot.lane.b32.xlu0 %v384, 60
        %v2705 = vpop.permute.xlu0 %2704
        %2706 = vrot.lane.b32.xlu0 %v386, 60
        %v2707 = vpop.permute.xlu0 %2706
        %2708 = vrot.lane.b32.xlu0 %v389, 60
        %v2709 = vpop.permute.xlu0 %2708
        %2710 = vrot.lane.b32.xlu0 %v391, 60
        %v2711 = vpop.permute.xlu0 %2710
        %2712 = vrot.lane.b32.xlu0 %v394, 60
        %v2713 = vpop.permute.xlu0 %2712
        %2714 = vrot.lane.b32.xlu0 %v396, 60
        %v2715 = vpop.permute.xlu0 %2714
        %2716 = vrot.lane.b32.xlu0 %v399, 60
        %v2717 = vpop.permute.xlu0 %2716
        %2718 = vrot.lane.b32.xlu0 %v401, 60
        %v2719 = vpop.permute.xlu0 %2718
        %2720 = vrot.lane.b32.xlu0 %v404, 60
        %v2721 = vpop.permute.xlu0 %2720
        %2722 = vrot.lane.b32.xlu0 %v406, 60
        %v2723 = vpop.permute.xlu0 %2722
        %2724 = vrot.lane.b32.xlu0 %v409, 60
        %v2725 = vpop.permute.xlu0 %2724
        %2726 = vrot.lane.b32.xlu0 %v411, 60
        %v2727 = vpop.permute.xlu0 %2726
        %2728 = vrot.lane.b32.xlu0 %v414, 60
        %v2729 = vpop.permute.xlu0 %2728
        %2730 = vrot.lane.b32.xlu0 %v416, 60
        %v2731 = vpop.permute.xlu0 %2730
        %2732 = vrot.lane.b32.xlu0 %v419, 60
        %v2733 = vpop.permute.xlu0 %2732
        %2734 = vrot.lane.b32.xlu0 %v421, 60
        %v2735 = vpop.permute.xlu0 %2734
        %2736 = vrot.lane.b32.xlu0 %v424, 60
        %v2737 = vpop.permute.xlu0 %2736
        %2738 = vrot.lane.b32.xlu0 %v426, 60
        %v2739 = vpop.permute.xlu0 %2738
        %2740 = vrot.lane.b32.xlu0 %v429, 60
        %v2741 = vpop.permute.xlu0 %2740
        %2742 = vrot.lane.b32.xlu0 %v431, 60
        %v2743 = vpop.permute.xlu0 %2742
        %2744 = vrot.lane.b32.xlu0 %v434, 60
        %v2745 = vpop.permute.xlu0 %2744
        %2746 = vrot.lane.b32.xlu0 %v436, 60
        %v2747 = vpop.permute.xlu0 %2746
        %2748 = vrot.lane.b32.xlu0 %v439, 60
        %v2749 = vpop.permute.xlu0 %2748
        %2750 = vrot.lane.b32.xlu0 %v441, 60
        %v2751 = vpop.permute.xlu0 %2750
        %2752 = vrot.lane.b32.xlu0 %v444, 60
        %v2753 = vpop.permute.xlu0 %2752
        %2754 = vrot.lane.b32.xlu0 %v446, 60
        %v2755 = vpop.permute.xlu0 %2754
        %2756 = vrot.lane.b32.xlu0 %v449, 60
        %v2757 = vpop.permute.xlu0 %2756
        %2758 = vrot.lane.b32.xlu0 %v451, 60
        %v2759 = vpop.permute.xlu0 %2758
        %2760 = vrot.lane.b32.xlu0 %v1765, 60
        %v2761 = vpop.permute.xlu0 %2760
        %2762 = vrot.lane.b32.xlu0 %v1767, 60
        %v2763 = vpop.permute.xlu0 %2762
        %2764 = vrot.lane.b32.xlu0 %v2701, 60
        %v2765 = vpop.permute.xlu0 %2764
        %2766 = vrot.lane.b32.xlu0 %v2703, 60
        %v2767 = vpop.permute.xlu0 %2766
        %vm2800 = vcmask 523744
        %2801 = vst.msk [vmem:[#allocation2] sm:$0xff] %vm2800, %v2705
        %2802 = vst.msk [vmem:[#allocation2 + $0x10] sm:$0xff] %vm2800, %v2707
        %2803 = vst.msk [vmem:[#allocation2 + $0x20] sm:$0xff] %vm2800, %v2709
        %2804 = vst.msk [vmem:[#allocation2 + $0x30] sm:$0xff] %vm2800, %v2711
        %2805 = vst.msk [vmem:[#allocation2 + $0x40] sm:$0xff] %vm2800, %v2713
        %2806 = vst.msk [vmem:[#allocation2 + $0x50] sm:$0xff] %vm2800, %v2715
        %2807 = vst.msk [vmem:[#allocation2 + $0x60] sm:$0xff] %vm2800, %v2717
        %2808 = vst.msk [vmem:[#allocation2 + $0x70] sm:$0xff] %vm2800, %v2719
        %2809 = vst.msk [vmem:[#allocation2 + $0x80] sm:$0xff] %vm2800, %v2721
        %2810 = vst.msk [vmem:[#allocation2 + $0x90] sm:$0xff] %vm2800, %v2723
        %2811 = vst.msk [vmem:[#allocation2 + $0xa0] sm:$0xff] %vm2800, %v2725
        %2812 = vst.msk [vmem:[#allocation2 + $0xb0] sm:$0xff] %vm2800, %v2727
        %2813 = vst.msk [vmem:[#allocation2 + $0xc0] sm:$0xff] %vm2800, %v2729
        %2814 = vst.msk [vmem:[#allocation2 + $0xd0] sm:$0xff] %vm2800, %v2731
        %2815 = vst.msk [vmem:[#allocation2 + $0xe0] sm:$0xff] %vm2800, %v2733
        %2816 = vst.msk [vmem:[#allocation2 + $0xf0] sm:$0xff] %vm2800, %v2735
        %2817 = vst.msk [vmem:[#allocation2 + $0x100] sm:$0xff] %vm2800, %v2737
        %2818 = vst.msk [vmem:[#allocation2 + $0x110] sm:$0xff] %vm2800, %v2739
        %2819 = vst.msk [vmem:[#allocation2 + $0x120] sm:$0xff] %vm2800, %v2741
        %2820 = vst.msk [vmem:[#allocation2 + $0x130] sm:$0xff] %vm2800, %v2743
        %2821 = vst.msk [vmem:[#allocation2 + $0x140] sm:$0xff] %vm2800, %v2745
        %2822 = vst.msk [vmem:[#allocation2 + $0x150] sm:$0xff] %vm2800, %v2747
        %2823 = vst.msk [vmem:[#allocation2 + $0x160] sm:$0xff] %vm2800, %v2749
        %2824 = vst.msk [vmem:[#allocation2 + $0x170] sm:$0xff] %vm2800, %v2751
        %2825 = vst.msk [vmem:[#allocation2 + $0x180] sm:$0xff] %vm2800, %v2753
        %2826 = vst.msk [vmem:[#allocation2 + $0x190] sm:$0xff] %vm2800, %v2755
        %2827 = vst.msk [vmem:[#allocation2 + $0x1a0] sm:$0xff] %vm2800, %v2757
        %2828 = vst.msk [vmem:[#allocation2 + $0x1b0] sm:$0xff] %vm2800, %v2759
        %2829 = vst.msk [vmem:[#allocation2 + $0x1c0] sm:$0xff] %vm2800, %v2761
        %2830 = vst.msk [vmem:[#allocation2 + $0x1d0] sm:$0xff] %vm2800, %v2763
        %2831 = vst.msk [vmem:[#allocation2 + $0x1e0] sm:$0xff] %vm2800, %v2765
        %2832 = vst.msk [vmem:[#allocation2 + $0x1f0] sm:$0xff] %vm2800, %v2767
        %v2833 = vrot.slane %v275, 2
        %v2834 = vrot.slane %v276, 2
        %v2835 = vsel %vm581, %v2833, %v2834
        %v2836 = vrot.slane %v277, 2
        %v2837 = vsel %vm581, %v2834, %v2836
        %2838 = vrot.lane.b32.xlu0 %v594, 64
        %v2839 = vpop.permute.xlu0 %2838
        %2840 = vrot.lane.b32.xlu0 %v596, 64
        %v2841 = vpop.permute.xlu0 %2840
        %2842 = vrot.lane.b32.xlu0 %v599, 64
        %v2843 = vpop.permute.xlu0 %2842
        %2844 = vrot.lane.b32.xlu0 %v601, 64
        %v2845 = vpop.permute.xlu0 %2844
        %2846 = vrot.lane.b32.xlu0 %v604, 64
        %v2847 = vpop.permute.xlu0 %2846
        %2848 = vrot.lane.b32.xlu0 %v606, 64
        %v2849 = vpop.permute.xlu0 %2848
        %2850 = vrot.lane.b32.xlu0 %v609, 64
        %v2851 = vpop.permute.xlu0 %2850
        %2852 = vrot.lane.b32.xlu0 %v611, 64
        %v2853 = vpop.permute.xlu0 %2852
        %2854 = vrot.lane.b32.xlu0 %v614, 64
        %v2855 = vpop.permute.xlu0 %2854
        %2856 = vrot.lane.b32.xlu0 %v616, 64
        %v2857 = vpop.permute.xlu0 %2856
        %2858 = vrot.lane.b32.xlu0 %v619, 64
        %v2859 = vpop.permute.xlu0 %2858
        %2860 = vrot.lane.b32.xlu0 %v621, 64
        %v2861 = vpop.permute.xlu0 %2860
        %2862 = vrot.lane.b32.xlu0 %v624, 64
        %v2863 = vpop.permute.xlu0 %2862
        %2864 = vrot.lane.b32.xlu0 %v626, 64
        %v2865 = vpop.permute.xlu0 %2864
        %2866 = vrot.lane.b32.xlu0 %v629, 64
        %v2867 = vpop.permute.xlu0 %2866
        %2868 = vrot.lane.b32.xlu0 %v631, 64
        %v2869 = vpop.permute.xlu0 %2868
        %2870 = vrot.lane.b32.xlu0 %v634, 64
        %v2871 = vpop.permute.xlu0 %2870
        %2872 = vrot.lane.b32.xlu0 %v636, 64
        %v2873 = vpop.permute.xlu0 %2872
        %2874 = vrot.lane.b32.xlu0 %v639, 64
        %v2875 = vpop.permute.xlu0 %2874
        %2876 = vrot.lane.b32.xlu0 %v641, 64
        %v2877 = vpop.permute.xlu0 %2876
        %2878 = vrot.lane.b32.xlu0 %v644, 64
        %v2879 = vpop.permute.xlu0 %2878
        %2880 = vrot.lane.b32.xlu0 %v646, 64
        %v2881 = vpop.permute.xlu0 %2880
        %2882 = vrot.lane.b32.xlu0 %v649, 64
        %v2883 = vpop.permute.xlu0 %2882
        %2884 = vrot.lane.b32.xlu0 %v651, 64
        %v2885 = vpop.permute.xlu0 %2884
        %2886 = vrot.lane.b32.xlu0 %v654, 64
        %v2887 = vpop.permute.xlu0 %2886
        %2888 = vrot.lane.b32.xlu0 %v656, 64
        %v2889 = vpop.permute.xlu0 %2888
        %2890 = vrot.lane.b32.xlu0 %v659, 64
        %v2891 = vpop.permute.xlu0 %2890
        %2892 = vrot.lane.b32.xlu0 %v661, 64
        %v2893 = vpop.permute.xlu0 %2892
        %2894 = vrot.lane.b32.xlu0 %v1899, 64
        %v2895 = vpop.permute.xlu0 %2894
        %2896 = vrot.lane.b32.xlu0 %v1901, 64
        %v2897 = vpop.permute.xlu0 %2896
        %2898 = vrot.lane.b32.xlu0 %v2835, 64
        %v2899 = vpop.permute.xlu0 %2898
        %2900 = vrot.lane.b32.xlu0 %v2837, 64
        %v2901 = vpop.permute.xlu0 %2900
        %vm2934 = vcmask 556544
        %2935 = vst.msk [vmem:[#allocation2] sm:$0xff] %vm2934, %v2839
        %2936 = vst.msk [vmem:[#allocation2 + $0x10] sm:$0xff] %vm2934, %v2841
        %2937 = vst.msk [vmem:[#allocation2 + $0x20] sm:$0xff] %vm2934, %v2843
        %2938 = vst.msk [vmem:[#allocation2 + $0x30] sm:$0xff] %vm2934, %v2845
        %2939 = vst.msk [vmem:[#allocation2 + $0x40] sm:$0xff] %vm2934, %v2847
        %2940 = vst.msk [vmem:[#allocation2 + $0x50] sm:$0xff] %vm2934, %v2849
        %2941 = vst.msk [vmem:[#allocation2 + $0x60] sm:$0xff] %vm2934, %v2851
        %2942 = vst.msk [vmem:[#allocation2 + $0x70] sm:$0xff] %vm2934, %v2853
        %2943 = vst.msk [vmem:[#allocation2 + $0x80] sm:$0xff] %vm2934, %v2855
        %2944 = vst.msk [vmem:[#allocation2 + $0x90] sm:$0xff] %vm2934, %v2857
        %2945 = vst.msk [vmem:[#allocation2 + $0xa0] sm:$0xff] %vm2934, %v2859
        %2946 = vst.msk [vmem:[#allocation2 + $0xb0] sm:$0xff] %vm2934, %v2861
        %2947 = vst.msk [vmem:[#allocation2 + $0xc0] sm:$0xff] %vm2934, %v2863
        %2948 = vst.msk [vmem:[#allocation2 + $0xd0] sm:$0xff] %vm2934, %v2865
        %2949 = vst.msk [vmem:[#allocation2 + $0xe0] sm:$0xff] %vm2934, %v2867
        %2950 = vst.msk [vmem:[#allocation2 + $0xf0] sm:$0xff] %vm2934, %v2869
        %2951 = vst.msk [vmem:[#allocation2 + $0x100] sm:$0xff] %vm2934, %v2871
        %2952 = vst.msk [vmem:[#allocation2 + $0x110] sm:$0xff] %vm2934, %v2873
        %2953 = vst.msk [vmem:[#allocation2 + $0x120] sm:$0xff] %vm2934, %v2875
        %2954 = vst.msk [vmem:[#allocation2 + $0x130] sm:$0xff] %vm2934, %v2877
        %2955 = vst.msk [vmem:[#allocation2 + $0x140] sm:$0xff] %vm2934, %v2879
        %2956 = vst.msk [vmem:[#allocation2 + $0x150] sm:$0xff] %vm2934, %v2881
        %2957 = vst.msk [vmem:[#allocation2 + $0x160] sm:$0xff] %vm2934, %v2883
        %2958 = vst.msk [vmem:[#allocation2 + $0x170] sm:$0xff] %vm2934, %v2885
        %2959 = vst.msk [vmem:[#allocation2 + $0x180] sm:$0xff] %vm2934, %v2887
        %2960 = vst.msk [vmem:[#allocation2 + $0x190] sm:$0xff] %vm2934, %v2889
        %2961 = vst.msk [vmem:[#allocation2 + $0x1a0] sm:$0xff] %vm2934, %v2891
        %2962 = vst.msk [vmem:[#allocation2 + $0x1b0] sm:$0xff] %vm2934, %v2893
        %2963 = vst.msk [vmem:[#allocation2 + $0x1c0] sm:$0xff] %vm2934, %v2895
        %2964 = vst.msk [vmem:[#allocation2 + $0x1d0] sm:$0xff] %vm2934, %v2897
        %2965 = vst.msk [vmem:[#allocation2 + $0x1e0] sm:$0xff] %vm2934, %v2899
        %2966 = vst.msk [vmem:[#allocation2 + $0x1f0] sm:$0xff] %vm2934, %v2901
        %v2967 = vrot.slane %v275, 3
        %v2968 = vrot.slane %v276, 3
        %v2969 = vsel %vm791, %v2967, %v2968
        %v2970 = vrot.slane %v277, 3
        %v2971 = vsel %vm791, %v2968, %v2970
        %2972 = vrot.lane.b32.xlu0 %v804, 68
        %v2973 = vpop.permute.xlu0 %2972
        %2974 = vrot.lane.b32.xlu0 %v806, 68
        %v2975 = vpop.permute.xlu0 %2974
        %2976 = vrot.lane.b32.xlu0 %v809, 68
        %v2977 = vpop.permute.xlu0 %2976
        %2978 = vrot.lane.b32.xlu0 %v811, 68
        %v2979 = vpop.permute.xlu0 %2978
        %2980 = vrot.lane.b32.xlu0 %v814, 68
        %v2981 = vpop.permute.xlu0 %2980
        %2982 = vrot.lane.b32.xlu0 %v816, 68
        %v2983 = vpop.permute.xlu0 %2982
        %2984 = vrot.lane.b32.xlu0 %v819, 68
        %v2985 = vpop.permute.xlu0 %2984
        %2986 = vrot.lane.b32.xlu0 %v821, 68
        %v2987 = vpop.permute.xlu0 %2986
        %2988 = vrot.lane.b32.xlu0 %v824, 68
        %v2989 = vpop.permute.xlu0 %2988
        %2990 = vrot.lane.b32.xlu0 %v826, 68
        %v2991 = vpop.permute.xlu0 %2990
        %2992 = vrot.lane.b32.xlu0 %v829, 68
        %v2993 = vpop.permute.xlu0 %2992
        %2994 = vrot.lane.b32.xlu0 %v831, 68
        %v2995 = vpop.permute.xlu0 %2994
        %2996 = vrot.lane.b32.xlu0 %v834, 68
        %v2997 = vpop.permute.xlu0 %2996
        %2998 = vrot.lane.b32.xlu0 %v836, 68
        %v2999 = vpop.permute.xlu0 %2998
        %3000 = vrot.lane.b32.xlu0 %v839, 68
        %v3001 = vpop.permute.xlu0 %3000
        %3002 = vrot.lane.b32.xlu0 %v841, 68
        %v3003 = vpop.permute.xlu0 %3002
        %3004 = vrot.lane.b32.xlu0 %v844, 68
        %v3005 = vpop.permute.xlu0 %3004
        %3006 = vrot.lane.b32.xlu0 %v846, 68
        %v3007 = vpop.permute.xlu0 %3006
        %3008 = vrot.lane.b32.xlu0 %v849, 68
        %v3009 = vpop.permute.xlu0 %3008
        %3010 = vrot.lane.b32.xlu0 %v851, 68
        %v3011 = vpop.permute.xlu0 %3010
        %3012 = vrot.lane.b32.xlu0 %v854, 68
        %v3013 = vpop.permute.xlu0 %3012
        %3014 = vrot.lane.b32.xlu0 %v856, 68
        %v3015 = vpop.permute.xlu0 %3014
        %3016 = vrot.lane.b32.xlu0 %v859, 68
        %v3017 = vpop.permute.xlu0 %3016
        %3018 = vrot.lane.b32.xlu0 %v861, 68
        %v3019 = vpop.permute.xlu0 %3018
        %3020 = vrot.lane.b32.xlu0 %v864, 68
        %v3021 = vpop.permute.xlu0 %3020
        %3022 = vrot.lane.b32.xlu0 %v866, 68
        %v3023 = vpop.permute.xlu0 %3022
        %3024 = vrot.lane.b32.xlu0 %v869, 68
        %v3025 = vpop.permute.xlu0 %3024
        %3026 = vrot.lane.b32.xlu0 %v871, 68
        %v3027 = vpop.permute.xlu0 %3026
        %3028 = vrot.lane.b32.xlu0 %v2033, 68
        %v3029 = vpop.permute.xlu0 %3028
        %3030 = vrot.lane.b32.xlu0 %v2035, 68
        %v3031 = vpop.permute.xlu0 %3030
        %3032 = vrot.lane.b32.xlu0 %v2969, 68
        %v3033 = vpop.permute.xlu0 %3032
        %3034 = vrot.lane.b32.xlu0 %v2971, 68
        %v3035 = vpop.permute.xlu0 %3034
        %vm3068 = vcmask 589344
        %3069 = vst.msk [vmem:[#allocation2] sm:$0xff] %vm3068, %v2973
        %3070 = vst.msk [vmem:[#allocation2 + $0x10] sm:$0xff] %vm3068, %v2975
        %3071 = vst.msk [vmem:[#allocation2 + $0x20] sm:$0xff] %vm3068, %v2977
        %3072 = vst.msk [vmem:[#allocation2 + $0x30] sm:$0xff] %vm3068, %v2979
        %3073 = vst.msk [vmem:[#allocation2 + $0x40] sm:$0xff] %vm3068, %v2981
        %3074 = vst.msk [vmem:[#allocation2 + $0x50] sm:$0xff] %vm3068, %v2983
        %3075 = vst.msk [vmem:[#allocation2 + $0x60] sm:$0xff] %vm3068, %v2985
        %3076 = vst.msk [vmem:[#allocation2 + $0x70] sm:$0xff] %vm3068, %v2987
        %3077 = vst.msk [vmem:[#allocation2 + $0x80] sm:$0xff] %vm3068, %v2989
        %3078 = vst.msk [vmem:[#allocation2 + $0x90] sm:$0xff] %vm3068, %v2991
        %3079 = vst.msk [vmem:[#allocation2 + $0xa0] sm:$0xff] %vm3068, %v2993
        %3080 = vst.msk [vmem:[#allocation2 + $0xb0] sm:$0xff] %vm3068, %v2995
        %3081 = vst.msk [vmem:[#allocation2 + $0xc0] sm:$0xff] %vm3068, %v2997
        %3082 = vst.msk [vmem:[#allocation2 + $0xd0] sm:$0xff] %vm3068, %v2999
        %3083 = vst.msk [vmem:[#allocation2 + $0xe0] sm:$0xff] %vm3068, %v3001
        %3084 = vst.msk [vmem:[#allocation2 + $0xf0] sm:$0xff] %vm3068, %v3003
        %3085 = vst.msk [vmem:[#allocation2 + $0x100] sm:$0xff] %vm3068, %v3005
        %3086 = vst.msk [vmem:[#allocation2 + $0x110] sm:$0xff] %vm3068, %v3007
        %3087 = vst.msk [vmem:[#allocation2 + $0x120] sm:$0xff] %vm3068, %v3009
        %3088 = vst.msk [vmem:[#allocation2 + $0x130] sm:$0xff] %vm3068, %v3011
        %3089 = vst.msk [vmem:[#allocation2 + $0x140] sm:$0xff] %vm3068, %v3013
        %3090 = vst.msk [vmem:[#allocation2 + $0x150] sm:$0xff] %vm3068, %v3015
        %3091 = vst.msk [vmem:[#allocation2 + $0x160] sm:$0xff] %vm3068, %v3017
        %3092 = vst.msk [vmem:[#allocation2 + $0x170] sm:$0xff] %vm3068, %v3019
        %3093 = vst.msk [vmem:[#allocation2 + $0x180] sm:$0xff] %vm3068, %v3021
        %3094 = vst.msk [vmem:[#allocation2 + $0x190] sm:$0xff] %vm3068, %v3023
        %3095 = vst.msk [vmem:[#allocation2 + $0x1a0] sm:$0xff] %vm3068, %v3025
        %3096 = vst.msk [vmem:[#allocation2 + $0x1b0] sm:$0xff] %vm3068, %v3027
        %3097 = vst.msk [vmem:[#allocation2 + $0x1c0] sm:$0xff] %vm3068, %v3029
        %3098 = vst.msk [vmem:[#allocation2 + $0x1d0] sm:$0xff] %vm3068, %v3031
        %3099 = vst.msk [vmem:[#allocation2 + $0x1e0] sm:$0xff] %vm3068, %v3033
        %3100 = vst.msk [vmem:[#allocation2 + $0x1f0] sm:$0xff] %vm3068, %v3035
        %v3101 = vrot.slane %v275, 4
        %v3102 = vrot.slane %v276, 4
        %v3103 = vsel %vm1001, %v3101, %v3102
        %v3104 = vrot.slane %v277, 4
        %v3105 = vsel %vm1001, %v3102, %v3104
        %3106 = vrot.lane.b32.xlu0 %v1014, 72
        %v3107 = vpop.permute.xlu0 %3106
        %3108 = vrot.lane.b32.xlu0 %v1016, 72
        %v3109 = vpop.permute.xlu0 %3108
        %3110 = vrot.lane.b32.xlu0 %v1019, 72
        %v3111 = vpop.permute.xlu0 %3110
        %3112 = vrot.lane.b32.xlu0 %v1021, 72
        %v3113 = vpop.permute.xlu0 %3112
        %3114 = vrot.lane.b32.xlu0 %v1024, 72
        %v3115 = vpop.permute.xlu0 %3114
        %3116 = vrot.lane.b32.xlu0 %v1026, 72
        %v3117 = vpop.permute.xlu0 %3116
        %3118 = vrot.lane.b32.xlu0 %v1029, 72
        %v3119 = vpop.permute.xlu0 %3118
        %3120 = vrot.lane.b32.xlu0 %v1031, 72
        %v3121 = vpop.permute.xlu0 %3120
        %3122 = vrot.lane.b32.xlu0 %v1034, 72
        %v3123 = vpop.permute.xlu0 %3122
        %3124 = vrot.lane.b32.xlu0 %v1036, 72
        %v3125 = vpop.permute.xlu0 %3124
        %3126 = vrot.lane.b32.xlu0 %v1039, 72
        %v3127 = vpop.permute.xlu0 %3126
        %3128 = vrot.lane.b32.xlu0 %v1041, 72
        %v3129 = vpop.permute.xlu0 %3128
        %3130 = vrot.lane.b32.xlu0 %v1044, 72
        %v3131 = vpop.permute.xlu0 %3130
        %3132 = vrot.lane.b32.xlu0 %v1046, 72
        %v3133 = vpop.permute.xlu0 %3132
        %3134 = vrot.lane.b32.xlu0 %v1049, 72
        %v3135 = vpop.permute.xlu0 %3134
        %3136 = vrot.lane.b32.xlu0 %v1051, 72
        %v3137 = vpop.permute.xlu0 %3136
        %3138 = vrot.lane.b32.xlu0 %v1054, 72
        %v3139 = vpop.permute.xlu0 %3138
        %3140 = vrot.lane.b32.xlu0 %v1056, 72
        %v3141 = vpop.permute.xlu0 %3140
        %3142 = vrot.lane.b32.xlu0 %v1059, 72
        %v3143 = vpop.permute.xlu0 %3142
        %3144 = vrot.lane.b32.xlu0 %v1061, 72
        %v3145 = vpop.permute.xlu0 %3144
        %3146 = vrot.lane.b32.xlu0 %v1064, 72
        %v3147 = vpop.permute.xlu0 %3146
        %3148 = vrot.lane.b32.xlu0 %v1066, 72
        %v3149 = vpop.permute.xlu0 %3148
        %3150 = vrot.lane.b32.xlu0 %v1069, 72
        %v3151 = vpop.permute.xlu0 %3150
        %3152 = vrot.lane.b32.xlu0 %v1071, 72
        %v3153 = vpop.permute.xlu0 %3152
        %3154 = vrot.lane.b32.xlu0 %v1074, 72
        %v3155 = vpop.permute.xlu0 %3154
        %3156 = vrot.lane.b32.xlu0 %v1076, 72
        %v3157 = vpop.permute.xlu0 %3156
        %3158 = vrot.lane.b32.xlu0 %v1079, 72
        %v3159 = vpop.permute.xlu0 %3158
        %3160 = vrot.lane.b32.xlu0 %v1081, 72
        %v3161 = vpop.permute.xlu0 %3160
        %3162 = vrot.lane.b32.xlu0 %v2167, 72
        %v3163 = vpop.permute.xlu0 %3162
        %3164 = vrot.lane.b32.xlu0 %v2169, 72
        %v3165 = vpop.permute.xlu0 %3164
        %3166 = vrot.lane.b32.xlu0 %v3103, 72
        %v3167 = vpop.permute.xlu0 %3166
        %3168 = vrot.lane.b32.xlu0 %v3105, 72
        %v3169 = vpop.permute.xlu0 %3168
        %vm3202 = vcmask 622144
        %3203 = vst.msk [vmem:[#allocation2] sm:$0xff] %vm3202, %v3107
        %3204 = vst.msk [vmem:[#allocation2 + $0x10] sm:$0xff] %vm3202, %v3109
        %3205 = vst.msk [vmem:[#allocation2 + $0x20] sm:$0xff] %vm3202, %v3111
        %3206 = vst.msk [vmem:[#allocation2 + $0x30] sm:$0xff] %vm3202, %v3113
        %3207 = vst.msk [vmem:[#allocation2 + $0x40] sm:$0xff] %vm3202, %v3115
        %3208 = vst.msk [vmem:[#allocation2 + $0x50] sm:$0xff] %vm3202, %v3117
        %3209 = vst.msk [vmem:[#allocation2 + $0x60] sm:$0xff] %vm3202, %v3119
        %3210 = vst.msk [vmem:[#allocation2 + $0x70] sm:$0xff] %vm3202, %v3121
        %3211 = vst.msk [vmem:[#allocation2 + $0x80] sm:$0xff] %vm3202, %v3123
        %3212 = vst.msk [vmem:[#allocation2 + $0x90] sm:$0xff] %vm3202, %v3125
        %3213 = vst.msk [vmem:[#allocation2 + $0xa0] sm:$0xff] %vm3202, %v3127
        %3214 = vst.msk [vmem:[#allocation2 + $0xb0] sm:$0xff] %vm3202, %v3129
        %3215 = vst.msk [vmem:[#allocation2 + $0xc0] sm:$0xff] %vm3202, %v3131
        %3216 = vst.msk [vmem:[#allocation2 + $0xd0] sm:$0xff] %vm3202, %v3133
        %3217 = vst.msk [vmem:[#allocation2 + $0xe0] sm:$0xff] %vm3202, %v3135
        %3218 = vst.msk [vmem:[#allocation2 + $0xf0] sm:$0xff] %vm3202, %v3137
        %3219 = vst.msk [vmem:[#allocation2 + $0x100] sm:$0xff] %vm3202, %v3139
        %3220 = vst.msk [vmem:[#allocation2 + $0x110] sm:$0xff] %vm3202, %v3141
        %3221 = vst.msk [vmem:[#allocation2 + $0x120] sm:$0xff] %vm3202, %v3143
        %3222 = vst.msk [vmem:[#allocation2 + $0x130] sm:$0xff] %vm3202, %v3145
        %3223 = vst.msk [vmem:[#allocation2 + $0x140] sm:$0xff] %vm3202, %v3147
        %3224 = vst.msk [vmem:[#allocation2 + $0x150] sm:$0xff] %vm3202, %v3149
        %3225 = vst.msk [vmem:[#allocation2 + $0x160] sm:$0xff] %vm3202, %v3151
        %3226 = vst.msk [vmem:[#allocation2 + $0x170] sm:$0xff] %vm3202, %v3153
        %3227 = vst.msk [vmem:[#allocation2 + $0x180] sm:$0xff] %vm3202, %v3155
        %3228 = vst.msk [vmem:[#allocation2 + $0x190] sm:$0xff] %vm3202, %v3157
        %3229 = vst.msk [vmem:[#allocation2 + $0x1a0] sm:$0xff] %vm3202, %v3159
        %3230 = vst.msk [vmem:[#allocation2 + $0x1b0] sm:$0xff] %vm3202, %v3161
        %3231 = vst.msk [vmem:[#allocation2 + $0x1c0] sm:$0xff] %vm3202, %v3163
        %3232 = vst.msk [vmem:[#allocation2 + $0x1d0] sm:$0xff] %vm3202, %v3165
        %3233 = vst.msk [vmem:[#allocation2 + $0x1e0] sm:$0xff] %vm3202, %v3167
        %3234 = vst.msk [vmem:[#allocation2 + $0x1f0] sm:$0xff] %vm3202, %v3169
        %v3235 = vrot.slane %v275, 5
        %v3236 = vrot.slane %v276, 5
        %v3237 = vsel %vm1211, %v3235, %v3236
        %v3238 = vrot.slane %v277, 5
        %v3239 = vsel %vm1211, %v3236, %v3238
        %3240 = vrot.lane.b32.xlu0 %v1224, 76
        %v3241 = vpop.permute.xlu0 %3240
        %3242 = vrot.lane.b32.xlu0 %v1226, 76
        %v3243 = vpop.permute.xlu0 %3242
        %3244 = vrot.lane.b32.xlu0 %v1229, 76
        %v3245 = vpop.permute.xlu0 %3244
        %3246 = vrot.lane.b32.xlu0 %v1231, 76
        %v3247 = vpop.permute.xlu0 %3246
        %3248 = vrot.lane.b32.xlu0 %v1234, 76
        %v3249 = vpop.permute.xlu0 %3248
        %3250 = vrot.lane.b32.xlu0 %v1236, 76
        %v3251 = vpop.permute.xlu0 %3250
        %3252 = vrot.lane.b32.xlu0 %v1239, 76
        %v3253 = vpop.permute.xlu0 %3252
        %3254 = vrot.lane.b32.xlu0 %v1241, 76
        %v3255 = vpop.permute.xlu0 %3254
        %3256 = vrot.lane.b32.xlu0 %v1244, 76
        %v3257 = vpop.permute.xlu0 %3256
        %3258 = vrot.lane.b32.xlu0 %v1246, 76
        %v3259 = vpop.permute.xlu0 %3258
        %3260 = vrot.lane.b32.xlu0 %v1249, 76
        %v3261 = vpop.permute.xlu0 %3260
        %3262 = vrot.lane.b32.xlu0 %v1251, 76
        %v3263 = vpop.permute.xlu0 %3262
        %3264 = vrot.lane.b32.xlu0 %v1254, 76
        %v3265 = vpop.permute.xlu0 %3264
        %3266 = vrot.lane.b32.xlu0 %v1256, 76
        %v3267 = vpop.permute.xlu0 %3266
        %3268 = vrot.lane.b32.xlu0 %v1259, 76
        %v3269 = vpop.permute.xlu0 %3268
        %3270 = vrot.lane.b32.xlu0 %v1261, 76
        %v3271 = vpop.permute.xlu0 %3270
        %3272 = vrot.lane.b32.xlu0 %v1264, 76
        %v3273 = vpop.permute.xlu0 %3272
        %3274 = vrot.lane.b32.xlu0 %v1266, 76
        %v3275 = vpop.permute.xlu0 %3274
        %3276 = vrot.lane.b32.xlu0 %v1269, 76
        %v3277 = vpop.permute.xlu0 %3276
        %3278 = vrot.lane.b32.xlu0 %v1271, 76
        %v3279 = vpop.permute.xlu0 %3278
        %3280 = vrot.lane.b32.xlu0 %v1274, 76
        %v3281 = vpop.permute.xlu0 %3280
        %3282 = vrot.lane.b32.xlu0 %v1276, 76
        %v3283 = vpop.permute.xlu0 %3282
        %3284 = vrot.lane.b32.xlu0 %v1279, 76
        %v3285 = vpop.permute.xlu0 %3284
        %3286 = vrot.lane.b32.xlu0 %v1281, 76
        %v3287 = vpop.permute.xlu0 %3286
        %3288 = vrot.lane.b32.xlu0 %v1284, 76
        %v3289 = vpop.permute.xlu0 %3288
        %3290 = vrot.lane.b32.xlu0 %v1286, 76
        %v3291 = vpop.permute.xlu0 %3290
        %3292 = vrot.lane.b32.xlu0 %v1289, 76
        %v3293 = vpop.permute.xlu0 %3292
        %3294 = vrot.lane.b32.xlu0 %v1291, 76
        %v3295 = vpop.permute.xlu0 %3294
        %3296 = vrot.lane.b32.xlu0 %v2301, 76
        %v3297 = vpop.permute.xlu0 %3296
        %3298 = vrot.lane.b32.xlu0 %v2303, 76
        %v3299 = vpop.permute.xlu0 %3298
        %3300 = vrot.lane.b32.xlu0 %v3237, 76
        %v3301 = vpop.permute.xlu0 %3300
        %3302 = vrot.lane.b32.xlu0 %v3239, 76
        %v3303 = vpop.permute.xlu0 %3302
        %vm3336 = vcmask 654944
        %3337 = vst.msk [vmem:[#allocation2] sm:$0xff] %vm3336, %v3241
        %3338 = vst.msk [vmem:[#allocation2 + $0x10] sm:$0xff] %vm3336, %v3243
        %3339 = vst.msk [vmem:[#allocation2 + $0x20] sm:$0xff] %vm3336, %v3245
        %3340 = vst.msk [vmem:[#allocation2 + $0x30] sm:$0xff] %vm3336, %v3247
        %3341 = vst.msk [vmem:[#allocation2 + $0x40] sm:$0xff] %vm3336, %v3249
        %3342 = vst.msk [vmem:[#allocation2 + $0x50] sm:$0xff] %vm3336, %v3251
        %3343 = vst.msk [vmem:[#allocation2 + $0x60] sm:$0xff] %vm3336, %v3253
        %3344 = vst.msk [vmem:[#allocation2 + $0x70] sm:$0xff] %vm3336, %v3255
        %3345 = vst.msk [vmem:[#allocation2 + $0x80] sm:$0xff] %vm3336, %v3257
        %3346 = vst.msk [vmem:[#allocation2 + $0x90] sm:$0xff] %vm3336, %v3259
        %3347 = vst.msk [vmem:[#allocation2 + $0xa0] sm:$0xff] %vm3336, %v3261
        %3348 = vst.msk [vmem:[#allocation2 + $0xb0] sm:$0xff] %vm3336, %v3263
        %3349 = vst.msk [vmem:[#allocation2 + $0xc0] sm:$0xff] %vm3336, %v3265
        %3350 = vst.msk [vmem:[#allocation2 + $0xd0] sm:$0xff] %vm3336, %v3267
        %3351 = vst.msk [vmem:[#allocation2 + $0xe0] sm:$0xff] %vm3336, %v3269
        %3352 = vst.msk [vmem:[#allocation2 + $0xf0] sm:$0xff] %vm3336, %v3271
        %3353 = vst.msk [vmem:[#allocation2 + $0x100] sm:$0xff] %vm3336, %v3273
        %3354 = vst.msk [vmem:[#allocation2 + $0x110] sm:$0xff] %vm3336, %v3275
        %3355 = vst.msk [vmem:[#allocation2 + $0x120] sm:$0xff] %vm3336, %v3277
        %3356 = vst.msk [vmem:[#allocation2 + $0x130] sm:$0xff] %vm3336, %v3279
        %3357 = vst.msk [vmem:[#allocation2 + $0x140] sm:$0xff] %vm3336, %v3281
        %3358 = vst.msk [vmem:[#allocation2 + $0x150] sm:$0xff] %vm3336, %v3283
        %3359 = vst.msk [vmem:[#allocation2 + $0x160] sm:$0xff] %vm3336, %v3285
        %3360 = vst.msk [vmem:[#allocation2 + $0x170] sm:$0xff] %vm3336, %v3287
        %3361 = vst.msk [vmem:[#allocation2 + $0x180] sm:$0xff] %vm3336, %v3289
        %3362 = vst.msk [vmem:[#allocation2 + $0x190] sm:$0xff] %vm3336, %v3291
        %3363 = vst.msk [vmem:[#allocation2 + $0x1a0] sm:$0xff] %vm3336, %v3293
        %3364 = vst.msk [vmem:[#allocation2 + $0x1b0] sm:$0xff] %vm3336, %v3295
        %3365 = vst.msk [vmem:[#allocation2 + $0x1c0] sm:$0xff] %vm3336, %v3297
        %3366 = vst.msk [vmem:[#allocation2 + $0x1d0] sm:$0xff] %vm3336, %v3299
        %3367 = vst.msk [vmem:[#allocation2 + $0x1e0] sm:$0xff] %vm3336, %v3301
        %3368 = vst.msk [vmem:[#allocation2 + $0x1f0] sm:$0xff] %vm3336, %v3303
        %v3369 = vrot.slane %v275, 6
        %v3370 = vrot.slane %v276, 6
        %v3371 = vsel %vm1421, %v3369, %v3370
        %v3372 = vrot.slane %v277, 6
        %v3373 = vsel %vm1421, %v3370, %v3372
        %3374 = vrot.lane.b32.xlu0 %v1434, 80
        %v3375 = vpop.permute.xlu0 %3374
        %3376 = vrot.lane.b32.xlu0 %v1436, 80
        %v3377 = vpop.permute.xlu0 %3376
        %3378 = vrot.lane.b32.xlu0 %v1439, 80
        %v3379 = vpop.permute.xlu0 %3378
        %3380 = vrot.lane.b32.xlu0 %v1441, 80
        %v3381 = vpop.permute.xlu0 %3380
        %3382 = vrot.lane.b32.xlu0 %v1444, 80
        %v3383 = vpop.permute.xlu0 %3382
        %3384 = vrot.lane.b32.xlu0 %v1446, 80
        %v3385 = vpop.permute.xlu0 %3384
        %3386 = vrot.lane.b32.xlu0 %v1449, 80
        %v3387 = vpop.permute.xlu0 %3386
        %3388 = vrot.lane.b32.xlu0 %v1451, 80
        %v3389 = vpop.permute.xlu0 %3388
        %3390 = vrot.lane.b32.xlu0 %v1454, 80
        %v3391 = vpop.permute.xlu0 %3390
        %3392 = vrot.lane.b32.xlu0 %v1456, 80
        %v3393 = vpop.permute.xlu0 %3392
        %3394 = vrot.lane.b32.xlu0 %v1459, 80
        %v3395 = vpop.permute.xlu0 %3394
        %3396 = vrot.lane.b32.xlu0 %v1461, 80
        %v3397 = vpop.permute.xlu0 %3396
        %3398 = vrot.lane.b32.xlu0 %v1464, 80
        %v3399 = vpop.permute.xlu0 %3398
        %3400 = vrot.lane.b32.xlu0 %v1466, 80
        %v3401 = vpop.permute.xlu0 %3400
        %3402 = vrot.lane.b32.xlu0 %v1469, 80
        %v3403 = vpop.permute.xlu0 %3402
        %3404 = vrot.lane.b32.xlu0 %v1471, 80
        %v3405 = vpop.permute.xlu0 %3404
        %3406 = vrot.lane.b32.xlu0 %v1474, 80
        %v3407 = vpop.permute.xlu0 %3406
        %3408 = vrot.lane.b32.xlu0 %v1476, 80
        %v3409 = vpop.permute.xlu0 %3408
        %3410 = vrot.lane.b32.xlu0 %v1479, 80
        %v3411 = vpop.permute.xlu0 %3410
        %3412 = vrot.lane.b32.xlu0 %v1481, 80
        %v3413 = vpop.permute.xlu0 %3412
        %3414 = vrot.lane.b32.xlu0 %v1484, 80
        %v3415 = vpop.permute.xlu0 %3414
        %3416 = vrot.lane.b32.xlu0 %v1486, 80
        %v3417 = vpop.permute.xlu0 %3416
        %3418 = vrot.lane.b32.xlu0 %v1489, 80
        %v3419 = vpop.permute.xlu0 %3418
        %3420 = vrot.lane.b32.xlu0 %v1491, 80
        %v3421 = vpop.permute.xlu0 %3420
        %3422 = vrot.lane.b32.xlu0 %v1494, 80
        %v3423 = vpop.permute.xlu0 %3422
        %3424 = vrot.lane.b32.xlu0 %v1496, 80
        %v3425 = vpop.permute.xlu0 %3424
        %3426 = vrot.lane.b32.xlu0 %v1499, 80
        %v3427 = vpop.permute.xlu0 %3426
        %3428 = vrot.lane.b32.xlu0 %v1501, 80
        %v3429 = vpop.permute.xlu0 %3428
        %3430 = vrot.lane.b32.xlu0 %v2435, 80
        %v3431 = vpop.permute.xlu0 %3430
        %3432 = vrot.lane.b32.xlu0 %v2437, 80
        %v3433 = vpop.permute.xlu0 %3432
        %3434 = vrot.lane.b32.xlu0 %v3371, 80
        %v3435 = vpop.permute.xlu0 %3434
        %3436 = vrot.lane.b32.xlu0 %v3373, 80
        %v3437 = vpop.permute.xlu0 %3436
        %vm3470 = vcmask 687744
        %3471 = vst.msk [vmem:[#allocation2] sm:$0xff] %vm3470, %v3375
        %3472 = vst.msk [vmem:[#allocation2 + $0x10] sm:$0xff] %vm3470, %v3377
        %3473 = vst.msk [vmem:[#allocation2 + $0x20] sm:$0xff] %vm3470, %v3379
        %3474 = vst.msk [vmem:[#allocation2 + $0x30] sm:$0xff] %vm3470, %v3381
        %3475 = vst.msk [vmem:[#allocation2 + $0x40] sm:$0xff] %vm3470, %v3383
        %3476 = vst.msk [vmem:[#allocation2 + $0x50] sm:$0xff] %vm3470, %v3385
        %3477 = vst.msk [vmem:[#allocation2 + $0x60] sm:$0xff] %vm3470, %v3387
        %3478 = vst.msk [vmem:[#allocation2 + $0x70] sm:$0xff] %vm3470, %v3389
        %3479 = vst.msk [vmem:[#allocation2 + $0x80] sm:$0xff] %vm3470, %v3391
        %3480 = vst.msk [vmem:[#allocation2 + $0x90] sm:$0xff] %vm3470, %v3393
        %3481 = vst.msk [vmem:[#allocation2 + $0xa0] sm:$0xff] %vm3470, %v3395
        %3482 = vst.msk [vmem:[#allocation2 + $0xb0] sm:$0xff] %vm3470, %v3397
        %3483 = vst.msk [vmem:[#allocation2 + $0xc0] sm:$0xff] %vm3470, %v3399
        %3484 = vst.msk [vmem:[#allocation2 + $0xd0] sm:$0xff] %vm3470, %v3401
        %3485 = vst.msk [vmem:[#allocation2 + $0xe0] sm:$0xff] %vm3470, %v3403
        %3486 = vst.msk [vmem:[#allocation2 + $0xf0] sm:$0xff] %vm3470, %v3405
        %3487 = vst.msk [vmem:[#allocation2 + $0x100] sm:$0xff] %vm3470, %v3407
        %3488 = vst.msk [vmem:[#allocation2 + $0x110] sm:$0xff] %vm3470, %v3409
        %3489 = vst.msk [vmem:[#allocation2 + $0x120] sm:$0xff] %vm3470, %v3411
        %3490 = vst.msk [vmem:[#allocation2 + $0x130] sm:$0xff] %vm3470, %v3413
        %3491 = vst.msk [vmem:[#allocation2 + $0x140] sm:$0xff] %vm3470, %v3415
        %3492 = vst.msk [vmem:[#allocation2 + $0x150] sm:$0xff] %vm3470, %v3417
        %3493 = vst.msk [vmem:[#allocation2 + $0x160] sm:$0xff] %vm3470, %v3419
        %3494 = vst.msk [vmem:[#allocation2 + $0x170] sm:$0xff] %vm3470, %v3421
        %3495 = vst.msk [vmem:[#allocation2 + $0x180] sm:$0xff] %vm3470, %v3423
        %3496 = vst.msk [vmem:[#allocation2 + $0x190] sm:$0xff] %vm3470, %v3425
        %3497 = vst.msk [vmem:[#allocation2 + $0x1a0] sm:$0xff] %vm3470, %v3427
        %3498 = vst.msk [vmem:[#allocation2 + $0x1b0] sm:$0xff] %vm3470, %v3429
        %3499 = vst.msk [vmem:[#allocation2 + $0x1c0] sm:$0xff] %vm3470, %v3431
        %3500 = vst.msk [vmem:[#allocation2 + $0x1d0] sm:$0xff] %vm3470, %v3433
        %3501 = vst.msk [vmem:[#allocation2 + $0x1e0] sm:$0xff] %vm3470, %v3435
        %3502 = vst.msk [vmem:[#allocation2 + $0x1f0] sm:$0xff] %vm3470, %v3437
        %3505 = vrot.lane.b32.xlu0 %v233, 84
        %v3506 = vpop.permute.xlu0 %3505
        %3507 = vrot.lane.b32.xlu0 %v234, 84
        %v3508 = vpop.permute.xlu0 %3507
        %3509 = vrot.lane.b32.xlu0 %v236, 84
        %v3510 = vpop.permute.xlu0 %3509
        %3511 = vrot.lane.b32.xlu0 %v237, 84
        %v3512 = vpop.permute.xlu0 %3511
        %3513 = vrot.lane.b32.xlu0 %v239, 84
        %v3514 = vpop.permute.xlu0 %3513
        %3515 = vrot.lane.b32.xlu0 %v240, 84
        %v3516 = vpop.permute.xlu0 %3515
        %3517 = vrot.lane.b32.xlu0 %v242, 84
        %v3518 = vpop.permute.xlu0 %3517
        %3519 = vrot.lane.b32.xlu0 %v243, 84
        %v3520 = vpop.permute.xlu0 %3519
        %3521 = vrot.lane.b32.xlu0 %v245, 84
        %v3522 = vpop.permute.xlu0 %3521
        %3523 = vrot.lane.b32.xlu0 %v246, 84
        %v3524 = vpop.permute.xlu0 %3523
        %3525 = vrot.lane.b32.xlu0 %v248, 84
        %v3526 = vpop.permute.xlu0 %3525
        %3527 = vrot.lane.b32.xlu0 %v249, 84
        %v3528 = vpop.permute.xlu0 %3527
        %3529 = vrot.lane.b32.xlu0 %v251, 84
        %v3530 = vpop.permute.xlu0 %3529
        %3531 = vrot.lane.b32.xlu0 %v252, 84
        %v3532 = vpop.permute.xlu0 %3531
        %3533 = vrot.lane.b32.xlu0 %v254, 84
        %v3534 = vpop.permute.xlu0 %3533
        %3535 = vrot.lane.b32.xlu0 %v255, 84
        %v3536 = vpop.permute.xlu0 %3535
        %3537 = vrot.lane.b32.xlu0 %v257, 84
        %v3538 = vpop.permute.xlu0 %3537
        %3539 = vrot.lane.b32.xlu0 %v258, 84
        %v3540 = vpop.permute.xlu0 %3539
        %3541 = vrot.lane.b32.xlu0 %v260, 84
        %v3542 = vpop.permute.xlu0 %3541
        %3543 = vrot.lane.b32.xlu0 %v261, 84
        %v3544 = vpop.permute.xlu0 %3543
        %3545 = vrot.lane.b32.xlu0 %v263, 84
        %v3546 = vpop.permute.xlu0 %3545
        %3547 = vrot.lane.b32.xlu0 %v264, 84
        %v3548 = vpop.permute.xlu0 %3547
        %3549 = vrot.lane.b32.xlu0 %v266, 84
        %v3550 = vpop.permute.xlu0 %3549
        %3551 = vrot.lane.b32.xlu0 %v267, 84
        %v3552 = vpop.permute.xlu0 %3551
        %3553 = vrot.lane.b32.xlu0 %v269, 84
        %v3554 = vpop.permute.xlu0 %3553
        %3555 = vrot.lane.b32.xlu0 %v270, 84
        %v3556 = vpop.permute.xlu0 %3555
        %3557 = vrot.lane.b32.xlu0 %v272, 84
        %v3558 = vpop.permute.xlu0 %3557
        %3559 = vrot.lane.b32.xlu0 %v273, 84
        %v3560 = vpop.permute.xlu0 %3559
        %3561 = vrot.lane.b32.xlu0 %v275, 84
        %v3562 = vpop.permute.xlu0 %3561
        %3563 = vrot.lane.b32.xlu0 %v276, 84
        %v3564 = vpop.permute.xlu0 %3563
        %3565 = vrot.lane.b32.xlu0 %v278, 84
        %v3566 = vpop.permute.xlu0 %3565
        %3567 = vrot.lane.b32.xlu0 %v279, 84
        %v3568 = vpop.permute.xlu0 %3567
        %vm3601 = vcmask 720544
        %3602 = vst.msk [vmem:[#allocation2] sm:$0xff] %vm3601, %v3506
        %3603 = vst.msk [vmem:[#allocation2 + $0x10] sm:$0xff] %vm3601, %v3508
        %3604 = vst.msk [vmem:[#allocation2 + $0x20] sm:$0xff] %vm3601, %v3510
        %3605 = vst.msk [vmem:[#allocation2 + $0x30] sm:$0xff] %vm3601, %v3512
        %3606 = vst.msk [vmem:[#allocation2 + $0x40] sm:$0xff] %vm3601, %v3514
        %3607 = vst.msk [vmem:[#allocation2 + $0x50] sm:$0xff] %vm3601, %v3516
        %3608 = vst.msk [vmem:[#allocation2 + $0x60] sm:$0xff] %vm3601, %v3518
        %3609 = vst.msk [vmem:[#allocation2 + $0x70] sm:$0xff] %vm3601, %v3520
        %3610 = vst.msk [vmem:[#allocation2 + $0x80] sm:$0xff] %vm3601, %v3522
        %3611 = vst.msk [vmem:[#allocation2 + $0x90] sm:$0xff] %vm3601, %v3524
        %3612 = vst.msk [vmem:[#allocation2 + $0xa0] sm:$0xff] %vm3601, %v3526
        %3613 = vst.msk [vmem:[#allocation2 + $0xb0] sm:$0xff] %vm3601, %v3528
        %3614 = vst.msk [vmem:[#allocation2 + $0xc0] sm:$0xff] %vm3601, %v3530
        %3615 = vst.msk [vmem:[#allocation2 + $0xd0] sm:$0xff] %vm3601, %v3532
        %3616 = vst.msk [vmem:[#allocation2 + $0xe0] sm:$0xff] %vm3601, %v3534
        %3617 = vst.msk [vmem:[#allocation2 + $0xf0] sm:$0xff] %vm3601, %v3536
        %3618 = vst.msk [vmem:[#allocation2 + $0x100] sm:$0xff] %vm3601, %v3538
        %3619 = vst.msk [vmem:[#allocation2 + $0x110] sm:$0xff] %vm3601, %v3540
        %3620 = vst.msk [vmem:[#allocation2 + $0x120] sm:$0xff] %vm3601, %v3542
        %3621 = vst.msk [vmem:[#allocation2 + $0x130] sm:$0xff] %vm3601, %v3544
        %3622 = vst.msk [vmem:[#allocation2 + $0x140] sm:$0xff] %vm3601, %v3546
        %3623 = vst.msk [vmem:[#allocation2 + $0x150] sm:$0xff] %vm3601, %v3548
        %3624 = vst.msk [vmem:[#allocation2 + $0x160] sm:$0xff] %vm3601, %v3550
        %3625 = vst.msk [vmem:[#allocation2 + $0x170] sm:$0xff] %vm3601, %v3552
        %3626 = vst.msk [vmem:[#allocation2 + $0x180] sm:$0xff] %vm3601, %v3554
        %3627 = vst.msk [vmem:[#allocation2 + $0x190] sm:$0xff] %vm3601, %v3556
        %3628 = vst.msk [vmem:[#allocation2 + $0x1a0] sm:$0xff] %vm3601, %v3558
        %3629 = vst.msk [vmem:[#allocation2 + $0x1b0] sm:$0xff] %vm3601, %v3560
        %3630 = vst.msk [vmem:[#allocation2 + $0x1c0] sm:$0xff] %vm3601, %v3562
        %3631 = vst.msk [vmem:[#allocation2 + $0x1d0] sm:$0xff] %vm3601, %v3564
        %3632 = vst.msk [vmem:[#allocation2 + $0x1e0] sm:$0xff] %vm3601, %v3566
        %3633 = vst.msk [vmem:[#allocation2 + $0x1f0] sm:$0xff] %vm3601, %v3568
        %v3635 = vrot.slane %v278, 1
        %v3636 = vrot.slane %v279, 1
        %v3637 = vsel %vm371, %v3635, %v3636
        %v3638 = vrot.slane %v280, 1
        %v3639 = vsel %vm371, %v3636, %v3638
        %3640 = vrot.lane.b32.xlu0 %v389, 88
        %v3641 = vpop.permute.xlu0 %3640
        %3642 = vrot.lane.b32.xlu0 %v391, 88
        %v3643 = vpop.permute.xlu0 %3642
        %3644 = vrot.lane.b32.xlu0 %v394, 88
        %v3645 = vpop.permute.xlu0 %3644
        %3646 = vrot.lane.b32.xlu0 %v396, 88
        %v3647 = vpop.permute.xlu0 %3646
        %3648 = vrot.lane.b32.xlu0 %v399, 88
        %v3649 = vpop.permute.xlu0 %3648
        %3650 = vrot.lane.b32.xlu0 %v401, 88
        %v3651 = vpop.permute.xlu0 %3650
        %3652 = vrot.lane.b32.xlu0 %v404, 88
        %v3653 = vpop.permute.xlu0 %3652
        %3654 = vrot.lane.b32.xlu0 %v406, 88
        %v3655 = vpop.permute.xlu0 %3654
        %3656 = vrot.lane.b32.xlu0 %v409, 88
        %v3657 = vpop.permute.xlu0 %3656
        %3658 = vrot.lane.b32.xlu0 %v411, 88
        %v3659 = vpop.permute.xlu0 %3658
        %3660 = vrot.lane.b32.xlu0 %v414, 88
        %v3661 = vpop.permute.xlu0 %3660
        %3662 = vrot.lane.b32.xlu0 %v416, 88
        %v3663 = vpop.permute.xlu0 %3662
        %3664 = vrot.lane.b32.xlu0 %v419, 88
        %v3665 = vpop.permute.xlu0 %3664
        %3666 = vrot.lane.b32.xlu0 %v421, 88
        %v3667 = vpop.permute.xlu0 %3666
        %3668 = vrot.lane.b32.xlu0 %v424, 88
        %v3669 = vpop.permute.xlu0 %3668
        %3670 = vrot.lane.b32.xlu0 %v426, 88
        %v3671 = vpop.permute.xlu0 %3670
        %3672 = vrot.lane.b32.xlu0 %v429, 88
        %v3673 = vpop.permute.xlu0 %3672
        %3674 = vrot.lane.b32.xlu0 %v431, 88
        %v3675 = vpop.permute.xlu0 %3674
        %3676 = vrot.lane.b32.xlu0 %v434, 88
        %v3677 = vpop.permute.xlu0 %3676
        %3678 = vrot.lane.b32.xlu0 %v436, 88
        %v3679 = vpop.permute.xlu0 %3678
        %3680 = vrot.lane.b32.xlu0 %v439, 88
        %v3681 = vpop.permute.xlu0 %3680
        %3682 = vrot.lane.b32.xlu0 %v441, 88
        %v3683 = vpop.permute.xlu0 %3682
        %3684 = vrot.lane.b32.xlu0 %v444, 88
        %v3685 = vpop.permute.xlu0 %3684
        %3686 = vrot.lane.b32.xlu0 %v446, 88
        %v3687 = vpop.permute.xlu0 %3686
        %3688 = vrot.lane.b32.xlu0 %v449, 88
        %v3689 = vpop.permute.xlu0 %3688
        %3690 = vrot.lane.b32.xlu0 %v451, 88
        %v3691 = vpop.permute.xlu0 %3690
        %3692 = vrot.lane.b32.xlu0 %v1765, 88
        %v3693 = vpop.permute.xlu0 %3692
        %3694 = vrot.lane.b32.xlu0 %v1767, 88
        %v3695 = vpop.permute.xlu0 %3694
        %3696 = vrot.lane.b32.xlu0 %v2701, 88
        %v3697 = vpop.permute.xlu0 %3696
        %3698 = vrot.lane.b32.xlu0 %v2703, 88
        %v3699 = vpop.permute.xlu0 %3698
        %3700 = vrot.lane.b32.xlu0 %v3637, 88
        %v3701 = vpop.permute.xlu0 %3700
        %3702 = vrot.lane.b32.xlu0 %v3639, 88
        %v3703 = vpop.permute.xlu0 %3702
        %vm3736 = vcmask 753344
        %3737 = vst.msk [vmem:[#allocation2] sm:$0xff] %vm3736, %v3641
        %3738 = vst.msk [vmem:[#allocation2 + $0x10] sm:$0xff] %vm3736, %v3643
        %3739 = vst.msk [vmem:[#allocation2 + $0x20] sm:$0xff] %vm3736, %v3645
        %3740 = vst.msk [vmem:[#allocation2 + $0x30] sm:$0xff] %vm3736, %v3647
        %3741 = vst.msk [vmem:[#allocation2 + $0x40] sm:$0xff] %vm3736, %v3649
        %3742 = vst.msk [vmem:[#allocation2 + $0x50] sm:$0xff] %vm3736, %v3651
        %3743 = vst.msk [vmem:[#allocation2 + $0x60] sm:$0xff] %vm3736, %v3653
        %3744 = vst.msk [vmem:[#allocation2 + $0x70] sm:$0xff] %vm3736, %v3655
        %3745 = vst.msk [vmem:[#allocation2 + $0x80] sm:$0xff] %vm3736, %v3657
        %3746 = vst.msk [vmem:[#allocation2 + $0x90] sm:$0xff] %vm3736, %v3659
        %3747 = vst.msk [vmem:[#allocation2 + $0xa0] sm:$0xff] %vm3736, %v3661
        %3748 = vst.msk [vmem:[#allocation2 + $0xb0] sm:$0xff] %vm3736, %v3663
        %3749 = vst.msk [vmem:[#allocation2 + $0xc0] sm:$0xff] %vm3736, %v3665
        %3750 = vst.msk [vmem:[#allocation2 + $0xd0] sm:$0xff] %vm3736, %v3667
        %3751 = vst.msk [vmem:[#allocation2 + $0xe0] sm:$0xff] %vm3736, %v3669
        %3752 = vst.msk [vmem:[#allocation2 + $0xf0] sm:$0xff] %vm3736, %v3671
        %3753 = vst.msk [vmem:[#allocation2 + $0x100] sm:$0xff] %vm3736, %v3673
        %3754 = vst.msk [vmem:[#allocation2 + $0x110] sm:$0xff] %vm3736, %v3675
        %3755 = vst.msk [vmem:[#allocation2 + $0x120] sm:$0xff] %vm3736, %v3677
        %3756 = vst.msk [vmem:[#allocation2 + $0x130] sm:$0xff] %vm3736, %v3679
        %3757 = vst.msk [vmem:[#allocation2 + $0x140] sm:$0xff] %vm3736, %v3681
        %3758 = vst.msk [vmem:[#allocation2 + $0x150] sm:$0xff] %vm3736, %v3683
        %3759 = vst.msk [vmem:[#allocation2 + $0x160] sm:$0xff] %vm3736, %v3685
        %3760 = vst.msk [vmem:[#allocation2 + $0x170] sm:$0xff] %vm3736, %v3687
        %3761 = vst.msk [vmem:[#allocation2 + $0x180] sm:$0xff] %vm3736, %v3689
        %3762 = vst.msk [vmem:[#allocation2 + $0x190] sm:$0xff] %vm3736, %v3691
        %3763 = vst.msk [vmem:[#allocation2 + $0x1a0] sm:$0xff] %vm3736, %v3693
        %3764 = vst.msk [vmem:[#allocation2 + $0x1b0] sm:$0xff] %vm3736, %v3695
        %3765 = vst.msk [vmem:[#allocation2 + $0x1c0] sm:$0xff] %vm3736, %v3697
        %3766 = vst.msk [vmem:[#allocation2 + $0x1d0] sm:$0xff] %vm3736, %v3699
        %3767 = vst.msk [vmem:[#allocation2 + $0x1e0] sm:$0xff] %vm3736, %v3701
        %3768 = vst.msk [vmem:[#allocation2 + $0x1f0] sm:$0xff] %vm3736, %v3703
        %v3769 = vrot.slane %v278, 2
        %v3770 = vrot.slane %v279, 2
        %v3771 = vsel %vm581, %v3769, %v3770
        %v3772 = vrot.slane %v280, 2
        %v3773 = vsel %vm581, %v3770, %v3772
        %3774 = vrot.lane.b32.xlu0 %v599, 92
        %v3775 = vpop.permute.xlu0 %3774
        %3776 = vrot.lane.b32.xlu0 %v601, 92
        %v3777 = vpop.permute.xlu0 %3776
        %3778 = vrot.lane.b32.xlu0 %v604, 92
        %v3779 = vpop.permute.xlu0 %3778
        %3780 = vrot.lane.b32.xlu0 %v606, 92
        %v3781 = vpop.permute.xlu0 %3780
        %3782 = vrot.lane.b32.xlu0 %v609, 92
        %v3783 = vpop.permute.xlu0 %3782
        %3784 = vrot.lane.b32.xlu0 %v611, 92
        %v3785 = vpop.permute.xlu0 %3784
        %3786 = vrot.lane.b32.xlu0 %v614, 92
        %v3787 = vpop.permute.xlu0 %3786
        %3788 = vrot.lane.b32.xlu0 %v616, 92
        %v3789 = vpop.permute.xlu0 %3788
        %3790 = vrot.lane.b32.xlu0 %v619, 92
        %v3791 = vpop.permute.xlu0 %3790
        %3792 = vrot.lane.b32.xlu0 %v621, 92
        %v3793 = vpop.permute.xlu0 %3792
        %3794 = vrot.lane.b32.xlu0 %v624, 92
        %v3795 = vpop.permute.xlu0 %3794
        %3796 = vrot.lane.b32.xlu0 %v626, 92
        %v3797 = vpop.permute.xlu0 %3796
        %3798 = vrot.lane.b32.xlu0 %v629, 92
        %v3799 = vpop.permute.xlu0 %3798
        %3800 = vrot.lane.b32.xlu0 %v631, 92
        %v3801 = vpop.permute.xlu0 %3800
        %3802 = vrot.lane.b32.xlu0 %v634, 92
        %v3803 = vpop.permute.xlu0 %3802
        %3804 = vrot.lane.b32.xlu0 %v636, 92
        %v3805 = vpop.permute.xlu0 %3804
        %3806 = vrot.lane.b32.xlu0 %v639, 92
        %v3807 = vpop.permute.xlu0 %3806
        %3808 = vrot.lane.b32.xlu0 %v641, 92
        %v3809 = vpop.permute.xlu0 %3808
        %3810 = vrot.lane.b32.xlu0 %v644, 92
        %v3811 = vpop.permute.xlu0 %3810
        %3812 = vrot.lane.b32.xlu0 %v646, 92
        %v3813 = vpop.permute.xlu0 %3812
        %3814 = vrot.lane.b32.xlu0 %v649, 92
        %v3815 = vpop.permute.xlu0 %3814
        %3816 = vrot.lane.b32.xlu0 %v651, 92
        %v3817 = vpop.permute.xlu0 %3816
        %3818 = vrot.lane.b32.xlu0 %v654, 92
        %v3819 = vpop.permute.xlu0 %3818
        %3820 = vrot.lane.b32.xlu0 %v656, 92
        %v3821 = vpop.permute.xlu0 %3820
        %3822 = vrot.lane.b32.xlu0 %v659, 92
        %v3823 = vpop.permute.xlu0 %3822
        %3824 = vrot.lane.b32.xlu0 %v661, 92
        %v3825 = vpop.permute.xlu0 %3824
        %3826 = vrot.lane.b32.xlu0 %v1899, 92
        %v3827 = vpop.permute.xlu0 %3826
        %3828 = vrot.lane.b32.xlu0 %v1901, 92
        %v3829 = vpop.permute.xlu0 %3828
        %3830 = vrot.lane.b32.xlu0 %v2835, 92
        %v3831 = vpop.permute.xlu0 %3830
        %3832 = vrot.lane.b32.xlu0 %v2837, 92
        %v3833 = vpop.permute.xlu0 %3832
        %3834 = vrot.lane.b32.xlu0 %v3771, 92
        %v3835 = vpop.permute.xlu0 %3834
        %3836 = vrot.lane.b32.xlu0 %v3773, 92
        %v3837 = vpop.permute.xlu0 %3836
        %vm3870 = vcmask 786144
        %3871 = vst.msk [vmem:[#allocation2] sm:$0xff] %vm3870, %v3775
        %3872 = vst.msk [vmem:[#allocation2 + $0x10] sm:$0xff] %vm3870, %v3777
        %3873 = vst.msk [vmem:[#allocation2 + $0x20] sm:$0xff] %vm3870, %v3779
        %3874 = vst.msk [vmem:[#allocation2 + $0x30] sm:$0xff] %vm3870, %v3781
        %3875 = vst.msk [vmem:[#allocation2 + $0x40] sm:$0xff] %vm3870, %v3783
        %3876 = vst.msk [vmem:[#allocation2 + $0x50] sm:$0xff] %vm3870, %v3785
        %3877 = vst.msk [vmem:[#allocation2 + $0x60] sm:$0xff] %vm3870, %v3787
        %3878 = vst.msk [vmem:[#allocation2 + $0x70] sm:$0xff] %vm3870, %v3789
        %3879 = vst.msk [vmem:[#allocation2 + $0x80] sm:$0xff] %vm3870, %v3791
        %3880 = vst.msk [vmem:[#allocation2 + $0x90] sm:$0xff] %vm3870, %v3793
        %3881 = vst.msk [vmem:[#allocation2 + $0xa0] sm:$0xff] %vm3870, %v3795
        %3882 = vst.msk [vmem:[#allocation2 + $0xb0] sm:$0xff] %vm3870, %v3797
        %3883 = vst.msk [vmem:[#allocation2 + $0xc0] sm:$0xff] %vm3870, %v3799
        %3884 = vst.msk [vmem:[#allocation2 + $0xd0] sm:$0xff] %vm3870, %v3801
        %3885 = vst.msk [vmem:[#allocation2 + $0xe0] sm:$0xff] %vm3870, %v3803
        %3886 = vst.msk [vmem:[#allocation2 + $0xf0] sm:$0xff] %vm3870, %v3805
        %3887 = vst.msk [vmem:[#allocation2 + $0x100] sm:$0xff] %vm3870, %v3807
        %3888 = vst.msk [vmem:[#allocation2 + $0x110] sm:$0xff] %vm3870, %v3809
        %3889 = vst.msk [vmem:[#allocation2 + $0x120] sm:$0xff] %vm3870, %v3811
        %3890 = vst.msk [vmem:[#allocation2 + $0x130] sm:$0xff] %vm3870, %v3813
        %3891 = vst.msk [vmem:[#allocation2 + $0x140] sm:$0xff] %vm3870, %v3815
        %3892 = vst.msk [vmem:[#allocation2 + $0x150] sm:$0xff] %vm3870, %v3817
        %3893 = vst.msk [vmem:[#allocation2 + $0x160] sm:$0xff] %vm3870, %v3819
        %3894 = vst.msk [vmem:[#allocation2 + $0x170] sm:$0xff] %vm3870, %v3821
        %3895 = vst.msk [vmem:[#allocation2 + $0x180] sm:$0xff] %vm3870, %v3823
        %3896 = vst.msk [vmem:[#allocation2 + $0x190] sm:$0xff] %vm3870, %v3825
        %3897 = vst.msk [vmem:[#allocation2 + $0x1a0] sm:$0xff] %vm3870, %v3827
        %3898 = vst.msk [vmem:[#allocation2 + $0x1b0] sm:$0xff] %vm3870, %v3829
        %3899 = vst.msk [vmem:[#allocation2 + $0x1c0] sm:$0xff] %vm3870, %v3831
        %3900 = vst.msk [vmem:[#allocation2 + $0x1d0] sm:$0xff] %vm3870, %v3833
        %3901 = vst.msk [vmem:[#allocation2 + $0x1e0] sm:$0xff] %vm3870, %v3835
        %3902 = vst.msk [vmem:[#allocation2 + $0x1f0] sm:$0xff] %vm3870, %v3837
        %v3903 = vrot.slane %v278, 3
        %v3904 = vrot.slane %v279, 3
        %v3905 = vsel %vm791, %v3903, %v3904
        %v3906 = vrot.slane %v280, 3
        %v3907 = vsel %vm791, %v3904, %v3906
        %3908 = vrot.lane.b32.xlu0 %v809, 96
        %v3909 = vpop.permute.xlu0 %3908
        %3910 = vrot.lane.b32.xlu0 %v811, 96
        %v3911 = vpop.permute.xlu0 %3910
        %3912 = vrot.lane.b32.xlu0 %v814, 96
        %v3913 = vpop.permute.xlu0 %3912
        %3914 = vrot.lane.b32.xlu0 %v816, 96
        %v3915 = vpop.permute.xlu0 %3914
        %3916 = vrot.lane.b32.xlu0 %v819, 96
        %v3917 = vpop.permute.xlu0 %3916
        %3918 = vrot.lane.b32.xlu0 %v821, 96
        %v3919 = vpop.permute.xlu0 %3918
        %3920 = vrot.lane.b32.xlu0 %v824, 96
        %v3921 = vpop.permute.xlu0 %3920
        %3922 = vrot.lane.b32.xlu0 %v826, 96
        %v3923 = vpop.permute.xlu0 %3922
        %3924 = vrot.lane.b32.xlu0 %v829, 96
        %v3925 = vpop.permute.xlu0 %3924
        %3926 = vrot.lane.b32.xlu0 %v831, 96
        %v3927 = vpop.permute.xlu0 %3926
        %3928 = vrot.lane.b32.xlu0 %v834, 96
        %v3929 = vpop.permute.xlu0 %3928
        %3930 = vrot.lane.b32.xlu0 %v836, 96
        %v3931 = vpop.permute.xlu0 %3930
        %3932 = vrot.lane.b32.xlu0 %v839, 96
        %v3933 = vpop.permute.xlu0 %3932
        %3934 = vrot.lane.b32.xlu0 %v841, 96
        %v3935 = vpop.permute.xlu0 %3934
        %3936 = vrot.lane.b32.xlu0 %v844, 96
        %v3937 = vpop.permute.xlu0 %3936
        %3938 = vrot.lane.b32.xlu0 %v846, 96
        %v3939 = vpop.permute.xlu0 %3938
        %3940 = vrot.lane.b32.xlu0 %v849, 96
        %v3941 = vpop.permute.xlu0 %3940
        %3942 = vrot.lane.b32.xlu0 %v851, 96
        %v3943 = vpop.permute.xlu0 %3942
        %3944 = vrot.lane.b32.xlu0 %v854, 96
        %v3945 = vpop.permute.xlu0 %3944
        %3946 = vrot.lane.b32.xlu0 %v856, 96
        %v3947 = vpop.permute.xlu0 %3946
        %3948 = vrot.lane.b32.xlu0 %v859, 96
        %v3949 = vpop.permute.xlu0 %3948
        %3950 = vrot.lane.b32.xlu0 %v861, 96
        %v3951 = vpop.permute.xlu0 %3950
        %3952 = vrot.lane.b32.xlu0 %v864, 96
        %v3953 = vpop.permute.xlu0 %3952
        %3954 = vrot.lane.b32.xlu0 %v866, 96
        %v3955 = vpop.permute.xlu0 %3954
        %3956 = vrot.lane.b32.xlu0 %v869, 96
        %v3957 = vpop.permute.xlu0 %3956
        %3958 = vrot.lane.b32.xlu0 %v871, 96
        %v3959 = vpop.permute.xlu0 %3958
        %3960 = vrot.lane.b32.xlu0 %v2033, 96
        %v3961 = vpop.permute.xlu0 %3960
        %3962 = vrot.lane.b32.xlu0 %v2035, 96
        %v3963 = vpop.permute.xlu0 %3962
        %3964 = vrot.lane.b32.xlu0 %v2969, 96
        %v3965 = vpop.permute.xlu0 %3964
        %3966 = vrot.lane.b32.xlu0 %v2971, 96
        %v3967 = vpop.permute.xlu0 %3966
        %3968 = vrot.lane.b32.xlu0 %v3905, 96
        %v3969 = vpop.permute.xlu0 %3968
        %3970 = vrot.lane.b32.xlu0 %v3907, 96
        %v3971 = vpop.permute.xlu0 %3970
        %vm4004 = vcmask 818944
        %4005 = vst.msk [vmem:[#allocation2] sm:$0xff] %vm4004, %v3909
        %4006 = vst.msk [vmem:[#allocation2 + $0x10] sm:$0xff] %vm4004, %v3911
        %4007 = vst.msk [vmem:[#allocation2 + $0x20] sm:$0xff] %vm4004, %v3913
        %4008 = vst.msk [vmem:[#allocation2 + $0x30] sm:$0xff] %vm4004, %v3915
        %4009 = vst.msk [vmem:[#allocation2 + $0x40] sm:$0xff] %vm4004, %v3917
        %4010 = vst.msk [vmem:[#allocation2 + $0x50] sm:$0xff] %vm4004, %v3919
        %4011 = vst.msk [vmem:[#allocation2 + $0x60] sm:$0xff] %vm4004, %v3921
        %4012 = vst.msk [vmem:[#allocation2 + $0x70] sm:$0xff] %vm4004, %v3923
        %4013 = vst.msk [vmem:[#allocation2 + $0x80] sm:$0xff] %vm4004, %v3925
        %4014 = vst.msk [vmem:[#allocation2 + $0x90] sm:$0xff] %vm4004, %v3927
        %4015 = vst.msk [vmem:[#allocation2 + $0xa0] sm:$0xff] %vm4004, %v3929
        %4016 = vst.msk [vmem:[#allocation2 + $0xb0] sm:$0xff] %vm4004, %v3931
        %4017 = vst.msk [vmem:[#allocation2 + $0xc0] sm:$0xff] %vm4004, %v3933
        %4018 = vst.msk [vmem:[#allocation2 + $0xd0] sm:$0xff] %vm4004, %v3935
        %4019 = vst.msk [vmem:[#allocation2 + $0xe0] sm:$0xff] %vm4004, %v3937
        %4020 = vst.msk [vmem:[#allocation2 + $0xf0] sm:$0xff] %vm4004, %v3939
        %4021 = vst.msk [vmem:[#allocation2 + $0x100] sm:$0xff] %vm4004, %v3941
        %4022 = vst.msk [vmem:[#allocation2 + $0x110] sm:$0xff] %vm4004, %v3943
        %4023 = vst.msk [vmem:[#allocation2 + $0x120] sm:$0xff] %vm4004, %v3945
        %4024 = vst.msk [vmem:[#allocation2 + $0x130] sm:$0xff] %vm4004, %v3947
        %4025 = vst.msk [vmem:[#allocation2 + $0x140] sm:$0xff] %vm4004, %v3949
        %4026 = vst.msk [vmem:[#allocation2 + $0x150] sm:$0xff] %vm4004, %v3951
        %4027 = vst.msk [vmem:[#allocation2 + $0x160] sm:$0xff] %vm4004, %v3953
        %4028 = vst.msk [vmem:[#allocation2 + $0x170] sm:$0xff] %vm4004, %v3955
        %4029 = vst.msk [vmem:[#allocation2 + $0x180] sm:$0xff] %vm4004, %v3957
        %4030 = vst.msk [vmem:[#allocation2 + $0x190] sm:$0xff] %vm4004, %v3959
        %4031 = vst.msk [vmem:[#allocation2 + $0x1a0] sm:$0xff] %vm4004, %v3961
        %4032 = vst.msk [vmem:[#allocation2 + $0x1b0] sm:$0xff] %vm4004, %v3963
        %4033 = vst.msk [vmem:[#allocation2 + $0x1c0] sm:$0xff] %vm4004, %v3965
        %4034 = vst.msk [vmem:[#allocation2 + $0x1d0] sm:$0xff] %vm4004, %v3967
        %4035 = vst.msk [vmem:[#allocation2 + $0x1e0] sm:$0xff] %vm4004, %v3969
        %4036 = vst.msk [vmem:[#allocation2 + $0x1f0] sm:$0xff] %vm4004, %v3971
        %v4037 = vrot.slane %v278, 4
        %v4038 = vrot.slane %v279, 4
        %v4039 = vsel %vm1001, %v4037, %v4038
        %v4040 = vrot.slane %v280, 4
        %v4041 = vsel %vm1001, %v4038, %v4040
        %4042 = vrot.lane.b32.xlu0 %v1019, 100
        %v4043 = vpop.permute.xlu0 %4042
        %4044 = vrot.lane.b32.xlu0 %v1021, 100
        %v4045 = vpop.permute.xlu0 %4044
        %4046 = vrot.lane.b32.xlu0 %v1024, 100
        %v4047 = vpop.permute.xlu0 %4046
        %4048 = vrot.lane.b32.xlu0 %v1026, 100
        %v4049 = vpop.permute.xlu0 %4048
        %4050 = vrot.lane.b32.xlu0 %v1029, 100
        %v4051 = vpop.permute.xlu0 %4050
        %4052 = vrot.lane.b32.xlu0 %v1031, 100
        %v4053 = vpop.permute.xlu0 %4052
        %4054 = vrot.lane.b32.xlu0 %v1034, 100
        %v4055 = vpop.permute.xlu0 %4054
        %4056 = vrot.lane.b32.xlu0 %v1036, 100
        %v4057 = vpop.permute.xlu0 %4056
        %4058 = vrot.lane.b32.xlu0 %v1039, 100
        %v4059 = vpop.permute.xlu0 %4058
        %4060 = vrot.lane.b32.xlu0 %v1041, 100
        %v4061 = vpop.permute.xlu0 %4060
        %4062 = vrot.lane.b32.xlu0 %v1044, 100
        %v4063 = vpop.permute.xlu0 %4062
        %4064 = vrot.lane.b32.xlu0 %v1046, 100
        %v4065 = vpop.permute.xlu0 %4064
        %4066 = vrot.lane.b32.xlu0 %v1049, 100
        %v4067 = vpop.permute.xlu0 %4066
        %4068 = vrot.lane.b32.xlu0 %v1051, 100
        %v4069 = vpop.permute.xlu0 %4068
        %4070 = vrot.lane.b32.xlu0 %v1054, 100
        %v4071 = vpop.permute.xlu0 %4070
        %4072 = vrot.lane.b32.xlu0 %v1056, 100
        %v4073 = vpop.permute.xlu0 %4072
        %4074 = vrot.lane.b32.xlu0 %v1059, 100
        %v4075 = vpop.permute.xlu0 %4074
        %4076 = vrot.lane.b32.xlu0 %v1061, 100
        %v4077 = vpop.permute.xlu0 %4076
        %4078 = vrot.lane.b32.xlu0 %v1064, 100
        %v4079 = vpop.permute.xlu0 %4078
        %4080 = vrot.lane.b32.xlu0 %v1066, 100
        %v4081 = vpop.permute.xlu0 %4080
        %4082 = vrot.lane.b32.xlu0 %v1069, 100
        %v4083 = vpop.permute.xlu0 %4082
        %4084 = vrot.lane.b32.xlu0 %v1071, 100
        %v4085 = vpop.permute.xlu0 %4084
        %4086 = vrot.lane.b32.xlu0 %v1074, 100
        %v4087 = vpop.permute.xlu0 %4086
        %4088 = vrot.lane.b32.xlu0 %v1076, 100
        %v4089 = vpop.permute.xlu0 %4088
        %4090 = vrot.lane.b32.xlu0 %v1079, 100
        %v4091 = vpop.permute.xlu0 %4090
        %4092 = vrot.lane.b32.xlu0 %v1081, 100
        %v4093 = vpop.permute.xlu0 %4092
        %4094 = vrot.lane.b32.xlu0 %v2167, 100
        %v4095 = vpop.permute.xlu0 %4094
        %4096 = vrot.lane.b32.xlu0 %v2169, 100
        %v4097 = vpop.permute.xlu0 %4096
        %4098 = vrot.lane.b32.xlu0 %v3103, 100
        %v4099 = vpop.permute.xlu0 %4098
        %4100 = vrot.lane.b32.xlu0 %v3105, 100
        %v4101 = vpop.permute.xlu0 %4100
        %4102 = vrot.lane.b32.xlu0 %v4039, 100
        %v4103 = vpop.permute.xlu0 %4102
        %4104 = vrot.lane.b32.xlu0 %v4041, 100
        %v4105 = vpop.permute.xlu0 %4104
        %vm4138 = vcmask 851744
        %4139 = vst.msk [vmem:[#allocation2] sm:$0xff] %vm4138, %v4043
        %4140 = vst.msk [vmem:[#allocation2 + $0x10] sm:$0xff] %vm4138, %v4045
        %4141 = vst.msk [vmem:[#allocation2 + $0x20] sm:$0xff] %vm4138, %v4047
        %4142 = vst.msk [vmem:[#allocation2 + $0x30] sm:$0xff] %vm4138, %v4049
        %4143 = vst.msk [vmem:[#allocation2 + $0x40] sm:$0xff] %vm4138, %v4051
        %4144 = vst.msk [vmem:[#allocation2 + $0x50] sm:$0xff] %vm4138, %v4053
        %4145 = vst.msk [vmem:[#allocation2 + $0x60] sm:$0xff] %vm4138, %v4055
        %4146 = vst.msk [vmem:[#allocation2 + $0x70] sm:$0xff] %vm4138, %v4057
        %4147 = vst.msk [vmem:[#allocation2 + $0x80] sm:$0xff] %vm4138, %v4059
        %4148 = vst.msk [vmem:[#allocation2 + $0x90] sm:$0xff] %vm4138, %v4061
        %4149 = vst.msk [vmem:[#allocation2 + $0xa0] sm:$0xff] %vm4138, %v4063
        %4150 = vst.msk [vmem:[#allocation2 + $0xb0] sm:$0xff] %vm4138, %v4065
        %4151 = vst.msk [vmem:[#allocation2 + $0xc0] sm:$0xff] %vm4138, %v4067
        %4152 = vst.msk [vmem:[#allocation2 + $0xd0] sm:$0xff] %vm4138, %v4069
        %4153 = vst.msk [vmem:[#allocation2 + $0xe0] sm:$0xff] %vm4138, %v4071
        %4154 = vst.msk [vmem:[#allocation2 + $0xf0] sm:$0xff] %vm4138, %v4073
        %4155 = vst.msk [vmem:[#allocation2 + $0x100] sm:$0xff] %vm4138, %v4075
        %4156 = vst.msk [vmem:[#allocation2 + $0x110] sm:$0xff] %vm4138, %v4077
        %4157 = vst.msk [vmem:[#allocation2 + $0x120] sm:$0xff] %vm4138, %v4079
        %4158 = vst.msk [vmem:[#allocation2 + $0x130] sm:$0xff] %vm4138, %v4081
        %4159 = vst.msk [vmem:[#allocation2 + $0x140] sm:$0xff] %vm4138, %v4083
        %4160 = vst.msk [vmem:[#allocation2 + $0x150] sm:$0xff] %vm4138, %v4085
        %4161 = vst.msk [vmem:[#allocation2 + $0x160] sm:$0xff] %vm4138, %v4087
        %4162 = vst.msk [vmem:[#allocation2 + $0x170] sm:$0xff] %vm4138, %v4089
        %4163 = vst.msk [vmem:[#allocation2 + $0x180] sm:$0xff] %vm4138, %v4091
        %4164 = vst.msk [vmem:[#allocation2 + $0x190] sm:$0xff] %vm4138, %v4093
        %4165 = vst.msk [vmem:[#allocation2 + $0x1a0] sm:$0xff] %vm4138, %v4095
        %4166 = vst.msk [vmem:[#allocation2 + $0x1b0] sm:$0xff] %vm4138, %v4097
        %4167 = vst.msk [vmem:[#allocation2 + $0x1c0] sm:$0xff] %vm4138, %v4099
        %4168 = vst.msk [vmem:[#allocation2 + $0x1d0] sm:$0xff] %vm4138, %v4101
        %4169 = vst.msk [vmem:[#allocation2 + $0x1e0] sm:$0xff] %vm4138, %v4103
        %4170 = vst.msk [vmem:[#allocation2 + $0x1f0] sm:$0xff] %vm4138, %v4105
        %v4171 = vrot.slane %v278, 5
        %v4172 = vrot.slane %v279, 5
        %v4173 = vsel %vm1211, %v4171, %v4172
        %v4174 = vrot.slane %v280, 5
        %v4175 = vsel %vm1211, %v4172, %v4174
        %4176 = vrot.lane.b32.xlu0 %v1229, 104
        %v4177 = vpop.permute.xlu0 %4176
        %4178 = vrot.lane.b32.xlu0 %v1231, 104
        %v4179 = vpop.permute.xlu0 %4178
        %4180 = vrot.lane.b32.xlu0 %v1234, 104
        %v4181 = vpop.permute.xlu0 %4180
        %4182 = vrot.lane.b32.xlu0 %v1236, 104
        %v4183 = vpop.permute.xlu0 %4182
        %4184 = vrot.lane.b32.xlu0 %v1239, 104
        %v4185 = vpop.permute.xlu0 %4184
        %4186 = vrot.lane.b32.xlu0 %v1241, 104
        %v4187 = vpop.permute.xlu0 %4186
        %4188 = vrot.lane.b32.xlu0 %v1244, 104
        %v4189 = vpop.permute.xlu0 %4188
        %4190 = vrot.lane.b32.xlu0 %v1246, 104
        %v4191 = vpop.permute.xlu0 %4190
        %4192 = vrot.lane.b32.xlu0 %v1249, 104
        %v4193 = vpop.permute.xlu0 %4192
        %4194 = vrot.lane.b32.xlu0 %v1251, 104
        %v4195 = vpop.permute.xlu0 %4194
        %4196 = vrot.lane.b32.xlu0 %v1254, 104
        %v4197 = vpop.permute.xlu0 %4196
        %4198 = vrot.lane.b32.xlu0 %v1256, 104
        %v4199 = vpop.permute.xlu0 %4198
        %4200 = vrot.lane.b32.xlu0 %v1259, 104
        %v4201 = vpop.permute.xlu0 %4200
        %4202 = vrot.lane.b32.xlu0 %v1261, 104
        %v4203 = vpop.permute.xlu0 %4202
        %4204 = vrot.lane.b32.xlu0 %v1264, 104
        %v4205 = vpop.permute.xlu0 %4204
        %4206 = vrot.lane.b32.xlu0 %v1266, 104
        %v4207 = vpop.permute.xlu0 %4206
        %4208 = vrot.lane.b32.xlu0 %v1269, 104
        %v4209 = vpop.permute.xlu0 %4208
        %4210 = vrot.lane.b32.xlu0 %v1271, 104
        %v4211 = vpop.permute.xlu0 %4210
        %4212 = vrot.lane.b32.xlu0 %v1274, 104
        %v4213 = vpop.permute.xlu0 %4212
        %4214 = vrot.lane.b32.xlu0 %v1276, 104
        %v4215 = vpop.permute.xlu0 %4214
        %4216 = vrot.lane.b32.xlu0 %v1279, 104
        %v4217 = vpop.permute.xlu0 %4216
        %4218 = vrot.lane.b32.xlu0 %v1281, 104
        %v4219 = vpop.permute.xlu0 %4218
        %4220 = vrot.lane.b32.xlu0 %v1284, 104
        %v4221 = vpop.permute.xlu0 %4220
        %4222 = vrot.lane.b32.xlu0 %v1286, 104
        %v4223 = vpop.permute.xlu0 %4222
        %4224 = vrot.lane.b32.xlu0 %v1289, 104
        %v4225 = vpop.permute.xlu0 %4224
        %4226 = vrot.lane.b32.xlu0 %v1291, 104
        %v4227 = vpop.permute.xlu0 %4226
        %4228 = vrot.lane.b32.xlu0 %v2301, 104
        %v4229 = vpop.permute.xlu0 %4228
        %4230 = vrot.lane.b32.xlu0 %v2303, 104
        %v4231 = vpop.permute.xlu0 %4230
        %4232 = vrot.lane.b32.xlu0 %v3237, 104
        %v4233 = vpop.permute.xlu0 %4232
        %4234 = vrot.lane.b32.xlu0 %v3239, 104
        %v4235 = vpop.permute.xlu0 %4234
        %4236 = vrot.lane.b32.xlu0 %v4173, 104
        %v4237 = vpop.permute.xlu0 %4236
        %4238 = vrot.lane.b32.xlu0 %v4175, 104
        %v4239 = vpop.permute.xlu0 %4238
        %vm4272 = vcmask 884544
        %4273 = vst.msk [vmem:[#allocation2] sm:$0xff] %vm4272, %v4177
        %4274 = vst.msk [vmem:[#allocation2 + $0x10] sm:$0xff] %vm4272, %v4179
        %4275 = vst.msk [vmem:[#allocation2 + $0x20] sm:$0xff] %vm4272, %v4181
        %4276 = vst.msk [vmem:[#allocation2 + $0x30] sm:$0xff] %vm4272, %v4183
        %4277 = vst.msk [vmem:[#allocation2 + $0x40] sm:$0xff] %vm4272, %v4185
        %4278 = vst.msk [vmem:[#allocation2 + $0x50] sm:$0xff] %vm4272, %v4187
        %4279 = vst.msk [vmem:[#allocation2 + $0x60] sm:$0xff] %vm4272, %v4189
        %4280 = vst.msk [vmem:[#allocation2 + $0x70] sm:$0xff] %vm4272, %v4191
        %4281 = vst.msk [vmem:[#allocation2 + $0x80] sm:$0xff] %vm4272, %v4193
        %4282 = vst.msk [vmem:[#allocation2 + $0x90] sm:$0xff] %vm4272, %v4195
        %4283 = vst.msk [vmem:[#allocation2 + $0xa0] sm:$0xff] %vm4272, %v4197
        %4284 = vst.msk [vmem:[#allocation2 + $0xb0] sm:$0xff] %vm4272, %v4199
        %4285 = vst.msk [vmem:[#allocation2 + $0xc0] sm:$0xff] %vm4272, %v4201
        %4286 = vst.msk [vmem:[#allocation2 + $0xd0] sm:$0xff] %vm4272, %v4203
        %4287 = vst.msk [vmem:[#allocation2 + $0xe0] sm:$0xff] %vm4272, %v4205
        %4288 = vst.msk [vmem:[#allocation2 + $0xf0] sm:$0xff] %vm4272, %v4207
        %4289 = vst.msk [vmem:[#allocation2 + $0x100] sm:$0xff] %vm4272, %v4209
        %4290 = vst.msk [vmem:[#allocation2 + $0x110] sm:$0xff] %vm4272, %v4211
        %4291 = vst.msk [vmem:[#allocation2 + $0x120] sm:$0xff] %vm4272, %v4213
        %4292 = vst.msk [vmem:[#allocation2 + $0x130] sm:$0xff] %vm4272, %v4215
        %4293 = vst.msk [vmem:[#allocation2 + $0x140] sm:$0xff] %vm4272, %v4217
        %4294 = vst.msk [vmem:[#allocation2 + $0x150] sm:$0xff] %vm4272, %v4219
        %4295 = vst.msk [vmem:[#allocation2 + $0x160] sm:$0xff] %vm4272, %v4221
        %4296 = vst.msk [vmem:[#allocation2 + $0x170] sm:$0xff] %vm4272, %v4223
        %4297 = vst.msk [vmem:[#allocation2 + $0x180] sm:$0xff] %vm4272, %v4225
        %4298 = vst.msk [vmem:[#allocation2 + $0x190] sm:$0xff] %vm4272, %v4227
        %4299 = vst.msk [vmem:[#allocation2 + $0x1a0] sm:$0xff] %vm4272, %v4229
        %4300 = vst.msk [vmem:[#allocation2 + $0x1b0] sm:$0xff] %vm4272, %v4231
        %4301 = vst.msk [vmem:[#allocation2 + $0x1c0] sm:$0xff] %vm4272, %v4233
        %4302 = vst.msk [vmem:[#allocation2 + $0x1d0] sm:$0xff] %vm4272, %v4235
        %4303 = vst.msk [vmem:[#allocation2 + $0x1e0] sm:$0xff] %vm4272, %v4237
        %4304 = vst.msk [vmem:[#allocation2 + $0x1f0] sm:$0xff] %vm4272, %v4239
        %v4305 = vrot.slane %v278, 6
        %v4306 = vrot.slane %v279, 6
        %v4307 = vsel %vm1421, %v4305, %v4306
        %v4308 = vrot.slane %v280, 6
        %v4309 = vsel %vm1421, %v4306, %v4308
        %4310 = vrot.lane.b32.xlu0 %v1439, 108
        %v4311 = vpop.permute.xlu0 %4310
        %4312 = vrot.lane.b32.xlu0 %v1441, 108
        %v4313 = vpop.permute.xlu0 %4312
        %4314 = vrot.lane.b32.xlu0 %v1444, 108
        %v4315 = vpop.permute.xlu0 %4314
        %4316 = vrot.lane.b32.xlu0 %v1446, 108
        %v4317 = vpop.permute.xlu0 %4316
        %4318 = vrot.lane.b32.xlu0 %v1449, 108
        %v4319 = vpop.permute.xlu0 %4318
        %4320 = vrot.lane.b32.xlu0 %v1451, 108
        %v4321 = vpop.permute.xlu0 %4320
        %4322 = vrot.lane.b32.xlu0 %v1454, 108
        %v4323 = vpop.permute.xlu0 %4322
        %4324 = vrot.lane.b32.xlu0 %v1456, 108
        %v4325 = vpop.permute.xlu0 %4324
        %4326 = vrot.lane.b32.xlu0 %v1459, 108
        %v4327 = vpop.permute.xlu0 %4326
        %4328 = vrot.lane.b32.xlu0 %v1461, 108
        %v4329 = vpop.permute.xlu0 %4328
        %4330 = vrot.lane.b32.xlu0 %v1464, 108
        %v4331 = vpop.permute.xlu0 %4330
        %4332 = vrot.lane.b32.xlu0 %v1466, 108
        %v4333 = vpop.permute.xlu0 %4332
        %4334 = vrot.lane.b32.xlu0 %v1469, 108
        %v4335 = vpop.permute.xlu0 %4334
        %4336 = vrot.lane.b32.xlu0 %v1471, 108
        %v4337 = vpop.permute.xlu0 %4336
        %4338 = vrot.lane.b32.xlu0 %v1474, 108
        %v4339 = vpop.permute.xlu0 %4338
        %4340 = vrot.lane.b32.xlu0 %v1476, 108
        %v4341 = vpop.permute.xlu0 %4340
        %4342 = vrot.lane.b32.xlu0 %v1479, 108
        %v4343 = vpop.permute.xlu0 %4342
        %4344 = vrot.lane.b32.xlu0 %v1481, 108
        %v4345 = vpop.permute.xlu0 %4344
        %4346 = vrot.lane.b32.xlu0 %v1484, 108
        %v4347 = vpop.permute.xlu0 %4346
        %4348 = vrot.lane.b32.xlu0 %v1486, 108
        %v4349 = vpop.permute.xlu0 %4348
        %4350 = vrot.lane.b32.xlu0 %v1489, 108
        %v4351 = vpop.permute.xlu0 %4350
        %4352 = vrot.lane.b32.xlu0 %v1491, 108
        %v4353 = vpop.permute.xlu0 %4352
        %4354 = vrot.lane.b32.xlu0 %v1494, 108
        %v4355 = vpop.permute.xlu0 %4354
        %4356 = vrot.lane.b32.xlu0 %v1496, 108
        %v4357 = vpop.permute.xlu0 %4356
        %4358 = vrot.lane.b32.xlu0 %v1499, 108
        %v4359 = vpop.permute.xlu0 %4358
        %4360 = vrot.lane.b32.xlu0 %v1501, 108
        %v4361 = vpop.permute.xlu0 %4360
        %4362 = vrot.lane.b32.xlu0 %v2435, 108
        %v4363 = vpop.permute.xlu0 %4362
        %4364 = vrot.lane.b32.xlu0 %v2437, 108
        %v4365 = vpop.permute.xlu0 %4364
        %4366 = vrot.lane.b32.xlu0 %v3371, 108
        %v4367 = vpop.permute.xlu0 %4366
        %4368 = vrot.lane.b32.xlu0 %v3373, 108
        %v4369 = vpop.permute.xlu0 %4368
        %4370 = vrot.lane.b32.xlu0 %v4307, 108
        %v4371 = vpop.permute.xlu0 %4370
        %4372 = vrot.lane.b32.xlu0 %v4309, 108
        %v4373 = vpop.permute.xlu0 %4372
        %vm4406 = vcmask 917344
        %4407 = vst.msk [vmem:[#allocation2] sm:$0xff] %vm4406, %v4311
        %4408 = vst.msk [vmem:[#allocation2 + $0x10] sm:$0xff] %vm4406, %v4313
        %4409 = vst.msk [vmem:[#allocation2 + $0x20] sm:$0xff] %vm4406, %v4315
        %4410 = vst.msk [vmem:[#allocation2 + $0x30] sm:$0xff] %vm4406, %v4317
        %4411 = vst.msk [vmem:[#allocation2 + $0x40] sm:$0xff] %vm4406, %v4319
        %4412 = vst.msk [vmem:[#allocation2 + $0x50] sm:$0xff] %vm4406, %v4321
        %4413 = vst.msk [vmem:[#allocation2 + $0x60] sm:$0xff] %vm4406, %v4323
        %4414 = vst.msk [vmem:[#allocation2 + $0x70] sm:$0xff] %vm4406, %v4325
        %4415 = vst.msk [vmem:[#allocation2 + $0x80] sm:$0xff] %vm4406, %v4327
        %4416 = vst.msk [vmem:[#allocation2 + $0x90] sm:$0xff] %vm4406, %v4329
        %4417 = vst.msk [vmem:[#allocation2 + $0xa0] sm:$0xff] %vm4406, %v4331
        %4418 = vst.msk [vmem:[#allocation2 + $0xb0] sm:$0xff] %vm4406, %v4333
        %4419 = vst.msk [vmem:[#allocation2 + $0xc0] sm:$0xff] %vm4406, %v4335
        %4420 = vst.msk [vmem:[#allocation2 + $0xd0] sm:$0xff] %vm4406, %v4337
        %4421 = vst.msk [vmem:[#allocation2 + $0xe0] sm:$0xff] %vm4406, %v4339
        %4422 = vst.msk [vmem:[#allocation2 + $0xf0] sm:$0xff] %vm4406, %v4341
        %4423 = vst.msk [vmem:[#allocation2 + $0x100] sm:$0xff] %vm4406, %v4343
        %4424 = vst.msk [vmem:[#allocation2 + $0x110] sm:$0xff] %vm4406, %v4345
        %4425 = vst.msk [vmem:[#allocation2 + $0x120] sm:$0xff] %vm4406, %v4347
        %4426 = vst.msk [vmem:[#allocation2 + $0x130] sm:$0xff] %vm4406, %v4349
        %4427 = vst.msk [vmem:[#allocation2 + $0x140] sm:$0xff] %vm4406, %v4351
        %4428 = vst.msk [vmem:[#allocation2 + $0x150] sm:$0xff] %vm4406, %v4353
        %4429 = vst.msk [vmem:[#allocation2 + $0x160] sm:$0xff] %vm4406, %v4355
        %4430 = vst.msk [vmem:[#allocation2 + $0x170] sm:$0xff] %vm4406, %v4357
        %4431 = vst.msk [vmem:[#allocation2 + $0x180] sm:$0xff] %vm4406, %v4359
        %4432 = vst.msk [vmem:[#allocation2 + $0x190] sm:$0xff] %vm4406, %v4361
        %4433 = vst.msk [vmem:[#allocation2 + $0x1a0] sm:$0xff] %vm4406, %v4363
        %4434 = vst.msk [vmem:[#allocation2 + $0x1b0] sm:$0xff] %vm4406, %v4365
        %4435 = vst.msk [vmem:[#allocation2 + $0x1c0] sm:$0xff] %vm4406, %v4367
        %4436 = vst.msk [vmem:[#allocation2 + $0x1d0] sm:$0xff] %vm4406, %v4369
        %4437 = vst.msk [vmem:[#allocation2 + $0x1e0] sm:$0xff] %vm4406, %v4371
        %4438 = vst.msk [vmem:[#allocation2 + $0x1f0] sm:$0xff] %vm4406, %v4373
        %4441 = vrot.lane.b32.xlu0 %v236, 112
        %v4442 = vpop.permute.xlu0 %4441
        %4443 = vrot.lane.b32.xlu0 %v237, 112
        %v4444 = vpop.permute.xlu0 %4443
        %4445 = vrot.lane.b32.xlu0 %v239, 112
        %v4446 = vpop.permute.xlu0 %4445
        %4447 = vrot.lane.b32.xlu0 %v240, 112
        %v4448 = vpop.permute.xlu0 %4447
        %4449 = vrot.lane.b32.xlu0 %v242, 112
        %v4450 = vpop.permute.xlu0 %4449
        %4451 = vrot.lane.b32.xlu0 %v243, 112
        %v4452 = vpop.permute.xlu0 %4451
        %4453 = vrot.lane.b32.xlu0 %v245, 112
        %v4454 = vpop.permute.xlu0 %4453
        %4455 = vrot.lane.b32.xlu0 %v246, 112
        %v4456 = vpop.permute.xlu0 %4455
        %4457 = vrot.lane.b32.xlu0 %v248, 112
        %v4458 = vpop.permute.xlu0 %4457
        %4459 = vrot.lane.b32.xlu0 %v249, 112
        %v4460 = vpop.permute.xlu0 %4459
        %4461 = vrot.lane.b32.xlu0 %v251, 112
        %v4462 = vpop.permute.xlu0 %4461
        %4463 = vrot.lane.b32.xlu0 %v252, 112
        %v4464 = vpop.permute.xlu0 %4463
        %4465 = vrot.lane.b32.xlu0 %v254, 112
        %v4466 = vpop.permute.xlu0 %4465
        %4467 = vrot.lane.b32.xlu0 %v255, 112
        %v4468 = vpop.permute.xlu0 %4467
        %4469 = vrot.lane.b32.xlu0 %v257, 112
        %v4470 = vpop.permute.xlu0 %4469
        %4471 = vrot.lane.b32.xlu0 %v258, 112
        %v4472 = vpop.permute.xlu0 %4471
        %4473 = vrot.lane.b32.xlu0 %v260, 112
        %v4474 = vpop.permute.xlu0 %4473
        %4475 = vrot.lane.b32.xlu0 %v261, 112
        %v4476 = vpop.permute.xlu0 %4475
        %4477 = vrot.lane.b32.xlu0 %v263, 112
        %v4478 = vpop.permute.xlu0 %4477
        %4479 = vrot.lane.b32.xlu0 %v264, 112
        %v4480 = vpop.permute.xlu0 %4479
        %4481 = vrot.lane.b32.xlu0 %v266, 112
        %v4482 = vpop.permute.xlu0 %4481
        %4483 = vrot.lane.b32.xlu0 %v267, 112
        %v4484 = vpop.permute.xlu0 %4483
        %4485 = vrot.lane.b32.xlu0 %v269, 112
        %v4486 = vpop.permute.xlu0 %4485
        %4487 = vrot.lane.b32.xlu0 %v270, 112
        %v4488 = vpop.permute.xlu0 %4487
        %4489 = vrot.lane.b32.xlu0 %v272, 112
        %v4490 = vpop.permute.xlu0 %4489
        %4491 = vrot.lane.b32.xlu0 %v273, 112
        %v4492 = vpop.permute.xlu0 %4491
        %4493 = vrot.lane.b32.xlu0 %v275, 112
        %v4494 = vpop.permute.xlu0 %4493
        %4495 = vrot.lane.b32.xlu0 %v276, 112
        %v4496 = vpop.permute.xlu0 %4495
        %4497 = vrot.lane.b32.xlu0 %v278, 112
        %v4498 = vpop.permute.xlu0 %4497
        %4499 = vrot.lane.b32.xlu0 %v279, 112
        %v4500 = vpop.permute.xlu0 %4499
        %4501 = vrot.lane.b32.xlu0 %v281, 112
        %v4502 = vpop.permute.xlu0 %4501
        %4503 = vrot.lane.b32.xlu0 %v282, 112
        %v4504 = vpop.permute.xlu0 %4503
        %vm4537 = vcmask 950144
        %4538 = vst.msk [vmem:[#allocation2] sm:$0xff] %vm4537, %v4442
        %4539 = vst.msk [vmem:[#allocation2 + $0x10] sm:$0xff] %vm4537, %v4444
        %4540 = vst.msk [vmem:[#allocation2 + $0x20] sm:$0xff] %vm4537, %v4446
        %4541 = vst.msk [vmem:[#allocation2 + $0x30] sm:$0xff] %vm4537, %v4448
        %4542 = vst.msk [vmem:[#allocation2 + $0x40] sm:$0xff] %vm4537, %v4450
        %4543 = vst.msk [vmem:[#allocation2 + $0x50] sm:$0xff] %vm4537, %v4452
        %4544 = vst.msk [vmem:[#allocation2 + $0x60] sm:$0xff] %vm4537, %v4454
        %4545 = vst.msk [vmem:[#allocation2 + $0x70] sm:$0xff] %vm4537, %v4456
        %4546 = vst.msk [vmem:[#allocation2 + $0x80] sm:$0xff] %vm4537, %v4458
        %4547 = vst.msk [vmem:[#allocation2 + $0x90] sm:$0xff] %vm4537, %v4460
        %4548 = vst.msk [vmem:[#allocation2 + $0xa0] sm:$0xff] %vm4537, %v4462
        %4549 = vst.msk [vmem:[#allocation2 + $0xb0] sm:$0xff] %vm4537, %v4464
        %4550 = vst.msk [vmem:[#allocation2 + $0xc0] sm:$0xff] %vm4537, %v4466
        %4551 = vst.msk [vmem:[#allocation2 + $0xd0] sm:$0xff] %vm4537, %v4468
        %4552 = vst.msk [vmem:[#allocation2 + $0xe0] sm:$0xff] %vm4537, %v4470
        %4553 = vst.msk [vmem:[#allocation2 + $0xf0] sm:$0xff] %vm4537, %v4472
        %4554 = vst.msk [vmem:[#allocation2 + $0x100] sm:$0xff] %vm4537, %v4474
        %4555 = vst.msk [vmem:[#allocation2 + $0x110] sm:$0xff] %vm4537, %v4476
        %4556 = vst.msk [vmem:[#allocation2 + $0x120] sm:$0xff] %vm4537, %v4478
        %4557 = vst.msk [vmem:[#allocation2 + $0x130] sm:$0xff] %vm4537, %v4480
        %4558 = vst.msk [vmem:[#allocation2 + $0x140] sm:$0xff] %vm4537, %v4482
        %4559 = vst.msk [vmem:[#allocation2 + $0x150] sm:$0xff] %vm4537, %v4484
        %4560 = vst.msk [vmem:[#allocation2 + $0x160] sm:$0xff] %vm4537, %v4486
        %4561 = vst.msk [vmem:[#allocation2 + $0x170] sm:$0xff] %vm4537, %v4488
        %4562 = vst.msk [vmem:[#allocation2 + $0x180] sm:$0xff] %vm4537, %v4490
        %4563 = vst.msk [vmem:[#allocation2 + $0x190] sm:$0xff] %vm4537, %v4492
        %4564 = vst.msk [vmem:[#allocation2 + $0x1a0] sm:$0xff] %vm4537, %v4494
        %4565 = vst.msk [vmem:[#allocation2 + $0x1b0] sm:$0xff] %vm4537, %v4496
        %4566 = vst.msk [vmem:[#allocation2 + $0x1c0] sm:$0xff] %vm4537, %v4498
        %4567 = vst.msk [vmem:[#allocation2 + $0x1d0] sm:$0xff] %vm4537, %v4500
        %4568 = vst.msk [vmem:[#allocation2 + $0x1e0] sm:$0xff] %vm4537, %v4502
        %4569 = vst.msk [vmem:[#allocation2 + $0x1f0] sm:$0xff] %vm4537, %v4504
        %v4571 = vrot.slane %v281, 1
        %v4572 = vrot.slane %v282, 1
        %v4573 = vsel %vm371, %v4571, %v4572
        %v4574 = vrot.slane %v283, 1
        %v4575 = vsel %vm371, %v4572, %v4574
        %4576 = vrot.lane.b32.xlu0 %v394, 116
        %v4577 = vpop.permute.xlu0 %4576
        %4578 = vrot.lane.b32.xlu0 %v396, 116
        %v4579 = vpop.permute.xlu0 %4578
        %4580 = vrot.lane.b32.xlu0 %v399, 116
        %v4581 = vpop.permute.xlu0 %4580
        %4582 = vrot.lane.b32.xlu0 %v401, 116
        %v4583 = vpop.permute.xlu0 %4582
        %4584 = vrot.lane.b32.xlu0 %v404, 116
        %v4585 = vpop.permute.xlu0 %4584
        %4586 = vrot.lane.b32.xlu0 %v406, 116
        %v4587 = vpop.permute.xlu0 %4586
        %4588 = vrot.lane.b32.xlu0 %v409, 116
        %v4589 = vpop.permute.xlu0 %4588
        %4590 = vrot.lane.b32.xlu0 %v411, 116
        %v4591 = vpop.permute.xlu0 %4590
        %4592 = vrot.lane.b32.xlu0 %v414, 116
        %v4593 = vpop.permute.xlu0 %4592
        %4594 = vrot.lane.b32.xlu0 %v416, 116
        %v4595 = vpop.permute.xlu0 %4594
        %4596 = vrot.lane.b32.xlu0 %v419, 116
        %v4597 = vpop.permute.xlu0 %4596
        %4598 = vrot.lane.b32.xlu0 %v421, 116
        %v4599 = vpop.permute.xlu0 %4598
        %4600 = vrot.lane.b32.xlu0 %v424, 116
        %v4601 = vpop.permute.xlu0 %4600
        %4602 = vrot.lane.b32.xlu0 %v426, 116
        %v4603 = vpop.permute.xlu0 %4602
        %4604 = vrot.lane.b32.xlu0 %v429, 116
        %v4605 = vpop.permute.xlu0 %4604
        %4606 = vrot.lane.b32.xlu0 %v431, 116
        %v4607 = vpop.permute.xlu0 %4606
        %4608 = vrot.lane.b32.xlu0 %v434, 116
        %v4609 = vpop.permute.xlu0 %4608
        %4610 = vrot.lane.b32.xlu0 %v436, 116
        %v4611 = vpop.permute.xlu0 %4610
        %4612 = vrot.lane.b32.xlu0 %v439, 116
        %v4613 = vpop.permute.xlu0 %4612
        %4614 = vrot.lane.b32.xlu0 %v441, 116
        %v4615 = vpop.permute.xlu0 %4614
        %4616 = vrot.lane.b32.xlu0 %v444, 116
        %v4617 = vpop.permute.xlu0 %4616
        %4618 = vrot.lane.b32.xlu0 %v446, 116
        %v4619 = vpop.permute.xlu0 %4618
        %4620 = vrot.lane.b32.xlu0 %v449, 116
        %v4621 = vpop.permute.xlu0 %4620
        %4622 = vrot.lane.b32.xlu0 %v451, 116
        %v4623 = vpop.permute.xlu0 %4622
        %4624 = vrot.lane.b32.xlu0 %v1765, 116
        %v4625 = vpop.permute.xlu0 %4624
        %4626 = vrot.lane.b32.xlu0 %v1767, 116
        %v4627 = vpop.permute.xlu0 %4626
        %4628 = vrot.lane.b32.xlu0 %v2701, 116
        %v4629 = vpop.permute.xlu0 %4628
        %4630 = vrot.lane.b32.xlu0 %v2703, 116
        %v4631 = vpop.permute.xlu0 %4630
        %4632 = vrot.lane.b32.xlu0 %v3637, 116
        %v4633 = vpop.permute.xlu0 %4632
        %4634 = vrot.lane.b32.xlu0 %v3639, 116
        %v4635 = vpop.permute.xlu0 %4634
        %4636 = vrot.lane.b32.xlu0 %v4573, 116
        %v4637 = vpop.permute.xlu0 %4636
        %4638 = vrot.lane.b32.xlu0 %v4575, 116
        %v4639 = vpop.permute.xlu0 %4638
        %vm4672 = vcmask 982944
        %4673 = vst.msk [vmem:[#allocation2] sm:$0xff] %vm4672, %v4577
        %4674 = vst.msk [vmem:[#allocation2 + $0x10] sm:$0xff] %vm4672, %v4579
        %4675 = vst.msk [vmem:[#allocation2 + $0x20] sm:$0xff] %vm4672, %v4581
        %4676 = vst.msk [vmem:[#allocation2 + $0x30] sm:$0xff] %vm4672, %v4583
        %4677 = vst.msk [vmem:[#allocation2 + $0x40] sm:$0xff] %vm4672, %v4585
        %4678 = vst.msk [vmem:[#allocation2 + $0x50] sm:$0xff] %vm4672, %v4587
        %4679 = vst.msk [vmem:[#allocation2 + $0x60] sm:$0xff] %vm4672, %v4589
        %4680 = vst.msk [vmem:[#allocation2 + $0x70] sm:$0xff] %vm4672, %v4591
        %4681 = vst.msk [vmem:[#allocation2 + $0x80] sm:$0xff] %vm4672, %v4593
        %4682 = vst.msk [vmem:[#allocation2 + $0x90] sm:$0xff] %vm4672, %v4595
        %4683 = vst.msk [vmem:[#allocation2 + $0xa0] sm:$0xff] %vm4672, %v4597
        %4684 = vst.msk [vmem:[#allocation2 + $0xb0] sm:$0xff] %vm4672, %v4599
        %4685 = vst.msk [vmem:[#allocation2 + $0xc0] sm:$0xff] %vm4672, %v4601
        %4686 = vst.msk [vmem:[#allocation2 + $0xd0] sm:$0xff] %vm4672, %v4603
        %4687 = vst.msk [vmem:[#allocation2 + $0xe0] sm:$0xff] %vm4672, %v4605
        %4688 = vst.msk [vmem:[#allocation2 + $0xf0] sm:$0xff] %vm4672, %v4607
        %4689 = vst.msk [vmem:[#allocation2 + $0x100] sm:$0xff] %vm4672, %v4609
        %4690 = vst.msk [vmem:[#allocation2 + $0x110] sm:$0xff] %vm4672, %v4611
        %4691 = vst.msk [vmem:[#allocation2 + $0x120] sm:$0xff] %vm4672, %v4613
        %4692 = vst.msk [vmem:[#allocation2 + $0x130] sm:$0xff] %vm4672, %v4615
        %4693 = vst.msk [vmem:[#allocation2 + $0x140] sm:$0xff] %vm4672, %v4617
        %4694 = vst.msk [vmem:[#allocation2 + $0x150] sm:$0xff] %vm4672, %v4619
        %4695 = vst.msk [vmem:[#allocation2 + $0x160] sm:$0xff] %vm4672, %v4621
        %4696 = vst.msk [vmem:[#allocation2 + $0x170] sm:$0xff] %vm4672, %v4623
        %4697 = vst.msk [vmem:[#allocation2 + $0x180] sm:$0xff] %vm4672, %v4625
        %4698 = vst.msk [vmem:[#allocation2 + $0x190] sm:$0xff] %vm4672, %v4627
        %4699 = vst.msk [vmem:[#allocation2 + $0x1a0] sm:$0xff] %vm4672, %v4629
        %4700 = vst.msk [vmem:[#allocation2 + $0x1b0] sm:$0xff] %vm4672, %v4631
        %4701 = vst.msk [vmem:[#allocation2 + $0x1c0] sm:$0xff] %vm4672, %v4633
        %4702 = vst.msk [vmem:[#allocation2 + $0x1d0] sm:$0xff] %vm4672, %v4635
        %4703 = vst.msk [vmem:[#allocation2 + $0x1e0] sm:$0xff] %vm4672, %v4637
        %4704 = vst.msk [vmem:[#allocation2 + $0x1f0] sm:$0xff] %vm4672, %v4639
        %v4705 = vrot.slane %v281, 2
        %v4706 = vrot.slane %v282, 2
        %v4707 = vsel %vm581, %v4705, %v4706
        %v4708 = vrot.slane %v283, 2
        %v4709 = vsel %vm581, %v4706, %v4708
        %4710 = vrot.lane.b32.xlu0 %v604, 120
        %v4711 = vpop.permute.xlu0 %4710
        %4712 = vrot.lane.b32.xlu0 %v606, 120
        %v4713 = vpop.permute.xlu0 %4712
        %4714 = vrot.lane.b32.xlu0 %v609, 120
        %v4715 = vpop.permute.xlu0 %4714
        %4716 = vrot.lane.b32.xlu0 %v611, 120
        %v4717 = vpop.permute.xlu0 %4716
        %4718 = vrot.lane.b32.xlu0 %v614, 120
        %v4719 = vpop.permute.xlu0 %4718
        %4720 = vrot.lane.b32.xlu0 %v616, 120
        %v4721 = vpop.permute.xlu0 %4720
        %4722 = vrot.lane.b32.xlu0 %v619, 120
        %v4723 = vpop.permute.xlu0 %4722
        %4724 = vrot.lane.b32.xlu0 %v621, 120
        %v4725 = vpop.permute.xlu0 %4724
        %4726 = vrot.lane.b32.xlu0 %v624, 120
        %v4727 = vpop.permute.xlu0 %4726
        %4728 = vrot.lane.b32.xlu0 %v626, 120
        %v4729 = vpop.permute.xlu0 %4728
        %4730 = vrot.lane.b32.xlu0 %v629, 120
        %v4731 = vpop.permute.xlu0 %4730
        %4732 = vrot.lane.b32.xlu0 %v631, 120
        %v4733 = vpop.permute.xlu0 %4732
        %4734 = vrot.lane.b32.xlu0 %v634, 120
        %v4735 = vpop.permute.xlu0 %4734
        %4736 = vrot.lane.b32.xlu0 %v636, 120
        %v4737 = vpop.permute.xlu0 %4736
        %4738 = vrot.lane.b32.xlu0 %v639, 120
        %v4739 = vpop.permute.xlu0 %4738
        %4740 = vrot.lane.b32.xlu0 %v641, 120
        %v4741 = vpop.permute.xlu0 %4740
        %4742 = vrot.lane.b32.xlu0 %v644, 120
        %v4743 = vpop.permute.xlu0 %4742
        %4744 = vrot.lane.b32.xlu0 %v646, 120
        %v4745 = vpop.permute.xlu0 %4744
        %4746 = vrot.lane.b32.xlu0 %v649, 120
        %v4747 = vpop.permute.xlu0 %4746
        %4748 = vrot.lane.b32.xlu0 %v651, 120
        %v4749 = vpop.permute.xlu0 %4748
        %4750 = vrot.lane.b32.xlu0 %v654, 120
        %v4751 = vpop.permute.xlu0 %4750
        %4752 = vrot.lane.b32.xlu0 %v656, 120
        %v4753 = vpop.permute.xlu0 %4752
        %4754 = vrot.lane.b32.xlu0 %v659, 120
        %v4755 = vpop.permute.xlu0 %4754
        %4756 = vrot.lane.b32.xlu0 %v661, 120
        %v4757 = vpop.permute.xlu0 %4756
        %4758 = vrot.lane.b32.xlu0 %v1899, 120
        %v4759 = vpop.permute.xlu0 %4758
        %4760 = vrot.lane.b32.xlu0 %v1901, 120
        %v4761 = vpop.permute.xlu0 %4760
        %4762 = vrot.lane.b32.xlu0 %v2835, 120
        %v4763 = vpop.permute.xlu0 %4762
        %4764 = vrot.lane.b32.xlu0 %v2837, 120
        %v4765 = vpop.permute.xlu0 %4764
        %4766 = vrot.lane.b32.xlu0 %v3771, 120
        %v4767 = vpop.permute.xlu0 %4766
        %4768 = vrot.lane.b32.xlu0 %v3773, 120
        %v4769 = vpop.permute.xlu0 %4768
        %4770 = vrot.lane.b32.xlu0 %v4707, 120
        %v4771 = vpop.permute.xlu0 %4770
        %4772 = vrot.lane.b32.xlu0 %v4709, 120
        %v4773 = vpop.permute.xlu0 %4772
        %vm4806 = vcmask 1015744
        %4807 = vst.msk [vmem:[#allocation2] sm:$0xff] %vm4806, %v4711
        %4808 = vst.msk [vmem:[#allocation2 + $0x10] sm:$0xff] %vm4806, %v4713
        %4809 = vst.msk [vmem:[#allocation2 + $0x20] sm:$0xff] %vm4806, %v4715
        %4810 = vst.msk [vmem:[#allocation2 + $0x30] sm:$0xff] %vm4806, %v4717
        %4811 = vst.msk [vmem:[#allocation2 + $0x40] sm:$0xff] %vm4806, %v4719
        %4812 = vst.msk [vmem:[#allocation2 + $0x50] sm:$0xff] %vm4806, %v4721
        %4813 = vst.msk [vmem:[#allocation2 + $0x60] sm:$0xff] %vm4806, %v4723
        %4814 = vst.msk [vmem:[#allocation2 + $0x70] sm:$0xff] %vm4806, %v4725
        %4815 = vst.msk [vmem:[#allocation2 + $0x80] sm:$0xff] %vm4806, %v4727
        %4816 = vst.msk [vmem:[#allocation2 + $0x90] sm:$0xff] %vm4806, %v4729
        %4817 = vst.msk [vmem:[#allocation2 + $0xa0] sm:$0xff] %vm4806, %v4731
        %4818 = vst.msk [vmem:[#allocation2 + $0xb0] sm:$0xff] %vm4806, %v4733
        %4819 = vst.msk [vmem:[#allocation2 + $0xc0] sm:$0xff] %vm4806, %v4735
        %4820 = vst.msk [vmem:[#allocation2 + $0xd0] sm:$0xff] %vm4806, %v4737
        %4821 = vst.msk [vmem:[#allocation2 + $0xe0] sm:$0xff] %vm4806, %v4739
        %4822 = vst.msk [vmem:[#allocation2 + $0xf0] sm:$0xff] %vm4806, %v4741
        %4823 = vst.msk [vmem:[#allocation2 + $0x100] sm:$0xff] %vm4806, %v4743
        %4824 = vst.msk [vmem:[#allocation2 + $0x110] sm:$0xff] %vm4806, %v4745
        %4825 = vst.msk [vmem:[#allocation2 + $0x120] sm:$0xff] %vm4806, %v4747
        %4826 = vst.msk [vmem:[#allocation2 + $0x130] sm:$0xff] %vm4806, %v4749
        %4827 = vst.msk [vmem:[#allocation2 + $0x140] sm:$0xff] %vm4806, %v4751
        %4828 = vst.msk [vmem:[#allocation2 + $0x150] sm:$0xff] %vm4806, %v4753
        %4829 = vst.msk [vmem:[#allocation2 + $0x160] sm:$0xff] %vm4806, %v4755
        %4830 = vst.msk [vmem:[#allocation2 + $0x170] sm:$0xff] %vm4806, %v4757
        %4831 = vst.msk [vmem:[#allocation2 + $0x180] sm:$0xff] %vm4806, %v4759
        %4832 = vst.msk [vmem:[#allocation2 + $0x190] sm:$0xff] %vm4806, %v4761
        %4833 = vst.msk [vmem:[#allocation2 + $0x1a0] sm:$0xff] %vm4806, %v4763
        %4834 = vst.msk [vmem:[#allocation2 + $0x1b0] sm:$0xff] %vm4806, %v4765
        %4835 = vst.msk [vmem:[#allocation2 + $0x1c0] sm:$0xff] %vm4806, %v4767
        %4836 = vst.msk [vmem:[#allocation2 + $0x1d0] sm:$0xff] %vm4806, %v4769
        %4837 = vst.msk [vmem:[#allocation2 + $0x1e0] sm:$0xff] %vm4806, %v4771
        %4838 = vst.msk [vmem:[#allocation2 + $0x1f0] sm:$0xff] %vm4806, %v4773
        %v4839 = vrot.slane %v281, 3
        %v4840 = vrot.slane %v282, 3
        %v4841 = vsel %vm791, %v4839, %v4840
        %v4842 = vrot.slane %v283, 3
        %v4843 = vsel %vm791, %v4840, %v4842
        %4844 = vrot.lane.b32.xlu0 %v814, 124
        %v4845 = vpop.permute.xlu0 %4844
        %4846 = vrot.lane.b32.xlu0 %v816, 124
        %v4847 = vpop.permute.xlu0 %4846
        %4848 = vrot.lane.b32.xlu0 %v819, 124
        %v4849 = vpop.permute.xlu0 %4848
        %4850 = vrot.lane.b32.xlu0 %v821, 124
        %v4851 = vpop.permute.xlu0 %4850
        %4852 = vrot.lane.b32.xlu0 %v824, 124
        %v4853 = vpop.permute.xlu0 %4852
        %4854 = vrot.lane.b32.xlu0 %v826, 124
        %v4855 = vpop.permute.xlu0 %4854
        %4856 = vrot.lane.b32.xlu0 %v829, 124
        %v4857 = vpop.permute.xlu0 %4856
        %4858 = vrot.lane.b32.xlu0 %v831, 124
        %v4859 = vpop.permute.xlu0 %4858
        %4860 = vrot.lane.b32.xlu0 %v834, 124
        %v4861 = vpop.permute.xlu0 %4860
        %4862 = vrot.lane.b32.xlu0 %v836, 124
        %v4863 = vpop.permute.xlu0 %4862
        %4864 = vrot.lane.b32.xlu0 %v839, 124
        %v4865 = vpop.permute.xlu0 %4864
        %4866 = vrot.lane.b32.xlu0 %v841, 124
        %v4867 = vpop.permute.xlu0 %4866
        %4868 = vrot.lane.b32.xlu0 %v844, 124
        %v4869 = vpop.permute.xlu0 %4868
        %4870 = vrot.lane.b32.xlu0 %v846, 124
        %v4871 = vpop.permute.xlu0 %4870
        %4872 = vrot.lane.b32.xlu0 %v849, 124
        %v4873 = vpop.permute.xlu0 %4872
        %4874 = vrot.lane.b32.xlu0 %v851, 124
        %v4875 = vpop.permute.xlu0 %4874
        %4876 = vrot.lane.b32.xlu0 %v854, 124
        %v4877 = vpop.permute.xlu0 %4876
        %4878 = vrot.lane.b32.xlu0 %v856, 124
        %v4879 = vpop.permute.xlu0 %4878
        %4880 = vrot.lane.b32.xlu0 %v859, 124
        %v4881 = vpop.permute.xlu0 %4880
        %4882 = vrot.lane.b32.xlu0 %v861, 124
        %v4883 = vpop.permute.xlu0 %4882
        %4884 = vrot.lane.b32.xlu0 %v864, 124
        %v4885 = vpop.permute.xlu0 %4884
        %4886 = vrot.lane.b32.xlu0 %v866, 124
        %v4887 = vpop.permute.xlu0 %4886
        %4888 = vrot.lane.b32.xlu0 %v869, 124
        %v4889 = vpop.permute.xlu0 %4888
        %4890 = vrot.lane.b32.xlu0 %v871, 124
        %v4891 = vpop.permute.xlu0 %4890
        %4892 = vrot.lane.b32.xlu0 %v2033, 124
        %v4893 = vpop.permute.xlu0 %4892
        %4894 = vrot.lane.b32.xlu0 %v2035, 124
        %v4895 = vpop.permute.xlu0 %4894
        %4896 = vrot.lane.b32.xlu0 %v2969, 124
        %v4897 = vpop.permute.xlu0 %4896
        %4898 = vrot.lane.b32.xlu0 %v2971, 124
        %v4899 = vpop.permute.xlu0 %4898
        %4900 = vrot.lane.b32.xlu0 %v3905, 124
        %v4901 = vpop.permute.xlu0 %4900
        %4902 = vrot.lane.b32.xlu0 %v3907, 124
        %v4903 = vpop.permute.xlu0 %4902
        %4904 = vrot.lane.b32.xlu0 %v4841, 124
        %v4905 = vpop.permute.xlu0 %4904
        %4906 = vrot.lane.b32.xlu0 %v4843, 124
        %v4907 = vpop.permute.xlu0 %4906
        %vm4940 = vcmask 1048544
        %4941 = vst.msk [vmem:[#allocation2] sm:$0xff] %vm4940, %v4845
        %4942 = vst.msk [vmem:[#allocation2 + $0x10] sm:$0xff] %vm4940, %v4847
        %4943 = vst.msk [vmem:[#allocation2 + $0x20] sm:$0xff] %vm4940, %v4849
        %4944 = vst.msk [vmem:[#allocation2 + $0x30] sm:$0xff] %vm4940, %v4851
        %4945 = vst.msk [vmem:[#allocation2 + $0x40] sm:$0xff] %vm4940, %v4853
        %4946 = vst.msk [vmem:[#allocation2 + $0x50] sm:$0xff] %vm4940, %v4855
        %4947 = vst.msk [vmem:[#allocation2 + $0x60] sm:$0xff] %vm4940, %v4857
        %4948 = vst.msk [vmem:[#allocation2 + $0x70] sm:$0xff] %vm4940, %v4859
        %4949 = vst.msk [vmem:[#allocation2 + $0x80] sm:$0xff] %vm4940, %v4861
        %4950 = vst.msk [vmem:[#allocation2 + $0x90] sm:$0xff] %vm4940, %v4863
        %4951 = vst.msk [vmem:[#allocation2 + $0xa0] sm:$0xff] %vm4940, %v4865
        %4952 = vst.msk [vmem:[#allocation2 + $0xb0] sm:$0xff] %vm4940, %v4867
        %4953 = vst.msk [vmem:[#allocation2 + $0xc0] sm:$0xff] %vm4940, %v4869
        %4954 = vst.msk [vmem:[#allocation2 + $0xd0] sm:$0xff] %vm4940, %v4871
        %4955 = vst.msk [vmem:[#allocation2 + $0xe0] sm:$0xff] %vm4940, %v4873
        %4956 = vst.msk [vmem:[#allocation2 + $0xf0] sm:$0xff] %vm4940, %v4875
        %4957 = vst.msk [vmem:[#allocation2 + $0x100] sm:$0xff] %vm4940, %v4877
        %4958 = vst.msk [vmem:[#allocation2 + $0x110] sm:$0xff] %vm4940, %v4879
        %4959 = vst.msk [vmem:[#allocation2 + $0x120] sm:$0xff] %vm4940, %v4881
        %4960 = vst.msk [vmem:[#allocation2 + $0x130] sm:$0xff] %vm4940, %v4883
        %4961 = vst.msk [vmem:[#allocation2 + $0x140] sm:$0xff] %vm4940, %v4885
        %4962 = vst.msk [vmem:[#allocation2 + $0x150] sm:$0xff] %vm4940, %v4887
        %4963 = vst.msk [vmem:[#allocation2 + $0x160] sm:$0xff] %vm4940, %v4889
        %4964 = vst.msk [vmem:[#allocation2 + $0x170] sm:$0xff] %vm4940, %v4891
        %4965 = vst.msk [vmem:[#allocation2 + $0x180] sm:$0xff] %vm4940, %v4893
        %4966 = vst.msk [vmem:[#allocation2 + $0x190] sm:$0xff] %vm4940, %v4895
        %4967 = vst.msk [vmem:[#allocation2 + $0x1a0] sm:$0xff] %vm4940, %v4897
        %4968 = vst.msk [vmem:[#allocation2 + $0x1b0] sm:$0xff] %vm4940, %v4899
        %4969 = vst.msk [vmem:[#allocation2 + $0x1c0] sm:$0xff] %vm4940, %v4901
        %4970 = vst.msk [vmem:[#allocation2 + $0x1d0] sm:$0xff] %vm4940, %v4903
        %4971 = vst.msk [vmem:[#allocation2 + $0x1e0] sm:$0xff] %vm4940, %v4905
        %4972 = vst.msk [vmem:[#allocation2 + $0x1f0] sm:$0xff] %vm4940, %v4907
        %v4973 = vrot.slane %v281, 4
        %v4974 = vrot.slane %v282, 4
        %v4975 = vsel %vm1001, %v4973, %v4974
        %v4976 = vrot.slane %v283, 4
        %v4977 = vsel %vm1001, %v4974, %v4976
        %5010 = vst.msk [vmem:[#allocation2 + $0x8] sm:$0xff] %vm290, %v1024
        %5011 = vst.msk [vmem:[#allocation2 + $0x18] sm:$0xff] %vm290, %v1026
        %5012 = vst.msk [vmem:[#allocation2 + $0x28] sm:$0xff] %vm290, %v1029
        %5013 = vst.msk [vmem:[#allocation2 + $0x38] sm:$0xff] %vm290, %v1031
        %5014 = vst.msk [vmem:[#allocation2 + $0x48] sm:$0xff] %vm290, %v1034
        %5015 = vst.msk [vmem:[#allocation2 + $0x58] sm:$0xff] %vm290, %v1036
        %5016 = vst.msk [vmem:[#allocation2 + $0x68] sm:$0xff] %vm290, %v1039
        %5017 = vst.msk [vmem:[#allocation2 + $0x78] sm:$0xff] %vm290, %v1041
        %5018 = vst.msk [vmem:[#allocation2 + $0x88] sm:$0xff] %vm290, %v1044
        %5019 = vst.msk [vmem:[#allocation2 + $0x98] sm:$0xff] %vm290, %v1046
        %5020 = vst.msk [vmem:[#allocation2 + $0xa8] sm:$0xff] %vm290, %v1049
        %5021 = vst.msk [vmem:[#allocation2 + $0xb8] sm:$0xff] %vm290, %v1051
        %5022 = vst.msk [vmem:[#allocation2 + $0xc8] sm:$0xff] %vm290, %v1054
        %5023 = vst.msk [vmem:[#allocation2 + $0xd8] sm:$0xff] %vm290, %v1056
        %5024 = vst.msk [vmem:[#allocation2 + $0xe8] sm:$0xff] %vm290, %v1059
        %5025 = vst.msk [vmem:[#allocation2 + $0xf8] sm:$0xff] %vm290, %v1061
        %5026 = vst.msk [vmem:[#allocation2 + $0x108] sm:$0xff] %vm290, %v1064
        %5027 = vst.msk [vmem:[#allocation2 + $0x118] sm:$0xff] %vm290, %v1066
        %5028 = vst.msk [vmem:[#allocation2 + $0x128] sm:$0xff] %vm290, %v1069
        %5029 = vst.msk [vmem:[#allocation2 + $0x138] sm:$0xff] %vm290, %v1071
        %5030 = vst.msk [vmem:[#allocation2 + $0x148] sm:$0xff] %vm290, %v1074
        %5031 = vst.msk [vmem:[#allocation2 + $0x158] sm:$0xff] %vm290, %v1076
        %5032 = vst.msk [vmem:[#allocation2 + $0x168] sm:$0xff] %vm290, %v1079
        %5033 = vst.msk [vmem:[#allocation2 + $0x178] sm:$0xff] %vm290, %v1081
        %5034 = vst.msk [vmem:[#allocation2 + $0x188] sm:$0xff] %vm290, %v2167
        %5035 = vst.msk [vmem:[#allocation2 + $0x198] sm:$0xff] %vm290, %v2169
        %5036 = vst.msk [vmem:[#allocation2 + $0x1a8] sm:$0xff] %vm290, %v3103
        %5037 = vst.msk [vmem:[#allocation2 + $0x1b8] sm:$0xff] %vm290, %v3105
        %5038 = vst.msk [vmem:[#allocation2 + $0x1c8] sm:$0xff] %vm290, %v4039
        %5039 = vst.msk [vmem:[#allocation2 + $0x1d8] sm:$0xff] %vm290, %v4041
        %5040 = vst.msk [vmem:[#allocation2 + $0x1e8] sm:$0xff] %vm290, %v4975
        %5041 = vst.msk [vmem:[#allocation2 + $0x1f8] sm:$0xff] %vm290, %v4977
        %v5042 = vrot.slane %v281, 5
        %v5043 = vrot.slane %v282, 5
        %v5044 = vsel %vm1211, %v5042, %v5043
        %v5045 = vrot.slane %v283, 5
        %v5046 = vsel %vm1211, %v5043, %v5045
        %5047 = vrot.lane.b32.xlu0 %v1234, 4
        %v5048 = vpop.permute.xlu0 %5047
        %5049 = vrot.lane.b32.xlu0 %v1236, 4
        %v5050 = vpop.permute.xlu0 %5049
        %5051 = vrot.lane.b32.xlu0 %v1239, 4
        %v5052 = vpop.permute.xlu0 %5051
        %5053 = vrot.lane.b32.xlu0 %v1241, 4
        %v5054 = vpop.permute.xlu0 %5053
        %5055 = vrot.lane.b32.xlu0 %v1244, 4
        %v5056 = vpop.permute.xlu0 %5055
        %5057 = vrot.lane.b32.xlu0 %v1246, 4
        %v5058 = vpop.permute.xlu0 %5057
        %5059 = vrot.lane.b32.xlu0 %v1249, 4
        %v5060 = vpop.permute.xlu0 %5059
        %5061 = vrot.lane.b32.xlu0 %v1251, 4
        %v5062 = vpop.permute.xlu0 %5061
        %5063 = vrot.lane.b32.xlu0 %v1254, 4
        %v5064 = vpop.permute.xlu0 %5063
        %5065 = vrot.lane.b32.xlu0 %v1256, 4
        %v5066 = vpop.permute.xlu0 %5065
        %5067 = vrot.lane.b32.xlu0 %v1259, 4
        %v5068 = vpop.permute.xlu0 %5067
        %5069 = vrot.lane.b32.xlu0 %v1261, 4
        %v5070 = vpop.permute.xlu0 %5069
        %5071 = vrot.lane.b32.xlu0 %v1264, 4
        %v5072 = vpop.permute.xlu0 %5071
        %5073 = vrot.lane.b32.xlu0 %v1266, 4
        %v5074 = vpop.permute.xlu0 %5073
        %5075 = vrot.lane.b32.xlu0 %v1269, 4
        %v5076 = vpop.permute.xlu0 %5075
        %5077 = vrot.lane.b32.xlu0 %v1271, 4
        %v5078 = vpop.permute.xlu0 %5077
        %5079 = vrot.lane.b32.xlu0 %v1274, 4
        %v5080 = vpop.permute.xlu0 %5079
        %5081 = vrot.lane.b32.xlu0 %v1276, 4
        %v5082 = vpop.permute.xlu0 %5081
        %5083 = vrot.lane.b32.xlu0 %v1279, 4
        %v5084 = vpop.permute.xlu0 %5083
        %5085 = vrot.lane.b32.xlu0 %v1281, 4
        %v5086 = vpop.permute.xlu0 %5085
        %5087 = vrot.lane.b32.xlu0 %v1284, 4
        %v5088 = vpop.permute.xlu0 %5087
        %5089 = vrot.lane.b32.xlu0 %v1286, 4
        %v5090 = vpop.permute.xlu0 %5089
        %5091 = vrot.lane.b32.xlu0 %v1289, 4
        %v5092 = vpop.permute.xlu0 %5091
        %5093 = vrot.lane.b32.xlu0 %v1291, 4
        %v5094 = vpop.permute.xlu0 %5093
        %5095 = vrot.lane.b32.xlu0 %v2301, 4
        %v5096 = vpop.permute.xlu0 %5095
        %5097 = vrot.lane.b32.xlu0 %v2303, 4
        %v5098 = vpop.permute.xlu0 %5097
        %5099 = vrot.lane.b32.xlu0 %v3237, 4
        %v5100 = vpop.permute.xlu0 %5099
        %5101 = vrot.lane.b32.xlu0 %v3239, 4
        %v5102 = vpop.permute.xlu0 %5101
        %5103 = vrot.lane.b32.xlu0 %v4173, 4
        %v5104 = vpop.permute.xlu0 %5103
        %5105 = vrot.lane.b32.xlu0 %v4175, 4
        %v5106 = vpop.permute.xlu0 %5105
        %5107 = vrot.lane.b32.xlu0 %v5044, 4
        %v5108 = vpop.permute.xlu0 %5107
        %5109 = vrot.lane.b32.xlu0 %v5046, 4
        %v5110 = vpop.permute.xlu0 %5109
        %5143 = vst.msk [vmem:[#allocation2 + $0x8] sm:$0xff] %vm548, %v5048
        %5144 = vst.msk [vmem:[#allocation2 + $0x18] sm:$0xff] %vm548, %v5050
        %5145 = vst.msk [vmem:[#allocation2 + $0x28] sm:$0xff] %vm548, %v5052
        %5146 = vst.msk [vmem:[#allocation2 + $0x38] sm:$0xff] %vm548, %v5054
        %5147 = vst.msk [vmem:[#allocation2 + $0x48] sm:$0xff] %vm548, %v5056
        %5148 = vst.msk [vmem:[#allocation2 + $0x58] sm:$0xff] %vm548, %v5058
        %5149 = vst.msk [vmem:[#allocation2 + $0x68] sm:$0xff] %vm548, %v5060
        %5150 = vst.msk [vmem:[#allocation2 + $0x78] sm:$0xff] %vm548, %v5062
        %5151 = vst.msk [vmem:[#allocation2 + $0x88] sm:$0xff] %vm548, %v5064
        %5152 = vst.msk [vmem:[#allocation2 + $0x98] sm:$0xff] %vm548, %v5066
        %5153 = vst.msk [vmem:[#allocation2 + $0xa8] sm:$0xff] %vm548, %v5068
        %5154 = vst.msk [vmem:[#allocation2 + $0xb8] sm:$0xff] %vm548, %v5070
        %5155 = vst.msk [vmem:[#allocation2 + $0xc8] sm:$0xff] %vm548, %v5072
        %5156 = vst.msk [vmem:[#allocation2 + $0xd8] sm:$0xff] %vm548, %v5074
        %5157 = vst.msk [vmem:[#allocation2 + $0xe8] sm:$0xff] %vm548, %v5076
        %5158 = vst.msk [vmem:[#allocation2 + $0xf8] sm:$0xff] %vm548, %v5078
        %5159 = vst.msk [vmem:[#allocation2 + $0x108] sm:$0xff] %vm548, %v5080
        %5160 = vst.msk [vmem:[#allocation2 + $0x118] sm:$0xff] %vm548, %v5082
        %5161 = vst.msk [vmem:[#allocation2 + $0x128] sm:$0xff] %vm548, %v5084
        %5162 = vst.msk [vmem:[#allocation2 + $0x138] sm:$0xff] %vm548, %v5086
        %5163 = vst.msk [vmem:[#allocation2 + $0x148] sm:$0xff] %vm548, %v5088
        %5164 = vst.msk [vmem:[#allocation2 + $0x158] sm:$0xff] %vm548, %v5090
        %5165 = vst.msk [vmem:[#allocation2 + $0x168] sm:$0xff] %vm548, %v5092
        %5166 = vst.msk [vmem:[#allocation2 + $0x178] sm:$0xff] %vm548, %v5094
        %5167 = vst.msk [vmem:[#allocation2 + $0x188] sm:$0xff] %vm548, %v5096
        %5168 = vst.msk [vmem:[#allocation2 + $0x198] sm:$0xff] %vm548, %v5098
        %5169 = vst.msk [vmem:[#allocation2 + $0x1a8] sm:$0xff] %vm548, %v5100
        %5170 = vst.msk [vmem:[#allocation2 + $0x1b8] sm:$0xff] %vm548, %v5102
        %5171 = vst.msk [vmem:[#allocation2 + $0x1c8] sm:$0xff] %vm548, %v5104
        %5172 = vst.msk [vmem:[#allocation2 + $0x1d8] sm:$0xff] %vm548, %v5106
        %5173 = vst.msk [vmem:[#allocation2 + $0x1e8] sm:$0xff] %vm548, %v5108
        %5174 = vst.msk [vmem:[#allocation2 + $0x1f8] sm:$0xff] %vm548, %v5110
        %v5175 = vrot.slane %v281, 6
        %v5176 = vrot.slane %v282, 6
        %v5177 = vsel %vm1421, %v5175, %v5176
        %v5178 = vrot.slane %v283, 6
        %v5179 = vsel %vm1421, %v5176, %v5178
        %5180 = vrot.lane.b32.xlu0 %v1444, 8
        %v5181 = vpop.permute.xlu0 %5180
        %5182 = vrot.lane.b32.xlu0 %v1446, 8
        %v5183 = vpop.permute.xlu0 %5182
        %5184 = vrot.lane.b32.xlu0 %v1449, 8
        %v5185 = vpop.permute.xlu0 %5184
        %5186 = vrot.lane.b32.xlu0 %v1451, 8
        %v5187 = vpop.permute.xlu0 %5186
        %5188 = vrot.lane.b32.xlu0 %v1454, 8
        %v5189 = vpop.permute.xlu0 %5188
        %5190 = vrot.lane.b32.xlu0 %v1456, 8
        %v5191 = vpop.permute.xlu0 %5190
        %5192 = vrot.lane.b32.xlu0 %v1459, 8
        %v5193 = vpop.permute.xlu0 %5192
        %5194 = vrot.lane.b32.xlu0 %v1461, 8
        %v5195 = vpop.permute.xlu0 %5194
        %5196 = vrot.lane.b32.xlu0 %v1464, 8
        %v5197 = vpop.permute.xlu0 %5196
        %5198 = vrot.lane.b32.xlu0 %v1466, 8
        %v5199 = vpop.permute.xlu0 %5198
        %5200 = vrot.lane.b32.xlu0 %v1469, 8
        %v5201 = vpop.permute.xlu0 %5200
        %5202 = vrot.lane.b32.xlu0 %v1471, 8
        %v5203 = vpop.permute.xlu0 %5202
        %5204 = vrot.lane.b32.xlu0 %v1474, 8
        %v5205 = vpop.permute.xlu0 %5204
        %5206 = vrot.lane.b32.xlu0 %v1476, 8
        %v5207 = vpop.permute.xlu0 %5206
        %5208 = vrot.lane.b32.xlu0 %v1479, 8
        %v5209 = vpop.permute.xlu0 %5208
        %5210 = vrot.lane.b32.xlu0 %v1481, 8
        %v5211 = vpop.permute.xlu0 %5210
        %5212 = vrot.lane.b32.xlu0 %v1484, 8
        %v5213 = vpop.permute.xlu0 %5212
        %5214 = vrot.lane.b32.xlu0 %v1486, 8
        %v5215 = vpop.permute.xlu0 %5214
        %5216 = vrot.lane.b32.xlu0 %v1489, 8
        %v5217 = vpop.permute.xlu0 %5216
        %5218 = vrot.lane.b32.xlu0 %v1491, 8
        %v5219 = vpop.permute.xlu0 %5218
        %5220 = vrot.lane.b32.xlu0 %v1494, 8
        %v5221 = vpop.permute.xlu0 %5220
        %5222 = vrot.lane.b32.xlu0 %v1496, 8
        %v5223 = vpop.permute.xlu0 %5222
        %5224 = vrot.lane.b32.xlu0 %v1499, 8
        %v5225 = vpop.permute.xlu0 %5224
        %5226 = vrot.lane.b32.xlu0 %v1501, 8
        %v5227 = vpop.permute.xlu0 %5226
        %5228 = vrot.lane.b32.xlu0 %v2435, 8
        %v5229 = vpop.permute.xlu0 %5228
        %5230 = vrot.lane.b32.xlu0 %v2437, 8
        %v5231 = vpop.permute.xlu0 %5230
        %5232 = vrot.lane.b32.xlu0 %v3371, 8
        %v5233 = vpop.permute.xlu0 %5232
        %5234 = vrot.lane.b32.xlu0 %v3373, 8
        %v5235 = vpop.permute.xlu0 %5234
        %5236 = vrot.lane.b32.xlu0 %v4307, 8
        %v5237 = vpop.permute.xlu0 %5236
        %5238 = vrot.lane.b32.xlu0 %v4309, 8
        %v5239 = vpop.permute.xlu0 %5238
        %5240 = vrot.lane.b32.xlu0 %v5177, 8
        %v5241 = vpop.permute.xlu0 %5240
        %5242 = vrot.lane.b32.xlu0 %v5179, 8
        %v5243 = vpop.permute.xlu0 %5242
        %5276 = vst.msk [vmem:[#allocation2 + $0x8] sm:$0xff] %vm758, %v5181
        %5277 = vst.msk [vmem:[#allocation2 + $0x18] sm:$0xff] %vm758, %v5183
        %5278 = vst.msk [vmem:[#allocation2 + $0x28] sm:$0xff] %vm758, %v5185
        %5279 = vst.msk [vmem:[#allocation2 + $0x38] sm:$0xff] %vm758, %v5187
        %5280 = vst.msk [vmem:[#allocation2 + $0x48] sm:$0xff] %vm758, %v5189
        %5281 = vst.msk [vmem:[#allocation2 + $0x58] sm:$0xff] %vm758, %v5191
        %5282 = vst.msk [vmem:[#allocation2 + $0x68] sm:$0xff] %vm758, %v5193
        %5283 = vst.msk [vmem:[#allocation2 + $0x78] sm:$0xff] %vm758, %v5195
        %5284 = vst.msk [vmem:[#allocation2 + $0x88] sm:$0xff] %vm758, %v5197
        %5285 = vst.msk [vmem:[#allocation2 + $0x98] sm:$0xff] %vm758, %v5199
        %5286 = vst.msk [vmem:[#allocation2 + $0xa8] sm:$0xff] %vm758, %v5201
        %5287 = vst.msk [vmem:[#allocation2 + $0xb8] sm:$0xff] %vm758, %v5203
        %5288 = vst.msk [vmem:[#allocation2 + $0xc8] sm:$0xff] %vm758, %v5205
        %5289 = vst.msk [vmem:[#allocation2 + $0xd8] sm:$0xff] %vm758, %v5207
        %5290 = vst.msk [vmem:[#allocation2 + $0xe8] sm:$0xff] %vm758, %v5209
        %5291 = vst.msk [vmem:[#allocation2 + $0xf8] sm:$0xff] %vm758, %v5211
        %5292 = vst.msk [vmem:[#allocation2 + $0x108] sm:$0xff] %vm758, %v5213
        %5293 = vst.msk [vmem:[#allocation2 + $0x118] sm:$0xff] %vm758, %v5215
        %5294 = vst.msk [vmem:[#allocation2 + $0x128] sm:$0xff] %vm758, %v5217
        %5295 = vst.msk [vmem:[#allocation2 + $0x138] sm:$0xff] %vm758, %v5219
        %5296 = vst.msk [vmem:[#allocation2 + $0x148] sm:$0xff] %vm758, %v5221
        %5297 = vst.msk [vmem:[#allocation2 + $0x158] sm:$0xff] %vm758, %v5223
        %5298 = vst.msk [vmem:[#allocation2 + $0x168] sm:$0xff] %vm758, %v5225
        %5299 = vst.msk [vmem:[#allocation2 + $0x178] sm:$0xff] %vm758, %v5227
        %5300 = vst.msk [vmem:[#allocation2 + $0x188] sm:$0xff] %vm758, %v5229
        %5301 = vst.msk [vmem:[#allocation2 + $0x198] sm:$0xff] %vm758, %v5231
        %5302 = vst.msk [vmem:[#allocation2 + $0x1a8] sm:$0xff] %vm758, %v5233
        %5303 = vst.msk [vmem:[#allocation2 + $0x1b8] sm:$0xff] %vm758, %v5235
        %5304 = vst.msk [vmem:[#allocation2 + $0x1c8] sm:$0xff] %vm758, %v5237
        %5305 = vst.msk [vmem:[#allocation2 + $0x1d8] sm:$0xff] %vm758, %v5239
        %5306 = vst.msk [vmem:[#allocation2 + $0x1e8] sm:$0xff] %vm758, %v5241
        %5307 = vst.msk [vmem:[#allocation2 + $0x1f8] sm:$0xff] %vm758, %v5243
        %5310 = vrot.lane.b32.xlu0 %v239, 12
        %v5311 = vpop.permute.xlu0 %5310
        %5312 = vrot.lane.b32.xlu0 %v240, 12
        %v5313 = vpop.permute.xlu0 %5312
        %5314 = vrot.lane.b32.xlu0 %v242, 12
        %v5315 = vpop.permute.xlu0 %5314
        %5316 = vrot.lane.b32.xlu0 %v243, 12
        %v5317 = vpop.permute.xlu0 %5316
        %5318 = vrot.lane.b32.xlu0 %v245, 12
        %v5319 = vpop.permute.xlu0 %5318
        %5320 = vrot.lane.b32.xlu0 %v246, 12
        %v5321 = vpop.permute.xlu0 %5320
        %5322 = vrot.lane.b32.xlu0 %v248, 12
        %v5323 = vpop.permute.xlu0 %5322
        %5324 = vrot.lane.b32.xlu0 %v249, 12
        %v5325 = vpop.permute.xlu0 %5324
        %5326 = vrot.lane.b32.xlu0 %v251, 12
        %v5327 = vpop.permute.xlu0 %5326
        %5328 = vrot.lane.b32.xlu0 %v252, 12
        %v5329 = vpop.permute.xlu0 %5328
        %5330 = vrot.lane.b32.xlu0 %v254, 12
        %v5331 = vpop.permute.xlu0 %5330
        %5332 = vrot.lane.b32.xlu0 %v255, 12
        %v5333 = vpop.permute.xlu0 %5332
        %5334 = vrot.lane.b32.xlu0 %v257, 12
        %v5335 = vpop.permute.xlu0 %5334
        %5336 = vrot.lane.b32.xlu0 %v258, 12
        %v5337 = vpop.permute.xlu0 %5336
        %5338 = vrot.lane.b32.xlu0 %v260, 12
        %v5339 = vpop.permute.xlu0 %5338
        %5340 = vrot.lane.b32.xlu0 %v261, 12
        %v5341 = vpop.permute.xlu0 %5340
        %5342 = vrot.lane.b32.xlu0 %v263, 12
        %v5343 = vpop.permute.xlu0 %5342
        %5344 = vrot.lane.b32.xlu0 %v264, 12
        %v5345 = vpop.permute.xlu0 %5344
        %5346 = vrot.lane.b32.xlu0 %v266, 12
        %v5347 = vpop.permute.xlu0 %5346
        %5348 = vrot.lane.b32.xlu0 %v267, 12
        %v5349 = vpop.permute.xlu0 %5348
        %5350 = vrot.lane.b32.xlu0 %v269, 12
        %v5351 = vpop.permute.xlu0 %5350
        %5352 = vrot.lane.b32.xlu0 %v270, 12
        %v5353 = vpop.permute.xlu0 %5352
        %5354 = vrot.lane.b32.xlu0 %v272, 12
        %v5355 = vpop.permute.xlu0 %5354
        %5356 = vrot.lane.b32.xlu0 %v273, 12
        %v5357 = vpop.permute.xlu0 %5356
        %5358 = vrot.lane.b32.xlu0 %v275, 12
        %v5359 = vpop.permute.xlu0 %5358
        %5360 = vrot.lane.b32.xlu0 %v276, 12
        %v5361 = vpop.permute.xlu0 %5360
        %5362 = vrot.lane.b32.xlu0 %v278, 12
        %v5363 = vpop.permute.xlu0 %5362
        %5364 = vrot.lane.b32.xlu0 %v279, 12
        %v5365 = vpop.permute.xlu0 %5364
        %5366 = vrot.lane.b32.xlu0 %v281, 12
        %v5367 = vpop.permute.xlu0 %5366
        %5368 = vrot.lane.b32.xlu0 %v282, 12
        %v5369 = vpop.permute.xlu0 %5368
        %5370 = vrot.lane.b32.xlu0 %v284, 12
        %v5371 = vpop.permute.xlu0 %5370
        %5372 = vrot.lane.b32.xlu0 %v285, 12
        %v5373 = vpop.permute.xlu0 %5372
        %5406 = vst.msk [vmem:[#allocation2 + $0x8] sm:$0xff] %vm968, %v5311
        %5407 = vst.msk [vmem:[#allocation2 + $0x18] sm:$0xff] %vm968, %v5313
        %5408 = vst.msk [vmem:[#allocation2 + $0x28] sm:$0xff] %vm968, %v5315
        %5409 = vst.msk [vmem:[#allocation2 + $0x38] sm:$0xff] %vm968, %v5317
        %5410 = vst.msk [vmem:[#allocation2 + $0x48] sm:$0xff] %vm968, %v5319
        %5411 = vst.msk [vmem:[#allocation2 + $0x58] sm:$0xff] %vm968, %v5321
        %5412 = vst.msk [vmem:[#allocation2 + $0x68] sm:$0xff] %vm968, %v5323
        %5413 = vst.msk [vmem:[#allocation2 + $0x78] sm:$0xff] %vm968, %v5325
        %5414 = vst.msk [vmem:[#allocation2 + $0x88] sm:$0xff] %vm968, %v5327
        %5415 = vst.msk [vmem:[#allocation2 + $0x98] sm:$0xff] %vm968, %v5329
        %5416 = vst.msk [vmem:[#allocation2 + $0xa8] sm:$0xff] %vm968, %v5331
        %5417 = vst.msk [vmem:[#allocation2 + $0xb8] sm:$0xff] %vm968, %v5333
        %5418 = vst.msk [vmem:[#allocation2 + $0xc8] sm:$0xff] %vm968, %v5335
        %5419 = vst.msk [vmem:[#allocation2 + $0xd8] sm:$0xff] %vm968, %v5337
        %5420 = vst.msk [vmem:[#allocation2 + $0xe8] sm:$0xff] %vm968, %v5339
        %5421 = vst.msk [vmem:[#allocation2 + $0xf8] sm:$0xff] %vm968, %v5341
        %5422 = vst.msk [vmem:[#allocation2 + $0x108] sm:$0xff] %vm968, %v5343
        %5423 = vst.msk [vmem:[#allocation2 + $0x118] sm:$0xff] %vm968, %v5345
        %5424 = vst.msk [vmem:[#allocation2 + $0x128] sm:$0xff] %vm968, %v5347
        %5425 = vst.msk [vmem:[#allocation2 + $0x138] sm:$0xff] %vm968, %v5349
        %5426 = vst.msk [vmem:[#allocation2 + $0x148] sm:$0xff] %vm968, %v5351
        %5427 = vst.msk [vmem:[#allocation2 + $0x158] sm:$0xff] %vm968, %v5353
        %5428 = vst.msk [vmem:[#allocation2 + $0x168] sm:$0xff] %vm968, %v5355
        %5429 = vst.msk [vmem:[#allocation2 + $0x178] sm:$0xff] %vm968, %v5357
        %5430 = vst.msk [vmem:[#allocation2 + $0x188] sm:$0xff] %vm968, %v5359
        %5431 = vst.msk [vmem:[#allocation2 + $0x198] sm:$0xff] %vm968, %v5361
        %5432 = vst.msk [vmem:[#allocation2 + $0x1a8] sm:$0xff] %vm968, %v5363
        %5433 = vst.msk [vmem:[#allocation2 + $0x1b8] sm:$0xff] %vm968, %v5365
        %5434 = vst.msk [vmem:[#allocation2 + $0x1c8] sm:$0xff] %vm968, %v5367
        %5435 = vst.msk [vmem:[#allocation2 + $0x1d8] sm:$0xff] %vm968, %v5369
        %5436 = vst.msk [vmem:[#allocation2 + $0x1e8] sm:$0xff] %vm968, %v5371
        %5437 = vst.msk [vmem:[#allocation2 + $0x1f8] sm:$0xff] %vm968, %v5373
        %v5439 = vrot.slane %v284, 1
        %v5440 = vrot.slane %v285, 1
        %v5441 = vsel %vm371, %v5439, %v5440
        %v5442 = vrot.slane %v286, 1
        %v5443 = vsel %vm371, %v5440, %v5442
        %5444 = vrot.lane.b32.xlu0 %v399, 16
        %v5445 = vpop.permute.xlu0 %5444
        %5446 = vrot.lane.b32.xlu0 %v401, 16
        %v5447 = vpop.permute.xlu0 %5446
        %5448 = vrot.lane.b32.xlu0 %v404, 16
        %v5449 = vpop.permute.xlu0 %5448
        %5450 = vrot.lane.b32.xlu0 %v406, 16
        %v5451 = vpop.permute.xlu0 %5450
        %5452 = vrot.lane.b32.xlu0 %v409, 16
        %v5453 = vpop.permute.xlu0 %5452
        %5454 = vrot.lane.b32.xlu0 %v411, 16
        %v5455 = vpop.permute.xlu0 %5454
        %5456 = vrot.lane.b32.xlu0 %v414, 16
        %v5457 = vpop.permute.xlu0 %5456
        %5458 = vrot.lane.b32.xlu0 %v416, 16
        %v5459 = vpop.permute.xlu0 %5458
        %5460 = vrot.lane.b32.xlu0 %v419, 16
        %v5461 = vpop.permute.xlu0 %5460
        %5462 = vrot.lane.b32.xlu0 %v421, 16
        %v5463 = vpop.permute.xlu0 %5462
        %5464 = vrot.lane.b32.xlu0 %v424, 16
        %v5465 = vpop.permute.xlu0 %5464
        %5466 = vrot.lane.b32.xlu0 %v426, 16
        %v5467 = vpop.permute.xlu0 %5466
        %5468 = vrot.lane.b32.xlu0 %v429, 16
        %v5469 = vpop.permute.xlu0 %5468
        %5470 = vrot.lane.b32.xlu0 %v431, 16
        %v5471 = vpop.permute.xlu0 %5470
        %5472 = vrot.lane.b32.xlu0 %v434, 16
        %v5473 = vpop.permute.xlu0 %5472
        %5474 = vrot.lane.b32.xlu0 %v436, 16
        %v5475 = vpop.permute.xlu0 %5474
        %5476 = vrot.lane.b32.xlu0 %v439, 16
        %v5477 = vpop.permute.xlu0 %5476
        %5478 = vrot.lane.b32.xlu0 %v441, 16
        %v5479 = vpop.permute.xlu0 %5478
        %5480 = vrot.lane.b32.xlu0 %v444, 16
        %v5481 = vpop.permute.xlu0 %5480
        %5482 = vrot.lane.b32.xlu0 %v446, 16
        %v5483 = vpop.permute.xlu0 %5482
        %5484 = vrot.lane.b32.xlu0 %v449, 16
        %v5485 = vpop.permute.xlu0 %5484
        %5486 = vrot.lane.b32.xlu0 %v451, 16
        %v5487 = vpop.permute.xlu0 %5486
        %5488 = vrot.lane.b32.xlu0 %v1765, 16
        %v5489 = vpop.permute.xlu0 %5488
        %5490 = vrot.lane.b32.xlu0 %v1767, 16
        %v5491 = vpop.permute.xlu0 %5490
        %5492 = vrot.lane.b32.xlu0 %v2701, 16
        %v5493 = vpop.permute.xlu0 %5492
        %5494 = vrot.lane.b32.xlu0 %v2703, 16
        %v5495 = vpop.permute.xlu0 %5494
        %5496 = vrot.lane.b32.xlu0 %v3637, 16
        %v5497 = vpop.permute.xlu0 %5496
        %5498 = vrot.lane.b32.xlu0 %v3639, 16
        %v5499 = vpop.permute.xlu0 %5498
        %5500 = vrot.lane.b32.xlu0 %v4573, 16
        %v5501 = vpop.permute.xlu0 %5500
        %5502 = vrot.lane.b32.xlu0 %v4575, 16
        %v5503 = vpop.permute.xlu0 %5502
        %5504 = vrot.lane.b32.xlu0 %v5441, 16
        %v5505 = vpop.permute.xlu0 %5504
        %5506 = vrot.lane.b32.xlu0 %v5443, 16
        %v5507 = vpop.permute.xlu0 %5506
        %5540 = vst.msk [vmem:[#allocation2 + $0x8] sm:$0xff] %vm1178, %v5445
        %5541 = vst.msk [vmem:[#allocation2 + $0x18] sm:$0xff] %vm1178, %v5447
        %5542 = vst.msk [vmem:[#allocation2 + $0x28] sm:$0xff] %vm1178, %v5449
        %5543 = vst.msk [vmem:[#allocation2 + $0x38] sm:$0xff] %vm1178, %v5451
        %5544 = vst.msk [vmem:[#allocation2 + $0x48] sm:$0xff] %vm1178, %v5453
        %5545 = vst.msk [vmem:[#allocation2 + $0x58] sm:$0xff] %vm1178, %v5455
        %5546 = vst.msk [vmem:[#allocation2 + $0x68] sm:$0xff] %vm1178, %v5457
        %5547 = vst.msk [vmem:[#allocation2 + $0x78] sm:$0xff] %vm1178, %v5459
        %5548 = vst.msk [vmem:[#allocation2 + $0x88] sm:$0xff] %vm1178, %v5461
        %5549 = vst.msk [vmem:[#allocation2 + $0x98] sm:$0xff] %vm1178, %v5463
        %5550 = vst.msk [vmem:[#allocation2 + $0xa8] sm:$0xff] %vm1178, %v5465
        %5551 = vst.msk [vmem:[#allocation2 + $0xb8] sm:$0xff] %vm1178, %v5467
        %5552 = vst.msk [vmem:[#allocation2 + $0xc8] sm:$0xff] %vm1178, %v5469
        %5553 = vst.msk [vmem:[#allocation2 + $0xd8] sm:$0xff] %vm1178, %v5471
        %5554 = vst.msk [vmem:[#allocation2 + $0xe8] sm:$0xff] %vm1178, %v5473
        %5555 = vst.msk [vmem:[#allocation2 + $0xf8] sm:$0xff] %vm1178, %v5475
        %5556 = vst.msk [vmem:[#allocation2 + $0x108] sm:$0xff] %vm1178, %v5477
        %5557 = vst.msk [vmem:[#allocation2 + $0x118] sm:$0xff] %vm1178, %v5479
        %5558 = vst.msk [vmem:[#allocation2 + $0x128] sm:$0xff] %vm1178, %v5481
        %5559 = vst.msk [vmem:[#allocation2 + $0x138] sm:$0xff] %vm1178, %v5483
        %5560 = vst.msk [vmem:[#allocation2 + $0x148] sm:$0xff] %vm1178, %v5485
        %5561 = vst.msk [vmem:[#allocation2 + $0x158] sm:$0xff] %vm1178, %v5487
        %5562 = vst.msk [vmem:[#allocation2 + $0x168] sm:$0xff] %vm1178, %v5489
        %5563 = vst.msk [vmem:[#allocation2 + $0x178] sm:$0xff] %vm1178, %v5491
        %5564 = vst.msk [vmem:[#allocation2 + $0x188] sm:$0xff] %vm1178, %v5493
        %5565 = vst.msk [vmem:[#allocation2 + $0x198] sm:$0xff] %vm1178, %v5495
        %5566 = vst.msk [vmem:[#allocation2 + $0x1a8] sm:$0xff] %vm1178, %v5497
        %5567 = vst.msk [vmem:[#allocation2 + $0x1b8] sm:$0xff] %vm1178, %v5499
        %5568 = vst.msk [vmem:[#allocation2 + $0x1c8] sm:$0xff] %vm1178, %v5501
        %5569 = vst.msk [vmem:[#allocation2 + $0x1d8] sm:$0xff] %vm1178, %v5503
        %5570 = vst.msk [vmem:[#allocation2 + $0x1e8] sm:$0xff] %vm1178, %v5505
        %5571 = vst.msk [vmem:[#allocation2 + $0x1f8] sm:$0xff] %vm1178, %v5507
        %v5572 = vrot.slane %v284, 2
        %v5573 = vrot.slane %v285, 2
        %v5574 = vsel %vm581, %v5572, %v5573
        %v5575 = vrot.slane %v286, 2
        %v5576 = vsel %vm581, %v5573, %v5575
        %5577 = vrot.lane.b32.xlu0 %v609, 20
        %v5578 = vpop.permute.xlu0 %5577
        %5579 = vrot.lane.b32.xlu0 %v611, 20
        %v5580 = vpop.permute.xlu0 %5579
        %5581 = vrot.lane.b32.xlu0 %v614, 20
        %v5582 = vpop.permute.xlu0 %5581
        %5583 = vrot.lane.b32.xlu0 %v616, 20
        %v5584 = vpop.permute.xlu0 %5583
        %5585 = vrot.lane.b32.xlu0 %v619, 20
        %v5586 = vpop.permute.xlu0 %5585
        %5587 = vrot.lane.b32.xlu0 %v621, 20
        %v5588 = vpop.permute.xlu0 %5587
        %5589 = vrot.lane.b32.xlu0 %v624, 20
        %v5590 = vpop.permute.xlu0 %5589
        %5591 = vrot.lane.b32.xlu0 %v626, 20
        %v5592 = vpop.permute.xlu0 %5591
        %5593 = vrot.lane.b32.xlu0 %v629, 20
        %v5594 = vpop.permute.xlu0 %5593
        %5595 = vrot.lane.b32.xlu0 %v631, 20
        %v5596 = vpop.permute.xlu0 %5595
        %5597 = vrot.lane.b32.xlu0 %v634, 20
        %v5598 = vpop.permute.xlu0 %5597
        %5599 = vrot.lane.b32.xlu0 %v636, 20
        %v5600 = vpop.permute.xlu0 %5599
        %5601 = vrot.lane.b32.xlu0 %v639, 20
        %v5602 = vpop.permute.xlu0 %5601
        %5603 = vrot.lane.b32.xlu0 %v641, 20
        %v5604 = vpop.permute.xlu0 %5603
        %5605 = vrot.lane.b32.xlu0 %v644, 20
        %v5606 = vpop.permute.xlu0 %5605
        %5607 = vrot.lane.b32.xlu0 %v646, 20
        %v5608 = vpop.permute.xlu0 %5607
        %5609 = vrot.lane.b32.xlu0 %v649, 20
        %v5610 = vpop.permute.xlu0 %5609
        %5611 = vrot.lane.b32.xlu0 %v651, 20
        %v5612 = vpop.permute.xlu0 %5611
        %5613 = vrot.lane.b32.xlu0 %v654, 20
        %v5614 = vpop.permute.xlu0 %5613
        %5615 = vrot.lane.b32.xlu0 %v656, 20
        %v5616 = vpop.permute.xlu0 %5615
        %5617 = vrot.lane.b32.xlu0 %v659, 20
        %v5618 = vpop.permute.xlu0 %5617
        %5619 = vrot.lane.b32.xlu0 %v661, 20
        %v5620 = vpop.permute.xlu0 %5619
        %5621 = vrot.lane.b32.xlu0 %v1899, 20
        %v5622 = vpop.permute.xlu0 %5621
        %5623 = vrot.lane.b32.xlu0 %v1901, 20
        %v5624 = vpop.permute.xlu0 %5623
        %5625 = vrot.lane.b32.xlu0 %v2835, 20
        %v5626 = vpop.permute.xlu0 %5625
        %5627 = vrot.lane.b32.xlu0 %v2837, 20
        %v5628 = vpop.permute.xlu0 %5627
        %5629 = vrot.lane.b32.xlu0 %v3771, 20
        %v5630 = vpop.permute.xlu0 %5629
        %5631 = vrot.lane.b32.xlu0 %v3773, 20
        %v5632 = vpop.permute.xlu0 %5631
        %5633 = vrot.lane.b32.xlu0 %v4707, 20
        %v5634 = vpop.permute.xlu0 %5633
        %5635 = vrot.lane.b32.xlu0 %v4709, 20
        %v5636 = vpop.permute.xlu0 %5635
        %5637 = vrot.lane.b32.xlu0 %v5574, 20
        %v5638 = vpop.permute.xlu0 %5637
        %5639 = vrot.lane.b32.xlu0 %v5576, 20
        %v5640 = vpop.permute.xlu0 %5639
        %5673 = vst.msk [vmem:[#allocation2 + $0x8] sm:$0xff] %vm1388, %v5578
        %5674 = vst.msk [vmem:[#allocation2 + $0x18] sm:$0xff] %vm1388, %v5580
        %5675 = vst.msk [vmem:[#allocation2 + $0x28] sm:$0xff] %vm1388, %v5582
        %5676 = vst.msk [vmem:[#allocation2 + $0x38] sm:$0xff] %vm1388, %v5584
        %5677 = vst.msk [vmem:[#allocation2 + $0x48] sm:$0xff] %vm1388, %v5586
        %5678 = vst.msk [vmem:[#allocation2 + $0x58] sm:$0xff] %vm1388, %v5588
        %5679 = vst.msk [vmem:[#allocation2 + $0x68] sm:$0xff] %vm1388, %v5590
        %5680 = vst.msk [vmem:[#allocation2 + $0x78] sm:$0xff] %vm1388, %v5592
        %5681 = vst.msk [vmem:[#allocation2 + $0x88] sm:$0xff] %vm1388, %v5594
        %5682 = vst.msk [vmem:[#allocation2 + $0x98] sm:$0xff] %vm1388, %v5596
        %5683 = vst.msk [vmem:[#allocation2 + $0xa8] sm:$0xff] %vm1388, %v5598
        %5684 = vst.msk [vmem:[#allocation2 + $0xb8] sm:$0xff] %vm1388, %v5600
        %5685 = vst.msk [vmem:[#allocation2 + $0xc8] sm:$0xff] %vm1388, %v5602
        %5686 = vst.msk [vmem:[#allocation2 + $0xd8] sm:$0xff] %vm1388, %v5604
        %5687 = vst.msk [vmem:[#allocation2 + $0xe8] sm:$0xff] %vm1388, %v5606
        %5688 = vst.msk [vmem:[#allocation2 + $0xf8] sm:$0xff] %vm1388, %v5608
        %5689 = vst.msk [vmem:[#allocation2 + $0x108] sm:$0xff] %vm1388, %v5610
        %5690 = vst.msk [vmem:[#allocation2 + $0x118] sm:$0xff] %vm1388, %v5612
        %5691 = vst.msk [vmem:[#allocation2 + $0x128] sm:$0xff] %vm1388, %v5614
        %5692 = vst.msk [vmem:[#allocation2 + $0x138] sm:$0xff] %vm1388, %v5616
        %5693 = vst.msk [vmem:[#allocation2 + $0x148] sm:$0xff] %vm1388, %v5618
        %5694 = vst.msk [vmem:[#allocation2 + $0x158] sm:$0xff] %vm1388, %v5620
        %5695 = vst.msk [vmem:[#allocation2 + $0x168] sm:$0xff] %vm1388, %v5622
        %5696 = vst.msk [vmem:[#allocation2 + $0x178] sm:$0xff] %vm1388, %v5624
        %5697 = vst.msk [vmem:[#allocation2 + $0x188] sm:$0xff] %vm1388, %v5626
        %5698 = vst.msk [vmem:[#allocation2 + $0x198] sm:$0xff] %vm1388, %v5628
        %5699 = vst.msk [vmem:[#allocation2 + $0x1a8] sm:$0xff] %vm1388, %v5630
        %5700 = vst.msk [vmem:[#allocation2 + $0x1b8] sm:$0xff] %vm1388, %v5632
        %5701 = vst.msk [vmem:[#allocation2 + $0x1c8] sm:$0xff] %vm1388, %v5634
        %5702 = vst.msk [vmem:[#allocation2 + $0x1d8] sm:$0xff] %vm1388, %v5636
        %5703 = vst.msk [vmem:[#allocation2 + $0x1e8] sm:$0xff] %vm1388, %v5638
        %5704 = vst.msk [vmem:[#allocation2 + $0x1f8] sm:$0xff] %vm1388, %v5640
        %v5705 = vrot.slane %v284, 3
        %v5706 = vrot.slane %v285, 3
        %v5707 = vsel %vm791, %v5705, %v5706
        %v5708 = vrot.slane %v286, 3
        %v5709 = vsel %vm791, %v5706, %v5708
        %5710 = vrot.lane.b32.xlu0 %v819, 24
        %v5711 = vpop.permute.xlu0 %5710
        %5712 = vrot.lane.b32.xlu0 %v821, 24
        %v5713 = vpop.permute.xlu0 %5712
        %5714 = vrot.lane.b32.xlu0 %v824, 24
        %v5715 = vpop.permute.xlu0 %5714
        %5716 = vrot.lane.b32.xlu0 %v826, 24
        %v5717 = vpop.permute.xlu0 %5716
        %5718 = vrot.lane.b32.xlu0 %v829, 24
        %v5719 = vpop.permute.xlu0 %5718
        %5720 = vrot.lane.b32.xlu0 %v831, 24
        %v5721 = vpop.permute.xlu0 %5720
        %5722 = vrot.lane.b32.xlu0 %v834, 24
        %v5723 = vpop.permute.xlu0 %5722
        %5724 = vrot.lane.b32.xlu0 %v836, 24
        %v5725 = vpop.permute.xlu0 %5724
        %5726 = vrot.lane.b32.xlu0 %v839, 24
        %v5727 = vpop.permute.xlu0 %5726
        %5728 = vrot.lane.b32.xlu0 %v841, 24
        %v5729 = vpop.permute.xlu0 %5728
        %5730 = vrot.lane.b32.xlu0 %v844, 24
        %v5731 = vpop.permute.xlu0 %5730
        %5732 = vrot.lane.b32.xlu0 %v846, 24
        %v5733 = vpop.permute.xlu0 %5732
        %5734 = vrot.lane.b32.xlu0 %v849, 24
        %v5735 = vpop.permute.xlu0 %5734
        %5736 = vrot.lane.b32.xlu0 %v851, 24
        %v5737 = vpop.permute.xlu0 %5736
        %5738 = vrot.lane.b32.xlu0 %v854, 24
        %v5739 = vpop.permute.xlu0 %5738
        %5740 = vrot.lane.b32.xlu0 %v856, 24
        %v5741 = vpop.permute.xlu0 %5740
        %5742 = vrot.lane.b32.xlu0 %v859, 24
        %v5743 = vpop.permute.xlu0 %5742
        %5744 = vrot.lane.b32.xlu0 %v861, 24
        %v5745 = vpop.permute.xlu0 %5744
        %5746 = vrot.lane.b32.xlu0 %v864, 24
        %v5747 = vpop.permute.xlu0 %5746
        %5748 = vrot.lane.b32.xlu0 %v866, 24
        %v5749 = vpop.permute.xlu0 %5748
        %5750 = vrot.lane.b32.xlu0 %v869, 24
        %v5751 = vpop.permute.xlu0 %5750
        %5752 = vrot.lane.b32.xlu0 %v871, 24
        %v5753 = vpop.permute.xlu0 %5752
        %5754 = vrot.lane.b32.xlu0 %v2033, 24
        %v5755 = vpop.permute.xlu0 %5754
        %5756 = vrot.lane.b32.xlu0 %v2035, 24
        %v5757 = vpop.permute.xlu0 %5756
        %5758 = vrot.lane.b32.xlu0 %v2969, 24
        %v5759 = vpop.permute.xlu0 %5758
        %5760 = vrot.lane.b32.xlu0 %v2971, 24
        %v5761 = vpop.permute.xlu0 %5760
        %5762 = vrot.lane.b32.xlu0 %v3905, 24
        %v5763 = vpop.permute.xlu0 %5762
        %5764 = vrot.lane.b32.xlu0 %v3907, 24
        %v5765 = vpop.permute.xlu0 %5764
        %5766 = vrot.lane.b32.xlu0 %v4841, 24
        %v5767 = vpop.permute.xlu0 %5766
        %5768 = vrot.lane.b32.xlu0 %v4843, 24
        %v5769 = vpop.permute.xlu0 %5768
        %5770 = vrot.lane.b32.xlu0 %v5707, 24
        %v5771 = vpop.permute.xlu0 %5770
        %5772 = vrot.lane.b32.xlu0 %v5709, 24
        %v5773 = vpop.permute.xlu0 %5772
        %5806 = vst.msk [vmem:[#allocation2 + $0x8] sm:$0xff] %vm1598, %v5711
        %5807 = vst.msk [vmem:[#allocation2 + $0x18] sm:$0xff] %vm1598, %v5713
        %5808 = vst.msk [vmem:[#allocation2 + $0x28] sm:$0xff] %vm1598, %v5715
        %5809 = vst.msk [vmem:[#allocation2 + $0x38] sm:$0xff] %vm1598, %v5717
        %5810 = vst.msk [vmem:[#allocation2 + $0x48] sm:$0xff] %vm1598, %v5719
        %5811 = vst.msk [vmem:[#allocation2 + $0x58] sm:$0xff] %vm1598, %v5721
        %5812 = vst.msk [vmem:[#allocation2 + $0x68] sm:$0xff] %vm1598, %v5723
        %5813 = vst.msk [vmem:[#allocation2 + $0x78] sm:$0xff] %vm1598, %v5725
        %5814 = vst.msk [vmem:[#allocation2 + $0x88] sm:$0xff] %vm1598, %v5727
        %5815 = vst.msk [vmem:[#allocation2 + $0x98] sm:$0xff] %vm1598, %v5729
        %5816 = vst.msk [vmem:[#allocation2 + $0xa8] sm:$0xff] %vm1598, %v5731
        %5817 = vst.msk [vmem:[#allocation2 + $0xb8] sm:$0xff] %vm1598, %v5733
        %5818 = vst.msk [vmem:[#allocation2 + $0xc8] sm:$0xff] %vm1598, %v5735
        %5819 = vst.msk [vmem:[#allocation2 + $0xd8] sm:$0xff] %vm1598, %v5737
        %5820 = vst.msk [vmem:[#allocation2 + $0xe8] sm:$0xff] %vm1598, %v5739
        %5821 = vst.msk [vmem:[#allocation2 + $0xf8] sm:$0xff] %vm1598, %v5741
        %5822 = vst.msk [vmem:[#allocation2 + $0x108] sm:$0xff] %vm1598, %v5743
        %5823 = vst.msk [vmem:[#allocation2 + $0x118] sm:$0xff] %vm1598, %v5745
        %5824 = vst.msk [vmem:[#allocation2 + $0x128] sm:$0xff] %vm1598, %v5747
        %5825 = vst.msk [vmem:[#allocation2 + $0x138] sm:$0xff] %vm1598, %v5749
        %5826 = vst.msk [vmem:[#allocation2 + $0x148] sm:$0xff] %vm1598, %v5751
        %5827 = vst.msk [vmem:[#allocation2 + $0x158] sm:$0xff] %vm1598, %v5753
        %5828 = vst.msk [vmem:[#allocation2 + $0x168] sm:$0xff] %vm1598, %v5755
        %5829 = vst.msk [vmem:[#allocation2 + $0x178] sm:$0xff] %vm1598, %v5757
        %5830 = vst.msk [vmem:[#allocation2 + $0x188] sm:$0xff] %vm1598, %v5759
        %5831 = vst.msk [vmem:[#allocation2 + $0x198] sm:$0xff] %vm1598, %v5761
        %5832 = vst.msk [vmem:[#allocation2 + $0x1a8] sm:$0xff] %vm1598, %v5763
        %5833 = vst.msk [vmem:[#allocation2 + $0x1b8] sm:$0xff] %vm1598, %v5765
        %5834 = vst.msk [vmem:[#allocation2 + $0x1c8] sm:$0xff] %vm1598, %v5767
        %5835 = vst.msk [vmem:[#allocation2 + $0x1d8] sm:$0xff] %vm1598, %v5769
        %5836 = vst.msk [vmem:[#allocation2 + $0x1e8] sm:$0xff] %vm1598, %v5771
        %5837 = vst.msk [vmem:[#allocation2 + $0x1f8] sm:$0xff] %vm1598, %v5773
        %v5838 = vrot.slane %v284, 4
        %v5839 = vrot.slane %v285, 4
        %v5840 = vsel %vm1001, %v5838, %v5839
        %v5841 = vrot.slane %v286, 4
        %v5842 = vsel %vm1001, %v5839, %v5841
        %5843 = vrot.lane.b32.xlu0 %v1029, 28
        %v5844 = vpop.permute.xlu0 %5843
        %5845 = vrot.lane.b32.xlu0 %v1031, 28
        %v5846 = vpop.permute.xlu0 %5845
        %5847 = vrot.lane.b32.xlu0 %v1034, 28
        %v5848 = vpop.permute.xlu0 %5847
        %5849 = vrot.lane.b32.xlu0 %v1036, 28
        %v5850 = vpop.permute.xlu0 %5849
        %5851 = vrot.lane.b32.xlu0 %v1039, 28
        %v5852 = vpop.permute.xlu0 %5851
        %5853 = vrot.lane.b32.xlu0 %v1041, 28
        %v5854 = vpop.permute.xlu0 %5853
        %5855 = vrot.lane.b32.xlu0 %v1044, 28
        %v5856 = vpop.permute.xlu0 %5855
        %5857 = vrot.lane.b32.xlu0 %v1046, 28
        %v5858 = vpop.permute.xlu0 %5857
        %5859 = vrot.lane.b32.xlu0 %v1049, 28
        %v5860 = vpop.permute.xlu0 %5859
        %5861 = vrot.lane.b32.xlu0 %v1051, 28
        %v5862 = vpop.permute.xlu0 %5861
        %5863 = vrot.lane.b32.xlu0 %v1054, 28
        %v5864 = vpop.permute.xlu0 %5863
        %5865 = vrot.lane.b32.xlu0 %v1056, 28
        %v5866 = vpop.permute.xlu0 %5865
        %5867 = vrot.lane.b32.xlu0 %v1059, 28
        %v5868 = vpop.permute.xlu0 %5867
        %5869 = vrot.lane.b32.xlu0 %v1061, 28
        %v5870 = vpop.permute.xlu0 %5869
        %5871 = vrot.lane.b32.xlu0 %v1064, 28
        %v5872 = vpop.permute.xlu0 %5871
        %5873 = vrot.lane.b32.xlu0 %v1066, 28
        %v5874 = vpop.permute.xlu0 %5873
        %5875 = vrot.lane.b32.xlu0 %v1069, 28
        %v5876 = vpop.permute.xlu0 %5875
        %5877 = vrot.lane.b32.xlu0 %v1071, 28
        %v5878 = vpop.permute.xlu0 %5877
        %5879 = vrot.lane.b32.xlu0 %v1074, 28
        %v5880 = vpop.permute.xlu0 %5879
        %5881 = vrot.lane.b32.xlu0 %v1076, 28
        %v5882 = vpop.permute.xlu0 %5881
        %5883 = vrot.lane.b32.xlu0 %v1079, 28
        %v5884 = vpop.permute.xlu0 %5883
        %5885 = vrot.lane.b32.xlu0 %v1081, 28
        %v5886 = vpop.permute.xlu0 %5885
        %5887 = vrot.lane.b32.xlu0 %v2167, 28
        %v5888 = vpop.permute.xlu0 %5887
        %5889 = vrot.lane.b32.xlu0 %v2169, 28
        %v5890 = vpop.permute.xlu0 %5889
        %5891 = vrot.lane.b32.xlu0 %v3103, 28
        %v5892 = vpop.permute.xlu0 %5891
        %5893 = vrot.lane.b32.xlu0 %v3105, 28
        %v5894 = vpop.permute.xlu0 %5893
        %5895 = vrot.lane.b32.xlu0 %v4039, 28
        %v5896 = vpop.permute.xlu0 %5895
        %5897 = vrot.lane.b32.xlu0 %v4041, 28
        %v5898 = vpop.permute.xlu0 %5897
        %5899 = vrot.lane.b32.xlu0 %v4975, 28
        %v5900 = vpop.permute.xlu0 %5899
        %5901 = vrot.lane.b32.xlu0 %v4977, 28
        %v5902 = vpop.permute.xlu0 %5901
        %5903 = vrot.lane.b32.xlu0 %v5840, 28
        %v5904 = vpop.permute.xlu0 %5903
        %5905 = vrot.lane.b32.xlu0 %v5842, 28
        %v5906 = vpop.permute.xlu0 %5905
        %5939 = vst.msk [vmem:[#allocation2 + $0x8] sm:$0xff] %vm1729, %v5844
        %5940 = vst.msk [vmem:[#allocation2 + $0x18] sm:$0xff] %vm1729, %v5846
        %5941 = vst.msk [vmem:[#allocation2 + $0x28] sm:$0xff] %vm1729, %v5848
        %5942 = vst.msk [vmem:[#allocation2 + $0x38] sm:$0xff] %vm1729, %v5850
        %5943 = vst.msk [vmem:[#allocation2 + $0x48] sm:$0xff] %vm1729, %v5852
        %5944 = vst.msk [vmem:[#allocation2 + $0x58] sm:$0xff] %vm1729, %v5854
        %5945 = vst.msk [vmem:[#allocation2 + $0x68] sm:$0xff] %vm1729, %v5856
        %5946 = vst.msk [vmem:[#allocation2 + $0x78] sm:$0xff] %vm1729, %v5858
        %5947 = vst.msk [vmem:[#allocation2 + $0x88] sm:$0xff] %vm1729, %v5860
        %5948 = vst.msk [vmem:[#allocation2 + $0x98] sm:$0xff] %vm1729, %v5862
        %5949 = vst.msk [vmem:[#allocation2 + $0xa8] sm:$0xff] %vm1729, %v5864
        %5950 = vst.msk [vmem:[#allocation2 + $0xb8] sm:$0xff] %vm1729, %v5866
        %5951 = vst.msk [vmem:[#allocation2 + $0xc8] sm:$0xff] %vm1729, %v5868
        %5952 = vst.msk [vmem:[#allocation2 + $0xd8] sm:$0xff] %vm1729, %v5870
        %5953 = vst.msk [vmem:[#allocation2 + $0xe8] sm:$0xff] %vm1729, %v5872
        %5954 = vst.msk [vmem:[#allocation2 + $0xf8] sm:$0xff] %vm1729, %v5874
        %5955 = vst.msk [vmem:[#allocation2 + $0x108] sm:$0xff] %vm1729, %v5876
        %5956 = vst.msk [vmem:[#allocation2 + $0x118] sm:$0xff] %vm1729, %v5878
        %5957 = vst.msk [vmem:[#allocation2 + $0x128] sm:$0xff] %vm1729, %v5880
        %5958 = vst.msk [vmem:[#allocation2 + $0x138] sm:$0xff] %vm1729, %v5882
        %5959 = vst.msk [vmem:[#allocation2 + $0x148] sm:$0xff] %vm1729, %v5884
        %5960 = vst.msk [vmem:[#allocation2 + $0x158] sm:$0xff] %vm1729, %v5886
        %5961 = vst.msk [vmem:[#allocation2 + $0x168] sm:$0xff] %vm1729, %v5888
        %5962 = vst.msk [vmem:[#allocation2 + $0x178] sm:$0xff] %vm1729, %v5890
        %5963 = vst.msk [vmem:[#allocation2 + $0x188] sm:$0xff] %vm1729, %v5892
        %5964 = vst.msk [vmem:[#allocation2 + $0x198] sm:$0xff] %vm1729, %v5894
        %5965 = vst.msk [vmem:[#allocation2 + $0x1a8] sm:$0xff] %vm1729, %v5896
        %5966 = vst.msk [vmem:[#allocation2 + $0x1b8] sm:$0xff] %vm1729, %v5898
        %5967 = vst.msk [vmem:[#allocation2 + $0x1c8] sm:$0xff] %vm1729, %v5900
        %5968 = vst.msk [vmem:[#allocation2 + $0x1d8] sm:$0xff] %vm1729, %v5902
        %5969 = vst.msk [vmem:[#allocation2 + $0x1e8] sm:$0xff] %vm1729, %v5904
        %5970 = vst.msk [vmem:[#allocation2 + $0x1f8] sm:$0xff] %vm1729, %v5906
        %v5971 = vrot.slane %v284, 5
        %v5972 = vrot.slane %v285, 5
        %v5973 = vsel %vm1211, %v5971, %v5972
        %v5974 = vrot.slane %v286, 5
        %v5975 = vsel %vm1211, %v5972, %v5974
        %5976 = vrot.lane.b32.xlu0 %v1239, 32
        %v5977 = vpop.permute.xlu0 %5976
        %5978 = vrot.lane.b32.xlu0 %v1241, 32
        %v5979 = vpop.permute.xlu0 %5978
        %5980 = vrot.lane.b32.xlu0 %v1244, 32
        %v5981 = vpop.permute.xlu0 %5980
        %5982 = vrot.lane.b32.xlu0 %v1246, 32
        %v5983 = vpop.permute.xlu0 %5982
        %5984 = vrot.lane.b32.xlu0 %v1249, 32
        %v5985 = vpop.permute.xlu0 %5984
        %5986 = vrot.lane.b32.xlu0 %v1251, 32
        %v5987 = vpop.permute.xlu0 %5986
        %5988 = vrot.lane.b32.xlu0 %v1254, 32
        %v5989 = vpop.permute.xlu0 %5988
        %5990 = vrot.lane.b32.xlu0 %v1256, 32
        %v5991 = vpop.permute.xlu0 %5990
        %5992 = vrot.lane.b32.xlu0 %v1259, 32
        %v5993 = vpop.permute.xlu0 %5992
        %5994 = vrot.lane.b32.xlu0 %v1261, 32
        %v5995 = vpop.permute.xlu0 %5994
        %5996 = vrot.lane.b32.xlu0 %v1264, 32
        %v5997 = vpop.permute.xlu0 %5996
        %5998 = vrot.lane.b32.xlu0 %v1266, 32
        %v5999 = vpop.permute.xlu0 %5998
        %6000 = vrot.lane.b32.xlu0 %v1269, 32
        %v6001 = vpop.permute.xlu0 %6000
        %6002 = vrot.lane.b32.xlu0 %v1271, 32
        %v6003 = vpop.permute.xlu0 %6002
        %6004 = vrot.lane.b32.xlu0 %v1274, 32
        %v6005 = vpop.permute.xlu0 %6004
        %6006 = vrot.lane.b32.xlu0 %v1276, 32
        %v6007 = vpop.permute.xlu0 %6006
        %6008 = vrot.lane.b32.xlu0 %v1279, 32
        %v6009 = vpop.permute.xlu0 %6008
        %6010 = vrot.lane.b32.xlu0 %v1281, 32
        %v6011 = vpop.permute.xlu0 %6010
        %6012 = vrot.lane.b32.xlu0 %v1284, 32
        %v6013 = vpop.permute.xlu0 %6012
        %6014 = vrot.lane.b32.xlu0 %v1286, 32
        %v6015 = vpop.permute.xlu0 %6014
        %6016 = vrot.lane.b32.xlu0 %v1289, 32
        %v6017 = vpop.permute.xlu0 %6016
        %6018 = vrot.lane.b32.xlu0 %v1291, 32
        %v6019 = vpop.permute.xlu0 %6018
        %6020 = vrot.lane.b32.xlu0 %v2301, 32
        %v6021 = vpop.permute.xlu0 %6020
        %6022 = vrot.lane.b32.xlu0 %v2303, 32
        %v6023 = vpop.permute.xlu0 %6022
        %6024 = vrot.lane.b32.xlu0 %v3237, 32
        %v6025 = vpop.permute.xlu0 %6024
        %6026 = vrot.lane.b32.xlu0 %v3239, 32
        %v6027 = vpop.permute.xlu0 %6026
        %6028 = vrot.lane.b32.xlu0 %v4173, 32
        %v6029 = vpop.permute.xlu0 %6028
        %6030 = vrot.lane.b32.xlu0 %v4175, 32
        %v6031 = vpop.permute.xlu0 %6030
        %6032 = vrot.lane.b32.xlu0 %v5044, 32
        %v6033 = vpop.permute.xlu0 %6032
        %6034 = vrot.lane.b32.xlu0 %v5046, 32
        %v6035 = vpop.permute.xlu0 %6034
        %6036 = vrot.lane.b32.xlu0 %v5973, 32
        %v6037 = vpop.permute.xlu0 %6036
        %6038 = vrot.lane.b32.xlu0 %v5975, 32
        %v6039 = vpop.permute.xlu0 %6038
        %6072 = vst.msk [vmem:[#allocation2 + $0x8] sm:$0xff] %vm1864, %v5977
        %6073 = vst.msk [vmem:[#allocation2 + $0x18] sm:$0xff] %vm1864, %v5979
        %6074 = vst.msk [vmem:[#allocation2 + $0x28] sm:$0xff] %vm1864, %v5981
        %6075 = vst.msk [vmem:[#allocation2 + $0x38] sm:$0xff] %vm1864, %v5983
        %6076 = vst.msk [vmem:[#allocation2 + $0x48] sm:$0xff] %vm1864, %v5985
        %6077 = vst.msk [vmem:[#allocation2 + $0x58] sm:$0xff] %vm1864, %v5987
        %6078 = vst.msk [vmem:[#allocation2 + $0x68] sm:$0xff] %vm1864, %v5989
        %6079 = vst.msk [vmem:[#allocation2 + $0x78] sm:$0xff] %vm1864, %v5991
        %6080 = vst.msk [vmem:[#allocation2 + $0x88] sm:$0xff] %vm1864, %v5993
        %6081 = vst.msk [vmem:[#allocation2 + $0x98] sm:$0xff] %vm1864, %v5995
        %6082 = vst.msk [vmem:[#allocation2 + $0xa8] sm:$0xff] %vm1864, %v5997
        %6083 = vst.msk [vmem:[#allocation2 + $0xb8] sm:$0xff] %vm1864, %v5999
        %6084 = vst.msk [vmem:[#allocation2 + $0xc8] sm:$0xff] %vm1864, %v6001
        %6085 = vst.msk [vmem:[#allocation2 + $0xd8] sm:$0xff] %vm1864, %v6003
        %6086 = vst.msk [vmem:[#allocation2 + $0xe8] sm:$0xff] %vm1864, %v6005
        %6087 = vst.msk [vmem:[#allocation2 + $0xf8] sm:$0xff] %vm1864, %v6007
        %6088 = vst.msk [vmem:[#allocation2 + $0x108] sm:$0xff] %vm1864, %v6009
        %6089 = vst.msk [vmem:[#allocation2 + $0x118] sm:$0xff] %vm1864, %v6011
        %6090 = vst.msk [vmem:[#allocation2 + $0x128] sm:$0xff] %vm1864, %v6013
        %6091 = vst.msk [vmem:[#allocation2 + $0x138] sm:$0xff] %vm1864, %v6015
        %6092 = vst.msk [vmem:[#allocation2 + $0x148] sm:$0xff] %vm1864, %v6017
        %6093 = vst.msk [vmem:[#allocation2 + $0x158] sm:$0xff] %vm1864, %v6019
        %6094 = vst.msk [vmem:[#allocation2 + $0x168] sm:$0xff] %vm1864, %v6021
        %6095 = vst.msk [vmem:[#allocation2 + $0x178] sm:$0xff] %vm1864, %v6023
        %6096 = vst.msk [vmem:[#allocation2 + $0x188] sm:$0xff] %vm1864, %v6025
        %6097 = vst.msk [vmem:[#allocation2 + $0x198] sm:$0xff] %vm1864, %v6027
        %6098 = vst.msk [vmem:[#allocation2 + $0x1a8] sm:$0xff] %vm1864, %v6029
        %6099 = vst.msk [vmem:[#allocation2 + $0x1b8] sm:$0xff] %vm1864, %v6031
        %6100 = vst.msk [vmem:[#allocation2 + $0x1c8] sm:$0xff] %vm1864, %v6033
        %6101 = vst.msk [vmem:[#allocation2 + $0x1d8] sm:$0xff] %vm1864, %v6035
        %6102 = vst.msk [vmem:[#allocation2 + $0x1e8] sm:$0xff] %vm1864, %v6037
        %6103 = vst.msk [vmem:[#allocation2 + $0x1f8] sm:$0xff] %vm1864, %v6039
        %v6104 = vrot.slane %v284, 6
        %v6105 = vrot.slane %v285, 6
        %v6106 = vsel %vm1421, %v6104, %v6105
        %v6107 = vrot.slane %v286, 6
        %v6108 = vsel %vm1421, %v6105, %v6107
        %6109 = vrot.lane.b32.xlu0 %v1449, 36
        %v6110 = vpop.permute.xlu0 %6109
        %6111 = vrot.lane.b32.xlu0 %v1451, 36
        %v6112 = vpop.permute.xlu0 %6111
        %6113 = vrot.lane.b32.xlu0 %v1454, 36
        %v6114 = vpop.permute.xlu0 %6113
        %6115 = vrot.lane.b32.xlu0 %v1456, 36
        %v6116 = vpop.permute.xlu0 %6115
        %6117 = vrot.lane.b32.xlu0 %v1459, 36
        %v6118 = vpop.permute.xlu0 %6117
        %6119 = vrot.lane.b32.xlu0 %v1461, 36
        %v6120 = vpop.permute.xlu0 %6119
        %6121 = vrot.lane.b32.xlu0 %v1464, 36
        %v6122 = vpop.permute.xlu0 %6121
        %6123 = vrot.lane.b32.xlu0 %v1466, 36
        %v6124 = vpop.permute.xlu0 %6123
        %6125 = vrot.lane.b32.xlu0 %v1469, 36
        %v6126 = vpop.permute.xlu0 %6125
        %6127 = vrot.lane.b32.xlu0 %v1471, 36
        %v6128 = vpop.permute.xlu0 %6127
        %6129 = vrot.lane.b32.xlu0 %v1474, 36
        %v6130 = vpop.permute.xlu0 %6129
        %6131 = vrot.lane.b32.xlu0 %v1476, 36
        %v6132 = vpop.permute.xlu0 %6131
        %6133 = vrot.lane.b32.xlu0 %v1479, 36
        %v6134 = vpop.permute.xlu0 %6133
        %6135 = vrot.lane.b32.xlu0 %v1481, 36
        %v6136 = vpop.permute.xlu0 %6135
        %6137 = vrot.lane.b32.xlu0 %v1484, 36
        %v6138 = vpop.permute.xlu0 %6137
        %6139 = vrot.lane.b32.xlu0 %v1486, 36
        %v6140 = vpop.permute.xlu0 %6139
        %6141 = vrot.lane.b32.xlu0 %v1489, 36
        %v6142 = vpop.permute.xlu0 %6141
        %6143 = vrot.lane.b32.xlu0 %v1491, 36
        %v6144 = vpop.permute.xlu0 %6143
        %6145 = vrot.lane.b32.xlu0 %v1494, 36
        %v6146 = vpop.permute.xlu0 %6145
        %6147 = vrot.lane.b32.xlu0 %v1496, 36
        %v6148 = vpop.permute.xlu0 %6147
        %6149 = vrot.lane.b32.xlu0 %v1499, 36
        %v6150 = vpop.permute.xlu0 %6149
        %6151 = vrot.lane.b32.xlu0 %v1501, 36
        %v6152 = vpop.permute.xlu0 %6151
        %6153 = vrot.lane.b32.xlu0 %v2435, 36
        %v6154 = vpop.permute.xlu0 %6153
        %6155 = vrot.lane.b32.xlu0 %v2437, 36
        %v6156 = vpop.permute.xlu0 %6155
        %6157 = vrot.lane.b32.xlu0 %v3371, 36
        %v6158 = vpop.permute.xlu0 %6157
        %6159 = vrot.lane.b32.xlu0 %v3373, 36
        %v6160 = vpop.permute.xlu0 %6159
        %6161 = vrot.lane.b32.xlu0 %v4307, 36
        %v6162 = vpop.permute.xlu0 %6161
        %6163 = vrot.lane.b32.xlu0 %v4309, 36
        %v6164 = vpop.permute.xlu0 %6163
        %6165 = vrot.lane.b32.xlu0 %v5177, 36
        %v6166 = vpop.permute.xlu0 %6165
        %6167 = vrot.lane.b32.xlu0 %v5179, 36
        %v6168 = vpop.permute.xlu0 %6167
        %6169 = vrot.lane.b32.xlu0 %v6106, 36
        %v6170 = vpop.permute.xlu0 %6169
        %6171 = vrot.lane.b32.xlu0 %v6108, 36
        %v6172 = vpop.permute.xlu0 %6171
        %6205 = vst.msk [vmem:[#allocation2 + $0x8] sm:$0xff] %vm1998, %v6110
        %6206 = vst.msk [vmem:[#allocation2 + $0x18] sm:$0xff] %vm1998, %v6112
        %6207 = vst.msk [vmem:[#allocation2 + $0x28] sm:$0xff] %vm1998, %v6114
        %6208 = vst.msk [vmem:[#allocation2 + $0x38] sm:$0xff] %vm1998, %v6116
        %6209 = vst.msk [vmem:[#allocation2 + $0x48] sm:$0xff] %vm1998, %v6118
        %6210 = vst.msk [vmem:[#allocation2 + $0x58] sm:$0xff] %vm1998, %v6120
        %6211 = vst.msk [vmem:[#allocation2 + $0x68] sm:$0xff] %vm1998, %v6122
        %6212 = vst.msk [vmem:[#allocation2 + $0x78] sm:$0xff] %vm1998, %v6124
        %6213 = vst.msk [vmem:[#allocation2 + $0x88] sm:$0xff] %vm1998, %v6126
        %6214 = vst.msk [vmem:[#allocation2 + $0x98] sm:$0xff] %vm1998, %v6128
        %6215 = vst.msk [vmem:[#allocation2 + $0xa8] sm:$0xff] %vm1998, %v6130
        %6216 = vst.msk [vmem:[#allocation2 + $0xb8] sm:$0xff] %vm1998, %v6132
        %6217 = vst.msk [vmem:[#allocation2 + $0xc8] sm:$0xff] %vm1998, %v6134
        %6218 = vst.msk [vmem:[#allocation2 + $0xd8] sm:$0xff] %vm1998, %v6136
        %6219 = vst.msk [vmem:[#allocation2 + $0xe8] sm:$0xff] %vm1998, %v6138
        %6220 = vst.msk [vmem:[#allocation2 + $0xf8] sm:$0xff] %vm1998, %v6140
        %6221 = vst.msk [vmem:[#allocation2 + $0x108] sm:$0xff] %vm1998, %v6142
        %6222 = vst.msk [vmem:[#allocation2 + $0x118] sm:$0xff] %vm1998, %v6144
        %6223 = vst.msk [vmem:[#allocation2 + $0x128] sm:$0xff] %vm1998, %v6146
        %6224 = vst.msk [vmem:[#allocation2 + $0x138] sm:$0xff] %vm1998, %v6148
        %6225 = vst.msk [vmem:[#allocation2 + $0x148] sm:$0xff] %vm1998, %v6150
        %6226 = vst.msk [vmem:[#allocation2 + $0x158] sm:$0xff] %vm1998, %v6152
        %6227 = vst.msk [vmem:[#allocation2 + $0x168] sm:$0xff] %vm1998, %v6154
        %6228 = vst.msk [vmem:[#allocation2 + $0x178] sm:$0xff] %vm1998, %v6156
        %6229 = vst.msk [vmem:[#allocation2 + $0x188] sm:$0xff] %vm1998, %v6158
        %6230 = vst.msk [vmem:[#allocation2 + $0x198] sm:$0xff] %vm1998, %v6160
        %6231 = vst.msk [vmem:[#allocation2 + $0x1a8] sm:$0xff] %vm1998, %v6162
        %6232 = vst.msk [vmem:[#allocation2 + $0x1b8] sm:$0xff] %vm1998, %v6164
        %6233 = vst.msk [vmem:[#allocation2 + $0x1c8] sm:$0xff] %vm1998, %v6166
        %6234 = vst.msk [vmem:[#allocation2 + $0x1d8] sm:$0xff] %vm1998, %v6168
        %6235 = vst.msk [vmem:[#allocation2 + $0x1e8] sm:$0xff] %vm1998, %v6170
        %6236 = vst.msk [vmem:[#allocation2 + $0x1f8] sm:$0xff] %vm1998, %v6172
        %6239 = vrot.lane.b32.xlu0 %v242, 40
        %v6240 = vpop.permute.xlu0 %6239
        %6241 = vrot.lane.b32.xlu0 %v243, 40
        %v6242 = vpop.permute.xlu0 %6241
        %6243 = vrot.lane.b32.xlu0 %v245, 40
        %v6244 = vpop.permute.xlu0 %6243
        %6245 = vrot.lane.b32.xlu0 %v246, 40
        %v6246 = vpop.permute.xlu0 %6245
        %6247 = vrot.lane.b32.xlu0 %v248, 40
        %v6248 = vpop.permute.xlu0 %6247
        %6249 = vrot.lane.b32.xlu0 %v249, 40
        %v6250 = vpop.permute.xlu0 %6249
        %6251 = vrot.lane.b32.xlu0 %v251, 40
        %v6252 = vpop.permute.xlu0 %6251
        %6253 = vrot.lane.b32.xlu0 %v252, 40
        %v6254 = vpop.permute.xlu0 %6253
        %6255 = vrot.lane.b32.xlu0 %v254, 40
        %v6256 = vpop.permute.xlu0 %6255
        %6257 = vrot.lane.b32.xlu0 %v255, 40
        %v6258 = vpop.permute.xlu0 %6257
        %6259 = vrot.lane.b32.xlu0 %v257, 40
        %v6260 = vpop.permute.xlu0 %6259
        %6261 = vrot.lane.b32.xlu0 %v258, 40
        %v6262 = vpop.permute.xlu0 %6261
        %6263 = vrot.lane.b32.xlu0 %v260, 40
        %v6264 = vpop.permute.xlu0 %6263
        %6265 = vrot.lane.b32.xlu0 %v261, 40
        %v6266 = vpop.permute.xlu0 %6265
        %6267 = vrot.lane.b32.xlu0 %v263, 40
        %v6268 = vpop.permute.xlu0 %6267
        %6269 = vrot.lane.b32.xlu0 %v264, 40
        %v6270 = vpop.permute.xlu0 %6269
        %6271 = vrot.lane.b32.xlu0 %v266, 40
        %v6272 = vpop.permute.xlu0 %6271
        %6273 = vrot.lane.b32.xlu0 %v267, 40
        %v6274 = vpop.permute.xlu0 %6273
        %6275 = vrot.lane.b32.xlu0 %v269, 40
        %v6276 = vpop.permute.xlu0 %6275
        %6277 = vrot.lane.b32.xlu0 %v270, 40
        %v6278 = vpop.permute.xlu0 %6277
        %6279 = vrot.lane.b32.xlu0 %v272, 40
        %v6280 = vpop.permute.xlu0 %6279
        %6281 = vrot.lane.b32.xlu0 %v273, 40
        %v6282 = vpop.permute.xlu0 %6281
        %6283 = vrot.lane.b32.xlu0 %v275, 40
        %v6284 = vpop.permute.xlu0 %6283
        %6285 = vrot.lane.b32.xlu0 %v276, 40
        %v6286 = vpop.permute.xlu0 %6285
        %6287 = vrot.lane.b32.xlu0 %v278, 40
        %v6288 = vpop.permute.xlu0 %6287
        %6289 = vrot.lane.b32.xlu0 %v279, 40
        %v6290 = vpop.permute.xlu0 %6289
        %6291 = vrot.lane.b32.xlu0 %v281, 40
        %v6292 = vpop.permute.xlu0 %6291
        %6293 = vrot.lane.b32.xlu0 %v282, 40
        %v6294 = vpop.permute.xlu0 %6293
        %6295 = vrot.lane.b32.xlu0 %v284, 40
        %v6296 = vpop.permute.xlu0 %6295
        %6297 = vrot.lane.b32.xlu0 %v285, 40
        %v6298 = vpop.permute.xlu0 %6297
        %6299 = vrot.lane.b32.xlu0 %v287, 40
        %v6300 = vpop.permute.xlu0 %6299
        %6301 = vrot.lane.b32.xlu0 %v288, 40
        %v6302 = vpop.permute.xlu0 %6301
        %6335 = vst.msk [vmem:[#allocation2 + $0x8] sm:$0xff] %vm2132, %v6240
        %6336 = vst.msk [vmem:[#allocation2 + $0x18] sm:$0xff] %vm2132, %v6242
        %6337 = vst.msk [vmem:[#allocation2 + $0x28] sm:$0xff] %vm2132, %v6244
        %6338 = vst.msk [vmem:[#allocation2 + $0x38] sm:$0xff] %vm2132, %v6246
        %6339 = vst.msk [vmem:[#allocation2 + $0x48] sm:$0xff] %vm2132, %v6248
        %6340 = vst.msk [vmem:[#allocation2 + $0x58] sm:$0xff] %vm2132, %v6250
        %6341 = vst.msk [vmem:[#allocation2 + $0x68] sm:$0xff] %vm2132, %v6252
        %6342 = vst.msk [vmem:[#allocation2 + $0x78] sm:$0xff] %vm2132, %v6254
        %6343 = vst.msk [vmem:[#allocation2 + $0x88] sm:$0xff] %vm2132, %v6256
        %6344 = vst.msk [vmem:[#allocation2 + $0x98] sm:$0xff] %vm2132, %v6258
        %6345 = vst.msk [vmem:[#allocation2 + $0xa8] sm:$0xff] %vm2132, %v6260
        %6346 = vst.msk [vmem:[#allocation2 + $0xb8] sm:$0xff] %vm2132, %v6262
        %6347 = vst.msk [vmem:[#allocation2 + $0xc8] sm:$0xff] %vm2132, %v6264
        %6348 = vst.msk [vmem:[#allocation2 + $0xd8] sm:$0xff] %vm2132, %v6266
        %6349 = vst.msk [vmem:[#allocation2 + $0xe8] sm:$0xff] %vm2132, %v6268
        %6350 = vst.msk [vmem:[#allocation2 + $0xf8] sm:$0xff] %vm2132, %v6270
        %6351 = vst.msk [vmem:[#allocation2 + $0x108] sm:$0xff] %vm2132, %v6272
        %6352 = vst.msk [vmem:[#allocation2 + $0x118] sm:$0xff] %vm2132, %v6274
        %6353 = vst.msk [vmem:[#allocation2 + $0x128] sm:$0xff] %vm2132, %v6276
        %6354 = vst.msk [vmem:[#allocation2 + $0x138] sm:$0xff] %vm2132, %v6278
        %6355 = vst.msk [vmem:[#allocation2 + $0x148] sm:$0xff] %vm2132, %v6280
        %6356 = vst.msk [vmem:[#allocation2 + $0x158] sm:$0xff] %vm2132, %v6282
        %6357 = vst.msk [vmem:[#allocation2 + $0x168] sm:$0xff] %vm2132, %v6284
        %6358 = vst.msk [vmem:[#allocation2 + $0x178] sm:$0xff] %vm2132, %v6286
        %6359 = vst.msk [vmem:[#allocation2 + $0x188] sm:$0xff] %vm2132, %v6288
        %6360 = vst.msk [vmem:[#allocation2 + $0x198] sm:$0xff] %vm2132, %v6290
        %6361 = vst.msk [vmem:[#allocation2 + $0x1a8] sm:$0xff] %vm2132, %v6292
        %6362 = vst.msk [vmem:[#allocation2 + $0x1b8] sm:$0xff] %vm2132, %v6294
        %6363 = vst.msk [vmem:[#allocation2 + $0x1c8] sm:$0xff] %vm2132, %v6296
        %6364 = vst.msk [vmem:[#allocation2 + $0x1d8] sm:$0xff] %vm2132, %v6298
        %6365 = vst.msk [vmem:[#allocation2 + $0x1e8] sm:$0xff] %vm2132, %v6300
        %6366 = vst.msk [vmem:[#allocation2 + $0x1f8] sm:$0xff] %vm2132, %v6302
        %v6368 = vrot.slane %v287, 1
        %v6369 = vrot.slane %v288, 1
        %v6370 = vsel %vm371, %v6368, %v6369
        %v6371 = vrot.slane %v289, 1
        %v6372 = vsel %vm371, %v6369, %v6371
        %6373 = vrot.lane.b32.xlu0 %v404, 44
        %v6374 = vpop.permute.xlu0 %6373
        %6375 = vrot.lane.b32.xlu0 %v406, 44
        %v6376 = vpop.permute.xlu0 %6375
        %6377 = vrot.lane.b32.xlu0 %v409, 44
        %v6378 = vpop.permute.xlu0 %6377
        %6379 = vrot.lane.b32.xlu0 %v411, 44
        %v6380 = vpop.permute.xlu0 %6379
        %6381 = vrot.lane.b32.xlu0 %v414, 44
        %v6382 = vpop.permute.xlu0 %6381
        %6383 = vrot.lane.b32.xlu0 %v416, 44
        %v6384 = vpop.permute.xlu0 %6383
        %6385 = vrot.lane.b32.xlu0 %v419, 44
        %v6386 = vpop.permute.xlu0 %6385
        %6387 = vrot.lane.b32.xlu0 %v421, 44
        %v6388 = vpop.permute.xlu0 %6387
        %6389 = vrot.lane.b32.xlu0 %v424, 44
        %v6390 = vpop.permute.xlu0 %6389
        %6391 = vrot.lane.b32.xlu0 %v426, 44
        %v6392 = vpop.permute.xlu0 %6391
        %6393 = vrot.lane.b32.xlu0 %v429, 44
        %v6394 = vpop.permute.xlu0 %6393
        %6395 = vrot.lane.b32.xlu0 %v431, 44
        %v6396 = vpop.permute.xlu0 %6395
        %6397 = vrot.lane.b32.xlu0 %v434, 44
        %v6398 = vpop.permute.xlu0 %6397
        %6399 = vrot.lane.b32.xlu0 %v436, 44
        %v6400 = vpop.permute.xlu0 %6399
        %6401 = vrot.lane.b32.xlu0 %v439, 44
        %v6402 = vpop.permute.xlu0 %6401
        %6403 = vrot.lane.b32.xlu0 %v441, 44
        %v6404 = vpop.permute.xlu0 %6403
        %6405 = vrot.lane.b32.xlu0 %v444, 44
        %v6406 = vpop.permute.xlu0 %6405
        %6407 = vrot.lane.b32.xlu0 %v446, 44
        %v6408 = vpop.permute.xlu0 %6407
        %6409 = vrot.lane.b32.xlu0 %v449, 44
        %v6410 = vpop.permute.xlu0 %6409
        %6411 = vrot.lane.b32.xlu0 %v451, 44
        %v6412 = vpop.permute.xlu0 %6411
        %6413 = vrot.lane.b32.xlu0 %v1765, 44
        %v6414 = vpop.permute.xlu0 %6413
        %6415 = vrot.lane.b32.xlu0 %v1767, 44
        %v6416 = vpop.permute.xlu0 %6415
        %6417 = vrot.lane.b32.xlu0 %v2701, 44
        %v6418 = vpop.permute.xlu0 %6417
        %6419 = vrot.lane.b32.xlu0 %v2703, 44
        %v6420 = vpop.permute.xlu0 %6419
        %6421 = vrot.lane.b32.xlu0 %v3637, 44
        %v6422 = vpop.permute.xlu0 %6421
        %6423 = vrot.lane.b32.xlu0 %v3639, 44
        %v6424 = vpop.permute.xlu0 %6423
        %6425 = vrot.lane.b32.xlu0 %v4573, 44
        %v6426 = vpop.permute.xlu0 %6425
        %6427 = vrot.lane.b32.xlu0 %v4575, 44
        %v6428 = vpop.permute.xlu0 %6427
        %6429 = vrot.lane.b32.xlu0 %v5441, 44
        %v6430 = vpop.permute.xlu0 %6429
        %6431 = vrot.lane.b32.xlu0 %v5443, 44
        %v6432 = vpop.permute.xlu0 %6431
        %6433 = vrot.lane.b32.xlu0 %v6370, 44
        %v6434 = vpop.permute.xlu0 %6433
        %6435 = vrot.lane.b32.xlu0 %v6372, 44
        %v6436 = vpop.permute.xlu0 %6435
        %6469 = vst.msk [vmem:[#allocation2 + $0x8] sm:$0xff] %vm2266, %v6374
        %6470 = vst.msk [vmem:[#allocation2 + $0x18] sm:$0xff] %vm2266, %v6376
        %6471 = vst.msk [vmem:[#allocation2 + $0x28] sm:$0xff] %vm2266, %v6378
        %6472 = vst.msk [vmem:[#allocation2 + $0x38] sm:$0xff] %vm2266, %v6380
        %6473 = vst.msk [vmem:[#allocation2 + $0x48] sm:$0xff] %vm2266, %v6382
        %6474 = vst.msk [vmem:[#allocation2 + $0x58] sm:$0xff] %vm2266, %v6384
        %6475 = vst.msk [vmem:[#allocation2 + $0x68] sm:$0xff] %vm2266, %v6386
        %6476 = vst.msk [vmem:[#allocation2 + $0x78] sm:$0xff] %vm2266, %v6388
        %6477 = vst.msk [vmem:[#allocation2 + $0x88] sm:$0xff] %vm2266, %v6390
        %6478 = vst.msk [vmem:[#allocation2 + $0x98] sm:$0xff] %vm2266, %v6392
        %6479 = vst.msk [vmem:[#allocation2 + $0xa8] sm:$0xff] %vm2266, %v6394
        %6480 = vst.msk [vmem:[#allocation2 + $0xb8] sm:$0xff] %vm2266, %v6396
        %6481 = vst.msk [vmem:[#allocation2 + $0xc8] sm:$0xff] %vm2266, %v6398
        %6482 = vst.msk [vmem:[#allocation2 + $0xd8] sm:$0xff] %vm2266, %v6400
        %6483 = vst.msk [vmem:[#allocation2 + $0xe8] sm:$0xff] %vm2266, %v6402
        %6484 = vst.msk [vmem:[#allocation2 + $0xf8] sm:$0xff] %vm2266, %v6404
        %6485 = vst.msk [vmem:[#allocation2 + $0x108] sm:$0xff] %vm2266, %v6406
        %6486 = vst.msk [vmem:[#allocation2 + $0x118] sm:$0xff] %vm2266, %v6408
        %6487 = vst.msk [vmem:[#allocation2 + $0x128] sm:$0xff] %vm2266, %v6410
        %6488 = vst.msk [vmem:[#allocation2 + $0x138] sm:$0xff] %vm2266, %v6412
        %6489 = vst.msk [vmem:[#allocation2 + $0x148] sm:$0xff] %vm2266, %v6414
        %6490 = vst.msk [vmem:[#allocation2 + $0x158] sm:$0xff] %vm2266, %v6416
        %6491 = vst.msk [vmem:[#allocation2 + $0x168] sm:$0xff] %vm2266, %v6418
        %6492 = vst.msk [vmem:[#allocation2 + $0x178] sm:$0xff] %vm2266, %v6420
        %6493 = vst.msk [vmem:[#allocation2 + $0x188] sm:$0xff] %vm2266, %v6422
        %6494 = vst.msk [vmem:[#allocation2 + $0x198] sm:$0xff] %vm2266, %v6424
        %6495 = vst.msk [vmem:[#allocation2 + $0x1a8] sm:$0xff] %vm2266, %v6426
        %6496 = vst.msk [vmem:[#allocation2 + $0x1b8] sm:$0xff] %vm2266, %v6428
        %6497 = vst.msk [vmem:[#allocation2 + $0x1c8] sm:$0xff] %vm2266, %v6430
        %6498 = vst.msk [vmem:[#allocation2 + $0x1d8] sm:$0xff] %vm2266, %v6432
        %6499 = vst.msk [vmem:[#allocation2 + $0x1e8] sm:$0xff] %vm2266, %v6434
        %6500 = vst.msk [vmem:[#allocation2 + $0x1f8] sm:$0xff] %vm2266, %v6436
        %v6501 = vrot.slane %v287, 2
        %v6502 = vrot.slane %v288, 2
        %v6503 = vsel %vm581, %v6501, %v6502
        %v6504 = vrot.slane %v289, 2
        %v6505 = vsel %vm581, %v6502, %v6504
        %6506 = vrot.lane.b32.xlu0 %v614, 48
        %v6507 = vpop.permute.xlu0 %6506
        %6508 = vrot.lane.b32.xlu0 %v616, 48
        %v6509 = vpop.permute.xlu0 %6508
        %6510 = vrot.lane.b32.xlu0 %v619, 48
        %v6511 = vpop.permute.xlu0 %6510
        %6512 = vrot.lane.b32.xlu0 %v621, 48
        %v6513 = vpop.permute.xlu0 %6512
        %6514 = vrot.lane.b32.xlu0 %v624, 48
        %v6515 = vpop.permute.xlu0 %6514
        %6516 = vrot.lane.b32.xlu0 %v626, 48
        %v6517 = vpop.permute.xlu0 %6516
        %6518 = vrot.lane.b32.xlu0 %v629, 48
        %v6519 = vpop.permute.xlu0 %6518
        %6520 = vrot.lane.b32.xlu0 %v631, 48
        %v6521 = vpop.permute.xlu0 %6520
        %6522 = vrot.lane.b32.xlu0 %v634, 48
        %v6523 = vpop.permute.xlu0 %6522
        %6524 = vrot.lane.b32.xlu0 %v636, 48
        %v6525 = vpop.permute.xlu0 %6524
        %6526 = vrot.lane.b32.xlu0 %v639, 48
        %v6527 = vpop.permute.xlu0 %6526
        %6528 = vrot.lane.b32.xlu0 %v641, 48
        %v6529 = vpop.permute.xlu0 %6528
        %6530 = vrot.lane.b32.xlu0 %v644, 48
        %v6531 = vpop.permute.xlu0 %6530
        %6532 = vrot.lane.b32.xlu0 %v646, 48
        %v6533 = vpop.permute.xlu0 %6532
        %6534 = vrot.lane.b32.xlu0 %v649, 48
        %v6535 = vpop.permute.xlu0 %6534
        %6536 = vrot.lane.b32.xlu0 %v651, 48
        %v6537 = vpop.permute.xlu0 %6536
        %6538 = vrot.lane.b32.xlu0 %v654, 48
        %v6539 = vpop.permute.xlu0 %6538
        %6540 = vrot.lane.b32.xlu0 %v656, 48
        %v6541 = vpop.permute.xlu0 %6540
        %6542 = vrot.lane.b32.xlu0 %v659, 48
        %v6543 = vpop.permute.xlu0 %6542
        %6544 = vrot.lane.b32.xlu0 %v661, 48
        %v6545 = vpop.permute.xlu0 %6544
        %6546 = vrot.lane.b32.xlu0 %v1899, 48
        %v6547 = vpop.permute.xlu0 %6546
        %6548 = vrot.lane.b32.xlu0 %v1901, 48
        %v6549 = vpop.permute.xlu0 %6548
        %6550 = vrot.lane.b32.xlu0 %v2835, 48
        %v6551 = vpop.permute.xlu0 %6550
        %6552 = vrot.lane.b32.xlu0 %v2837, 48
        %v6553 = vpop.permute.xlu0 %6552
        %6554 = vrot.lane.b32.xlu0 %v3771, 48
        %v6555 = vpop.permute.xlu0 %6554
        %6556 = vrot.lane.b32.xlu0 %v3773, 48
        %v6557 = vpop.permute.xlu0 %6556
        %6558 = vrot.lane.b32.xlu0 %v4707, 48
        %v6559 = vpop.permute.xlu0 %6558
        %6560 = vrot.lane.b32.xlu0 %v4709, 48
        %v6561 = vpop.permute.xlu0 %6560
        %6562 = vrot.lane.b32.xlu0 %v5574, 48
        %v6563 = vpop.permute.xlu0 %6562
        %6564 = vrot.lane.b32.xlu0 %v5576, 48
        %v6565 = vpop.permute.xlu0 %6564
        %6566 = vrot.lane.b32.xlu0 %v6503, 48
        %v6567 = vpop.permute.xlu0 %6566
        %6568 = vrot.lane.b32.xlu0 %v6505, 48
        %v6569 = vpop.permute.xlu0 %6568
        %6602 = vst.msk [vmem:[#allocation2 + $0x8] sm:$0xff] %vm2400, %v6507
        %6603 = vst.msk [vmem:[#allocation2 + $0x18] sm:$0xff] %vm2400, %v6509
        %6604 = vst.msk [vmem:[#allocation2 + $0x28] sm:$0xff] %vm2400, %v6511
        %6605 = vst.msk [vmem:[#allocation2 + $0x38] sm:$0xff] %vm2400, %v6513
        %6606 = vst.msk [vmem:[#allocation2 + $0x48] sm:$0xff] %vm2400, %v6515
        %6607 = vst.msk [vmem:[#allocation2 + $0x58] sm:$0xff] %vm2400, %v6517
        %6608 = vst.msk [vmem:[#allocation2 + $0x68] sm:$0xff] %vm2400, %v6519
        %6609 = vst.msk [vmem:[#allocation2 + $0x78] sm:$0xff] %vm2400, %v6521
        %6610 = vst.msk [vmem:[#allocation2 + $0x88] sm:$0xff] %vm2400, %v6523
        %6611 = vst.msk [vmem:[#allocation2 + $0x98] sm:$0xff] %vm2400, %v6525
        %6612 = vst.msk [vmem:[#allocation2 + $0xa8] sm:$0xff] %vm2400, %v6527
        %6613 = vst.msk [vmem:[#allocation2 + $0xb8] sm:$0xff] %vm2400, %v6529
        %6614 = vst.msk [vmem:[#allocation2 + $0xc8] sm:$0xff] %vm2400, %v6531
        %6615 = vst.msk [vmem:[#allocation2 + $0xd8] sm:$0xff] %vm2400, %v6533
        %6616 = vst.msk [vmem:[#allocation2 + $0xe8] sm:$0xff] %vm2400, %v6535
        %6617 = vst.msk [vmem:[#allocation2 + $0xf8] sm:$0xff] %vm2400, %v6537
        %6618 = vst.msk [vmem:[#allocation2 + $0x108] sm:$0xff] %vm2400, %v6539
        %6619 = vst.msk [vmem:[#allocation2 + $0x118] sm:$0xff] %vm2400, %v6541
        %6620 = vst.msk [vmem:[#allocation2 + $0x128] sm:$0xff] %vm2400, %v6543
        %6621 = vst.msk [vmem:[#allocation2 + $0x138] sm:$0xff] %vm2400, %v6545
        %6622 = vst.msk [vmem:[#allocation2 + $0x148] sm:$0xff] %vm2400, %v6547
        %6623 = vst.msk [vmem:[#allocation2 + $0x158] sm:$0xff] %vm2400, %v6549
        %6624 = vst.msk [vmem:[#allocation2 + $0x168] sm:$0xff] %vm2400, %v6551
        %6625 = vst.msk [vmem:[#allocation2 + $0x178] sm:$0xff] %vm2400, %v6553
        %6626 = vst.msk [vmem:[#allocation2 + $0x188] sm:$0xff] %vm2400, %v6555
        %6627 = vst.msk [vmem:[#allocation2 + $0x198] sm:$0xff] %vm2400, %v6557
        %6628 = vst.msk [vmem:[#allocation2 + $0x1a8] sm:$0xff] %vm2400, %v6559
        %6629 = vst.msk [vmem:[#allocation2 + $0x1b8] sm:$0xff] %vm2400, %v6561
        %6630 = vst.msk [vmem:[#allocation2 + $0x1c8] sm:$0xff] %vm2400, %v6563
        %6631 = vst.msk [vmem:[#allocation2 + $0x1d8] sm:$0xff] %vm2400, %v6565
        %6632 = vst.msk [vmem:[#allocation2 + $0x1e8] sm:$0xff] %vm2400, %v6567
        %6633 = vst.msk [vmem:[#allocation2 + $0x1f8] sm:$0xff] %vm2400, %v6569
        %v6634 = vrot.slane %v287, 3
        %v6635 = vrot.slane %v288, 3
        %v6636 = vsel %vm791, %v6634, %v6635
        %v6637 = vrot.slane %v289, 3
        %v6638 = vsel %vm791, %v6635, %v6637
        %6639 = vrot.lane.b32.xlu0 %v824, 52
        %v6640 = vpop.permute.xlu0 %6639
        %6641 = vrot.lane.b32.xlu0 %v826, 52
        %v6642 = vpop.permute.xlu0 %6641
        %6643 = vrot.lane.b32.xlu0 %v829, 52
        %v6644 = vpop.permute.xlu0 %6643
        %6645 = vrot.lane.b32.xlu0 %v831, 52
        %v6646 = vpop.permute.xlu0 %6645
        %6647 = vrot.lane.b32.xlu0 %v834, 52
        %v6648 = vpop.permute.xlu0 %6647
        %6649 = vrot.lane.b32.xlu0 %v836, 52
        %v6650 = vpop.permute.xlu0 %6649
        %6651 = vrot.lane.b32.xlu0 %v839, 52
        %v6652 = vpop.permute.xlu0 %6651
        %6653 = vrot.lane.b32.xlu0 %v841, 52
        %v6654 = vpop.permute.xlu0 %6653
        %6655 = vrot.lane.b32.xlu0 %v844, 52
        %v6656 = vpop.permute.xlu0 %6655
        %6657 = vrot.lane.b32.xlu0 %v846, 52
        %v6658 = vpop.permute.xlu0 %6657
        %6659 = vrot.lane.b32.xlu0 %v849, 52
        %v6660 = vpop.permute.xlu0 %6659
        %6661 = vrot.lane.b32.xlu0 %v851, 52
        %v6662 = vpop.permute.xlu0 %6661
        %6663 = vrot.lane.b32.xlu0 %v854, 52
        %v6664 = vpop.permute.xlu0 %6663
        %6665 = vrot.lane.b32.xlu0 %v856, 52
        %v6666 = vpop.permute.xlu0 %6665
        %6667 = vrot.lane.b32.xlu0 %v859, 52
        %v6668 = vpop.permute.xlu0 %6667
        %6669 = vrot.lane.b32.xlu0 %v861, 52
        %v6670 = vpop.permute.xlu0 %6669
        %6671 = vrot.lane.b32.xlu0 %v864, 52
        %v6672 = vpop.permute.xlu0 %6671
        %6673 = vrot.lane.b32.xlu0 %v866, 52
        %v6674 = vpop.permute.xlu0 %6673
        %6675 = vrot.lane.b32.xlu0 %v869, 52
        %v6676 = vpop.permute.xlu0 %6675
        %6677 = vrot.lane.b32.xlu0 %v871, 52
        %v6678 = vpop.permute.xlu0 %6677
        %6679 = vrot.lane.b32.xlu0 %v2033, 52
        %v6680 = vpop.permute.xlu0 %6679
        %6681 = vrot.lane.b32.xlu0 %v2035, 52
        %v6682 = vpop.permute.xlu0 %6681
        %6683 = vrot.lane.b32.xlu0 %v2969, 52
        %v6684 = vpop.permute.xlu0 %6683
        %6685 = vrot.lane.b32.xlu0 %v2971, 52
        %v6686 = vpop.permute.xlu0 %6685
        %6687 = vrot.lane.b32.xlu0 %v3905, 52
        %v6688 = vpop.permute.xlu0 %6687
        %6689 = vrot.lane.b32.xlu0 %v3907, 52
        %v6690 = vpop.permute.xlu0 %6689
        %6691 = vrot.lane.b32.xlu0 %v4841, 52
        %v6692 = vpop.permute.xlu0 %6691
        %6693 = vrot.lane.b32.xlu0 %v4843, 52
        %v6694 = vpop.permute.xlu0 %6693
        %6695 = vrot.lane.b32.xlu0 %v5707, 52
        %v6696 = vpop.permute.xlu0 %6695
        %6697 = vrot.lane.b32.xlu0 %v5709, 52
        %v6698 = vpop.permute.xlu0 %6697
        %6699 = vrot.lane.b32.xlu0 %v6636, 52
        %v6700 = vpop.permute.xlu0 %6699
        %6701 = vrot.lane.b32.xlu0 %v6638, 52
        %v6702 = vpop.permute.xlu0 %6701
        %6735 = vst.msk [vmem:[#allocation2 + $0x8] sm:$0xff] %vm2534, %v6640
        %6736 = vst.msk [vmem:[#allocation2 + $0x18] sm:$0xff] %vm2534, %v6642
        %6737 = vst.msk [vmem:[#allocation2 + $0x28] sm:$0xff] %vm2534, %v6644
        %6738 = vst.msk [vmem:[#allocation2 + $0x38] sm:$0xff] %vm2534, %v6646
        %6739 = vst.msk [vmem:[#allocation2 + $0x48] sm:$0xff] %vm2534, %v6648
        %6740 = vst.msk [vmem:[#allocation2 + $0x58] sm:$0xff] %vm2534, %v6650
        %6741 = vst.msk [vmem:[#allocation2 + $0x68] sm:$0xff] %vm2534, %v6652
        %6742 = vst.msk [vmem:[#allocation2 + $0x78] sm:$0xff] %vm2534, %v6654
        %6743 = vst.msk [vmem:[#allocation2 + $0x88] sm:$0xff] %vm2534, %v6656
        %6744 = vst.msk [vmem:[#allocation2 + $0x98] sm:$0xff] %vm2534, %v6658
        %6745 = vst.msk [vmem:[#allocation2 + $0xa8] sm:$0xff] %vm2534, %v6660
        %6746 = vst.msk [vmem:[#allocation2 + $0xb8] sm:$0xff] %vm2534, %v6662
        %6747 = vst.msk [vmem:[#allocation2 + $0xc8] sm:$0xff] %vm2534, %v6664
        %6748 = vst.msk [vmem:[#allocation2 + $0xd8] sm:$0xff] %vm2534, %v6666
        %6749 = vst.msk [vmem:[#allocation2 + $0xe8] sm:$0xff] %vm2534, %v6668
        %6750 = vst.msk [vmem:[#allocation2 + $0xf8] sm:$0xff] %vm2534, %v6670
        %6751 = vst.msk [vmem:[#allocation2 + $0x108] sm:$0xff] %vm2534, %v6672
        %6752 = vst.msk [vmem:[#allocation2 + $0x118] sm:$0xff] %vm2534, %v6674
        %6753 = vst.msk [vmem:[#allocation2 + $0x128] sm:$0xff] %vm2534, %v6676
        %6754 = vst.msk [vmem:[#allocation2 + $0x138] sm:$0xff] %vm2534, %v6678
        %6755 = vst.msk [vmem:[#allocation2 + $0x148] sm:$0xff] %vm2534, %v6680
        %6756 = vst.msk [vmem:[#allocation2 + $0x158] sm:$0xff] %vm2534, %v6682
        %6757 = vst.msk [vmem:[#allocation2 + $0x168] sm:$0xff] %vm2534, %v6684
        %6758 = vst.msk [vmem:[#allocation2 + $0x178] sm:$0xff] %vm2534, %v6686
        %6759 = vst.msk [vmem:[#allocation2 + $0x188] sm:$0xff] %vm2534, %v6688
        %6760 = vst.msk [vmem:[#allocation2 + $0x198] sm:$0xff] %vm2534, %v6690
        %6761 = vst.msk [vmem:[#allocation2 + $0x1a8] sm:$0xff] %vm2534, %v6692
        %6762 = vst.msk [vmem:[#allocation2 + $0x1b8] sm:$0xff] %vm2534, %v6694
        %6763 = vst.msk [vmem:[#allocation2 + $0x1c8] sm:$0xff] %vm2534, %v6696
        %6764 = vst.msk [vmem:[#allocation2 + $0x1d8] sm:$0xff] %vm2534, %v6698
        %6765 = vst.msk [vmem:[#allocation2 + $0x1e8] sm:$0xff] %vm2534, %v6700
        %6766 = vst.msk [vmem:[#allocation2 + $0x1f8] sm:$0xff] %vm2534, %v6702
        %v6767 = vrot.slane %v287, 4
        %v6768 = vrot.slane %v288, 4
        %v6769 = vsel %vm1001, %v6767, %v6768
        %v6770 = vrot.slane %v289, 4
        %v6771 = vsel %vm1001, %v6768, %v6770
        %6772 = vrot.lane.b32.xlu0 %v1034, 56
        %v6773 = vpop.permute.xlu0 %6772
        %6774 = vrot.lane.b32.xlu0 %v1036, 56
        %v6775 = vpop.permute.xlu0 %6774
        %6776 = vrot.lane.b32.xlu0 %v1039, 56
        %v6777 = vpop.permute.xlu0 %6776
        %6778 = vrot.lane.b32.xlu0 %v1041, 56
        %v6779 = vpop.permute.xlu0 %6778
        %6780 = vrot.lane.b32.xlu0 %v1044, 56
        %v6781 = vpop.permute.xlu0 %6780
        %6782 = vrot.lane.b32.xlu0 %v1046, 56
        %v6783 = vpop.permute.xlu0 %6782
        %6784 = vrot.lane.b32.xlu0 %v1049, 56
        %v6785 = vpop.permute.xlu0 %6784
        %6786 = vrot.lane.b32.xlu0 %v1051, 56
        %v6787 = vpop.permute.xlu0 %6786
        %6788 = vrot.lane.b32.xlu0 %v1054, 56
        %v6789 = vpop.permute.xlu0 %6788
        %6790 = vrot.lane.b32.xlu0 %v1056, 56
        %v6791 = vpop.permute.xlu0 %6790
        %6792 = vrot.lane.b32.xlu0 %v1059, 56
        %v6793 = vpop.permute.xlu0 %6792
        %6794 = vrot.lane.b32.xlu0 %v1061, 56
        %v6795 = vpop.permute.xlu0 %6794
        %6796 = vrot.lane.b32.xlu0 %v1064, 56
        %v6797 = vpop.permute.xlu0 %6796
        %6798 = vrot.lane.b32.xlu0 %v1066, 56
        %v6799 = vpop.permute.xlu0 %6798
        %6800 = vrot.lane.b32.xlu0 %v1069, 56
        %v6801 = vpop.permute.xlu0 %6800
        %6802 = vrot.lane.b32.xlu0 %v1071, 56
        %v6803 = vpop.permute.xlu0 %6802
        %6804 = vrot.lane.b32.xlu0 %v1074, 56
        %v6805 = vpop.permute.xlu0 %6804
        %6806 = vrot.lane.b32.xlu0 %v1076, 56
        %v6807 = vpop.permute.xlu0 %6806
        %6808 = vrot.lane.b32.xlu0 %v1079, 56
        %v6809 = vpop.permute.xlu0 %6808
        %6810 = vrot.lane.b32.xlu0 %v1081, 56
        %v6811 = vpop.permute.xlu0 %6810
        %6812 = vrot.lane.b32.xlu0 %v2167, 56
        %v6813 = vpop.permute.xlu0 %6812
        %6814 = vrot.lane.b32.xlu0 %v2169, 56
        %v6815 = vpop.permute.xlu0 %6814
        %6816 = vrot.lane.b32.xlu0 %v3103, 56
        %v6817 = vpop.permute.xlu0 %6816
        %6818 = vrot.lane.b32.xlu0 %v3105, 56
        %v6819 = vpop.permute.xlu0 %6818
        %6820 = vrot.lane.b32.xlu0 %v4039, 56
        %v6821 = vpop.permute.xlu0 %6820
        %6822 = vrot.lane.b32.xlu0 %v4041, 56
        %v6823 = vpop.permute.xlu0 %6822
        %6824 = vrot.lane.b32.xlu0 %v4975, 56
        %v6825 = vpop.permute.xlu0 %6824
        %6826 = vrot.lane.b32.xlu0 %v4977, 56
        %v6827 = vpop.permute.xlu0 %6826
        %6828 = vrot.lane.b32.xlu0 %v5840, 56
        %v6829 = vpop.permute.xlu0 %6828
        %6830 = vrot.lane.b32.xlu0 %v5842, 56
        %v6831 = vpop.permute.xlu0 %6830
        %6832 = vrot.lane.b32.xlu0 %v6769, 56
        %v6833 = vpop.permute.xlu0 %6832
        %6834 = vrot.lane.b32.xlu0 %v6771, 56
        %v6835 = vpop.permute.xlu0 %6834
        %6868 = vst.msk [vmem:[#allocation2 + $0x8] sm:$0xff] %vm2665, %v6773
        %6869 = vst.msk [vmem:[#allocation2 + $0x18] sm:$0xff] %vm2665, %v6775
        %6870 = vst.msk [vmem:[#allocation2 + $0x28] sm:$0xff] %vm2665, %v6777
        %6871 = vst.msk [vmem:[#allocation2 + $0x38] sm:$0xff] %vm2665, %v6779
        %6872 = vst.msk [vmem:[#allocation2 + $0x48] sm:$0xff] %vm2665, %v6781
        %6873 = vst.msk [vmem:[#allocation2 + $0x58] sm:$0xff] %vm2665, %v6783
        %6874 = vst.msk [vmem:[#allocation2 + $0x68] sm:$0xff] %vm2665, %v6785
        %6875 = vst.msk [vmem:[#allocation2 + $0x78] sm:$0xff] %vm2665, %v6787
        %6876 = vst.msk [vmem:[#allocation2 + $0x88] sm:$0xff] %vm2665, %v6789
        %6877 = vst.msk [vmem:[#allocation2 + $0x98] sm:$0xff] %vm2665, %v6791
        %6878 = vst.msk [vmem:[#allocation2 + $0xa8] sm:$0xff] %vm2665, %v6793
        %6879 = vst.msk [vmem:[#allocation2 + $0xb8] sm:$0xff] %vm2665, %v6795
        %6880 = vst.msk [vmem:[#allocation2 + $0xc8] sm:$0xff] %vm2665, %v6797
        %6881 = vst.msk [vmem:[#allocation2 + $0xd8] sm:$0xff] %vm2665, %v6799
        %6882 = vst.msk [vmem:[#allocation2 + $0xe8] sm:$0xff] %vm2665, %v6801
        %6883 = vst.msk [vmem:[#allocation2 + $0xf8] sm:$0xff] %vm2665, %v6803
        %6884 = vst.msk [vmem:[#allocation2 + $0x108] sm:$0xff] %vm2665, %v6805
        %6885 = vst.msk [vmem:[#allocation2 + $0x118] sm:$0xff] %vm2665, %v6807
        %6886 = vst.msk [vmem:[#allocation2 + $0x128] sm:$0xff] %vm2665, %v6809
        %6887 = vst.msk [vmem:[#allocation2 + $0x138] sm:$0xff] %vm2665, %v6811
        %6888 = vst.msk [vmem:[#allocation2 + $0x148] sm:$0xff] %vm2665, %v6813
        %6889 = vst.msk [vmem:[#allocation2 + $0x158] sm:$0xff] %vm2665, %v6815
        %6890 = vst.msk [vmem:[#allocation2 + $0x168] sm:$0xff] %vm2665, %v6817
        %6891 = vst.msk [vmem:[#allocation2 + $0x178] sm:$0xff] %vm2665, %v6819
        %6892 = vst.msk [vmem:[#allocation2 + $0x188] sm:$0xff] %vm2665, %v6821
        %6893 = vst.msk [vmem:[#allocation2 + $0x198] sm:$0xff] %vm2665, %v6823
        %6894 = vst.msk [vmem:[#allocation2 + $0x1a8] sm:$0xff] %vm2665, %v6825
        %6895 = vst.msk [vmem:[#allocation2 + $0x1b8] sm:$0xff] %vm2665, %v6827
        %6896 = vst.msk [vmem:[#allocation2 + $0x1c8] sm:$0xff] %vm2665, %v6829
        %6897 = vst.msk [vmem:[#allocation2 + $0x1d8] sm:$0xff] %vm2665, %v6831
        %6898 = vst.msk [vmem:[#allocation2 + $0x1e8] sm:$0xff] %vm2665, %v6833
        %6899 = vst.msk [vmem:[#allocation2 + $0x1f8] sm:$0xff] %vm2665, %v6835
        %v6900 = vrot.slane %v287, 5
        %v6901 = vrot.slane %v288, 5
        %v6902 = vsel %vm1211, %v6900, %v6901
        %v6903 = vrot.slane %v289, 5
        %v6904 = vsel %vm1211, %v6901, %v6903
        %6905 = vrot.lane.b32.xlu0 %v1244, 60
        %v6906 = vpop.permute.xlu0 %6905
        %6907 = vrot.lane.b32.xlu0 %v1246, 60
        %v6908 = vpop.permute.xlu0 %6907
        %6909 = vrot.lane.b32.xlu0 %v1249, 60
        %v6910 = vpop.permute.xlu0 %6909
        %6911 = vrot.lane.b32.xlu0 %v1251, 60
        %v6912 = vpop.permute.xlu0 %6911
        %6913 = vrot.lane.b32.xlu0 %v1254, 60
        %v6914 = vpop.permute.xlu0 %6913
        %6915 = vrot.lane.b32.xlu0 %v1256, 60
        %v6916 = vpop.permute.xlu0 %6915
        %6917 = vrot.lane.b32.xlu0 %v1259, 60
        %v6918 = vpop.permute.xlu0 %6917
        %6919 = vrot.lane.b32.xlu0 %v1261, 60
        %v6920 = vpop.permute.xlu0 %6919
        %6921 = vrot.lane.b32.xlu0 %v1264, 60
        %v6922 = vpop.permute.xlu0 %6921
        %6923 = vrot.lane.b32.xlu0 %v1266, 60
        %v6924 = vpop.permute.xlu0 %6923
        %6925 = vrot.lane.b32.xlu0 %v1269, 60
        %v6926 = vpop.permute.xlu0 %6925
        %6927 = vrot.lane.b32.xlu0 %v1271, 60
        %v6928 = vpop.permute.xlu0 %6927
        %6929 = vrot.lane.b32.xlu0 %v1274, 60
        %v6930 = vpop.permute.xlu0 %6929
        %6931 = vrot.lane.b32.xlu0 %v1276, 60
        %v6932 = vpop.permute.xlu0 %6931
        %6933 = vrot.lane.b32.xlu0 %v1279, 60
        %v6934 = vpop.permute.xlu0 %6933
        %6935 = vrot.lane.b32.xlu0 %v1281, 60
        %v6936 = vpop.permute.xlu0 %6935
        %6937 = vrot.lane.b32.xlu0 %v1284, 60
        %v6938 = vpop.permute.xlu0 %6937
        %6939 = vrot.lane.b32.xlu0 %v1286, 60
        %v6940 = vpop.permute.xlu0 %6939
        %6941 = vrot.lane.b32.xlu0 %v1289, 60
        %v6942 = vpop.permute.xlu0 %6941
        %6943 = vrot.lane.b32.xlu0 %v1291, 60
        %v6944 = vpop.permute.xlu0 %6943
        %6945 = vrot.lane.b32.xlu0 %v2301, 60
        %v6946 = vpop.permute.xlu0 %6945
        %6947 = vrot.lane.b32.xlu0 %v2303, 60
        %v6948 = vpop.permute.xlu0 %6947
        %6949 = vrot.lane.b32.xlu0 %v3237, 60
        %v6950 = vpop.permute.xlu0 %6949
        %6951 = vrot.lane.b32.xlu0 %v3239, 60
        %v6952 = vpop.permute.xlu0 %6951
        %6953 = vrot.lane.b32.xlu0 %v4173, 60
        %v6954 = vpop.permute.xlu0 %6953
        %6955 = vrot.lane.b32.xlu0 %v4175, 60
        %v6956 = vpop.permute.xlu0 %6955
        %6957 = vrot.lane.b32.xlu0 %v5044, 60
        %v6958 = vpop.permute.xlu0 %6957
        %6959 = vrot.lane.b32.xlu0 %v5046, 60
        %v6960 = vpop.permute.xlu0 %6959
        %6961 = vrot.lane.b32.xlu0 %v5973, 60
        %v6962 = vpop.permute.xlu0 %6961
        %6963 = vrot.lane.b32.xlu0 %v5975, 60
        %v6964 = vpop.permute.xlu0 %6963
        %6965 = vrot.lane.b32.xlu0 %v6902, 60
        %v6966 = vpop.permute.xlu0 %6965
        %6967 = vrot.lane.b32.xlu0 %v6904, 60
        %v6968 = vpop.permute.xlu0 %6967
        %7001 = vst.msk [vmem:[#allocation2 + $0x8] sm:$0xff] %vm2800, %v6906
        %7002 = vst.msk [vmem:[#allocation2 + $0x18] sm:$0xff] %vm2800, %v6908
        %7003 = vst.msk [vmem:[#allocation2 + $0x28] sm:$0xff] %vm2800, %v6910
        %7004 = vst.msk [vmem:[#allocation2 + $0x38] sm:$0xff] %vm2800, %v6912
        %7005 = vst.msk [vmem:[#allocation2 + $0x48] sm:$0xff] %vm2800, %v6914
        %7006 = vst.msk [vmem:[#allocation2 + $0x58] sm:$0xff] %vm2800, %v6916
        %7007 = vst.msk [vmem:[#allocation2 + $0x68] sm:$0xff] %vm2800, %v6918
        %7008 = vst.msk [vmem:[#allocation2 + $0x78] sm:$0xff] %vm2800, %v6920
        %7009 = vst.msk [vmem:[#allocation2 + $0x88] sm:$0xff] %vm2800, %v6922
        %7010 = vst.msk [vmem:[#allocation2 + $0x98] sm:$0xff] %vm2800, %v6924
        %7011 = vst.msk [vmem:[#allocation2 + $0xa8] sm:$0xff] %vm2800, %v6926
        %7012 = vst.msk [vmem:[#allocation2 + $0xb8] sm:$0xff] %vm2800, %v6928
        %7013 = vst.msk [vmem:[#allocation2 + $0xc8] sm:$0xff] %vm2800, %v6930
        %7014 = vst.msk [vmem:[#allocation2 + $0xd8] sm:$0xff] %vm2800, %v6932
        %7015 = vst.msk [vmem:[#allocation2 + $0xe8] sm:$0xff] %vm2800, %v6934
        %7016 = vst.msk [vmem:[#allocation2 + $0xf8] sm:$0xff] %vm2800, %v6936
        %7017 = vst.msk [vmem:[#allocation2 + $0x108] sm:$0xff] %vm2800, %v6938
        %7018 = vst.msk [vmem:[#allocation2 + $0x118] sm:$0xff] %vm2800, %v6940
        %7019 = vst.msk [vmem:[#allocation2 + $0x128] sm:$0xff] %vm2800, %v6942
        %7020 = vst.msk [vmem:[#allocation2 + $0x138] sm:$0xff] %vm2800, %v6944
        %7021 = vst.msk [vmem:[#allocation2 + $0x148] sm:$0xff] %vm2800, %v6946
        %7022 = vst.msk [vmem:[#allocation2 + $0x158] sm:$0xff] %vm2800, %v6948
        %7023 = vst.msk [vmem:[#allocation2 + $0x168] sm:$0xff] %vm2800, %v6950
        %7024 = vst.msk [vmem:[#allocation2 + $0x178] sm:$0xff] %vm2800, %v6952
        %7025 = vst.msk [vmem:[#allocation2 + $0x188] sm:$0xff] %vm2800, %v6954
        %7026 = vst.msk [vmem:[#allocation2 + $0x198] sm:$0xff] %vm2800, %v6956
        %7027 = vst.msk [vmem:[#allocation2 + $0x1a8] sm:$0xff] %vm2800, %v6958
        %7028 = vst.msk [vmem:[#allocation2 + $0x1b8] sm:$0xff] %vm2800, %v6960
        %7029 = vst.msk [vmem:[#allocation2 + $0x1c8] sm:$0xff] %vm2800, %v6962
        %7030 = vst.msk [vmem:[#allocation2 + $0x1d8] sm:$0xff] %vm2800, %v6964
        %7031 = vst.msk [vmem:[#allocation2 + $0x1e8] sm:$0xff] %vm2800, %v6966
        %7032 = vst.msk [vmem:[#allocation2 + $0x1f8] sm:$0xff] %vm2800, %v6968
        %v7033 = vrot.slane %v287, 6
        %v7034 = vrot.slane %v288, 6
        %v7035 = vsel %vm1421, %v7033, %v7034
        %v7036 = vrot.slane %v289, 6
        %v7037 = vsel %vm1421, %v7034, %v7036
        %7038 = vrot.lane.b32.xlu0 %v1454, 64
        %v7039 = vpop.permute.xlu0 %7038
        %7040 = vrot.lane.b32.xlu0 %v1456, 64
        %v7041 = vpop.permute.xlu0 %7040
        %7042 = vrot.lane.b32.xlu0 %v1459, 64
        %v7043 = vpop.permute.xlu0 %7042
        %7044 = vrot.lane.b32.xlu0 %v1461, 64
        %v7045 = vpop.permute.xlu0 %7044
        %7046 = vrot.lane.b32.xlu0 %v1464, 64
        %v7047 = vpop.permute.xlu0 %7046
        %7048 = vrot.lane.b32.xlu0 %v1466, 64
        %v7049 = vpop.permute.xlu0 %7048
        %7050 = vrot.lane.b32.xlu0 %v1469, 64
        %v7051 = vpop.permute.xlu0 %7050
        %7052 = vrot.lane.b32.xlu0 %v1471, 64
        %v7053 = vpop.permute.xlu0 %7052
        %7054 = vrot.lane.b32.xlu0 %v1474, 64
        %v7055 = vpop.permute.xlu0 %7054
        %7056 = vrot.lane.b32.xlu0 %v1476, 64
        %v7057 = vpop.permute.xlu0 %7056
        %7058 = vrot.lane.b32.xlu0 %v1479, 64
        %v7059 = vpop.permute.xlu0 %7058
        %7060 = vrot.lane.b32.xlu0 %v1481, 64
        %v7061 = vpop.permute.xlu0 %7060
        %7062 = vrot.lane.b32.xlu0 %v1484, 64
        %v7063 = vpop.permute.xlu0 %7062
        %7064 = vrot.lane.b32.xlu0 %v1486, 64
        %v7065 = vpop.permute.xlu0 %7064
        %7066 = vrot.lane.b32.xlu0 %v1489, 64
        %v7067 = vpop.permute.xlu0 %7066
        %7068 = vrot.lane.b32.xlu0 %v1491, 64
        %v7069 = vpop.permute.xlu0 %7068
        %7070 = vrot.lane.b32.xlu0 %v1494, 64
        %v7071 = vpop.permute.xlu0 %7070
        %7072 = vrot.lane.b32.xlu0 %v1496, 64
        %v7073 = vpop.permute.xlu0 %7072
        %7074 = vrot.lane.b32.xlu0 %v1499, 64
        %v7075 = vpop.permute.xlu0 %7074
        %7076 = vrot.lane.b32.xlu0 %v1501, 64
        %v7077 = vpop.permute.xlu0 %7076
        %7078 = vrot.lane.b32.xlu0 %v2435, 64
        %v7079 = vpop.permute.xlu0 %7078
        %7080 = vrot.lane.b32.xlu0 %v2437, 64
        %v7081 = vpop.permute.xlu0 %7080
        %7082 = vrot.lane.b32.xlu0 %v3371, 64
        %v7083 = vpop.permute.xlu0 %7082
        %7084 = vrot.lane.b32.xlu0 %v3373, 64
        %v7085 = vpop.permute.xlu0 %7084
        %7086 = vrot.lane.b32.xlu0 %v4307, 64
        %v7087 = vpop.permute.xlu0 %7086
        %7088 = vrot.lane.b32.xlu0 %v4309, 64
        %v7089 = vpop.permute.xlu0 %7088
        %7090 = vrot.lane.b32.xlu0 %v5177, 64
        %v7091 = vpop.permute.xlu0 %7090
        %7092 = vrot.lane.b32.xlu0 %v5179, 64
        %v7093 = vpop.permute.xlu0 %7092
        %7094 = vrot.lane.b32.xlu0 %v6106, 64
        %v7095 = vpop.permute.xlu0 %7094
        %7096 = vrot.lane.b32.xlu0 %v6108, 64
        %v7097 = vpop.permute.xlu0 %7096
        %7098 = vrot.lane.b32.xlu0 %v7035, 64
        %v7099 = vpop.permute.xlu0 %7098
        %7100 = vrot.lane.b32.xlu0 %v7037, 64
        %v7101 = vpop.permute.xlu0 %7100
        %7134 = vst.msk [vmem:[#allocation2 + $0x8] sm:$0xff] %vm2934, %v7039
        %7135 = vst.msk [vmem:[#allocation2 + $0x18] sm:$0xff] %vm2934, %v7041
        %7136 = vst.msk [vmem:[#allocation2 + $0x28] sm:$0xff] %vm2934, %v7043
        %7137 = vst.msk [vmem:[#allocation2 + $0x38] sm:$0xff] %vm2934, %v7045
        %7138 = vst.msk [vmem:[#allocation2 + $0x48] sm:$0xff] %vm2934, %v7047
        %7139 = vst.msk [vmem:[#allocation2 + $0x58] sm:$0xff] %vm2934, %v7049
        %7140 = vst.msk [vmem:[#allocation2 + $0x68] sm:$0xff] %vm2934, %v7051
        %7141 = vst.msk [vmem:[#allocation2 + $0x78] sm:$0xff] %vm2934, %v7053
        %7142 = vst.msk [vmem:[#allocation2 + $0x88] sm:$0xff] %vm2934, %v7055
        %7143 = vst.msk [vmem:[#allocation2 + $0x98] sm:$0xff] %vm2934, %v7057
        %7144 = vst.msk [vmem:[#allocation2 + $0xa8] sm:$0xff] %vm2934, %v7059
        %7145 = vst.msk [vmem:[#allocation2 + $0xb8] sm:$0xff] %vm2934, %v7061
        %7146 = vst.msk [vmem:[#allocation2 + $0xc8] sm:$0xff] %vm2934, %v7063
        %7147 = vst.msk [vmem:[#allocation2 + $0xd8] sm:$0xff] %vm2934, %v7065
        %7148 = vst.msk [vmem:[#allocation2 + $0xe8] sm:$0xff] %vm2934, %v7067
        %7149 = vst.msk [vmem:[#allocation2 + $0xf8] sm:$0xff] %vm2934, %v7069
        %7150 = vst.msk [vmem:[#allocation2 + $0x108] sm:$0xff] %vm2934, %v7071
        %7151 = vst.msk [vmem:[#allocation2 + $0x118] sm:$0xff] %vm2934, %v7073
        %7152 = vst.msk [vmem:[#allocation2 + $0x128] sm:$0xff] %vm2934, %v7075
        %7153 = vst.msk [vmem:[#allocation2 + $0x138] sm:$0xff] %vm2934, %v7077
        %7154 = vst.msk [vmem:[#allocation2 + $0x148] sm:$0xff] %vm2934, %v7079
        %7155 = vst.msk [vmem:[#allocation2 + $0x158] sm:$0xff] %vm2934, %v7081
        %7156 = vst.msk [vmem:[#allocation2 + $0x168] sm:$0xff] %vm2934, %v7083
        %7157 = vst.msk [vmem:[#allocation2 + $0x178] sm:$0xff] %vm2934, %v7085
        %7158 = vst.msk [vmem:[#allocation2 + $0x188] sm:$0xff] %vm2934, %v7087
        %7159 = vst.msk [vmem:[#allocation2 + $0x198] sm:$0xff] %vm2934, %v7089
        %7160 = vst.msk [vmem:[#allocation2 + $0x1a8] sm:$0xff] %vm2934, %v7091
        %7161 = vst.msk [vmem:[#allocation2 + $0x1b8] sm:$0xff] %vm2934, %v7093
        %7162 = vst.msk [vmem:[#allocation2 + $0x1c8] sm:$0xff] %vm2934, %v7095
        %7163 = vst.msk [vmem:[#allocation2 + $0x1d8] sm:$0xff] %vm2934, %v7097
        %7164 = vst.msk [vmem:[#allocation2 + $0x1e8] sm:$0xff] %vm2934, %v7099
        %7165 = vst.msk [vmem:[#allocation2 + $0x1f8] sm:$0xff] %vm2934, %v7101
        %v7166 = vld [vmem:[#allocation2] sm:$0xff]
        %v7167 = vld [vmem:[#allocation2 + $0x8] sm:$0xff]
        %v7168 = vld [vmem:[#allocation2 + $0x10] sm:$0xff]
        %v7169 = vld [vmem:[#allocation2 + $0x18] sm:$0xff]
        %v7170 = vld [vmem:[#allocation2 + $0x20] sm:$0xff]
        %v7171 = vld [vmem:[#allocation2 + $0x28] sm:$0xff]
        %v7172 = vld [vmem:[#allocation2 + $0x30] sm:$0xff]
        %v7173 = vld [vmem:[#allocation2 + $0x38] sm:$0xff]
        %v7174 = vld [vmem:[#allocation2 + $0x40] sm:$0xff]
        %v7175 = vld [vmem:[#allocation2 + $0x48] sm:$0xff]
        %v7176 = vld [vmem:[#allocation2 + $0x50] sm:$0xff]
        %v7177 = vld [vmem:[#allocation2 + $0x58] sm:$0xff]
        %v7178 = vld [vmem:[#allocation2 + $0x60] sm:$0xff]
        %v7179 = vld [vmem:[#allocation2 + $0x68] sm:$0xff]
        %v7180 = vld [vmem:[#allocation2 + $0x70] sm:$0xff]
        %v7181 = vld [vmem:[#allocation2 + $0x78] sm:$0xff]
        %v7182 = vld [vmem:[#allocation2 + $0x80] sm:$0xff]
        %v7183 = vld [vmem:[#allocation2 + $0x88] sm:$0xff]
        %v7184 = vld [vmem:[#allocation2 + $0x90] sm:$0xff]
        %v7185 = vld [vmem:[#allocation2 + $0x98] sm:$0xff]
        %v7186 = vld [vmem:[#allocation2 + $0xa0] sm:$0xff]
        %v7187 = vld [vmem:[#allocation2 + $0xa8] sm:$0xff]
        %v7188 = vld [vmem:[#allocation2 + $0xb0] sm:$0xff]
        %v7189 = vld [vmem:[#allocation2 + $0xb8] sm:$0xff]
        %v7190 = vld [vmem:[#allocation2 + $0xc0] sm:$0xff]
        %v7191 = vld [vmem:[#allocation2 + $0xc8] sm:$0xff]
        %v7192 = vld [vmem:[#allocation2 + $0xd0] sm:$0xff]
        %v7193 = vld [vmem:[#allocation2 + $0xd8] sm:$0xff]
        %v7194 = vld [vmem:[#allocation2 + $0xe0] sm:$0xff]
        %v7195 = vld [vmem:[#allocation2 + $0xe8] sm:$0xff]
        %v7196 = vld [vmem:[#allocation2 + $0xf0] sm:$0xff]
        %v7197 = vld [vmem:[#allocation2 + $0xf8] sm:$0xff]
        %v7198 = vld [vmem:[#allocation2 + $0x100] sm:$0xff]
        %v7199 = vld [vmem:[#allocation2 + $0x108] sm:$0xff]
        %v7200 = vld [vmem:[#allocation2 + $0x110] sm:$0xff]
        %v7201 = vld [vmem:[#allocation2 + $0x118] sm:$0xff]
        %v7202 = vld [vmem:[#allocation2 + $0x120] sm:$0xff]
        %v7203 = vld [vmem:[#allocation2 + $0x128] sm:$0xff]
        %v7204 = vld [vmem:[#allocation2 + $0x130] sm:$0xff]
        %v7205 = vld [vmem:[#allocation2 + $0x138] sm:$0xff]
        %v7206 = vld [vmem:[#allocation2 + $0x140] sm:$0xff]
        %v7207 = vld [vmem:[#allocation2 + $0x148] sm:$0xff]
        %v7208 = vld [vmem:[#allocation2 + $0x150] sm:$0xff]
        %v7209 = vld [vmem:[#allocation2 + $0x158] sm:$0xff]
        %v7210 = vld [vmem:[#allocation2 + $0x160] sm:$0xff]
        %v7211 = vld [vmem:[#allocation2 + $0x168] sm:$0xff]
        %v7212 = vld [vmem:[#allocation2 + $0x170] sm:$0xff]
        %v7213 = vld [vmem:[#allocation2 + $0x178] sm:$0xff]
        %v7214 = vld [vmem:[#allocation2 + $0x180] sm:$0xff]
        %v7215 = vld [vmem:[#allocation2 + $0x188] sm:$0xff]
        %v7216 = vld [vmem:[#allocation2 + $0x190] sm:$0xff]
        %v7217 = vld [vmem:[#allocation2 + $0x198] sm:$0xff]
        %v7218 = vld [vmem:[#allocation2 + $0x1a0] sm:$0xff]
        %v7219 = vld [vmem:[#allocation2 + $0x1a8] sm:$0xff]
        %v7220 = vld [vmem:[#allocation2 + $0x1b0] sm:$0xff]
        %v7221 = vld [vmem:[#allocation2 + $0x1b8] sm:$0xff]
        %v7222 = vld [vmem:[#allocation2 + $0x1c0] sm:$0xff]
        %v7223 = vld [vmem:[#allocation2 + $0x1c8] sm:$0xff]
        %v7224 = vld [vmem:[#allocation2 + $0x1d0] sm:$0xff]
        %v7225 = vld [vmem:[#allocation2 + $0x1d8] sm:$0xff]
        %v7226 = vld [vmem:[#allocation2 + $0x1e0] sm:$0xff]
        %v7227 = vld [vmem:[#allocation2 + $0x1e8] sm:$0xff]
        %v7228 = vld [vmem:[#allocation2 + $0x1f0] sm:$0xff]
        %v7229 = vld [vmem:[#allocation2 + $0x1f8] sm:$0xff]
        %v7230 = vpack.c.bf16 %v7168, %v7166
        %v7231 = vpack.c.bf16 %v7169, %v7167
        %v7232 = vpack.c.bf16 %v7172, %v7170
        %v7233 = vpack.c.bf16 %v7173, %v7171
        %v7234 = vpack.c.bf16 %v7176, %v7174
        %v7235 = vpack.c.bf16 %v7177, %v7175
        %v7236 = vpack.c.bf16 %v7180, %v7178
        %v7237 = vpack.c.bf16 %v7181, %v7179
        %v7238 = vpack.c.bf16 %v7184, %v7182
        %v7239 = vpack.c.bf16 %v7185, %v7183
        %v7240 = vpack.c.bf16 %v7188, %v7186
        %v7241 = vpack.c.bf16 %v7189, %v7187
        %v7242 = vpack.c.bf16 %v7192, %v7190
        %v7243 = vpack.c.bf16 %v7193, %v7191
        %v7244 = vpack.c.bf16 %v7196, %v7194
        %v7245 = vpack.c.bf16 %v7197, %v7195
        %v7246 = vpack.c.bf16 %v7200, %v7198
        %v7247 = vpack.c.bf16 %v7201, %v7199
        %v7248 = vpack.c.bf16 %v7204, %v7202
        %v7249 = vpack.c.bf16 %v7205, %v7203
        %v7250 = vpack.c.bf16 %v7208, %v7206
        %v7251 = vpack.c.bf16 %v7209, %v7207
        %v7252 = vpack.c.bf16 %v7212, %v7210
        %v7253 = vpack.c.bf16 %v7213, %v7211
        %v7254 = vpack.c.bf16 %v7216, %v7214
        %v7255 = vpack.c.bf16 %v7217, %v7215
        %v7256 = vpack.c.bf16 %v7220, %v7218
        %v7257 = vpack.c.bf16 %v7221, %v7219
        %v7258 = vpack.c.bf16 %v7224, %v7222
        %v7259 = vpack.c.bf16 %v7225, %v7223
        %v7260 = vpack.c.bf16 %v7228, %v7226
        %v7261 = vpack.c.bf16 %v7229, %v7227
        %v7262 = vld [vmem:[%s1] sm:$0xf]
        %v7263 = vld [vmem:[%s1 + $0x4] sm:$0xf]
        %v7264 = vld [vmem:[%s1 + $0x8] sm:$0xf]
        %v7265 = vld [vmem:[%s1 + $0xc] sm:$0xf]
        %v7266 = vld [vmem:[%s1 + $0x10] sm:$0xf]
        %v7267 = vld [vmem:[%s1 + $0x14] sm:$0xf]
        %v7268 = vld [vmem:[%s1 + $0x18] sm:$0xf]
        %v7269 = vld [vmem:[%s1 + $0x1c] sm:$0xf]
        %v7270 = vld [vmem:[%s1 + $0x20] sm:$0xf]
        %v7271 = vld [vmem:[%s1 + $0x24] sm:$0xf]
        %v7272 = vld [vmem:[%s1 + $0x28] sm:$0xf]
        %v7273 = vld [vmem:[%s1 + $0x2c] sm:$0xf]
        %v7274 = vld [vmem:[%s1 + $0x30] sm:$0xf]
        %v7275 = vld [vmem:[%s1 + $0x34] sm:$0xf]
        %v7276 = vld [vmem:[%s1 + $0x38] sm:$0xf]
        %v7277 = vld [vmem:[%s1 + $0x3c] sm:$0xf]
        %v7278 = vld [vmem:[%s1 + $0x40] sm:$0xf]
        %v7279 = vld [vmem:[%s1 + $0x44] sm:$0xf]
        %v7280 = vld [vmem:[%s1 + $0x48] sm:$0xf]
        %v7281 = vld [vmem:[%s1 + $0x4c] sm:$0xf]
        %v7282 = vld [vmem:[%s1 + $0x50] sm:$0xf]
        %v7283 = vld [vmem:[%s1 + $0x54] sm:$0xf]
        %v7284 = vld [vmem:[%s1 + $0x58] sm:$0xf]
        %v7285 = vld [vmem:[%s1 + $0x5c] sm:$0xf]
        %v7286 = vld [vmem:[%s1 + $0x60] sm:$0x3]
        %v7287 = vld [vmem:[%s2] sm:$0x1]
        %v7289 = vlaneseq
        %v7290 = vshrl.u32 %v7289, 7
        %v7291 = vsub.s32 0, %v7290
        %v7292 = vrot.slane %v7287, %v7291
        %v7319 = vunpack.c.l.b16 %v7262
        %v7320 = vunpack.c.l.b16 %v7263
        %v7321 = vunpack.c.l.b16 %v7264
        %v7322 = vunpack.c.l.b16 %v7265
        %v7323 = vunpack.c.l.b16 %v7266
        %v7324 = vunpack.c.l.b16 %v7267
        %v7325 = vunpack.c.l.b16 %v7268
        %v7326 = vunpack.c.l.b16 %v7269
        %v7327 = vunpack.c.l.b16 %v7270
        %v7328 = vunpack.c.l.b16 %v7271
        %v7329 = vunpack.c.l.b16 %v7272
        %v7330 = vunpack.c.l.b16 %v7273
        %v7331 = vunpack.c.l.b16 %v7274
        %v7332 = vunpack.c.l.b16 %v7275
        %v7333 = vunpack.c.l.b16 %v7276
        %v7334 = vunpack.c.l.b16 %v7277
        %v7335 = vunpack.c.l.b16 %v7278
        %v7336 = vunpack.c.l.b16 %v7279
        %v7337 = vunpack.c.l.b16 %v7280
        %v7338 = vunpack.c.l.b16 %v7281
        %v7339 = vunpack.c.l.b16 %v7282
        %v7340 = vunpack.c.l.b16 %v7283
        %v7341 = vunpack.c.l.b16 %v7284
        %v7342 = vunpack.c.l.b16 %v7285
        %v7343 = vunpack.c.l.b16 %v7286
        %v7344 = vpack.c.b16 %v7320, %v7319
        %v7345 = vpack.c.b16 %v7322, %v7321
        %v7346 = vpack.c.b16 %v7324, %v7323
        %v7347 = vpack.c.b16 %v7326, %v7325
        %v7348 = vpack.c.b16 %v7328, %v7327
        %v7349 = vpack.c.b16 %v7330, %v7329
        %v7350 = vpack.c.b16 %v7332, %v7331
        %v7351 = vpack.c.b16 %v7334, %v7333
        %v7352 = vpack.c.b16 %v7336, %v7335
        %v7353 = vpack.c.b16 %v7338, %v7337
        %v7354 = vpack.c.b16 %v7340, %v7339
        %v7355 = vpack.c.b16 %v7342, %v7341
        %v7356 = vpack.c.b16 %v7343, %v7343
        %vm7369 = vcmask 556032
        %v7371 = vsel %vm7369, %v7231, 0
        %v7374 = vsel %vm7369, %v7233, 0
        %v7377 = vsel %vm7369, %v7235, 0
        %v7380 = vsel %vm7369, %v7237, 0
        %v7383 = vsel %vm7369, %v7239, 0
        %v7386 = vsel %vm7369, %v7241, 0
        %v7389 = vsel %vm7369, %v7243, 0
        %v7392 = vsel %vm7369, %v7245, 0
        %v7395 = vsel %vm7369, %v7247, 0
        %v7398 = vsel %vm7369, %v7249, 0
        %v7401 = vsel %vm7369, %v7251, 0
        %v7404 = vsel %vm7369, %v7253, 0
        %v7407 = vsel %vm7369, %v7255, 0
        %v7410 = vsel %vm7369, %v7257, 0
        %v7413 = vsel %vm7369, %v7259, 0
        %v7416 = vsel %vm7369, %v7261, 0
        %v7419 = vsel %vm1421, %v7356, 0
        %7421 = vmatprep.subr.bf16.mxu0 0
        %7422 = vmatpush1.bf16.msra.mxu0 %v7344
        %7423 = vmatprep.subr.bf16.mxu0 0
        %7424 = vmatpush1.bf16.msra.mxu0 %v7345
        %7425 = vmatprep.subr.bf16.mxu0 0
        %7426 = vmatpush1.bf16.msra.mxu0 %v7346
        %7427 = vmatprep.subr.bf16.mxu0 0
        %7428 = vmatpush1.bf16.msra.mxu0 %v7347
        %7429 = vmatprep.subr.bf16.mxu0 0
        %7430 = vmatpush1.bf16.msra.mxu0 %v7348
        %7431 = vmatprep.subr.bf16.mxu0 0
        %7432 = vmatpush1.bf16.msra.mxu0 %v7349
        %7433 = vmatprep.subr.bf16.mxu0 0
        %7434 = vmatpush1.bf16.msra.mxu0 %v7350
        %7435 = vmatprep.subr.bf16.mxu0 0
        %7436 = vmatpush1.bf16.msra.mxu0 %v7351
        %7437 = vmatprep.subr.bf16.mxu0 0
        %7438 = vmatpush1.bf16.msra.mxu0 %v7352
        %7439 = vmatprep.subr.bf16.mxu0 0
        %7440 = vmatpush1.bf16.msra.mxu0 %v7353
        %7441 = vmatprep.subr.bf16.mxu0 0
        %7442 = vmatpush1.bf16.msra.mxu0 %v7354
        %7443 = vmatprep.subr.bf16.mxu0 0
        %7444 = vmatpush1.bf16.msra.mxu0 %v7355
        %7445 = vmatprep.subr.bf16.mxu0 0
        %7446 = vmatpush1.bf16.msra.mxu0 %v7419
        %7447 = vmatprep.subr.bf16.mxu0 0
        %7448 = vmatpush1.bf16.msra.mxu0 0
        %7449 = vmatprep.subr.bf16.mxu0 0
        %7450 = vmatpush1.bf16.msra.mxu0 0
        %7451 = vmatprep.subr.bf16.mxu0 0
        %7452 = vmatpush1.bf16.msra.mxu0 0
        %7453 = vmatprep.mubr.bf16.mxu0 %v7371
        %7454 = vmatmul.mubr.bf16.gmra.mrb[0].mxu0 %v7230
        %v7455 = vpop.f32.mrb[0].mxu0
        %v7456 = vadd.f32 %v7292, %v7455
        %v7457 = vpop.f32.mrb[0].mxu0
        %v7458 = vpop.f32.mrb[0].mxu0
        %v7459 = vadd.f32 %v7292, %v7458
        %v7460 = vpop.f32.mrb[0].mxu0
        %7461 = vmatprep.mubr.bf16.mxu0 %v7374
        %7462 = vmatmul.mubr.bf16.gmra.mrb[0].mxu0 %v7232
        %v7463 = vpop.f32.mrb[0].mxu0
        %v7464 = vadd.f32 %v7292, %v7463
        %v7465 = vpop.f32.mrb[0].mxu0
        %v7466 = vpop.f32.mrb[0].mxu0
        %v7467 = vadd.f32 %v7292, %v7466
        %v7468 = vpop.f32.mrb[0].mxu0
        %7469 = vmatprep.mubr.bf16.mxu0 %v7377
        %7470 = vmatmul.mubr.bf16.gmra.mrb[0].mxu0 %v7234
        %v7471 = vpop.f32.mrb[0].mxu0
        %v7472 = vadd.f32 %v7292, %v7471
        %v7473 = vpop.f32.mrb[0].mxu0
        %v7474 = vpop.f32.mrb[0].mxu0
        %v7475 = vadd.f32 %v7292, %v7474
        %v7476 = vpop.f32.mrb[0].mxu0
        %7477 = vmatprep.mubr.bf16.mxu0 %v7380
        %7478 = vmatmul.mubr.bf16.gmra.mrb[0].mxu0 %v7236
        %v7479 = vpop.f32.mrb[0].mxu0
        %v7480 = vadd.f32 %v7292, %v7479
        %v7481 = vpop.f32.mrb[0].mxu0
        %v7482 = vpop.f32.mrb[0].mxu0
        %v7483 = vadd.f32 %v7292, %v7482
        %v7484 = vpop.f32.mrb[0].mxu0
        %7485 = vmatprep.mubr.bf16.mxu0 %v7383
        %7486 = vmatmul.mubr.bf16.gmra.mrb[0].mxu0 %v7238
        %v7487 = vpop.f32.mrb[0].mxu0
        %v7488 = vadd.f32 %v7292, %v7487
        %v7489 = vpop.f32.mrb[0].mxu0
        %v7490 = vpop.f32.mrb[0].mxu0
        %v7491 = vadd.f32 %v7292, %v7490
        %v7492 = vpop.f32.mrb[0].mxu0
        %7493 = vmatprep.mubr.bf16.mxu0 %v7386
        %7494 = vmatmul.mubr.bf16.gmra.mrb[0].mxu0 %v7240
        %v7495 = vpop.f32.mrb[0].mxu0
        %v7496 = vadd.f32 %v7292, %v7495
        %v7497 = vpop.f32.mrb[0].mxu0
        %v7498 = vpop.f32.mrb[0].mxu0
        %v7499 = vadd.f32 %v7292, %v7498
        %v7500 = vpop.f32.mrb[0].mxu0
        %7501 = vmatprep.mubr.bf16.mxu0 %v7389
        %7502 = vmatmul.mubr.bf16.gmra.mrb[0].mxu0 %v7242
        %v7503 = vpop.f32.mrb[0].mxu0
        %v7504 = vadd.f32 %v7292, %v7503
        %v7505 = vpop.f32.mrb[0].mxu0
        %v7506 = vpop.f32.mrb[0].mxu0
        %v7507 = vadd.f32 %v7292, %v7506
        %v7508 = vpop.f32.mrb[0].mxu0
        %7509 = vmatprep.mubr.bf16.mxu0 %v7392
        %7510 = vmatmul.mubr.bf16.gmra.mrb[0].mxu0 %v7244
        %v7511 = vpop.f32.mrb[0].mxu0
        %v7512 = vadd.f32 %v7292, %v7511
        %v7513 = vpop.f32.mrb[0].mxu0
        %v7514 = vpop.f32.mrb[0].mxu0
        %v7515 = vadd.f32 %v7292, %v7514
        %v7516 = vpop.f32.mrb[0].mxu0
        %7517 = vmatprep.mubr.bf16.mxu0 %v7395
        %7518 = vmatmul.mubr.bf16.gmra.mrb[0].mxu0 %v7246
        %v7519 = vpop.f32.mrb[0].mxu0
        %v7520 = vadd.f32 %v7292, %v7519
        %v7521 = vpop.f32.mrb[0].mxu0
        %v7522 = vpop.f32.mrb[0].mxu0
        %v7523 = vadd.f32 %v7292, %v7522
        %v7524 = vpop.f32.mrb[0].mxu0
        %7525 = vmatprep.mubr.bf16.mxu0 %v7398
        %7526 = vmatmul.mubr.bf16.gmra.mrb[0].mxu0 %v7248
        %v7527 = vpop.f32.mrb[0].mxu0
        %v7528 = vadd.f32 %v7292, %v7527
        %v7529 = vpop.f32.mrb[0].mxu0
        %v7530 = vpop.f32.mrb[0].mxu0
        %v7531 = vadd.f32 %v7292, %v7530
        %v7532 = vpop.f32.mrb[0].mxu0
        %7533 = vmatprep.mubr.bf16.mxu0 %v7401
        %7534 = vmatmul.mubr.bf16.gmra.mrb[0].mxu0 %v7250
        %v7535 = vpop.f32.mrb[0].mxu0
        %v7536 = vadd.f32 %v7292, %v7535
        %v7537 = vpop.f32.mrb[0].mxu0
        %v7538 = vpop.f32.mrb[0].mxu0
        %v7539 = vadd.f32 %v7292, %v7538
        %v7540 = vpop.f32.mrb[0].mxu0
        %7541 = vmatprep.mubr.bf16.mxu0 %v7404
        %7542 = vmatmul.mubr.bf16.gmra.mrb[0].mxu0 %v7252
        %v7543 = vpop.f32.mrb[0].mxu0
        %v7544 = vadd.f32 %v7292, %v7543
        %v7545 = vpop.f32.mrb[0].mxu0
        %v7546 = vpop.f32.mrb[0].mxu0
        %v7547 = vadd.f32 %v7292, %v7546
        %v7548 = vpop.f32.mrb[0].mxu0
        %7549 = vmatprep.mubr.bf16.mxu0 %v7407
        %7550 = vmatmul.mubr.bf16.gmra.mrb[0].mxu0 %v7254
        %v7551 = vpop.f32.mrb[0].mxu0
        %v7552 = vadd.f32 %v7292, %v7551
        %v7553 = vpop.f32.mrb[0].mxu0
        %v7554 = vpop.f32.mrb[0].mxu0
        %v7555 = vadd.f32 %v7292, %v7554
        %v7556 = vpop.f32.mrb[0].mxu0
        %7557 = vmatprep.mubr.bf16.mxu0 %v7410
        %7558 = vmatmul.mubr.bf16.gmra.mrb[0].mxu0 %v7256
        %v7559 = vpop.f32.mrb[0].mxu0
        %v7560 = vadd.f32 %v7292, %v7559
        %v7561 = vpop.f32.mrb[0].mxu0
        %v7562 = vpop.f32.mrb[0].mxu0
        %v7563 = vadd.f32 %v7292, %v7562
        %v7564 = vpop.f32.mrb[0].mxu0
        %7565 = vmatprep.mubr.bf16.mxu0 %v7413
        %7566 = vmatmul.mubr.bf16.gmra.mrb[0].mxu0 %v7258
        %v7567 = vpop.f32.mrb[0].mxu0
        %v7568 = vadd.f32 %v7292, %v7567
        %v7569 = vpop.f32.mrb[0].mxu0
        %v7570 = vpop.f32.mrb[0].mxu0
        %v7571 = vadd.f32 %v7292, %v7570
        %v7572 = vpop.f32.mrb[0].mxu0
        %7573 = vmatprep.mubr.bf16.mxu0 %v7416
        %7574 = vmatmul.mubr.bf16.gmra.mrb[0].mxu0 %v7260
        %v7575 = vpop.f32.mrb[0].mxu0
        %v7576 = vadd.f32 %v7292, %v7575
        %v7577 = vpop.f32.mrb[0].mxu0
        %v7578 = vpop.f32.mrb[0].mxu0
        %v7579 = vadd.f32 %v7292, %v7578
        %v7580 = vpop.f32.mrb[0].mxu0
        %7581 = vdwg.mxu0
        %v7582 = vpack.c.bf16 %v7459, %v7456
        %v7583 = vpack.c.bf16 %v7467, %v7464
        %v7584 = vpack.c.bf16 %v7475, %v7472
        %v7585 = vpack.c.bf16 %v7483, %v7480
        %v7586 = vpack.c.bf16 %v7491, %v7488
        %v7587 = vpack.c.bf16 %v7499, %v7496
        %v7588 = vpack.c.bf16 %v7507, %v7504
        %v7589 = vpack.c.bf16 %v7515, %v7512
        %v7590 = vpack.c.bf16 %v7523, %v7520
        %v7591 = vpack.c.bf16 %v7531, %v7528
        %v7592 = vpack.c.bf16 %v7539, %v7536
        %v7593 = vpack.c.bf16 %v7547, %v7544
        %v7594 = vpack.c.bf16 %v7555, %v7552
        %v7595 = vpack.c.bf16 %v7563, %v7560
        %v7596 = vpack.c.bf16 %v7571, %v7568
        %v7597 = vpack.c.bf16 %v7579, %v7576
        %v7598 = vld [vmem:[%s3] sm:$0x3]
        %v7599 = vld [vmem:[%s4] sm:$0x1]
        %v7601 = vlaneseq
        %v7602 = vshrl.u32 %v7601, 7
        %v7603 = vsub.s32 0, %v7602
        %v7604 = vrot.slane %v7599, %v7603
        %v7607 = vsel %vm290, %v7582, 0
        %v7610 = vsel %vm290, %v7583, 0
        %v7613 = vsel %vm290, %v7584, 0
        %v7616 = vsel %vm290, %v7585, 0
        %v7619 = vsel %vm290, %v7586, 0
        %v7622 = vsel %vm290, %v7587, 0
        %v7625 = vsel %vm290, %v7588, 0
        %v7628 = vsel %vm290, %v7589, 0
        %v7631 = vsel %vm290, %v7590, 0
        %v7634 = vsel %vm290, %v7591, 0
        %v7637 = vsel %vm290, %v7592, 0
        %v7640 = vsel %vm290, %v7593, 0
        %v7643 = vsel %vm290, %v7594, 0
        %v7646 = vsel %vm290, %v7595, 0
        %v7649 = vsel %vm290, %v7596, 0
        %v7652 = vsel %vm290, %v7597, 0
        %v7655 = vsel %vm1421, %v7598, 0
        %7657 = vmatprep.subr.bf16.mxu0 0
        %7658 = vmatpush1.bf16.msra.mxu0 %v7655
        %7659 = vmatprep.subr.bf16.mxu0 0
        %7660 = vmatpush1.bf16.msra.mxu0 0
        %7661 = vmatprep.subr.bf16.mxu0 0
        %7662 = vmatpush1.bf16.msra.mxu0 0
        %7663 = vmatprep.subr.bf16.mxu0 0
        %7664 = vmatpush1.bf16.msra.mxu0 0
        %7665 = vmatprep.subr.bf16.mxu0 0
        %7666 = vmatpush1.bf16.msra.mxu0 0
        %7667 = vmatprep.subr.bf16.mxu0 0
        %7668 = vmatpush1.bf16.msra.mxu0 0
        %7669 = vmatprep.subr.bf16.mxu0 0
        %7670 = vmatpush1.bf16.msra.mxu0 0
        %7671 = vmatprep.subr.bf16.mxu0 0
        %7672 = vmatpush1.bf16.msra.mxu0 0
        %7673 = vmatprep.subr.bf16.mxu0 0
        %7674 = vmatpush1.bf16.msra.mxu0 0
        %7675 = vmatprep.subr.bf16.mxu0 0
        %7676 = vmatpush1.bf16.msra.mxu0 0
        %7677 = vmatprep.subr.bf16.mxu0 0
        %7678 = vmatpush1.bf16.msra.mxu0 0
        %7679 = vmatprep.subr.bf16.mxu0 0
        %7680 = vmatpush1.bf16.msra.mxu0 0
        %7681 = vmatprep.subr.bf16.mxu0 0
        %7682 = vmatpush1.bf16.msra.mxu0 0
        %7683 = vmatprep.subr.bf16.mxu0 0
        %7684 = vmatpush1.bf16.msra.mxu0 0
        %7685 = vmatprep.subr.bf16.mxu0 0
        %7686 = vmatpush1.bf16.msra.mxu0 0
        %7687 = vmatprep.subr.bf16.mxu0 0
        %7688 = vmatpush1.bf16.msra.mxu0 0
        %7689 = vmatprep.mubr.bf16.mxu0 0
        %7690 = vmatmul.mubr.bf16.gmra.mrb[0].mxu0 %v7607
        %v7691 = vpop.f32.mrb[0].mxu0
        %v7692 = vadd.f32 %v7604, %v7691
        %v7693 = vpop.f32.mrb[0].mxu0
        %v7694 = vpop.f32.mrb[0].mxu0
        %v7695 = vadd.f32 %v7604, %v7694
        %v7696 = vpop.f32.mrb[0].mxu0
        %7697 = vmatprep.mubr.bf16.mxu0 0
        %7698 = vmatmul.mubr.bf16.gmra.mrb[0].mxu0 %v7610
        %v7699 = vpop.f32.mrb[0].mxu0
        %v7700 = vadd.f32 %v7604, %v7699
        %v7701 = vpop.f32.mrb[0].mxu0
        %v7702 = vpop.f32.mrb[0].mxu0
        %v7703 = vadd.f32 %v7604, %v7702
        %v7704 = vpop.f32.mrb[0].mxu0
        %7705 = vmatprep.mubr.bf16.mxu0 0
        %7706 = vmatmul.mubr.bf16.gmra.mrb[0].mxu0 %v7613
        %v7707 = vpop.f32.mrb[0].mxu0
        %v7708 = vadd.f32 %v7604, %v7707
        %v7709 = vpop.f32.mrb[0].mxu0
        %v7710 = vpop.f32.mrb[0].mxu0
        %v7711 = vadd.f32 %v7604, %v7710
        %v7712 = vpop.f32.mrb[0].mxu0
        %7713 = vmatprep.mubr.bf16.mxu0 0
        %7714 = vmatmul.mubr.bf16.gmra.mrb[0].mxu0 %v7616
        %v7715 = vpop.f32.mrb[0].mxu0
        %v7716 = vadd.f32 %v7604, %v7715
        %v7717 = vpop.f32.mrb[0].mxu0
        %v7718 = vpop.f32.mrb[0].mxu0
        %v7719 = vadd.f32 %v7604, %v7718
        %v7720 = vpop.f32.mrb[0].mxu0
        %7721 = vmatprep.mubr.bf16.mxu0 0
        %7722 = vmatmul.mubr.bf16.gmra.mrb[0].mxu0 %v7619
        %v7723 = vpop.f32.mrb[0].mxu0
        %v7724 = vadd.f32 %v7604, %v7723
        %v7725 = vpop.f32.mrb[0].mxu0
        %v7726 = vpop.f32.mrb[0].mxu0
        %v7727 = vadd.f32 %v7604, %v7726
        %v7728 = vpop.f32.mrb[0].mxu0
        %7729 = vmatprep.mubr.bf16.mxu0 0
        %7730 = vmatmul.mubr.bf16.gmra.mrb[0].mxu0 %v7622
        %v7731 = vpop.f32.mrb[0].mxu0
        %v7732 = vadd.f32 %v7604, %v7731
        %v7733 = vpop.f32.mrb[0].mxu0
        %v7734 = vpop.f32.mrb[0].mxu0
        %v7735 = vadd.f32 %v7604, %v7734
        %v7736 = vpop.f32.mrb[0].mxu0
        %7737 = vmatprep.mubr.bf16.mxu0 0
        %7738 = vmatmul.mubr.bf16.gmra.mrb[0].mxu0 %v7625
        %v7739 = vpop.f32.mrb[0].mxu0
        %v7740 = vadd.f32 %v7604, %v7739
        %v7741 = vpop.f32.mrb[0].mxu0
        %v7742 = vpop.f32.mrb[0].mxu0
        %v7743 = vadd.f32 %v7604, %v7742
        %v7744 = vpop.f32.mrb[0].mxu0
        %7745 = vmatprep.mubr.bf16.mxu0 0
        %7746 = vmatmul.mubr.bf16.gmra.mrb[0].mxu0 %v7628
        %v7747 = vpop.f32.mrb[0].mxu0
        %v7748 = vadd.f32 %v7604, %v7747
        %v7749 = vpop.f32.mrb[0].mxu0
        %v7750 = vpop.f32.mrb[0].mxu0
        %v7751 = vadd.f32 %v7604, %v7750
        %v7752 = vpop.f32.mrb[0].mxu0
        %7753 = vmatprep.mubr.bf16.mxu0 0
        %7754 = vmatmul.mubr.bf16.gmra.mrb[0].mxu0 %v7631
        %v7755 = vpop.f32.mrb[0].mxu0
        %v7756 = vadd.f32 %v7604, %v7755
        %v7757 = vpop.f32.mrb[0].mxu0
        %v7758 = vpop.f32.mrb[0].mxu0
        %v7759 = vadd.f32 %v7604, %v7758
        %v7760 = vpop.f32.mrb[0].mxu0
        %7761 = vmatprep.mubr.bf16.mxu0 0
        %7762 = vmatmul.mubr.bf16.gmra.mrb[0].mxu0 %v7634
        %v7763 = vpop.f32.mrb[0].mxu0
        %v7764 = vadd.f32 %v7604, %v7763
        %v7765 = vpop.f32.mrb[0].mxu0
        %v7766 = vpop.f32.mrb[0].mxu0
        %v7767 = vadd.f32 %v7604, %v7766
        %v7768 = vpop.f32.mrb[0].mxu0
        %7769 = vmatprep.mubr.bf16.mxu0 0
        %7770 = vmatmul.mubr.bf16.gmra.mrb[0].mxu0 %v7637
        %v7771 = vpop.f32.mrb[0].mxu0
        %v7772 = vadd.f32 %v7604, %v7771
        %v7773 = vpop.f32.mrb[0].mxu0
        %v7774 = vpop.f32.mrb[0].mxu0
        %v7775 = vadd.f32 %v7604, %v7774
        %v7776 = vpop.f32.mrb[0].mxu0
        %7777 = vmatprep.mubr.bf16.mxu0 0
        %7778 = vmatmul.mubr.bf16.gmra.mrb[0].mxu0 %v7640
        %v7779 = vpop.f32.mrb[0].mxu0
        %v7780 = vadd.f32 %v7604, %v7779
        %v7781 = vpop.f32.mrb[0].mxu0
        %v7782 = vpop.f32.mrb[0].mxu0
        %v7783 = vadd.f32 %v7604, %v7782
        %v7784 = vpop.f32.mrb[0].mxu0
        %7785 = vmatprep.mubr.bf16.mxu0 0
        %7786 = vmatmul.mubr.bf16.gmra.mrb[0].mxu0 %v7643
        %v7787 = vpop.f32.mrb[0].mxu0
        %v7788 = vadd.f32 %v7604, %v7787
        %v7789 = vpop.f32.mrb[0].mxu0
        %v7790 = vpop.f32.mrb[0].mxu0
        %v7791 = vadd.f32 %v7604, %v7790
        %v7792 = vpop.f32.mrb[0].mxu0
        %7793 = vmatprep.mubr.bf16.mxu0 0
        %7794 = vmatmul.mubr.bf16.gmra.mrb[0].mxu0 %v7646
        %v7795 = vpop.f32.mrb[0].mxu0
        %v7796 = vadd.f32 %v7604, %v7795
        %v7797 = vpop.f32.mrb[0].mxu0
        %v7798 = vpop.f32.mrb[0].mxu0
        %v7799 = vadd.f32 %v7604, %v7798
        %v7800 = vpop.f32.mrb[0].mxu0
        %7801 = vmatprep.mubr.bf16.mxu0 0
        %7802 = vmatmul.mubr.bf16.gmra.mrb[0].mxu0 %v7649
        %v7803 = vpop.f32.mrb[0].mxu0
        %v7804 = vadd.f32 %v7604, %v7803
        %v7805 = vpop.f32.mrb[0].mxu0
        %v7806 = vpop.f32.mrb[0].mxu0
        %v7807 = vadd.f32 %v7604, %v7806
        %v7808 = vpop.f32.mrb[0].mxu0
        %7809 = vmatprep.mubr.bf16.mxu0 0
        %7810 = vmatmul.mubr.bf16.gmra.mrb[0].mxu0 %v7652
        %v7811 = vpop.f32.mrb[0].mxu0
        %v7812 = vadd.f32 %v7604, %v7811
        %v7813 = vpop.f32.mrb[0].mxu0
        %v7814 = vpop.f32.mrb[0].mxu0
        %v7815 = vadd.f32 %v7604, %v7814
        %v7816 = vpop.f32.mrb[0].mxu0
        %7817 = vdwg.mxu0
        %v7818 = vmax.f32 %v7692, 0.0
        %v7819 = vmax.f32 %v7695, 0.0
        %v7820 = vmax.f32 %v7700, 0.0
        %v7821 = vmax.f32 %v7703, 0.0
        %v7822 = vmax.f32 %v7708, 0.0
        %v7823 = vmax.f32 %v7711, 0.0
        %v7824 = vmax.f32 %v7716, 0.0
        %v7825 = vmax.f32 %v7719, 0.0
        %v7826 = vmax.f32 %v7724, 0.0
        %v7827 = vmax.f32 %v7727, 0.0
        %v7828 = vmax.f32 %v7732, 0.0
        %v7829 = vmax.f32 %v7735, 0.0
        %v7830 = vmax.f32 %v7740, 0.0
        %v7831 = vmax.f32 %v7743, 0.0
        %v7832 = vmax.f32 %v7748, 0.0
        %v7833 = vmax.f32 %v7751, 0.0
        %v7834 = vmax.f32 %v7756, 0.0
        %v7835 = vmax.f32 %v7759, 0.0
        %v7836 = vmax.f32 %v7764, 0.0
        %v7837 = vmax.f32 %v7767, 0.0
        %v7838 = vmax.f32 %v7772, 0.0
        %v7839 = vmax.f32 %v7775, 0.0
        %v7840 = vmax.f32 %v7780, 0.0
        %v7841 = vmax.f32 %v7783, 0.0
        %v7842 = vmax.f32 %v7788, 0.0
        %v7843 = vmax.f32 %v7791, 0.0
        %v7844 = vmax.f32 %v7796, 0.0
        %v7845 = vmax.f32 %v7799, 0.0
        %v7846 = vmax.f32 %v7804, 0.0
        %v7847 = vmax.f32 %v7807, 0.0
        %v7848 = vmax.f32 %v7812, 0.0
        %v7849 = vmax.f32 %v7815, 0.0
        %7850 = vst [vmem:[%s217] sm:$0xff] %v7818
        %7851 = vst [vmem:[%s217 + $0x8] sm:$0xff] %v7819
        %7852 = vst [vmem:[%s217 + $0x10] sm:$0xff] %v7820
        %7853 = vst [vmem:[%s217 + $0x18] sm:$0xff] %v7821
        %7854 = vst [vmem:[%s217 + $0x20] sm:$0xff] %v7822
        %7855 = vst [vmem:[%s217 + $0x28] sm:$0xff] %v7823
        %7856 = vst [vmem:[%s217 + $0x30] sm:$0xff] %v7824
        %7857 = vst [vmem:[%s217 + $0x38] sm:$0xff] %v7825
        %7858 = vst [vmem:[%s217 + $0x40] sm:$0xff] %v7826
        %7859 = vst [vmem:[%s217 + $0x48] sm:$0xff] %v7827
        %7860 = vst [vmem:[%s217 + $0x50] sm:$0xff] %v7828
        %7861 = vst [vmem:[%s217 + $0x58] sm:$0xff] %v7829
        %7862 = vst [vmem:[%s217 + $0x60] sm:$0xff] %v7830
        %7863 = vst [vmem:[%s217 + $0x68] sm:$0xff] %v7831
        %7864 = vst [vmem:[%s217 + $0x70] sm:$0xff] %v7832
        %7865 = vst [vmem:[%s217 + $0x78] sm:$0xff] %v7833
        %7866 = vst [vmem:[%s217 + $0x80] sm:$0xff] %v7834
        %7867 = vst [vmem:[%s217 + $0x88] sm:$0xff] %v7835
        %7868 = vst [vmem:[%s217 + $0x90] sm:$0xff] %v7836
        %7869 = vst [vmem:[%s217 + $0x98] sm:$0xff] %v7837
        %7870 = vst [vmem:[%s217 + $0xa0] sm:$0xff] %v7838
        %7871 = vst [vmem:[%s217 + $0xa8] sm:$0xff] %v7839
        %7872 = vst [vmem:[%s217 + $0xb0] sm:$0xff] %v7840
        %7873 = vst [vmem:[%s217 + $0xb8] sm:$0xff] %v7841
        %7874 = vst [vmem:[%s217 + $0xc0] sm:$0xff] %v7842
        %7875 = vst [vmem:[%s217 + $0xc8] sm:$0xff] %v7843
        %7876 = vst [vmem:[%s217 + $0xd0] sm:$0xff] %v7844
        %7877 = vst [vmem:[%s217 + $0xd8] sm:$0xff] %v7845
        %7878 = vst [vmem:[%s217 + $0xe0] sm:$0xff] %v7846
        %7879 = vst [vmem:[%s217 + $0xe8] sm:$0xff] %v7847
        %7880 = vst [vmem:[%s217 + $0xf0] sm:$0xff] %v7848
        %7881 = vst [vmem:[%s217 + $0xf8] sm:$0xff] %v7849
        %s7882 = sand.u32 %s137, 1
        %s7883 = scalar_lea.sflag [#allocation4], %s7882
        %s7884 = sand.u32 %s137, 1
        %s7885 = smul.addr %s7884, 256
        %s7886 = scalar_lea.vmem [#allocation3], %s7885
        // Predicated region
        $region41: #{tpu_custom_call.1} parent=39 // pred_check
          %p7887 = pneg %p147
        $region42: #{tpu_custom_call.1} parent=39 // pred_check_branch
          %7889 = sbr.rel (%p7887) target = $region44
        $region43: #{tpu_custom_call.1} parent=39 // pred_region
          %s7891 = ssub.s32 4096, 4096
          %7892 = vsyncadd %s7883, %s7891
          %s7893 = smul.addr %s19, 32
          %s7894 = smul.addr %s7893, 128
          %s7895 = scalar_lea.hbm %s5, %s7894
          %s7896 = sshll.u32 %s7886, 4
          %s7897 = int_to_ptr.vmem [resolvable:$true] %s7896
          %7902 = dma.vmem_to_hbm [thread:$0]  %s7897, 4096, %s7895, %s7883, 128, 128, 8
        $region44: #{tpu_custom_call.1} parent=39 // pred_fallthru
          _
      $region40: #{tpu_custom_call.1} parent=5 // pred_fallthru
        _
      %p7903 = scmp.le.s32.totalorder 2, %s14
      // Predicated region
      $region45: #{tpu_custom_call.1} parent=5 // pred_check
        %p7904 = pneg %p7903
      $region46: #{tpu_custom_call.1} parent=5 // pred_check_branch
        %7906 = sbr.rel (%p7904) target = $region48
      $region47: #{tpu_custom_call.1} parent=5 // pred_region
        %s7907 = ssub.s32 %s14, 2
        // Predicated region
        $region49: #{tpu_custom_call.1} parent=47 // pred_check
          %p7908 = pneg %p153
        $region50: #{tpu_custom_call.1} parent=47 // pred_check_branch
          %7910 = sbr.rel (%p7908) target = $region52
        $region51: #{tpu_custom_call.1} parent=47 // pred_region
          %s7911 = sand.u32 %s138, 1
          %s7912 = scalar_lea.sflag [#allocation4], %s7911
          %s7913 = sand.u32 %s138, 1
          %s7914 = smul.addr %s7913, 256
          %s7915 = scalar_lea.vmem [#allocation3], %s7914
          %7916 = dma.done %s7912, 4096
        $region52: #{tpu_custom_call.1} parent=47 // pred_fallthru
          _
      $region48: #{tpu_custom_call.1} parent=5 // pred_fallthru
        _
    $region6: #{tpu_custom_call.1} parent=1 // loop_footer
      %s18 = sadd.s32 1, %s14
    $region7: #{tpu_custom_call.1} parent=1 // loop_footer_branch
      %13 = sbr.rel target = $region3
    $region8: #{tpu_custom_call.1} parent=1 // loop_exit
      _
    %7917 = vsyncpa [#allocation4], 1
    %s7918 = scalar_lea.sflag [#allocation4], 1
    %7919 = vsyncpa %s7918, 1

</llo_original>
